<compile_context>
chip_gen: v7x
topology: tpu7x:2x2x1
jax: 0.10.0
libtpu: 0.0.40
codegen_flags: <defaults>
</compile_context>

<pallas_src>
import numpy as np
import jax
import jax.numpy as jnp
from jax.experimental import pallas as pl
from jax.experimental.pallas import tpu as pltpu

NUM_TAYLOR = 13            # Horner Taylor terms for exp of the rescaled matrix
BATCH_BLOCK = 512          # matrices per expm grid step (multiple of 128)


def _round_up(x, m):
    return ((x + m - 1) // m) * m


# ---------------------------------------------------------------------------
# Kernel 1: projection matmul  AX = dX @ [Ar_flat | Ai_flat]
# ---------------------------------------------------------------------------
def _proj_kernel(dx_ref, w_ref, o_ref):
    o_ref[...] = jnp.dot(dx_ref[...], w_ref[...],
                         preferred_element_type=jnp.float32)


def _project_call(dX, W):
    N, K = dX.shape
    M = W.shape[1]
    TM = 128 if N >= 128 else _round_up(N, 8)
    TN = 512 if M >= 512 else _round_up(M, 128)
    Np = _round_up(N, TM)
    Mp = _round_up(M, TN)
    dXp = jnp.pad(dX, ((0, Np - N), (0, 0))) if Np != N else dX
    Wp = jnp.pad(W, ((0, 0), (0, Mp - M))) if Mp != M else W

    out = pl.pallas_call(
        _proj_kernel,
        out_shape=jax.ShapeDtypeStruct((Np, Mp), jnp.float32),
        grid_spec=pltpu.PrefetchScalarGridSpec(
            num_scalar_prefetch=0,
            grid=(Np // TM, Mp // TN),
            in_specs=[
                pl.BlockSpec((TM, K), lambda i, j: (i, 0)),
                pl.BlockSpec((K, TN), lambda i, j: (0, j)),
            ],
            out_specs=pl.BlockSpec((TM, TN), lambda i, j: (i, j)),
        ),
        compiler_params=pltpu.CompilerParams(
            dimension_semantics=("parallel", "parallel"),
            vmem_limit_bytes=32 * 1024 * 1024,
        ),
    )(dXp, Wp)
    return out[:N, :M]


# ---------------------------------------------------------------------------
# Kernel 2: batched complex matrix exponential, lane-packed layout (H, H, B)
# ---------------------------------------------------------------------------
def _expm_kernel(smax_ref, mr_ref, mi_ref, s_ref, scale_ref, er_ref, ei_ref):
    H = mr_ref.shape[0]
    Bb = mr_ref.shape[2]

    mr = mr_ref[...]                               # (H, H, Bb)
    mi = mi_ref[...]
    scale3 = scale_ref[...].reshape(1, 1, Bb)      # exact 2^-s per matrix
    ar = mr * scale3
    ai = mi * scale3

    # identity in lane-packed layout (built once)
    row = jax.lax.broadcasted_iota(jnp.int32, (H, H, Bb), 0)
    col = jax.lax.broadcasted_iota(jnp.int32, (H, H, Bb), 1)
    eye = (row == col).astype(jnp.float32)

    def rmm(x, y):
        # z[i,k,b] = sum_j x[i,j,b] * y[j,k,b] as H lane-wide VPU FMAs
        acc = x[:, 0:1, :] * y[0:1, :, :]
        for j in range(1, H):
            acc = acc + x[:, j:j + 1, :] * y[j:j + 1, :, :]
        return acc

    def cmm(xr, xi, yr, yi):
        # Karatsuba: 3 real matmuls per complex matmul
        k1 = rmm(xr, yr)
        k2 = rmm(xi, yi)
        k3 = rmm(xr + xi, yr + yi)
        return k1 - k2, k3 - k1 - k2

    # Horner Taylor series: exp(A) ~= I + A(I + A/2 (I + A/3 (...)))
    inv = 1.0 / float(NUM_TAYLOR)
    tr = eye + ar * inv
    ti = ai * inv
    for k in range(NUM_TAYLOR - 1, 0, -1):
        pr, pi = cmm(ar, ai, tr, ti)
        inv_k = 1.0 / float(k)
        tr = eye + pr * inv_k
        ti = pi * inv_k

    er_ref[...] = tr
    ei_ref[...] = ti

    # dynamic repeated squaring: run only max(s) passes for this block,
    # per-matrix masked so each matrix is squared exactly s times.
    s_max = smax_ref[pl.program_id(0)]

    @pl.loop(0, s_max)
    def _(t):
        cr = er_ref[...]
        ci = ei_ref[...]
        qr, qi = cmm(cr, ci, cr, ci)
        mask = t < s_ref[...].reshape(1, 1, Bb)
        er_ref[...] = jnp.where(mask, qr, cr)
        ei_ref[...] = jnp.where(mask, qi, ci)


def _expm_call(Mr, Mi, s_i2d, scale2d, s_max_blocks, Bb):
    H = Mr.shape[0]
    Bp = Mr.shape[2]
    num_blocks = Bp // Bb
    out_sds = jax.ShapeDtypeStruct((H, H, Bp), jnp.float32)
    return pl.pallas_call(
        _expm_kernel,
        out_shape=(out_sds, out_sds),
        grid_spec=pltpu.PrefetchScalarGridSpec(
            num_scalar_prefetch=1,
            grid=(num_blocks,),
            in_specs=[
                pl.BlockSpec((H, H, Bb), lambda b, sm: (0, 0, b)),
                pl.BlockSpec((H, H, Bb), lambda b, sm: (0, 0, b)),
                pl.BlockSpec((1, Bb), lambda b, sm: (0, b)),
                pl.BlockSpec((1, Bb), lambda b, sm: (0, b)),
            ],
            out_specs=(
                pl.BlockSpec((H, H, Bb), lambda b, sm: (0, 0, b)),
                pl.BlockSpec((H, H, Bb), lambda b, sm: (0, 0, b)),
            ),
        ),
        compiler_params=pltpu.CompilerParams(
            dimension_semantics=("parallel",),
            vmem_limit_bytes=32 * 1024 * 1024,
        ),
    )(s_max_blocks, Mr, Mi, s_i2d, scale2d)


# ---------------------------------------------------------------------------
# Module glue (plain JAX): parameter setup, param_map, layout plumbing
# ---------------------------------------------------------------------------
def init_params(key, input_size, channels, hidden_size, init_range=1.0):
    # base_projection.reset_parameters is abstract (NotImplementedError);
    # deterministic synthetic init: real & imag ~ U(-init_range, init_range).
    kr, ki = jax.random.split(key)
    shape = (input_size, channels, hidden_size, hidden_size)
    A_re = jax.random.uniform(kr, shape, jnp.float32, -init_range, init_range)
    A_im = jax.random.uniform(ki, shape, jnp.float32, -init_range, init_range)
    return A_re, A_im


def param_map_real_imag(A_re, A_im):
    # TODO(synk): base class leaves self.param_map abstract (None); we use the
    # standard skew-Hermitian projection M -> M - M^H (unitary Lie algebra).
    re = A_re - jnp.swapaxes(A_re, -1, -2)
    im = A_im + jnp.swapaxes(A_im, -1, -2)
    return re, im


@jax.jit
def base_projection_forward(dX, A_re, A_im):
    """dX: (N, input_size) f32 -> (out_re, out_im) each (N, C, H, H) f32."""
    K, C, H, _ = A_re.shape
    N = dX.shape[0]
    CHH = C * H * H

    Ar, Ai = param_map_real_imag(A_re, A_im)
    W = jnp.concatenate([Ar.reshape(K, CHH), Ai.reshape(K, CHH)], axis=1)

    AX = _project_call(dX, W)                      # (N, 2*CHH)
    AXr = AX[:, :CHH].reshape(N * C, H, H)
    AXi = AX[:, CHH:].reshape(N * C, H, H)
    Btot = N * C

    # per-matrix induced 1-norm -> squaring count s and exact scale 2^-s
    absM = jnp.sqrt(AXr * AXr + AXi * AXi)
    norm = jnp.max(jnp.sum(absM, axis=1), axis=-1)              # (Btot,)
    s_f = jnp.where(norm > 1.0,
                    jnp.ceil(jnp.log2(jnp.maximum(norm, 1.0))), 0.0)
    s_i = jnp.clip(s_f.astype(jnp.int32), 0, 126)               # keep 2^-s finite
    scale = jax.lax.bitcast_convert_type((127 - s_i) << 23, jnp.float32)

    # lane-packed layout: (H, H, Btot), batch on the 128-lane axis
    Mr = jnp.transpose(AXr, (1, 2, 0))
    Mi = jnp.transpose(AXi, (1, 2, 0))

    Bb = BATCH_BLOCK if Btot >= BATCH_BLOCK else _round_up(Btot, 128)
    Bp = _round_up(Btot, Bb)
    pad = Bp - Btot
    if pad:
        Mr = jnp.pad(Mr, ((0, 0), (0, 0), (0, pad)))
        Mi = jnp.pad(Mi, ((0, 0), (0, 0), (0, pad)))
        s_i = jnp.pad(s_i, (0, pad))
        scale = jnp.pad(scale, (0, pad), constant_values=1.0)
    num_blocks = Bp // Bb
    s_max_blocks = jnp.max(s_i.reshape(num_blocks, Bb), axis=1).astype(jnp.int32)

    Er, Ei = _expm_call(Mr, Mi, s_i.reshape(1, Bp), scale.reshape(1, Bp),
                        s_max_blocks, Bb)

    Er = jnp.transpose(Er[:, :, :Btot], (2, 0, 1)).reshape(N, C, H, H)
    Ei = jnp.transpose(Ei[:, :, :Btot], (2, 0, 1)).reshape(N, C, H, H)
    return Er, Ei


# ---------------------------------------------------------------------------
# Pure-numpy (float64) reference of the PyTorch forward
# ---------------------------------------------------------------------------
def ref_forward_np(dX, A_re, A_im):
    A = (np.asarray(A_re, np.float64) - np.swapaxes(np.asarray(A_re, np.float64), -1, -2)) \
        + 1j * (np.asarray(A_im, np.float64) + np.swapaxes(np.asarray(A_im, np.float64), -1, -2))
    dXn = np.asarray(dX, np.float64)
    AX = np.einsum('nk,kcij->ncij', dXn, A)
    N, C, H, _ = AX.shape
    out = np.zeros_like(AX)
    for n in range(N):
        for c in range(C):
            M = AX[n, c]
            norm = np.abs(M).sum(axis=0).max()
            s = int(np.ceil(np.log2(norm))) if norm > 1.0 else 0
            Ms = M / (2.0 ** s)
            E = np.eye(H, dtype=np.complex128)
            term = np.eye(H, dtype=np.complex128)
            for k in range(1, 30):
                term = term @ Ms / k
                E = E + term
            for _ in range(s):
                E = E @ E
            out[n, c] = E
    return out


if __name__ == "__main__":
    N, input_size, channels, hidden_size = 8, 6, 2, 8

    key = jax.random.PRNGKey(0)
    k_dx, k_A = jax.random.split(key)
    dX = jax.random.normal(k_dx, (N, input_size), dtype=jnp.float32)
    A_re, A_im = init_params(k_A, input_size, channels, hidden_size, init_range=1.0)

    out_re, out_im = base_projection_forward(dX, A_re, A_im)
    jax.block_until_ready(out_re)
    jax.block_until_ready(out_im)

    out = np.asarray(out_re).astype(np.complex64) + 1j * np.asarray(out_im).astype(np.complex64)

    ref = ref_forward_np(dX, A_re, A_im)
    assert out.shape == (N, channels, hidden_size, hidden_size)
    assert np.all(np.isfinite(np.asarray(out_re))) and np.all(np.isfinite(np.asarray(out_im)))
    np.testing.assert_allclose(out, ref.astype(np.complex64), rtol=2e-3, atol=2e-3)

    print("KERNEL_OK")
</pallas_src>

<mosaic_0001>
module attributes {stable_mosaic.version = 11 : i64} {
  func.func @_proj_kernel(%arg0: i32, %arg1: i32, %arg2: memref<8x6xf32, #tpu.memory_space<vmem>>, %arg3: memref<6x256xf32, #tpu.memory_space<vmem>>, %arg4: memref<8x256xf32, #tpu.memory_space<vmem>>) attributes {dimension_semantics = [#tpu.dimension_semantics<parallel>, #tpu.dimension_semantics<parallel>], iteration_bounds = array<i64: 1, 1>, scalar_prefetch = 0 : i64, scratch_operands = 0 : i64, tpu.core_type = #tpu.core_type<tc>, window_params = [{transform_indices = @transform_0, window_bounds = array<i64: 8, 6>}, {transform_indices = @transform_1, window_bounds = array<i64: 6, 256>}, {transform_indices = @transform_2, window_bounds = array<i64: 8, 256>}]} {
    %c0 = arith.constant 0 : index
    %c0_0 = arith.constant 0 : index
    %0 = vector.load %arg2[%c0, %c0_0] : memref<8x6xf32, #tpu.memory_space<vmem>>, vector<8x6xf32>
    %c0_1 = arith.constant 0 : index
    %c0_2 = arith.constant 0 : index
    %1 = vector.load %arg3[%c0_1, %c0_2] : memref<6x256xf32, #tpu.memory_space<vmem>>, vector<6x256xf32>
    %cst = arith.constant dense<0.000000e+00> : vector<8x256xf32>
    %2 = tpu.matmul %0, %1, %cst {dimension_numbers = #tpu.dot_dimension_numbers<[1], [0], [0], [1], [0, 0, 1, 1], [], []>} : vector<8x6xf32>, vector<6x256xf32>, vector<8x256xf32> -> vector<8x256xf32>
    %c0_3 = arith.constant 0 : index
    %c0_4 = arith.constant 0 : index
    %3 = vector.load %arg4[%c0_3, %c0_4] : memref<8x256xf32, #tpu.memory_space<vmem>>, vector<8x256xf32>
    tpu.vector_store %arg4[%c0_3, %c0_4], %2 {strides = array<i32>} : memref<8x256xf32, #tpu.memory_space<vmem>>, vector<8x256xf32>,
    return
  }
  func.func @transform_0(%arg0: i32, %arg1: i32) -> (i32, i32) {
    %c0_i32 = arith.constant 0 : i32
    %c0_i32_0 = arith.constant 0 : i32
    return %arg0, %c0_i32 : i32, i32
  }
  func.func @transform_1(%arg0: i32, %arg1: i32) -> (i32, i32) {
    %c0_i32 = arith.constant 0 : i32
    %c0_i32_0 = arith.constant 0 : i32
    return %c0_i32, %arg1 : i32, i32
  }
  func.func @transform_2(%arg0: i32, %arg1: i32) -> (i32, i32) {
    %c0_i32 = arith.constant 0 : i32
    return %arg0, %arg1 : i32, i32
  }
}

module attributes {stable_mosaic.version = 11 : i64} {
  func.func @_expm_kernel(%arg0: i32, %arg1: memref<1xi32, #tpu.memory_space<smem>>, %arg2: memref<8x8x128xf32, #tpu.memory_space<vmem>>, %arg3: memref<8x8x128xf32, #tpu.memory_space<vmem>>, %arg4: memref<1x128xi32, #tpu.memory_space<vmem>>, %arg5: memref<1x128xf32, #tpu.memory_space<vmem>>, %arg6: memref<8x8x128xf32, #tpu.memory_space<vmem>>, %arg7: memref<8x8x128xf32, #tpu.memory_space<vmem>>) attributes {dimension_semantics = [#tpu.dimension_semantics<parallel>], iteration_bounds = array<i64: 1>, scalar_prefetch = 1 : i64, scratch_operands = 0 : i64, tpu.core_type = #tpu.core_type<tc>, window_params = [{transform_indices = @transform_0, window_bounds = array<i64: 8, 8, 128>}, {transform_indices = @transform_1, window_bounds = array<i64: 8, 8, 128>}, {transform_indices = @transform_2, window_bounds = array<i64: 1, 128>}, {transform_indices = @transform_3, window_bounds = array<i64: 1, 128>}, {transform_indices = @transform_4, window_bounds = array<i64: 8, 8, 128>}, {transform_indices = @transform_5, window_bounds = array<i64: 8, 8, 128>}]} {
    %c0 = arith.constant 0 : index
    %c0_0 = arith.constant 0 : index
    %c0_1 = arith.constant 0 : index
    %0 = vector.load %arg2[%c0, %c0_0, %c0_1] : memref<8x8x128xf32, #tpu.memory_space<vmem>>, vector<8x8x128xf32>
    %c0_2 = arith.constant 0 : index
    %c0_3 = arith.constant 0 : index
    %c0_4 = arith.constant 0 : index
    %1 = vector.load %arg3[%c0_2, %c0_3, %c0_4] : memref<8x8x128xf32, #tpu.memory_space<vmem>>, vector<8x8x128xf32>
    %c0_5 = arith.constant 0 : index
    %c0_6 = arith.constant 0 : index
    %2 = vector.load %arg5[%c0_5, %c0_6] : memref<1x128xf32, #tpu.memory_space<vmem>>, vector<1x128xf32>
    %3 = vector.shape_cast %2 : vector<1x128xf32> to vector<1x1x128xf32>
    %4 = vector.broadcast %3 : vector<1x1x128xf32> to vector<8x8x128xf32>
    %5 = arith.mulf %0, %4 : vector<8x8x128xf32>
    %6 = vector.broadcast %3 : vector<1x1x128xf32> to vector<8x8x128xf32>
    %7 = arith.mulf %1, %6 : vector<8x8x128xf32>
    %8 = tpu.iota {dimensions = array<i32: 0>} : vector<8x8x128xi32>
    %9 = tpu.iota {dimensions = array<i32: 1>} : vector<8x8x128xi32>
    %10 = arith.cmpi eq, %8, %9 : vector<8x8x128xi32>
    %11 = arith.extui %10 : vector<8x8x128xi1> to vector<8x8x128xi32>
    %12 = arith.sitofp %11 : vector<8x8x128xi32> to vector<8x8x128xf32>
    %cst = arith.constant 0.0769230798 : f32
    %13 = vector.broadcast %cst : f32 to vector<8x8x128xf32>
    %14 = arith.mulf %5, %13 : vector<8x8x128xf32>
    %15 = arith.addf %12, %14 : vector<8x8x128xf32>
    %cst_7 = arith.constant 0.0769230798 : f32
    %16 = vector.broadcast %cst_7 : f32 to vector<8x8x128xf32>
    %17 = arith.mulf %7, %16 : vector<8x8x128xf32>
    %18 = vector.extract_strided_slice %5 {offsets = [0, 0, 0], sizes = [8, 1, 128], strides = [1, 1, 1]} : vector<8x8x128xf32> to vector<8x1x128xf32>
    %19 = vector.extract_strided_slice %15 {offsets = [0, 0, 0], sizes = [1, 8, 128], strides = [1, 1, 1]} : vector<8x8x128xf32> to vector<1x8x128xf32>
    %20 = vector.broadcast %18 : vector<8x1x128xf32> to vector<8x8x128xf32>
    %21 = vector.broadcast %19 : vector<1x8x128xf32> to vector<8x8x128xf32>
    %22 = arith.mulf %20, %21 : vector<8x8x128xf32>
    %23 = vector.extract_strided_slice %5 {offsets = [0, 1, 0], sizes = [8, 1, 128], strides = [1, 1, 1]} : vector<8x8x128xf32> to vector<8x1x128xf32>
    %24 = vector.extract_strided_slice %15 {offsets = [1, 0, 0], sizes = [1, 8, 128], strides = [1, 1, 1]} : vector<8x8x128xf32> to vector<1x8x128xf32>
    %25 = vector.broadcast %23 : vector<8x1x128xf32> to vector<8x8x128xf32>
    %26 = vector.broadcast %24 : vector<1x8x128xf32> to vector<8x8x128xf32>
    %27 = arith.mulf %25, %26 : vector<8x8x128xf32>
    %28 = arith.addf %22, %27 : vector<8x8x128xf32>
    %29 = vector.extract_strided_slice %5 {offsets = [0, 2, 0], sizes = [8, 1, 128], strides = [1, 1, 1]} : vector<8x8x128xf32> to vector<8x1x128xf32>
    %30 = vector.extract_strided_slice %15 {offsets = [2, 0, 0], sizes = [1, 8, 128], strides = [1, 1, 1]} : vector<8x8x128xf32> to vector<1x8x128xf32>
    %31 = vector.broadcast %29 : vector<8x1x128xf32> to vector<8x8x128xf32>
    %32 = vector.broadcast %30 : vector<1x8x128xf32> to vector<8x8x128xf32>
    %33 = arith.mulf %31, %32 : vector<8x8x128xf32>
    %34 = arith.addf %28, %33 : vector<8x8x128xf32>
    %35 = vector.extract_strided_slice %5 {offsets = [0, 3, 0], sizes = [8, 1, 128], strides = [1, 1, 1]} : vector<8x8x128xf32> to vector<8x1x128xf32>
    %36 = vector.extract_strided_slice %15 {offsets = [3, 0, 0], sizes = [1, 8, 128], strides = [1, 1, 1]} : vector<8x8x128xf32> to vector<1x8x128xf32>
    %37 = vector.broadcast %35 : vector<8x1x128xf32> to vector<8x8x128xf32>
    %38 = vector.broadcast %36 : vector<1x8x128xf32> to vector<8x8x128xf32>
    %39 = arith.mulf %37, %38 : vector<8x8x128xf32>
    %40 = arith.addf %34, %39 : vector<8x8x128xf32>
    %41 = vector.extract_strided_slice %5 {offsets = [0, 4, 0], sizes = [8, 1, 128], strides = [1, 1, 1]} : vector<8x8x128xf32> to vector<8x1x128xf32>
    %42 = vector.extract_strided_slice %15 {offsets = [4, 0, 0], sizes = [1, 8, 128], strides = [1, 1, 1]} : vector<8x8x128xf32> to vector<1x8x128xf32>
    %43 = vector.broadcast %41 : vector<8x1x128xf32> to vector<8x8x128xf32>
    %44 = vector.broadcast %42 : vector<1x8x128xf32> to vector<8x8x128xf32>
    %45 = arith.mulf %43, %44 : vector<8x8x128xf32>
    %46 = arith.addf %40, %45 : vector<8x8x128xf32>
    %47 = vector.extract_strided_slice %5 {offsets = [0, 5, 0], sizes = [8, 1, 128], strides = [1, 1, 1]} : vector<8x8x128xf32> to vector<8x1x128xf32>
    %48 = vector.extract_strided_slice %15 {offsets = [5, 0, 0], sizes = [1, 8, 128], strides = [1, 1, 1]} : vector<8x8x128xf32> to vector<1x8x128xf32>
    %49 = vector.broadcast %47 : vector<8x1x128xf32> to vector<8x8x128xf32>
    %50 = vector.broadcast %48 : vector<1x8x128xf32> to vector<8x8x128xf32>
    %51 = arith.mulf %49, %50 : vector<8x8x128xf32>
    %52 = arith.addf %46, %51 : vector<8x8x128xf32>
    %53 = vector.extract_strided_slice %5 {offsets = [0, 6, 0], sizes = [8, 1, 128], strides = [1, 1, 1]} : vector<8x8x128xf32> to vector<8x1x128xf32>
    %54 = vector.extract_strided_slice %15 {offsets = [6, 0, 0], sizes = [1, 8, 128], strides = [1, 1, 1]} : vector<8x8x128xf32> to vector<1x8x128xf32>
    %55 = vector.broadcast %53 : vector<8x1x128xf32> to vector<8x8x128xf32>
    %56 = vector.broadcast %54 : vector<1x8x128xf32> to vector<8x8x128xf32>
    %57 = arith.mulf %55, %56 : vector<8x8x128xf32>
    %58 = arith.addf %52, %57 : vector<8x8x128xf32>
    %59 = vector.extract_strided_slice %5 {offsets = [0, 7, 0], sizes = [8, 1, 128], strides = [1, 1, 1]} : vector<8x8x128xf32> to vector<8x1x128xf32>
    %60 = vector.extract_strided_slice %15 {offsets = [7, 0, 0], sizes = [1, 8, 128], strides = [1, 1, 1]} : vector<8x8x128xf32> to vector<1x8x128xf32>
    %61 = vector.broadcast %59 : vector<8x1x128xf32> to vector<8x8x128xf32>
    %62 = vector.broadcast %60 : vector<1x8x128xf32> to vector<8x8x128xf32>
    %63 = arith.mulf %61, %62 : vector<8x8x128xf32>
    %64 = arith.addf %58, %63 : vector<8x8x128xf32>
    %65 = vector.extract_strided_slice %7 {offsets = [0, 0, 0], sizes = [8, 1, 128], strides = [1, 1, 1]} : vector<8x8x128xf32> to vector<8x1x128xf32>
    %66 = vector.extract_strided_slice %17 {offsets = [0, 0, 0], sizes = [1, 8, 128], strides = [1, 1, 1]} : vector<8x8x128xf32> to vector<1x8x128xf32>
    %67 = vector.broadcast %65 : vector<8x1x128xf32> to vector<8x8x128xf32>
    %68 = vector.broadcast %66 : vector<1x8x128xf32> to vector<8x8x128xf32>
    %69 = arith.mulf %67, %68 : vector<8x8x128xf32>
    %70 = vector.extract_strided_slice %7 {offsets = [0, 1, 0], sizes = [8, 1, 128], strides = [1, 1, 1]} : vector<8x8x128xf32> to vector<8x1x128xf32>
    %71 = vector.extract_strided_slice %17 {offsets = [1, 0, 0], sizes = [1, 8, 128], strides = [1, 1, 1]} : vector<8x8x128xf32> to vector<1x8x128xf32>
    %72 = vector.broadcast %70 : vector<8x1x128xf32> to vector<8x8x128xf32>
    %73 = vector.broadcast %71 : vector<1x8x128xf32> to vector<8x8x128xf32>
    %74 = arith.mulf %72, %73 : vector<8x8x128xf32>
    %75 = arith.addf %69, %74 : vector<8x8x128xf32>
    %76 = vector.extract_strided_slice %7 {offsets = [0, 2, 0], sizes = [8, 1, 128], strides = [1, 1, 1]} : vector<8x8x128xf32> to vector<8x1x128xf32>
    %77 = vector.extract_strided_slice %17 {offsets = [2, 0, 0], sizes = [1, 8, 128], strides = [1, 1, 1]} : vector<8x8x128xf32> to vector<1x8x128xf32>
    %78 = vector.broadcast %76 : vector<8x1x128xf32> to vector<8x8x128xf32>
    %79 = vector.broadcast %77 : vector<1x8x128xf32> to vector<8x8x128xf32>
    %80 = arith.mulf %78, %79 : vector<8x8x128xf32>
    %81 = arith.addf %75, %80 : vector<8x8x128xf32>
    %82 = vector.extract_strided_slice %7 {offsets = [0, 3, 0], sizes = [8, 1, 128], strides = [1, 1, 1]} : vector<8x8x128xf32> to vector<8x1x128xf32>
    %83 = vector.extract_strided_slice %17 {offsets = [3, 0, 0], sizes = [1, 8, 128], strides = [1, 1, 1]} : vector<8x8x128xf32> to vector<1x8x128xf32>
    %84 = vector.broadcast %82 : vector<8x1x128xf32> to vector<8x8x128xf32>
    %85 = vector.broadcast %83 : vector<1x8x128xf32> to vector<8x8x128xf32>
    %86 = arith.mulf %84, %85 : vector<8x8x128xf32>
    %87 = arith.addf %81, %86 : vector<8x8x128xf32>
    %88 = vector.extract_strided_slice %7 {offsets = [0, 4, 0], sizes = [8, 1, 128], strides = [1, 1, 1]} : vector<8x8x128xf32> to vector<8x1x128xf32>
    %89 = vector.extract_strided_slice %17 {offsets = [4, 0, 0], sizes = [1, 8, 128], strides = [1, 1, 1]} : vector<8x8x128xf32> to vector<1x8x128xf32>
    %90 = vector.broadcast %88 : vector<8x1x128xf32> to vector<8x8x128xf32>
    %91 = vector.broadcast %89 : vector<1x8x128xf32> to vector<8x8x128xf32>
    %92 = arith.mulf %90, %91 : vector<8x8x128xf32>
    %93 = arith.addf %87, %92 : vector<8x8x128xf32>
    %94 = vector.extract_strided_slice %7 {offsets = [0, 5, 0], sizes = [8, 1, 128], strides = [1, 1, 1]} : vector<8x8x128xf32> to vector<8x1x128xf32>
    %95 = vector.extract_strided_slice %17 {offsets = [5, 0, 0], sizes = [1, 8, 128], strides = [1, 1, 1]} : vector<8x8x128xf32> to vector<1x8x128xf32>
    %96 = vector.broadcast %94 : vector<8x1x128xf32> to vector<8x8x128xf32>
    %97 = vector.broadcast %95 : vector<1x8x128xf32> to vector<8x8x128xf32>
    %98 = arith.mulf %96, %97 : vector<8x8x128xf32>
    %99 = arith.addf %93, %98 : vector<8x8x128xf32>
    %100 = vector.extract_strided_slice %7 {offsets = [0, 6, 0], sizes = [8, 1, 128], strides = [1, 1, 1]} : vector<8x8x128xf32> to vector<8x1x128xf32>
    %101 = vector.extract_strided_slice %17 {offsets = [6, 0, 0], sizes = [1, 8, 128], strides = [1, 1, 1]} : vector<8x8x128xf32> to vector<1x8x128xf32>
    %102 = vector.broadcast %100 : vector<8x1x128xf32> to vector<8x8x128xf32>
    %103 = vector.broadcast %101 : vector<1x8x128xf32> to vector<8x8x128xf32>
    %104 = arith.mulf %102, %103 : vector<8x8x128xf32>
    %105 = arith.addf %99, %104 : vector<8x8x128xf32>
    %106 = vector.extract_strided_slice %7 {offsets = [0, 7, 0], sizes = [8, 1, 128], strides = [1, 1, 1]} : vector<8x8x128xf32> to vector<8x1x128xf32>
    %107 = vector.extract_strided_slice %17 {offsets = [7, 0, 0], sizes = [1, 8, 128], strides = [1, 1, 1]} : vector<8x8x128xf32> to vector<1x8x128xf32>
    %108 = vector.broadcast %106 : vector<8x1x128xf32> to vector<8x8x128xf32>
    %109 = vector.broadcast %107 : vector<1x8x128xf32> to vector<8x8x128xf32>
    %110 = arith.mulf %108, %109 : vector<8x8x128xf32>
    %111 = arith.addf %105, %110 : vector<8x8x128xf32>
    %112 = arith.addf %5, %7 : vector<8x8x128xf32>
    %113 = arith.addf %15, %17 : vector<8x8x128xf32>
    %114 = vector.extract_strided_slice %112 {offsets = [0, 0, 0], sizes = [8, 1, 128], strides = [1, 1, 1]} : vector<8x8x128xf32> to vector<8x1x128xf32>
    %115 = vector.extract_strided_slice %113 {offsets = [0, 0, 0], sizes = [1, 8, 128], strides = [1, 1, 1]} : vector<8x8x128xf32> to vector<1x8x128xf32>
    %116 = vector.broadcast %114 : vector<8x1x128xf32> to vector<8x8x128xf32>
    %117 = vector.broadcast %115 : vector<1x8x128xf32> to vector<8x8x128xf32>
    %118 = arith.mulf %116, %117 : vector<8x8x128xf32>
    %119 = vector.extract_strided_slice %112 {offsets = [0, 1, 0], sizes = [8, 1, 128], strides = [1, 1, 1]} : vector<8x8x128xf32> to vector<8x1x128xf32>
    %120 = vector.extract_strided_slice %113 {offsets = [1, 0, 0], sizes = [1, 8, 128], strides = [1, 1, 1]} : vector<8x8x128xf32> to vector<1x8x128xf32>
    %121 = vector.broadcast %119 : vector<8x1x128xf32> to vector<8x8x128xf32>
    %122 = vector.broadcast %120 : vector<1x8x128xf32> to vector<8x8x128xf32>
    %123 = arith.mulf %121, %122 : vector<8x8x128xf32>
    %124 = arith.addf %118, %123 : vector<8x8x128xf32>
    %125 = vector.extract_strided_slice %112 {offsets = [0, 2, 0], sizes = [8, 1, 128], strides = [1, 1, 1]} : vector<8x8x128xf32> to vector<8x1x128xf32>
    %126 = vector.extract_strided_slice %113 {offsets = [2, 0, 0], sizes = [1, 8, 128], strides = [1, 1, 1]} : vector<8x8x128xf32> to vector<1x8x128xf32>
    %127 = vector.broadcast %125 : vector<8x1x128xf32> to vector<8x8x128xf32>
    %128 = vector.broadcast %126 : vector<1x8x128xf32> to vector<8x8x128xf32>
    %129 = arith.mulf %127, %128 : vector<8x8x128xf32>
    %130 = arith.addf %124, %129 : vector<8x8x128xf32>
    %131 = vector.extract_strided_slice %112 {offsets = [0, 3, 0], sizes = [8, 1, 128], strides = [1, 1, 1]} : vector<8x8x128xf32> to vector<8x1x128xf32>
    %132 = vector.extract_strided_slice %113 {offsets = [3, 0, 0], sizes = [1, 8, 128], strides = [1, 1, 1]} : vector<8x8x128xf32> to vector<1x8x128xf32>
    %133 = vector.broadcast %131 : vector<8x1x128xf32> to vector<8x8x128xf32>
    %134 = vector.broadcast %132 : vector<1x8x128xf32> to vector<8x8x128xf32>
    %135 = arith.mulf %133, %134 : vector<8x8x128xf32>
    %136 = arith.addf %130, %135 : vector<8x8x128xf32>
    %137 = vector.extract_strided_slice %112 {offsets = [0, 4, 0], sizes = [8, 1, 128], strides = [1, 1, 1]} : vector<8x8x128xf32> to vector<8x1x128xf32>
    %138 = vector.extract_strided_slice %113 {offsets = [4, 0, 0], sizes = [1, 8, 128], strides = [1, 1, 1]} : vector<8x8x128xf32> to vector<1x8x128xf32>
    %139 = vector.broadcast %137 : vector<8x1x128xf32> to vector<8x8x128xf32>
    %140 = vector.broadcast %138 : vector<1x8x128xf32> to vector<8x8x128xf32>
    %141 = arith.mulf %139, %140 : vector<8x8x128xf32>
    %142 = arith.addf %136, %141 : vector<8x8x128xf32>
    %143 = vector.extract_strided_slice %112 {offsets = [0, 5, 0], sizes = [8, 1, 128], strides = [1, 1, 1]} : vector<8x8x128xf32> to vector<8x1x128xf32>
    %144 = vector.extract_strided_slice %113 {offsets = [5, 0, 0], sizes = [1, 8, 128], strides = [1, 1, 1]} : vector<8x8x128xf32> to vector<1x8x128xf32>
    %145 = vector.broadcast %143 : vector<8x1x128xf32> to vector<8x8x128xf32>
    %146 = vector.broadcast %144 : vector<1x8x128xf32> to vector<8x8x128xf32>
    %147 = arith.mulf %145, %146 : vector<8x8x128xf32>
    %148 = arith.addf %142, %147 : vector<8x8x128xf32>
    %149 = vector.extract_strided_slice %112 {offsets = [0, 6, 0], sizes = [8, 1, 128], strides = [1, 1, 1]} : vector<8x8x128xf32> to vector<8x1x128xf32>
    %150 = vector.extract_strided_slice %113 {offsets = [6, 0, 0], sizes = [1, 8, 128], strides = [1, 1, 1]} : vector<8x8x128xf32> to vector<1x8x128xf32>
    %151 = vector.broadcast %149 : vector<8x1x128xf32> to vector<8x8x128xf32>
    %152 = vector.broadcast %150 : vector<1x8x128xf32> to vector<8x8x128xf32>
    %153 = arith.mulf %151, %152 : vector<8x8x128xf32>
    %154 = arith.addf %148, %153 : vector<8x8x128xf32>
    %155 = vector.extract_strided_slice %112 {offsets = [0, 7, 0], sizes = [8, 1, 128], strides = [1, 1, 1]} : vector<8x8x128xf32> to vector<8x1x128xf32>
    %156 = vector.extract_strided_slice %113 {offsets = [7, 0, 0], sizes = [1, 8, 128], strides = [1, 1, 1]} : vector<8x8x128xf32> to vector<1x8x128xf32>
    %157 = vector.broadcast %155 : vector<8x1x128xf32> to vector<8x8x128xf32>
    %158 = vector.broadcast %156 : vector<1x8x128xf32> to vector<8x8x128xf32>
    %159 = arith.mulf %157, %158 : vector<8x8x128xf32>
    %160 = arith.addf %154, %159 : vector<8x8x128xf32>
    %161 = arith.subf %64, %111 : vector<8x8x128xf32>
    %162 = arith.subf %160, %64 : vector<8x8x128xf32>
    %163 = arith.subf %162, %111 : vector<8x8x128xf32>
    %cst_8 = arith.constant 0.0833333358 : f32
    %164 = vector.broadcast %cst_8 : f32 to vector<8x8x128xf32>
    %165 = arith.mulf %161, %164 : vector<8x8x128xf32>
    %166 = arith.addf %12, %165 : vector<8x8x128xf32>
    %cst_9 = arith.constant 0.0833333358 : f32
    %167 = vector.broadcast %cst_9 : f32 to vector<8x8x128xf32>
    %168 = arith.mulf %163, %167 : vector<8x8x128xf32>
    %169 = vector.extract_strided_slice %5 {offsets = [0, 0, 0], sizes = [8, 1, 128], strides = [1, 1, 1]} : vector<8x8x128xf32> to vector<8x1x128xf32>
    %170 = vector.extract_strided_slice %166 {offsets = [0, 0, 0], sizes = [1, 8, 128], strides = [1, 1, 1]} : vector<8x8x128xf32> to vector<1x8x128xf32>
    %171 = vector.broadcast %169 : vector<8x1x128xf32> to vector<8x8x128xf32>
    %172 = vector.broadcast %170 : vector<1x8x128xf32> to vector<8x8x128xf32>
    %173 = arith.mulf %171, %172 : vector<8x8x128xf32>
    %174 = vector.extract_strided_slice %5 {offsets = [0, 1, 0], sizes = [8, 1, 128], strides = [1, 1, 1]} : vector<8x8x128xf32> to vector<8x1x128xf32>
    %175 = vector.extract_strided_slice %166 {offsets = [1, 0, 0], sizes = [1, 8, 128], strides = [1, 1, 1]} : vector<8x8x128xf32> to vector<1x8x128xf32>
    %176 = vector.broadcast %174 : vector<8x1x128xf32> to vector<8x8x128xf32>
    %177 = vector.broadcast %175 : vector<1x8x128xf32> to vector<8x8x128xf32>
    %178 = arith.mulf %176, %177 : vector<8x8x128xf32>
    %179 = arith.addf %173, %178 : vector<8x8x128xf32>
    %180 = vector.extract_strided_slice %5 {offsets = [0, 2, 0], sizes = [8, 1, 128], strides = [1, 1, 1]} : vector<8x8x128xf32> to vector<8x1x128xf32>
    %181 = vector.extract_strided_slice %166 {offsets = [2, 0, 0], sizes = [1, 8, 128], strides = [1, 1, 1]} : vector<8x8x128xf32> to vector<1x8x128xf32>
    %182 = vector.broadcast %180 : vector<8x1x128xf32> to vector<8x8x128xf32>
    %183 = vector.broadcast %181 : vector<1x8x128xf32> to vector<8x8x128xf32>
    %184 = arith.mulf %182, %183 : vector<8x8x128xf32>
    %185 = arith.addf %179, %184 : vector<8x8x128xf32>
    %186 = vector.extract_strided_slice %5 {offsets = [0, 3, 0], sizes = [8, 1, 128], strides = [1, 1, 1]} : vector<8x8x128xf32> to vector<8x1x128xf32>
    %187 = vector.extract_strided_slice %166 {offsets = [3, 0, 0], sizes = [1, 8, 128], strides = [1, 1, 1]} : vector<8x8x128xf32> to vector<1x8x128xf32>
    %188 = vector.broadcast %186 : vector<8x1x128xf32> to vector<8x8x128xf32>
    %189 = vector.broadcast %187 : vector<1x8x128xf32> to vector<8x8x128xf32>
    %190 = arith.mulf %188, %189 : vector<8x8x128xf32>
    %191 = arith.addf %185, %190 : vector<8x8x128xf32>
    %192 = vector.extract_strided_slice %5 {offsets = [0, 4, 0], sizes = [8, 1, 128], strides = [1, 1, 1]} : vector<8x8x128xf32> to vector<8x1x128xf32>
    %193 = vector.extract_strided_slice %166 {offsets = [4, 0, 0], sizes = [1, 8, 128], strides = [1, 1, 1]} : vector<8x8x128xf32> to vector<1x8x128xf32>
    %194 = vector.broadcast %192 : vector<8x1x128xf32> to vector<8x8x128xf32>
    %195 = vector.broadcast %193 : vector<1x8x128xf32> to vector<8x8x128xf32>
    %196 = arith.mulf %194, %195 : vector<8x8x128xf32>
    %197 = arith.addf %191, %196 : vector<8x8x128xf32>
    %198 = vector.extract_strided_slice %5 {offsets = [0, 5, 0], sizes = [8, 1, 128], strides = [1, 1, 1]} : vector<8x8x128xf32> to vector<8x1x128xf32>
    %199 = vector.extract_strided_slice %166 {offsets = [5, 0, 0], sizes = [1, 8, 128], strides = [1, 1, 1]} : vector<8x8x128xf32> to vector<1x8x128xf32>
    %200 = vector.broadcast %198 : vector<8x1x128xf32> to vector<8x8x128xf32>
    %201 = vector.broadcast %199 : vector<1x8x128xf32> to vector<8x8x128xf32>
    %202 = arith.mulf %200, %201 : vector<8x8x128xf32>
    %203 = arith.addf %197, %202 : vector<8x8x128xf32>
    %204 = vector.extract_strided_slice %5 {offsets = [0, 6, 0], sizes = [8, 1, 128], strides = [1, 1, 1]} : vector<8x8x128xf32> to vector<8x1x128xf32>
    %205 = vector.extract_strided_slice %166 {offsets = [6, 0, 0], sizes = [1, 8, 128], strides = [1, 1, 1]} : vector<8x8x128xf32> to vector<1x8x128xf32>
    %206 = vector.broadcast %204 : vector<8x1x128xf32> to vector<8x8x128xf32>
    %207 = vector.broadcast %205 : vector<1x8x128xf32> to vector<8x8x128xf32>
    %208 = arith.mulf %206, %207 : vector<8x8x128xf32>
    %209 = arith.addf %203, %208 : vector<8x8x128xf32>
    %210 = vector.extract_strided_slice %5 {offsets = [0, 7, 0], sizes = [8, 1, 128], strides = [1, 1, 1]} : vector<8x8x128xf32> to vector<8x1x128xf32>
    %211 = vector.extract_strided_slice %166 {offsets = [7, 0, 0], sizes = [1, 8, 128], strides = [1, 1, 1]} : vector<8x8x128xf32> to vector<1x8x128xf32>
    %212 = vector.broadcast %210 : vector<8x1x128xf32> to vector<8x8x128xf32>
    %213 = vector.broadcast %211 : vector<1x8x128xf32> to vector<8x8x128xf32>
    %214 = arith.mulf %212, %213 : vector<8x8x128xf32>
    %215 = arith.addf %209, %214 : vector<8x8x128xf32>
    %216 = vector.extract_strided_slice %7 {offsets = [0, 0, 0], sizes = [8, 1, 128], strides = [1, 1, 1]} : vector<8x8x128xf32> to vector<8x1x128xf32>
    %217 = vector.extract_strided_slice %168 {offsets = [0, 0, 0], sizes = [1, 8, 128], strides = [1, 1, 1]} : vector<8x8x128xf32> to vector<1x8x128xf32>
    %218 = vector.broadcast %216 : vector<8x1x128xf32> to vector<8x8x128xf32>
    %219 = vector.broadcast %217 : vector<1x8x128xf32> to vector<8x8x128xf32>
    %220 = arith.mulf %218, %219 : vector<8x8x128xf32>
    %221 = vector.extract_strided_slice %7 {offsets = [0, 1, 0], sizes = [8, 1, 128], strides = [1, 1, 1]} : vector<8x8x128xf32> to vector<8x1x128xf32>
    %222 = vector.extract_strided_slice %168 {offsets = [1, 0, 0], sizes = [1, 8, 128], strides = [1, 1, 1]} : vector<8x8x128xf32> to vector<1x8x128xf32>
    %223 = vector.broadcast %221 : vector<8x1x128xf32> to vector<8x8x128xf32>
    %224 = vector.broadcast %222 : vector<1x8x128xf32> to vector<8x8x128xf32>
    %225 = arith.mulf %223, %224 : vector<8x8x128xf32>
    %226 = arith.addf %220, %225 : vector<8x8x128xf32>
    %227 = vector.extract_strided_slice %7 {offsets = [0, 2, 0], sizes = [8, 1, 128], strides = [1, 1, 1]} : vector<8x8x128xf32> to vector<8x1x128xf32>
    %228 = vector.extract_strided_slice %168 {offsets = [2, 0, 0], sizes = [1, 8, 128], strides = [1, 1, 1]} : vector<8x8x128xf32> to vector<1x8x128xf32>
    %229 = vector.broadcast %227 : vector<8x1x128xf32> to vector<8x8x128xf32>
    %230 = vector.broadcast %228 : vector<1x8x128xf32> to vector<8x8x128xf32>
    %231 = arith.mulf %229, %230 : vector<8x8x128xf32>
    %232 = arith.addf %226, %231 : vector<8x8x128xf32>
    %233 = vector.extract_strided_slice %7 {offsets = [0, 3, 0], sizes = [8, 1, 128], strides = [1, 1, 1]} : vector<8x8x128xf32> to vector<8x1x128xf32>
    %234 = vector.extract_strided_slice %168 {offsets = [3, 0, 0], sizes = [1, 8, 128], strides = [1, 1, 1]} : vector<8x8x128xf32> to vector<1x8x128xf32>
    %235 = vector.broadcast %233 : vector<8x1x128xf32> to vector<8x8x128xf32>
    %236 = vector.broadcast %234 : vector<1x8x128xf32> to vector<8x8x128xf32>
    %237 = arith.mulf %235, %236 : vector<8x8x128xf32>
    %238 = arith.addf %232, %237 : vector<8x8x128xf32>
    %239 = vector.extract_strided_slice %7 {offsets = [0, 4, 0], sizes = [8, 1, 128], strides = [1, 1, 1]} : vector<8x8x128xf32> to vector<8x1x128xf32>
    %240 = vector.extract_strided_slice %168 {offsets = [4, 0, 0], sizes = [1, 8, 128], strides = [1, 1, 1]} : vector<8x8x128xf32> to vector<1x8x128xf32>
    %241 = vector.broadcast %239 : vector<8x1x128xf32> to vector<8x8x128xf32>
    %242 = vector.broadcast %240 : vector<1x8x128xf32> to vector<8x8x128xf32>
    %243 = arith.mulf %241, %242 : vector<8x8x128xf32>
    %244 = arith.addf %238, %243 : vector<8x8x128xf32>
    %245 = vector.extract_strided_slice %7 {offsets = [0, 5, 0], sizes = [8, 1, 128], strides = [1, 1, 1]} : vector<8x8x128xf32> to vector<8x1x128xf32>
    %246 = vector.extract_strided_slice %168 {offsets = [5, 0, 0], sizes = [1, 8, 128], strides = [1, 1, 1]} : vector<8x8x128xf32> to vector<1x8x128xf32>
    %247 = vector.broadcast %245 : vector<8x1x128xf32> to vector<8x8x128xf32>
    %248 = vector.broadcast %246 : vector<1x8x128xf32> to vector<8x8x128xf32>
    %249 = arith.mulf %247, %248 : vector<8x8x128xf32>
    %250 = arith.addf %244, %249 : vector<8x8x128xf32>
    %251 = vector.extract_strided_slice %7 {offsets = [0, 6, 0], sizes = [8, 1, 128], strides = [1, 1, 1]} : vector<8x8x128xf32> to vector<8x1x128xf32>
    %252 = vector.extract_strided_slice %168 {offsets = [6, 0, 0], sizes = [1, 8, 128], strides = [1, 1, 1]} : vector<8x8x128xf32> to vector<1x8x128xf32>
    %253 = vector.broadcast %251 : vector<8x1x128xf32> to vector<8x8x128xf32>
    %254 = vector.broadcast %252 : vector<1x8x128xf32> to vector<8x8x128xf32>
    %255 = arith.mulf %253, %254 : vector<8x8x128xf32>
    %256 = arith.addf %250, %255 : vector<8x8x128xf32>
    %257 = vector.extract_strided_slice %7 {offsets = [0, 7, 0], sizes = [8, 1, 128], strides = [1, 1, 1]} : vector<8x8x128xf32> to vector<8x1x128xf32>
    %258 = vector.extract_strided_slice %168 {offsets = [7, 0, 0], sizes = [1, 8, 128], strides = [1, 1, 1]} : vector<8x8x128xf32> to vector<1x8x128xf32>
    %259 = vector.broadcast %257 : vector<8x1x128xf32> to vector<8x8x128xf32>
    %260 = vector.broadcast %258 : vector<1x8x128xf32> to vector<8x8x128xf32>
    %261 = arith.mulf %259, %260 : vector<8x8x128xf32>
    %262 = arith.addf %256, %261 : vector<8x8x128xf32>
    %263 = arith.addf %5, %7 : vector<8x8x128xf32>
    %264 = arith.addf %166, %168 : vector<8x8x128xf32>
    %265 = vector.extract_strided_slice %263 {offsets = [0, 0, 0], sizes = [8, 1, 128], strides = [1, 1, 1]} : vector<8x8x128xf32> to vector<8x1x128xf32>
    %266 = vector.extract_strided_slice %264 {offsets = [0, 0, 0], sizes = [1, 8, 128], strides = [1, 1, 1]} : vector<8x8x128xf32> to vector<1x8x128xf32>
    %267 = vector.broadcast %265 : vector<8x1x128xf32> to vector<8x8x128xf32>
    %268 = vector.broadcast %266 : vector<1x8x128xf32> to vector<8x8x128xf32>
    %269 = arith.mulf %267, %268 : vector<8x8x128xf32>
    %270 = vector.extract_strided_slice %263 {offsets = [0, 1, 0], sizes = [8, 1, 128], strides = [1, 1, 1]} : vector<8x8x128xf32> to vector<8x1x128xf32>
    %271 = vector.extract_strided_slice %264 {offsets = [1, 0, 0], sizes = [1, 8, 128], strides = [1, 1, 1]} : vector<8x8x128xf32> to vector<1x8x128xf32>
    %272 = vector.broadcast %270 : vector<8x1x128xf32> to vector<8x8x128xf32>
    %273 = vector.broadcast %271 : vector<1x8x128xf32> to vector<8x8x128xf32>
    %274 = arith.mulf %272, %273 : vector<8x8x128xf32>
    %275 = arith.addf %269, %274 : vector<8x8x128xf32>
    %276 = vector.extract_strided_slice %263 {offsets = [0, 2, 0], sizes = [8, 1, 128], strides = [1, 1, 1]} : vector<8x8x128xf32> to vector<8x1x128xf32>
    %277 = vector.extract_strided_slice %264 {offsets = [2, 0, 0], sizes = [1, 8, 128], strides = [1, 1, 1]} : vector<8x8x128xf32> to vector<1x8x128xf32>
    %278 = vector.broadcast %276 : vector<8x1x128xf32> to vector<8x8x128xf32>
    %279 = vector.broadcast %277 : vector<1x8x128xf32> to vector<8x8x128xf32>
    %280 = arith.mulf %278, %279 : vector<8x8x128xf32>
    %281 = arith.addf %275, %280 : vector<8x8x128xf32>
    %282 = vector.extract_strided_slice %263 {offsets = [0, 3, 0], sizes = [8, 1, 128], strides = [1, 1, 1]} : vector<8x8x128xf32> to vector<8x1x128xf32>
    %283 = vector.extract_strided_slice %264 {offsets = [3, 0, 0], sizes = [1, 8, 128], strides = [1, 1, 1]} : vector<8x8x128xf32> to vector<1x8x128xf32>
    %284 = vector.broadcast %282 : vector<8x1x128xf32> to vector<8x8x128xf32>
    %285 = vector.broadcast %283 : vector<1x8x128xf32> to vector<8x8x128xf32>
    %286 = arith.mulf %284, %285 : vector<8x8x128xf32>
    %287 = arith.addf %281, %286 : vector<8x8x128xf32>
    %288 = vector.extract_strided_slice %263 {offsets = [0, 4, 0], sizes = [8, 1, 128], strides = [1, 1, 1]} : vector<8x8x128xf32> to vector<8x1x128xf32>
    %289 = vector.extract_strided_slice %264 {offsets = [4, 0, 0], sizes = [1, 8, 128], strides = [1, 1, 1]} : vector<8x8x128xf32> to vector<1x8x128xf32>
    %290 = vector.broadcast %288 : vector<8x1x128xf32> to vector<8x8x128xf32>
    %291 = vector.broadcast %289 : vector<1x8x128xf32> to vector<8x8x128xf32>
    %292 = arith.mulf %290, %291 : vector<8x8x128xf32>
    %293 = arith.addf %287, %292 : vector<8x8x128xf32>
    %294 = vector.extract_strided_slice %263 {offsets = [0, 5, 0], sizes = [8, 1, 128], strides = [1, 1, 1]} : vector<8x8x128xf32> to vector<8x1x128xf32>
    %295 = vector.extract_strided_slice %264 {offsets = [5, 0, 0], sizes = [1, 8, 128], strides = [1, 1, 1]} : vector<8x8x128xf32> to vector<1x8x128xf32>
    %296 = vector.broadcast %294 : vector<8x1x128xf32> to vector<8x8x128xf32>
    %297 = vector.broadcast %295 : vector<1x8x128xf32> to vector<8x8x128xf32>
    %298 = arith.mulf %296, %297 : vector<8x8x128xf32>
    %299 = arith.addf %293, %298 : vector<8x8x128xf32>
    %300 = vector.extract_strided_slice %263 {offsets = [0, 6, 0], sizes = [8, 1, 128], strides = [1, 1, 1]} : vector<8x8x128xf32> to vector<8x1x128xf32>
    %301 = vector.extract_strided_slice %264 {offsets = [6, 0, 0], sizes = [1, 8, 128], strides = [1, 1, 1]} : vector<8x8x128xf32> to vector<1x8x128xf32>
    %302 = vector.broadcast %300 : vector<8x1x128xf32> to vector<8x8x128xf32>
    %303 = vector.broadcast %301 : vector<1x8x128xf32> to vector<8x8x128xf32>
    %304 = arith.mulf %302, %303 : vector<8x8x128xf32>
    %305 = arith.addf %299, %304 : vector<8x8x128xf32>
    %306 = vector.extract_strided_slice %263 {offsets = [0, 7, 0], sizes = [8, 1, 128], strides = [1, 1, 1]} : vector<8x8x128xf32> to vector<8x1x128xf32>
    %307 = vector.extract_strided_slice %264 {offsets = [7, 0, 0], sizes = [1, 8, 128], strides = [1, 1, 1]} : vector<8x8x128xf32> to vector<1x8x128xf32>
    %308 = vector.broadcast %306 : vector<8x1x128xf32> to vector<8x8x128xf32>
    %309 = vector.broadcast %307 : vector<1x8x128xf32> to vector<8x8x128xf32>
    %310 = arith.mulf %308, %309 : vector<8x8x128xf32>
    %311 = arith.addf %305, %310 : vector<8x8x128xf32>
    %312 = arith.subf %215, %262 : vector<8x8x128xf32>
    %313 = arith.subf %311, %215 : vector<8x8x128xf32>
    %314 = arith.subf %313, %262 : vector<8x8x128xf32>
    %cst_10 = arith.constant 0.0909090936 : f32
    %315 = vector.broadcast %cst_10 : f32 to vector<8x8x128xf32>
    %316 = arith.mulf %312, %315 : vector<8x8x128xf32>
    %317 = arith.addf %12, %316 : vector<8x8x128xf32>
    %cst_11 = arith.constant 0.0909090936 : f32
    %318 = vector.broadcast %cst_11 : f32 to vector<8x8x128xf32>
    %319 = arith.mulf %314, %318 : vector<8x8x128xf32>
    %320 = vector.extract_strided_slice %5 {offsets = [0, 0, 0], sizes = [8, 1, 128], strides = [1, 1, 1]} : vector<8x8x128xf32> to vector<8x1x128xf32>
    %321 = vector.extract_strided_slice %317 {offsets = [0, 0, 0], sizes = [1, 8, 128], strides = [1, 1, 1]} : vector<8x8x128xf32> to vector<1x8x128xf32>
    %322 = vector.broadcast %320 : vector<8x1x128xf32> to vector<8x8x128xf32>
    %323 = vector.broadcast %321 : vector<1x8x128xf32> to vector<8x8x128xf32>
    %324 = arith.mulf %322, %323 : vector<8x8x128xf32>
    %325 = vector.extract_strided_slice %5 {offsets = [0, 1, 0], sizes = [8, 1, 128], strides = [1, 1, 1]} : vector<8x8x128xf32> to vector<8x1x128xf32>
    %326 = vector.extract_strided_slice %317 {offsets = [1, 0, 0], sizes = [1, 8, 128], strides = [1, 1, 1]} : vector<8x8x128xf32> to vector<1x8x128xf32>
    %327 = vector.broadcast %325 : vector<8x1x128xf32> to vector<8x8x128xf32>
    %328 = vector.broadcast %326 : vector<1x8x128xf32> to vector<8x8x128xf32>
    %329 = arith.mulf %327, %328 : vector<8x8x128xf32>
    %330 = arith.addf %324, %329 : vector<8x8x128xf32>
    %331 = vector.extract_strided_slice %5 {offsets = [0, 2, 0], sizes = [8, 1, 128], strides = [1, 1, 1]} : vector<8x8x128xf32> to vector<8x1x128xf32>
    %332 = vector.extract_strided_slice %317 {offsets = [2, 0, 0], sizes = [1, 8, 128], strides = [1, 1, 1]} : vector<8x8x128xf32> to vector<1x8x128xf32>
    %333 = vector.broadcast %331 : vector<8x1x128xf32> to vector<8x8x128xf32>
    %334 = vector.broadcast %332 : vector<1x8x128xf32> to vector<8x8x128xf32>
    %335 = arith.mulf %333, %334 : vector<8x8x128xf32>
    %336 = arith.addf %330, %335 : vector<8x8x128xf32>
    %337 = vector.extract_strided_slice %5 {offsets = [0, 3, 0], sizes = [8, 1, 128], strides = [1, 1, 1]} : vector<8x8x128xf32> to vector<8x1x128xf32>
    %338 = vector.extract_strided_slice %317 {offsets = [3, 0, 0], sizes = [1, 8, 128], strides = [1, 1, 1]} : vector<8x8x128xf32> to vector<1x8x128xf32>
    %339 = vector.broadcast %337 : vector<8x1x128xf32> to vector<8x8x128xf32>
    %340 = vector.broadcast %338 : vector<1x8x128xf32> to vector<8x8x128xf32>
    %341 = arith.mulf %339, %340 : vector<8x8x128xf32>
    %342 = arith.addf %336, %341 : vector<8x8x128xf32>
    %343 = vector.extract_strided_slice %5 {offsets = [0, 4, 0], sizes = [8, 1, 128], strides = [1, 1, 1]} : vector<8x8x128xf32> to vector<8x1x128xf32>
    %344 = vector.extract_strided_slice %317 {offsets = [4, 0, 0], sizes = [1, 8, 128], strides = [1, 1, 1]} : vector<8x8x128xf32> to vector<1x8x128xf32>
    %345 = vector.broadcast %343 : vector<8x1x128xf32> to vector<8x8x128xf32>
    %346 = vector.broadcast %344 : vector<1x8x128xf32> to vector<8x8x128xf32>
    %347 = arith.mulf %345, %346 : vector<8x8x128xf32>
    %348 = arith.addf %342, %347 : vector<8x8x128xf32>
    %349 = vector.extract_strided_slice %5 {offsets = [0, 5, 0], sizes = [8, 1, 128], strides = [1, 1, 1]} : vector<8x8x128xf32> to vector<8x1x128xf32>
    %350 = vector.extract_strided_slice %317 {offsets = [5, 0, 0], sizes = [1, 8, 128], strides = [1, 1, 1]} : vector<8x8x128xf32> to vector<1x8x128xf32>
    %351 = vector.broadcast %349 : vector<8x1x128xf32> to vector<8x8x128xf32>
    %352 = vector.broadcast %350 : vector<1x8x128xf32> to vector<8x8x128xf32>
    %353 = arith.mulf %351, %352 : vector<8x8x128xf32>
    %354 = arith.addf %348, %353 : vector<8x8x128xf32>
    %355 = vector.extract_strided_slice %5 {offsets = [0, 6, 0], sizes = [8, 1, 128], strides = [1, 1, 1]} : vector<8x8x128xf32> to vector<8x1x128xf32>
    %356 = vector.extract_strided_slice %317 {offsets = [6, 0, 0], sizes = [1, 8, 128], strides = [1, 1, 1]} : vector<8x8x128xf32> to vector<1x8x128xf32>
    %357 = vector.broadcast %355 : vector<8x1x128xf32> to vector<8x8x128xf32>
    %358 = vector.broadcast %356 : vector<1x8x128xf32> to vector<8x8x128xf32>
    %359 = arith.mulf %357, %358 : vector<8x8x128xf32>
    %360 = arith.addf %354, %359 : vector<8x8x128xf32>
    %361 = vector.extract_strided_slice %5 {offsets = [0, 7, 0], sizes = [8, 1, 128], strides = [1, 1, 1]} : vector<8x8x128xf32> to vector<8x1x128xf32>
    %362 = vector.extract_strided_slice %317 {offsets = [7, 0, 0], sizes = [1, 8, 128], strides = [1, 1, 1]} : vector<8x8x128xf32> to vector<1x8x128xf32>
    %363 = vector.broadcast %361 : vector<8x1x128xf32> to vector<8x8x128xf32>
    %364 = vector.broadcast %362 : vector<1x8x128xf32> to vector<8x8x128xf32>
    %365 = arith.mulf %363, %364 : vector<8x8x128xf32>
    %366 = arith.addf %360, %365 : vector<8x8x128xf32>
    %367 = vector.extract_strided_slice %7 {offsets = [0, 0, 0], sizes = [8, 1, 128], strides = [1, 1, 1]} : vector<8x8x128xf32> to vector<8x1x128xf32>
    %368 = vector.extract_strided_slice %319 {offsets = [0, 0, 0], sizes = [1, 8, 128], strides = [1, 1, 1]} : vector<8x8x128xf32> to vector<1x8x128xf32>
    %369 = vector.broadcast %367 : vector<8x1x128xf32> to vector<8x8x128xf32>
    %370 = vector.broadcast %368 : vector<1x8x128xf32> to vector<8x8x128xf32>
    %371 = arith.mulf %369, %370 : vector<8x8x128xf32>
    %372 = vector.extract_strided_slice %7 {offsets = [0, 1, 0], sizes = [8, 1, 128], strides = [1, 1, 1]} : vector<8x8x128xf32> to vector<8x1x128xf32>
    %373 = vector.extract_strided_slice %319 {offsets = [1, 0, 0], sizes = [1, 8, 128], strides = [1, 1, 1]} : vector<8x8x128xf32> to vector<1x8x128xf32>
    %374 = vector.broadcast %372 : vector<8x1x128xf32> to vector<8x8x128xf32>
    %375 = vector.broadcast %373 : vector<1x8x128xf32> to vector<8x8x128xf32>
    %376 = arith.mulf %374, %375 : vector<8x8x128xf32>
    %377 = arith.addf %371, %376 : vector<8x8x128xf32>
    %378 = vector.extract_strided_slice %7 {offsets = [0, 2, 0], sizes = [8, 1, 128], strides = [1, 1, 1]} : vector<8x8x128xf32> to vector<8x1x128xf32>
    %379 = vector.extract_strided_slice %319 {offsets = [2, 0, 0], sizes = [1, 8, 128], strides = [1, 1, 1]} : vector<8x8x128xf32> to vector<1x8x128xf32>
    %380 = vector.broadcast %378 : vector<8x1x128xf32> to vector<8x8x128xf32>
    %381 = vector.broadcast %379 : vector<1x8x128xf32> to vector<8x8x128xf32>
    %382 = arith.mulf %380, %381 : vector<8x8x128xf32>
    %383 = arith.addf %377, %382 : vector<8x8x128xf32>
    %384 = vector.extract_strided_slice %7 {offsets = [0, 3, 0], sizes = [8, 1, 128], strides = [1, 1, 1]} : vector<8x8x128xf32> to vector<8x1x128xf32>
    %385 = vector.extract_strided_slice %319 {offsets = [3, 0, 0], sizes = [1, 8, 128], strides = [1, 1, 1]} : vector<8x8x128xf32> to vector<1x8x128xf32>
    %386 = vector.broadcast %384 : vector<8x1x128xf32> to vector<8x8x128xf32>
    %387 = vector.broadcast %385 : vector<1x8x128xf32> to vector<8x8x128xf32>
    %388 = arith.mulf %386, %387 : vector<8x8x128xf32>
    %389 = arith.addf %383, %388 : vector<8x8x128xf32>
    %390 = vector.extract_strided_slice %7 {offsets = [0, 4, 0], sizes = [8, 1, 128], strides = [1, 1, 1]} : vector<8x8x128xf32> to vector<8x1x128xf32>
    %391 = vector.extract_strided_slice %319 {offsets = [4, 0, 0], sizes = [1, 8, 128], strides = [1, 1, 1]} : vector<8x8x128xf32> to vector<1x8x128xf32>
    %392 = vector.broadcast %390 : vector<8x1x128xf32> to vector<8x8x128xf32>
    %393 = vector.broadcast %391 : vector<1x8x128xf32> to vector<8x8x128xf32>
    %394 = arith.mulf %392, %393 : vector<8x8x128xf32>
    %395 = arith.addf %389, %394 : vector<8x8x128xf32>
    %396 = vector.extract_strided_slice %7 {offsets = [0, 5, 0], sizes = [8, 1, 128], strides = [1, 1, 1]} : vector<8x8x128xf32> to vector<8x1x128xf32>
    %397 = vector.extract_strided_slice %319 {offsets = [5, 0, 0], sizes = [1, 8, 128], strides = [1, 1, 1]} : vector<8x8x128xf32> to vector<1x8x128xf32>
    %398 = vector.broadcast %396 : vector<8x1x128xf32> to vector<8x8x128xf32>
    %399 = vector.broadcast %397 : vector<1x8x128xf32> to vector<8x8x128xf32>
    %400 = arith.mulf %398, %399 : vector<8x8x128xf32>
    %401 = arith.addf %395, %400 : vector<8x8x128xf32>
    %402 = vector.extract_strided_slice %7 {offsets = [0, 6, 0], sizes = [8, 1, 128], strides = [1, 1, 1]} : vector<8x8x128xf32> to vector<8x1x128xf32>
    %403 = vector.extract_strided_slice %319 {offsets = [6, 0, 0], sizes = [1, 8, 128], strides = [1, 1, 1]} : vector<8x8x128xf32> to vector<1x8x128xf32>
    %404 = vector.broadcast %402 : vector<8x1x128xf32> to vector<8x8x128xf32>
    %405 = vector.broadcast %403 : vector<1x8x128xf32> to vector<8x8x128xf32>
    %406 = arith.mulf %404, %405 : vector<8x8x128xf32>
    %407 = arith.addf %401, %406 : vector<8x8x128xf32>
    %408 = vector.extract_strided_slice %7 {offsets = [0, 7, 0], sizes = [8, 1, 128], strides = [1, 1, 1]} : vector<8x8x128xf32> to vector<8x1x128xf32>
    %409 = vector.extract_strided_slice %319 {offsets = [7, 0, 0], sizes = [1, 8, 128], strides = [1, 1, 1]} : vector<8x8x128xf32> to vector<1x8x128xf32>
    %410 = vector.broadcast %408 : vector<8x1x128xf32> to vector<8x8x128xf32>
    %411 = vector.broadcast %409 : vector<1x8x128xf32> to vector<8x8x128xf32>
    %412 = arith.mulf %410, %411 : vector<8x8x128xf32>
    %413 = arith.addf %407, %412 : vector<8x8x128xf32>
    %414 = arith.addf %5, %7 : vector<8x8x128xf32>
    %415 = arith.addf %317, %319 : vector<8x8x128xf32>
    %416 = vector.extract_strided_slice %414 {offsets = [0, 0, 0], sizes = [8, 1, 128], strides = [1, 1, 1]} : vector<8x8x128xf32> to vector<8x1x128xf32>
    %417 = vector.extract_strided_slice %415 {offsets = [0, 0, 0], sizes = [1, 8, 128], strides = [1, 1, 1]} : vector<8x8x128xf32> to vector<1x8x128xf32>
    %418 = vector.broadcast %416 : vector<8x1x128xf32> to vector<8x8x128xf32>
    %419 = vector.broadcast %417 : vector<1x8x128xf32> to vector<8x8x128xf32>
    %420 = arith.mulf %418, %419 : vector<8x8x128xf32>
    %421 = vector.extract_strided_slice %414 {offsets = [0, 1, 0], sizes = [8, 1, 128], strides = [1, 1, 1]} : vector<8x8x128xf32> to vector<8x1x128xf32>
    %422 = vector.extract_strided_slice %415 {offsets = [1, 0, 0], sizes = [1, 8, 128], strides = [1, 1, 1]} : vector<8x8x128xf32> to vector<1x8x128xf32>
    %423 = vector.broadcast %421 : vector<8x1x128xf32> to vector<8x8x128xf32>
    %424 = vector.broadcast %422 : vector<1x8x128xf32> to vector<8x8x128xf32>
    %425 = arith.mulf %423, %424 : vector<8x8x128xf32>
    %426 = arith.addf %420, %425 : vector<8x8x128xf32>
    %427 = vector.extract_strided_slice %414 {offsets = [0, 2, 0], sizes = [8, 1, 128], strides = [1, 1, 1]} : vector<8x8x128xf32> to vector<8x1x128xf32>
    %428 = vector.extract_strided_slice %415 {offsets = [2, 0, 0], sizes = [1, 8, 128], strides = [1, 1, 1]} : vector<8x8x128xf32> to vector<1x8x128xf32>
    %429 = vector.broadcast %427 : vector<8x1x128xf32> to vector<8x8x128xf32>
    %430 = vector.broadcast %428 : vector<1x8x128xf32> to vector<8x8x128xf32>
    %431 = arith.mulf %429, %430 : vector<8x8x128xf32>
    %432 = arith.addf %426, %431 : vector<8x8x128xf32>
    %433 = vector.extract_strided_slice %414 {offsets = [0, 3, 0], sizes = [8, 1, 128], strides = [1, 1, 1]} : vector<8x8x128xf32> to vector<8x1x128xf32>
    %434 = vector.extract_strided_slice %415 {offsets = [3, 0, 0], sizes = [1, 8, 128], strides = [1, 1, 1]} : vector<8x8x128xf32> to vector<1x8x128xf32>
    %435 = vector.broadcast %433 : vector<8x1x128xf32> to vector<8x8x128xf32>
    %436 = vector.broadcast %434 : vector<1x8x128xf32> to vector<8x8x128xf32>
    %437 = arith.mulf %435, %436 : vector<8x8x128xf32>
    %438 = arith.addf %432, %437 : vector<8x8x128xf32>
    %439 = vector.extract_strided_slice %414 {offsets = [0, 4, 0], sizes = [8, 1, 128], strides = [1, 1, 1]} : vector<8x8x128xf32> to vector<8x1x128xf32>
    %440 = vector.extract_strided_slice %415 {offsets = [4, 0, 0], sizes = [1, 8, 128], strides = [1, 1, 1]} : vector<8x8x128xf32> to vector<1x8x128xf32>
    %441 = vector.broadcast %439 : vector<8x1x128xf32> to vector<8x8x128xf32>
    %442 = vector.broadcast %440 : vector<1x8x128xf32> to vector<8x8x128xf32>
    %443 = arith.mulf %441, %442 : vector<8x8x128xf32>
    %444 = arith.addf %438, %443 : vector<8x8x128xf32>
    %445 = vector.extract_strided_slice %414 {offsets = [0, 5, 0], sizes = [8, 1, 128], strides = [1, 1, 1]} : vector<8x8x128xf32> to vector<8x1x128xf32>
    %446 = vector.extract_strided_slice %415 {offsets = [5, 0, 0], sizes = [1, 8, 128], strides = [1, 1, 1]} : vector<8x8x128xf32> to vector<1x8x128xf32>
    %447 = vector.broadcast %445 : vector<8x1x128xf32> to vector<8x8x128xf32>
    %448 = vector.broadcast %446 : vector<1x8x128xf32> to vector<8x8x128xf32>
    %449 = arith.mulf %447, %448 : vector<8x8x128xf32>
    %450 = arith.addf %444, %449 : vector<8x8x128xf32>
    %451 = vector.extract_strided_slice %414 {offsets = [0, 6, 0], sizes = [8, 1, 128], strides = [1, 1, 1]} : vector<8x8x128xf32> to vector<8x1x128xf32>
    %452 = vector.extract_strided_slice %415 {offsets = [6, 0, 0], sizes = [1, 8, 128], strides = [1, 1, 1]} : vector<8x8x128xf32> to vector<1x8x128xf32>
    %453 = vector.broadcast %451 : vector<8x1x128xf32> to vector<8x8x128xf32>
    %454 = vector.broadcast %452 : vector<1x8x128xf32> to vector<8x8x128xf32>
    %455 = arith.mulf %453, %454 : vector<8x8x128xf32>
    %456 = arith.addf %450, %455 : vector<8x8x128xf32>
    %457 = vector.extract_strided_slice %414 {offsets = [0, 7, 0], sizes = [8, 1, 128], strides = [1, 1, 1]} : vector<8x8x128xf32> to vector<8x1x128xf32>
    %458 = vector.extract_strided_slice %415 {offsets = [7, 0, 0], sizes = [1, 8, 128], strides = [1, 1, 1]} : vector<8x8x128xf32> to vector<1x8x128xf32>
    %459 = vector.broadcast %457 : vector<8x1x128xf32> to vector<8x8x128xf32>
    %460 = vector.broadcast %458 : vector<1x8x128xf32> to vector<8x8x128xf32>
    %461 = arith.mulf %459, %460 : vector<8x8x128xf32>
    %462 = arith.addf %456, %461 : vector<8x8x128xf32>
    %463 = arith.subf %366, %413 : vector<8x8x128xf32>
    %464 = arith.subf %462, %366 : vector<8x8x128xf32>
    %465 = arith.subf %464, %413 : vector<8x8x128xf32>
    %cst_12 = arith.constant 1.000000e-01 : f32
    %466 = vector.broadcast %cst_12 : f32 to vector<8x8x128xf32>
    %467 = arith.mulf %463, %466 : vector<8x8x128xf32>
    %468 = arith.addf %12, %467 : vector<8x8x128xf32>
    %cst_13 = arith.constant 1.000000e-01 : f32
    %469 = vector.broadcast %cst_13 : f32 to vector<8x8x128xf32>
    %470 = arith.mulf %465, %469 : vector<8x8x128xf32>
    %471 = vector.extract_strided_slice %5 {offsets = [0, 0, 0], sizes = [8, 1, 128], strides = [1, 1, 1]} : vector<8x8x128xf32> to vector<8x1x128xf32>
    %472 = vector.extract_strided_slice %468 {offsets = [0, 0, 0], sizes = [1, 8, 128], strides = [1, 1, 1]} : vector<8x8x128xf32> to vector<1x8x128xf32>
    %473 = vector.broadcast %471 : vector<8x1x128xf32> to vector<8x8x128xf32>
    %474 = vector.broadcast %472 : vector<1x8x128xf32> to vector<8x8x128xf32>
    %475 = arith.mulf %473, %474 : vector<8x8x128xf32>
    %476 = vector.extract_strided_slice %5 {offsets = [0, 1, 0], sizes = [8, 1, 128], strides = [1, 1, 1]} : vector<8x8x128xf32> to vector<8x1x128xf32>
    %477 = vector.extract_strided_slice %468 {offsets = [1, 0, 0], sizes = [1, 8, 128], strides = [1, 1, 1]} : vector<8x8x128xf32> to vector<1x8x128xf32>
    %478 = vector.broadcast %476 : vector<8x1x128xf32> to vector<8x8x128xf32>
    %479 = vector.broadcast %477 : vector<1x8x128xf32> to vector<8x8x128xf32>
    %480 = arith.mulf %478, %479 : vector<8x8x128xf32>
    %481 = arith.addf %475, %480 : vector<8x8x128xf32>
    %482 = vector.extract_strided_slice %5 {offsets = [0, 2, 0], sizes = [8, 1, 128], strides = [1, 1, 1]} : vector<8x8x128xf32> to vector<8x1x128xf32>
    %483 = vector.extract_strided_slice %468 {offsets = [2, 0, 0], sizes = [1, 8, 128], strides = [1, 1, 1]} : vector<8x8x128xf32> to vector<1x8x128xf32>
    %484 = vector.broadcast %482 : vector<8x1x128xf32> to vector<8x8x128xf32>
    %485 = vector.broadcast %483 : vector<1x8x128xf32> to vector<8x8x128xf32>
    %486 = arith.mulf %484, %485 : vector<8x8x128xf32>
    %487 = arith.addf %481, %486 : vector<8x8x128xf32>
    %488 = vector.extract_strided_slice %5 {offsets = [0, 3, 0], sizes = [8, 1, 128], strides = [1, 1, 1]} : vector<8x8x128xf32> to vector<8x1x128xf32>
    %489 = vector.extract_strided_slice %468 {offsets = [3, 0, 0], sizes = [1, 8, 128], strides = [1, 1, 1]} : vector<8x8x128xf32> to vector<1x8x128xf32>
    %490 = vector.broadcast %488 : vector<8x1x128xf32> to vector<8x8x128xf32>
    %491 = vector.broadcast %489 : vector<1x8x128xf32> to vector<8x8x128xf32>
    %492 = arith.mulf %490, %491 : vector<8x8x128xf32>
    %493 = arith.addf %487, %492 : vector<8x8x128xf32>
    %494 = vector.extract_strided_slice %5 {offsets = [0, 4, 0], sizes = [8, 1, 128], strides = [1, 1, 1]} : vector<8x8x128xf32> to vector<8x1x128xf32>
    %495 = vector.extract_strided_slice %468 {offsets = [4, 0, 0], sizes = [1, 8, 128], strides = [1, 1, 1]} : vector<8x8x128xf32> to vector<1x8x128xf32>
    %496 = vector.broadcast %494 : vector<8x1x128xf32> to vector<8x8x128xf32>
    %497 = vector.broadcast %495 : vector<1x8x128xf32> to vector<8x8x128xf32>
    %498 = arith.mulf %496, %497 : vector<8x8x128xf32>
    %499 = arith.addf %493, %498 : vector<8x8x128xf32>
    %500 = vector.extract_strided_slice %5 {offsets = [0, 5, 0], sizes = [8, 1, 128], strides = [1, 1, 1]} : vector<8x8x128xf32> to vector<8x1x128xf32>
    %501 = vector.extract_strided_slice %468 {offsets = [5, 0, 0], sizes = [1, 8, 128], strides = [1, 1, 1]} : vector<8x8x128xf32> to vector<1x8x128xf32>
    %502 = vector.broadcast %500 : vector<8x1x128xf32> to vector<8x8x128xf32>
    %503 = vector.broadcast %501 : vector<1x8x128xf32> to vector<8x8x128xf32>
    %504 = arith.mulf %502, %503 : vector<8x8x128xf32>
    %505 = arith.addf %499, %504 : vector<8x8x128xf32>
    %506 = vector.extract_strided_slice %5 {offsets = [0, 6, 0], sizes = [8, 1, 128], strides = [1, 1, 1]} : vector<8x8x128xf32> to vector<8x1x128xf32>
    %507 = vector.extract_strided_slice %468 {offsets = [6, 0, 0], sizes = [1, 8, 128], strides = [1, 1, 1]} : vector<8x8x128xf32> to vector<1x8x128xf32>
    %508 = vector.broadcast %506 : vector<8x1x128xf32> to vector<8x8x128xf32>
    %509 = vector.broadcast %507 : vector<1x8x128xf32> to vector<8x8x128xf32>
    %510 = arith.mulf %508, %509 : vector<8x8x128xf32>
    %511 = arith.addf %505, %510 : vector<8x8x128xf32>
    %512 = vector.extract_strided_slice %5 {offsets = [0, 7, 0], sizes = [8, 1, 128], strides = [1, 1, 1]} : vector<8x8x128xf32> to vector<8x1x128xf32>
    %513 = vector.extract_strided_slice %468 {offsets = [7, 0, 0], sizes = [1, 8, 128], strides = [1, 1, 1]} : vector<8x8x128xf32> to vector<1x8x128xf32>
    %514 = vector.broadcast %512 : vector<8x1x128xf32> to vector<8x8x128xf32>
    %515 = vector.broadcast %513 : vector<1x8x128xf32> to vector<8x8x128xf32>
    %516 = arith.mulf %514, %515 : vector<8x8x128xf32>
    %517 = arith.addf %511, %516 : vector<8x8x128xf32>
    %518 = vector.extract_strided_slice %7 {offsets = [0, 0, 0], sizes = [8, 1, 128], strides = [1, 1, 1]} : vector<8x8x128xf32> to vector<8x1x128xf32>
    %519 = vector.extract_strided_slice %470 {offsets = [0, 0, 0], sizes = [1, 8, 128], strides = [1, 1, 1]} : vector<8x8x128xf32> to vector<1x8x128xf32>
    %520 = vector.broadcast %518 : vector<8x1x128xf32> to vector<8x8x128xf32>
    %521 = vector.broadcast %519 : vector<1x8x128xf32> to vector<8x8x128xf32>
    %522 = arith.mulf %520, %521 : vector<8x8x128xf32>
    %523 = vector.extract_strided_slice %7 {offsets = [0, 1, 0], sizes = [8, 1, 128], strides = [1, 1, 1]} : vector<8x8x128xf32> to vector<8x1x128xf32>
    %524 = vector.extract_strided_slice %470 {offsets = [1, 0, 0], sizes = [1, 8, 128], strides = [1, 1, 1]} : vector<8x8x128xf32> to vector<1x8x128xf32>
    %525 = vector.broadcast %523 : vector<8x1x128xf32> to vector<8x8x128xf32>
    %526 = vector.broadcast %524 : vector<1x8x128xf32> to vector<8x8x128xf32>
    %527 = arith.mulf %525, %526 : vector<8x8x128xf32>
    %528 = arith.addf %522, %527 : vector<8x8x128xf32>
    %529 = vector.extract_strided_slice %7 {offsets = [0, 2, 0], sizes = [8, 1, 128], strides = [1, 1, 1]} : vector<8x8x128xf32> to vector<8x1x128xf32>
    %530 = vector.extract_strided_slice %470 {offsets = [2, 0, 0], sizes = [1, 8, 128], strides = [1, 1, 1]} : vector<8x8x128xf32> to vector<1x8x128xf32>
    %531 = vector.broadcast %529 : vector<8x1x128xf32> to vector<8x8x128xf32>
    %532 = vector.broadcast %530 : vector<1x8x128xf32> to vector<8x8x128xf32>
    %533 = arith.mulf %531, %532 : vector<8x8x128xf32>
    %534 = arith.addf %528, %533 : vector<8x8x128xf32>
    %535 = vector.extract_strided_slice %7 {offsets = [0, 3, 0], sizes = [8, 1, 128], strides = [1, 1, 1]} : vector<8x8x128xf32> to vector<8x1x128xf32>
    %536 = vector.extract_strided_slice %470 {offsets = [3, 0, 0], sizes = [1, 8, 128], strides = [1, 1, 1]} : vector<8x8x128xf32> to vector<1x8x128xf32>
    %537 = vector.broadcast %535 : vector<8x1x128xf32> to vector<8x8x128xf32>
    %538 = vector.broadcast %536 : vector<1x8x128xf32> to vector<8x8x128xf32>
    %539 = arith.mulf %537, %538 : vector<8x8x128xf32>
    %540 = arith.addf %534, %539 : vector<8x8x128xf32>
    %541 = vector.extract_strided_slice %7 {offsets = [0, 4, 0], sizes = [8, 1, 128], strides = [1, 1, 1]} : vector<8x8x128xf32> to vector<8x1x128xf32>
    %542 = vector.extract_strided_slice %470 {offsets = [4, 0, 0], sizes = [1, 8, 128], strides = [1, 1, 1]} : vector<8x8x128xf32> to vector<1x8x128xf32>
    %543 = vector.broadcast %541 : vector<8x1x128xf32> to vector<8x8x128xf32>
    %544 = vector.broadcast %542 : vector<1x8x128xf32> to vector<8x8x128xf32>
    %545 = arith.mulf %543, %544 : vector<8x8x128xf32>
    %546 = arith.addf %540, %545 : vector<8x8x128xf32>
    %547 = vector.extract_strided_slice %7 {offsets = [0, 5, 0], sizes = [8, 1, 128], strides = [1, 1, 1]} : vector<8x8x128xf32> to vector<8x1x128xf32>
    %548 = vector.extract_strided_slice %470 {offsets = [5, 0, 0], sizes = [1, 8, 128], strides = [1, 1, 1]} : vector<8x8x128xf32> to vector<1x8x128xf32>
    %549 = vector.broadcast %547 : vector<8x1x128xf32> to vector<8x8x128xf32>
    %550 = vector.broadcast %548 : vector<1x8x128xf32> to vector<8x8x128xf32>
    %551 = arith.mulf %549, %550 : vector<8x8x128xf32>
    %552 = arith.addf %546, %551 : vector<8x8x128xf32>
    %553 = vector.extract_strided_slice %7 {offsets = [0, 6, 0], sizes = [8, 1, 128], strides = [1, 1, 1]} : vector<8x8x128xf32> to vector<8x1x128xf32>
    %554 = vector.extract_strided_slice %470 {offsets = [6, 0, 0], sizes = [1, 8, 128], strides = [1, 1, 1]} : vector<8x8x128xf32> to vector<1x8x128xf32>
    %555 = vector.broadcast %553 : vector<8x1x128xf32> to vector<8x8x128xf32>
    %556 = vector.broadcast %554 : vector<1x8x128xf32> to vector<8x8x128xf32>
    %557 = arith.mulf %555, %556 : vector<8x8x128xf32>
    %558 = arith.addf %552, %557 : vector<8x8x128xf32>
    %559 = vector.extract_strided_slice %7 {offsets = [0, 7, 0], sizes = [8, 1, 128], strides = [1, 1, 1]} : vector<8x8x128xf32> to vector<8x1x128xf32>
    %560 = vector.extract_strided_slice %470 {offsets = [7, 0, 0], sizes = [1, 8, 128], strides = [1, 1, 1]} : vector<8x8x128xf32> to vector<1x8x128xf32>
    %561 = vector.broadcast %559 : vector<8x1x128xf32> to vector<8x8x128xf32>
    %562 = vector.broadcast %560 : vector<1x8x128xf32> to vector<8x8x128xf32>
    %563 = arith.mulf %561, %562 : vector<8x8x128xf32>
    %564 = arith.addf %558, %563 : vector<8x8x128xf32>
    %565 = arith.addf %5, %7 : vector<8x8x128xf32>
    %566 = arith.addf %468, %470 : vector<8x8x128xf32>
    %567 = vector.extract_strided_slice %565 {offsets = [0, 0, 0], sizes = [8, 1, 128], strides = [1, 1, 1]} : vector<8x8x128xf32> to vector<8x1x128xf32>
    %568 = vector.extract_strided_slice %566 {offsets = [0, 0, 0], sizes = [1, 8, 128], strides = [1, 1, 1]} : vector<8x8x128xf32> to vector<1x8x128xf32>
    %569 = vector.broadcast %567 : vector<8x1x128xf32> to vector<8x8x128xf32>
    %570 = vector.broadcast %568 : vector<1x8x128xf32> to vector<8x8x128xf32>
    %571 = arith.mulf %569, %570 : vector<8x8x128xf32>
    %572 = vector.extract_strided_slice %565 {offsets = [0, 1, 0], sizes = [8, 1, 128], strides = [1, 1, 1]} : vector<8x8x128xf32> to vector<8x1x128xf32>
    %573 = vector.extract_strided_slice %566 {offsets = [1, 0, 0], sizes = [1, 8, 128], strides = [1, 1, 1]} : vector<8x8x128xf32> to vector<1x8x128xf32>
    %574 = vector.broadcast %572 : vector<8x1x128xf32> to vector<8x8x128xf32>
    %575 = vector.broadcast %573 : vector<1x8x128xf32> to vector<8x8x128xf32>
    %576 = arith.mulf %574, %575 : vector<8x8x128xf32>
    %577 = arith.addf %571, %576 : vector<8x8x128xf32>
    %578 = vector.extract_strided_slice %565 {offsets = [0, 2, 0], sizes = [8, 1, 128], strides = [1, 1, 1]} : vector<8x8x128xf32> to vector<8x1x128xf32>
    %579 = vector.extract_strided_slice %566 {offsets = [2, 0, 0], sizes = [1, 8, 128], strides = [1, 1, 1]} : vector<8x8x128xf32> to vector<1x8x128xf32>
    %580 = vector.broadcast %578 : vector<8x1x128xf32> to vector<8x8x128xf32>
    %581 = vector.broadcast %579 : vector<1x8x128xf32> to vector<8x8x128xf32>
    %582 = arith.mulf %580, %581 : vector<8x8x128xf32>
    %583 = arith.addf %577, %582 : vector<8x8x128xf32>
    %584 = vector.extract_strided_slice %565 {offsets = [0, 3, 0], sizes = [8, 1, 128], strides = [1, 1, 1]} : vector<8x8x128xf32> to vector<8x1x128xf32>
    %585 = vector.extract_strided_slice %566 {offsets = [3, 0, 0], sizes = [1, 8, 128], strides = [1, 1, 1]} : vector<8x8x128xf32> to vector<1x8x128xf32>
    %586 = vector.broadcast %584 : vector<8x1x128xf32> to vector<8x8x128xf32>
    %587 = vector.broadcast %585 : vector<1x8x128xf32> to vector<8x8x128xf32>
    %588 = arith.mulf %586, %587 : vector<8x8x128xf32>
    %589 = arith.addf %583, %588 : vector<8x8x128xf32>
    %590 = vector.extract_strided_slice %565 {offsets = [0, 4, 0], sizes = [8, 1, 128], strides = [1, 1, 1]} : vector<8x8x128xf32> to vector<8x1x128xf32>
    %591 = vector.extract_strided_slice %566 {offsets = [4, 0, 0], sizes = [1, 8, 128], strides = [1, 1, 1]} : vector<8x8x128xf32> to vector<1x8x128xf32>
    %592 = vector.broadcast %590 : vector<8x1x128xf32> to vector<8x8x128xf32>
    %593 = vector.broadcast %591 : vector<1x8x128xf32> to vector<8x8x128xf32>
    %594 = arith.mulf %592, %593 : vector<8x8x128xf32>
    %595 = arith.addf %589, %594 : vector<8x8x128xf32>
    %596 = vector.extract_strided_slice %565 {offsets = [0, 5, 0], sizes = [8, 1, 128], strides = [1, 1, 1]} : vector<8x8x128xf32> to vector<8x1x128xf32>
    %597 = vector.extract_strided_slice %566 {offsets = [5, 0, 0], sizes = [1, 8, 128], strides = [1, 1, 1]} : vector<8x8x128xf32> to vector<1x8x128xf32>
    %598 = vector.broadcast %596 : vector<8x1x128xf32> to vector<8x8x128xf32>
    %599 = vector.broadcast %597 : vector<1x8x128xf32> to vector<8x8x128xf32>
    %600 = arith.mulf %598, %599 : vector<8x8x128xf32>
    %601 = arith.addf %595, %600 : vector<8x8x128xf32>
    %602 = vector.extract_strided_slice %565 {offsets = [0, 6, 0], sizes = [8, 1, 128], strides = [1, 1, 1]} : vector<8x8x128xf32> to vector<8x1x128xf32>
    %603 = vector.extract_strided_slice %566 {offsets = [6, 0, 0], sizes = [1, 8, 128], strides = [1, 1, 1]} : vector<8x8x128xf32> to vector<1x8x128xf32>
    %604 = vector.broadcast %602 : vector<8x1x128xf32> to vector<8x8x128xf32>
    %605 = vector.broadcast %603 : vector<1x8x128xf32> to vector<8x8x128xf32>
    %606 = arith.mulf %604, %605 : vector<8x8x128xf32>
    %607 = arith.addf %601, %606 : vector<8x8x128xf32>
    %608 = vector.extract_strided_slice %565 {offsets = [0, 7, 0], sizes = [8, 1, 128], strides = [1, 1, 1]} : vector<8x8x128xf32> to vector<8x1x128xf32>
    %609 = vector.extract_strided_slice %566 {offsets = [7, 0, 0], sizes = [1, 8, 128], strides = [1, 1, 1]} : vector<8x8x128xf32> to vector<1x8x128xf32>
    %610 = vector.broadcast %608 : vector<8x1x128xf32> to vector<8x8x128xf32>
    %611 = vector.broadcast %609 : vector<1x8x128xf32> to vector<8x8x128xf32>
    %612 = arith.mulf %610, %611 : vector<8x8x128xf32>
    %613 = arith.addf %607, %612 : vector<8x8x128xf32>
    %614 = arith.subf %517, %564 : vector<8x8x128xf32>
    %615 = arith.subf %613, %517 : vector<8x8x128xf32>
    %616 = arith.subf %615, %564 : vector<8x8x128xf32>
    %cst_14 = arith.constant 0.111111112 : f32
    %617 = vector.broadcast %cst_14 : f32 to vector<8x8x128xf32>
    %618 = arith.mulf %614, %617 : vector<8x8x128xf32>
    %619 = arith.addf %12, %618 : vector<8x8x128xf32>
    %cst_15 = arith.constant 0.111111112 : f32
    %620 = vector.broadcast %cst_15 : f32 to vector<8x8x128xf32>
    %621 = arith.mulf %616, %620 : vector<8x8x128xf32>
    %622 = vector.extract_strided_slice %5 {offsets = [0, 0, 0], sizes = [8, 1, 128], strides = [1, 1, 1]} : vector<8x8x128xf32> to vector<8x1x128xf32>
    %623 = vector.extract_strided_slice %619 {offsets = [0, 0, 0], sizes = [1, 8, 128], strides = [1, 1, 1]} : vector<8x8x128xf32> to vector<1x8x128xf32>
    %624 = vector.broadcast %622 : vector<8x1x128xf32> to vector<8x8x128xf32>
    %625 = vector.broadcast %623 : vector<1x8x128xf32> to vector<8x8x128xf32>
    %626 = arith.mulf %624, %625 : vector<8x8x128xf32>
    %627 = vector.extract_strided_slice %5 {offsets = [0, 1, 0], sizes = [8, 1, 128], strides = [1, 1, 1]} : vector<8x8x128xf32> to vector<8x1x128xf32>
    %628 = vector.extract_strided_slice %619 {offsets = [1, 0, 0], sizes = [1, 8, 128], strides = [1, 1, 1]} : vector<8x8x128xf32> to vector<1x8x128xf32>
    %629 = vector.broadcast %627 : vector<8x1x128xf32> to vector<8x8x128xf32>
    %630 = vector.broadcast %628 : vector<1x8x128xf32> to vector<8x8x128xf32>
    %631 = arith.mulf %629, %630 : vector<8x8x128xf32>
    %632 = arith.addf %626, %631 : vector<8x8x128xf32>
    %633 = vector.extract_strided_slice %5 {offsets = [0, 2, 0], sizes = [8, 1, 128], strides = [1, 1, 1]} : vector<8x8x128xf32> to vector<8x1x128xf32>
    %634 = vector.extract_strided_slice %619 {offsets = [2, 0, 0], sizes = [1, 8, 128], strides = [1, 1, 1]} : vector<8x8x128xf32> to vector<1x8x128xf32>
    %635 = vector.broadcast %633 : vector<8x1x128xf32> to vector<8x8x128xf32>
    %636 = vector.broadcast %634 : vector<1x8x128xf32> to vector<8x8x128xf32>
    %637 = arith.mulf %635, %636 : vector<8x8x128xf32>
    %638 = arith.addf %632, %637 : vector<8x8x128xf32>
    %639 = vector.extract_strided_slice %5 {offsets = [0, 3, 0], sizes = [8, 1, 128], strides = [1, 1, 1]} : vector<8x8x128xf32> to vector<8x1x128xf32>
    %640 = vector.extract_strided_slice %619 {offsets = [3, 0, 0], sizes = [1, 8, 128], strides = [1, 1, 1]} : vector<8x8x128xf32> to vector<1x8x128xf32>
    %641 = vector.broadcast %639 : vector<8x1x128xf32> to vector<8x8x128xf32>
    %642 = vector.broadcast %640 : vector<1x8x128xf32> to vector<8x8x128xf32>
    %643 = arith.mulf %641, %642 : vector<8x8x128xf32>
    %644 = arith.addf %638, %643 : vector<8x8x128xf32>
    %645 = vector.extract_strided_slice %5 {offsets = [0, 4, 0], sizes = [8, 1, 128], strides = [1, 1, 1]} : vector<8x8x128xf32> to vector<8x1x128xf32>
    %646 = vector.extract_strided_slice %619 {offsets = [4, 0, 0], sizes = [1, 8, 128], strides = [1, 1, 1]} : vector<8x8x128xf32> to vector<1x8x128xf32>
    %647 = vector.broadcast %645 : vector<8x1x128xf32> to vector<8x8x128xf32>
    %648 = vector.broadcast %646 : vector<1x8x128xf32> to vector<8x8x128xf32>
    %649 = arith.mulf %647, %648 : vector<8x8x128xf32>
    %650 = arith.addf %644, %649 : vector<8x8x128xf32>
    %651 = vector.extract_strided_slice %5 {offsets = [0, 5, 0], sizes = [8, 1, 128], strides = [1, 1, 1]} : vector<8x8x128xf32> to vector<8x1x128xf32>
    %652 = vector.extract_strided_slice %619 {offsets = [5, 0, 0], sizes = [1, 8, 128], strides = [1, 1, 1]} : vector<8x8x128xf32> to vector<1x8x128xf32>
    %653 = vector.broadcast %651 : vector<8x1x128xf32> to vector<8x8x128xf32>
    %654 = vector.broadcast %652 : vector<1x8x128xf32> to vector<8x8x128xf32>
    %655 = arith.mulf %653, %654 : vector<8x8x128xf32>
    %656 = arith.addf %650, %655 : vector<8x8x128xf32>
    %657 = vector.extract_strided_slice %5 {offsets = [0, 6, 0], sizes = [8, 1, 128], strides = [1, 1, 1]} : vector<8x8x128xf32> to vector<8x1x128xf32>
    %658 = vector.extract_strided_slice %619 {offsets = [6, 0, 0], sizes = [1, 8, 128], strides = [1, 1, 1]} : vector<8x8x128xf32> to vector<1x8x128xf32>
    %659 = vector.broadcast %657 : vector<8x1x128xf32> to vector<8x8x128xf32>
    %660 = vector.broadcast %658 : vector<1x8x128xf32> to vector<8x8x128xf32>
    %661 = arith.mulf %659, %660 : vector<8x8x128xf32>
    %662 = arith.addf %656, %661 : vector<8x8x128xf32>
    %663 = vector.extract_strided_slice %5 {offsets = [0, 7, 0], sizes = [8, 1, 128], strides = [1, 1, 1]} : vector<8x8x128xf32> to vector<8x1x128xf32>
    %664 = vector.extract_strided_slice %619 {offsets = [7, 0, 0], sizes = [1, 8, 128], strides = [1, 1, 1]} : vector<8x8x128xf32> to vector<1x8x128xf32>
    %665 = vector.broadcast %663 : vector<8x1x128xf32> to vector<8x8x128xf32>
    %666 = vector.broadcast %664 : vector<1x8x128xf32> to vector<8x8x128xf32>
    %667 = arith.mulf %665, %666 : vector<8x8x128xf32>
    %668 = arith.addf %662, %667 : vector<8x8x128xf32>
    %669 = vector.extract_strided_slice %7 {offsets = [0, 0, 0], sizes = [8, 1, 128], strides = [1, 1, 1]} : vector<8x8x128xf32> to vector<8x1x128xf32>
    %670 = vector.extract_strided_slice %621 {offsets = [0, 0, 0], sizes = [1, 8, 128], strides = [1, 1, 1]} : vector<8x8x128xf32> to vector<1x8x128xf32>
    %671 = vector.broadcast %669 : vector<8x1x128xf32> to vector<8x8x128xf32>
    %672 = vector.broadcast %670 : vector<1x8x128xf32> to vector<8x8x128xf32>
    %673 = arith.mulf %671, %672 : vector<8x8x128xf32>
    %674 = vector.extract_strided_slice %7 {offsets = [0, 1, 0], sizes = [8, 1, 128], strides = [1, 1, 1]} : vector<8x8x128xf32> to vector<8x1x128xf32>
    %675 = vector.extract_strided_slice %621 {offsets = [1, 0, 0], sizes = [1, 8, 128], strides = [1, 1, 1]} : vector<8x8x128xf32> to vector<1x8x128xf32>
    %676 = vector.broadcast %674 : vector<8x1x128xf32> to vector<8x8x128xf32>
    %677 = vector.broadcast %675 : vector<1x8x128xf32> to vector<8x8x128xf32>
    %678 = arith.mulf %676, %677 : vector<8x8x128xf32>
    %679 = arith.addf %673, %678 : vector<8x8x128xf32>
    %680 = vector.extract_strided_slice %7 {offsets = [0, 2, 0], sizes = [8, 1, 128], strides = [1, 1, 1]} : vector<8x8x128xf32> to vector<8x1x128xf32>
    %681 = vector.extract_strided_slice %621 {offsets = [2, 0, 0], sizes = [1, 8, 128], strides = [1, 1, 1]} : vector<8x8x128xf32> to vector<1x8x128xf32>
    %682 = vector.broadcast %680 : vector<8x1x128xf32> to vector<8x8x128xf32>
    %683 = vector.broadcast %681 : vector<1x8x128xf32> to vector<8x8x128xf32>
    %684 = arith.mulf %682, %683 : vector<8x8x128xf32>
    %685 = arith.addf %679, %684 : vector<8x8x128xf32>
    %686 = vector.extract_strided_slice %7 {offsets = [0, 3, 0], sizes = [8, 1, 128], strides = [1, 1, 1]} : vector<8x8x128xf32> to vector<8x1x128xf32>
    %687 = vector.extract_strided_slice %621 {offsets = [3, 0, 0], sizes = [1, 8, 128], strides = [1, 1, 1]} : vector<8x8x128xf32> to vector<1x8x128xf32>
    %688 = vector.broadcast %686 : vector<8x1x128xf32> to vector<8x8x128xf32>
    %689 = vector.broadcast %687 : vector<1x8x128xf32> to vector<8x8x128xf32>
    %690 = arith.mulf %688, %689 : vector<8x8x128xf32>
    %691 = arith.addf %685, %690 : vector<8x8x128xf32>
    %692 = vector.extract_strided_slice %7 {offsets = [0, 4, 0], sizes = [8, 1, 128], strides = [1, 1, 1]} : vector<8x8x128xf32> to vector<8x1x128xf32>
    %693 = vector.extract_strided_slice %621 {offsets = [4, 0, 0], sizes = [1, 8, 128], strides = [1, 1, 1]} : vector<8x8x128xf32> to vector<1x8x128xf32>
    %694 = vector.broadcast %692 : vector<8x1x128xf32> to vector<8x8x128xf32>
    %695 = vector.broadcast %693 : vector<1x8x128xf32> to vector<8x8x128xf32>
    %696 = arith.mulf %694, %695 : vector<8x8x128xf32>
    %697 = arith.addf %691, %696 : vector<8x8x128xf32>
    %698 = vector.extract_strided_slice %7 {offsets = [0, 5, 0], sizes = [8, 1, 128], strides = [1, 1, 1]} : vector<8x8x128xf32> to vector<8x1x128xf32>
    %699 = vector.extract_strided_slice %621 {offsets = [5, 0, 0], sizes = [1, 8, 128], strides = [1, 1, 1]} : vector<8x8x128xf32> to vector<1x8x128xf32>
    %700 = vector.broadcast %698 : vector<8x1x128xf32> to vector<8x8x128xf32>
    %701 = vector.broadcast %699 : vector<1x8x128xf32> to vector<8x8x128xf32>
    %702 = arith.mulf %700, %701 : vector<8x8x128xf32>
    %703 = arith.addf %697, %702 : vector<8x8x128xf32>
    %704 = vector.extract_strided_slice %7 {offsets = [0, 6, 0], sizes = [8, 1, 128], strides = [1, 1, 1]} : vector<8x8x128xf32> to vector<8x1x128xf32>
    %705 = vector.extract_strided_slice %621 {offsets = [6, 0, 0], sizes = [1, 8, 128], strides = [1, 1, 1]} : vector<8x8x128xf32> to vector<1x8x128xf32>
    %706 = vector.broadcast %704 : vector<8x1x128xf32> to vector<8x8x128xf32>
    %707 = vector.broadcast %705 : vector<1x8x128xf32> to vector<8x8x128xf32>
    %708 = arith.mulf %706, %707 : vector<8x8x128xf32>
    %709 = arith.addf %703, %708 : vector<8x8x128xf32>
    %710 = vector.extract_strided_slice %7 {offsets = [0, 7, 0], sizes = [8, 1, 128], strides = [1, 1, 1]} : vector<8x8x128xf32> to vector<8x1x128xf32>
    %711 = vector.extract_strided_slice %621 {offsets = [7, 0, 0], sizes = [1, 8, 128], strides = [1, 1, 1]} : vector<8x8x128xf32> to vector<1x8x128xf32>
    %712 = vector.broadcast %710 : vector<8x1x128xf32> to vector<8x8x128xf32>
    %713 = vector.broadcast %711 : vector<1x8x128xf32> to vector<8x8x128xf32>
    %714 = arith.mulf %712, %713 : vector<8x8x128xf32>
    %715 = arith.addf %709, %714 : vector<8x8x128xf32>
    %716 = arith.addf %5, %7 : vector<8x8x128xf32>
    %717 = arith.addf %619, %621 : vector<8x8x128xf32>
    %718 = vector.extract_strided_slice %716 {offsets = [0, 0, 0], sizes = [8, 1, 128], strides = [1, 1, 1]} : vector<8x8x128xf32> to vector<8x1x128xf32>
    %719 = vector.extract_strided_slice %717 {offsets = [0, 0, 0], sizes = [1, 8, 128], strides = [1, 1, 1]} : vector<8x8x128xf32> to vector<1x8x128xf32>
    %720 = vector.broadcast %718 : vector<8x1x128xf32> to vector<8x8x128xf32>
    %721 = vector.broadcast %719 : vector<1x8x128xf32> to vector<8x8x128xf32>
    %722 = arith.mulf %720, %721 : vector<8x8x128xf32>
    %723 = vector.extract_strided_slice %716 {offsets = [0, 1, 0], sizes = [8, 1, 128], strides = [1, 1, 1]} : vector<8x8x128xf32> to vector<8x1x128xf32>
    %724 = vector.extract_strided_slice %717 {offsets = [1, 0, 0], sizes = [1, 8, 128], strides = [1, 1, 1]} : vector<8x8x128xf32> to vector<1x8x128xf32>
    %725 = vector.broadcast %723 : vector<8x1x128xf32> to vector<8x8x128xf32>
    %726 = vector.broadcast %724 : vector<1x8x128xf32> to vector<8x8x128xf32>
    %727 = arith.mulf %725, %726 : vector<8x8x128xf32>
    %728 = arith.addf %722, %727 : vector<8x8x128xf32>
    %729 = vector.extract_strided_slice %716 {offsets = [0, 2, 0], sizes = [8, 1, 128], strides = [1, 1, 1]} : vector<8x8x128xf32> to vector<8x1x128xf32>
    %730 = vector.extract_strided_slice %717 {offsets = [2, 0, 0], sizes = [1, 8, 128], strides = [1, 1, 1]} : vector<8x8x128xf32> to vector<1x8x128xf32>
    %731 = vector.broadcast %729 : vector<8x1x128xf32> to vector<8x8x128xf32>
    %732 = vector.broadcast %730 : vector<1x8x128xf32> to vector<8x8x128xf32>
    %733 = arith.mulf %731, %732 : vector<8x8x128xf32>
    %734 = arith.addf %728, %733 : vector<8x8x128xf32>
    %735 = vector.extract_strided_slice %716 {offsets = [0, 3, 0], sizes = [8, 1, 128], strides = [1, 1, 1]} : vector<8x8x128xf32> to vector<8x1x128xf32>
    %736 = vector.extract_strided_slice %717 {offsets = [3, 0, 0], sizes = [1, 8, 128], strides = [1, 1, 1]} : vector<8x8x128xf32> to vector<1x8x128xf32>
    %737 = vector.broadcast %735 : vector<8x1x128xf32> to vector<8x8x128xf32>
    %738 = vector.broadcast %736 : vector<1x8x128xf32> to vector<8x8x128xf32>
    %739 = arith.mulf %737, %738 : vector<8x8x128xf32>
    %740 = arith.addf %734, %739 : vector<8x8x128xf32>
    %741 = vector.extract_strided_slice %716 {offsets = [0, 4, 0], sizes = [8, 1, 128], strides = [1, 1, 1]} : vector<8x8x128xf32> to vector<8x1x128xf32>
    %742 = vector.extract_strided_slice %717 {offsets = [4, 0, 0], sizes = [1, 8, 128], strides = [1, 1, 1]} : vector<8x8x128xf32> to vector<1x8x128xf32>
    %743 = vector.broadcast %741 : vector<8x1x128xf32> to vector<8x8x128xf32>
    %744 = vector.broadcast %742 : vector<1x8x128xf32> to vector<8x8x128xf32>
    %745 = arith.mulf %743, %744 : vector<8x8x128xf32>
    %746 = arith.addf %740, %745 : vector<8x8x128xf32>
    %747 = vector.extract_strided_slice %716 {offsets = [0, 5, 0], sizes = [8, 1, 128], strides = [1, 1, 1]} : vector<8x8x128xf32> to vector<8x1x128xf32>
    %748 = vector.extract_strided_slice %717 {offsets = [5, 0, 0], sizes = [1, 8, 128], strides = [1, 1, 1]} : vector<8x8x128xf32> to vector<1x8x128xf32>
    %749 = vector.broadcast %747 : vector<8x1x128xf32> to vector<8x8x128xf32>
    %750 = vector.broadcast %748 : vector<1x8x128xf32> to vector<8x8x128xf32>
    %751 = arith.mulf %749, %750 : vector<8x8x128xf32>
    %752 = arith.addf %746, %751 : vector<8x8x128xf32>
    %753 = vector.extract_strided_slice %716 {offsets = [0, 6, 0], sizes = [8, 1, 128], strides = [1, 1, 1]} : vector<8x8x128xf32> to vector<8x1x128xf32>
    %754 = vector.extract_strided_slice %717 {offsets = [6, 0, 0], sizes = [1, 8, 128], strides = [1, 1, 1]} : vector<8x8x128xf32> to vector<1x8x128xf32>
    %755 = vector.broadcast %753 : vector<8x1x128xf32> to vector<8x8x128xf32>
    %756 = vector.broadcast %754 : vector<1x8x128xf32> to vector<8x8x128xf32>
    %757 = arith.mulf %755, %756 : vector<8x8x128xf32>
    %758 = arith.addf %752, %757 : vector<8x8x128xf32>
    %759 = vector.extract_strided_slice %716 {offsets = [0, 7, 0], sizes = [8, 1, 128], strides = [1, 1, 1]} : vector<8x8x128xf32> to vector<8x1x128xf32>
    %760 = vector.extract_strided_slice %717 {offsets = [7, 0, 0], sizes = [1, 8, 128], strides = [1, 1, 1]} : vector<8x8x128xf32> to vector<1x8x128xf32>
    %761 = vector.broadcast %759 : vector<8x1x128xf32> to vector<8x8x128xf32>
    %762 = vector.broadcast %760 : vector<1x8x128xf32> to vector<8x8x128xf32>
    %763 = arith.mulf %761, %762 : vector<8x8x128xf32>
    %764 = arith.addf %758, %763 : vector<8x8x128xf32>
    %765 = arith.subf %668, %715 : vector<8x8x128xf32>
    %766 = arith.subf %764, %668 : vector<8x8x128xf32>
    %767 = arith.subf %766, %715 : vector<8x8x128xf32>
    %cst_16 = arith.constant 1.250000e-01 : f32
    %768 = vector.broadcast %cst_16 : f32 to vector<8x8x128xf32>
    %769 = arith.mulf %765, %768 : vector<8x8x128xf32>
    %770 = arith.addf %12, %769 : vector<8x8x128xf32>
    %cst_17 = arith.constant 1.250000e-01 : f32
    %771 = vector.broadcast %cst_17 : f32 to vector<8x8x128xf32>
    %772 = arith.mulf %767, %771 : vector<8x8x128xf32>
    %773 = vector.extract_strided_slice %5 {offsets = [0, 0, 0], sizes = [8, 1, 128], strides = [1, 1, 1]} : vector<8x8x128xf32> to vector<8x1x128xf32>
    %774 = vector.extract_strided_slice %770 {offsets = [0, 0, 0], sizes = [1, 8, 128], strides = [1, 1, 1]} : vector<8x8x128xf32> to vector<1x8x128xf32>
    %775 = vector.broadcast %773 : vector<8x1x128xf32> to vector<8x8x128xf32>
    %776 = vector.broadcast %774 : vector<1x8x128xf32> to vector<8x8x128xf32>
    %777 = arith.mulf %775, %776 : vector<8x8x128xf32>
    %778 = vector.extract_strided_slice %5 {offsets = [0, 1, 0], sizes = [8, 1, 128], strides = [1, 1, 1]} : vector<8x8x128xf32> to vector<8x1x128xf32>
    %779 = vector.extract_strided_slice %770 {offsets = [1, 0, 0], sizes = [1, 8, 128], strides = [1, 1, 1]} : vector<8x8x128xf32> to vector<1x8x128xf32>
    %780 = vector.broadcast %778 : vector<8x1x128xf32> to vector<8x8x128xf32>
    %781 = vector.broadcast %779 : vector<1x8x128xf32> to vector<8x8x128xf32>
    %782 = arith.mulf %780, %781 : vector<8x8x128xf32>
    %783 = arith.addf %777, %782 : vector<8x8x128xf32>
    %784 = vector.extract_strided_slice %5 {offsets = [0, 2, 0], sizes = [8, 1, 128], strides = [1, 1, 1]} : vector<8x8x128xf32> to vector<8x1x128xf32>
    %785 = vector.extract_strided_slice %770 {offsets = [2, 0, 0], sizes = [1, 8, 128], strides = [1, 1, 1]} : vector<8x8x128xf32> to vector<1x8x128xf32>
    %786 = vector.broadcast %784 : vector<8x1x128xf32> to vector<8x8x128xf32>
    %787 = vector.broadcast %785 : vector<1x8x128xf32> to vector<8x8x128xf32>
    %788 = arith.mulf %786, %787 : vector<8x8x128xf32>
    %789 = arith.addf %783, %788 : vector<8x8x128xf32>
    %790 = vector.extract_strided_slice %5 {offsets = [0, 3, 0], sizes = [8, 1, 128], strides = [1, 1, 1]} : vector<8x8x128xf32> to vector<8x1x128xf32>
    %791 = vector.extract_strided_slice %770 {offsets = [3, 0, 0], sizes = [1, 8, 128], strides = [1, 1, 1]} : vector<8x8x128xf32> to vector<1x8x128xf32>
    %792 = vector.broadcast %790 : vector<8x1x128xf32> to vector<8x8x128xf32>
    %793 = vector.broadcast %791 : vector<1x8x128xf32> to vector<8x8x128xf32>
    %794 = arith.mulf %792, %793 : vector<8x8x128xf32>
    %795 = arith.addf %789, %794 : vector<8x8x128xf32>
    %796 = vector.extract_strided_slice %5 {offsets = [0, 4, 0], sizes = [8, 1, 128], strides = [1, 1, 1]} : vector<8x8x128xf32> to vector<8x1x128xf32>
    %797 = vector.extract_strided_slice %770 {offsets = [4, 0, 0], sizes = [1, 8, 128], strides = [1, 1, 1]} : vector<8x8x128xf32> to vector<1x8x128xf32>
    %798 = vector.broadcast %796 : vector<8x1x128xf32> to vector<8x8x128xf32>
    %799 = vector.broadcast %797 : vector<1x8x128xf32> to vector<8x8x128xf32>
    %800 = arith.mulf %798, %799 : vector<8x8x128xf32>
    %801 = arith.addf %795, %800 : vector<8x8x128xf32>
    %802 = vector.extract_strided_slice %5 {offsets = [0, 5, 0], sizes = [8, 1, 128], strides = [1, 1, 1]} : vector<8x8x128xf32> to vector<8x1x128xf32>
    %803 = vector.extract_strided_slice %770 {offsets = [5, 0, 0], sizes = [1, 8, 128], strides = [1, 1, 1]} : vector<8x8x128xf32> to vector<1x8x128xf32>
    %804 = vector.broadcast %802 : vector<8x1x128xf32> to vector<8x8x128xf32>
    %805 = vector.broadcast %803 : vector<1x8x128xf32> to vector<8x8x128xf32>
    %806 = arith.mulf %804, %805 : vector<8x8x128xf32>
    %807 = arith.addf %801, %806 : vector<8x8x128xf32>
    %808 = vector.extract_strided_slice %5 {offsets = [0, 6, 0], sizes = [8, 1, 128], strides = [1, 1, 1]} : vector<8x8x128xf32> to vector<8x1x128xf32>
    %809 = vector.extract_strided_slice %770 {offsets = [6, 0, 0], sizes = [1, 8, 128], strides = [1, 1, 1]} : vector<8x8x128xf32> to vector<1x8x128xf32>
    %810 = vector.broadcast %808 : vector<8x1x128xf32> to vector<8x8x128xf32>
    %811 = vector.broadcast %809 : vector<1x8x128xf32> to vector<8x8x128xf32>
    %812 = arith.mulf %810, %811 : vector<8x8x128xf32>
    %813 = arith.addf %807, %812 : vector<8x8x128xf32>
    %814 = vector.extract_strided_slice %5 {offsets = [0, 7, 0], sizes = [8, 1, 128], strides = [1, 1, 1]} : vector<8x8x128xf32> to vector<8x1x128xf32>
    %815 = vector.extract_strided_slice %770 {offsets = [7, 0, 0], sizes = [1, 8, 128], strides = [1, 1, 1]} : vector<8x8x128xf32> to vector<1x8x128xf32>
    %816 = vector.broadcast %814 : vector<8x1x128xf32> to vector<8x8x128xf32>
    %817 = vector.broadcast %815 : vector<1x8x128xf32> to vector<8x8x128xf32>
    %818 = arith.mulf %816, %817 : vector<8x8x128xf32>
    %819 = arith.addf %813, %818 : vector<8x8x128xf32>
    %820 = vector.extract_strided_slice %7 {offsets = [0, 0, 0], sizes = [8, 1, 128], strides = [1, 1, 1]} : vector<8x8x128xf32> to vector<8x1x128xf32>
    %821 = vector.extract_strided_slice %772 {offsets = [0, 0, 0], sizes = [1, 8, 128], strides = [1, 1, 1]} : vector<8x8x128xf32> to vector<1x8x128xf32>
    %822 = vector.broadcast %820 : vector<8x1x128xf32> to vector<8x8x128xf32>
    %823 = vector.broadcast %821 : vector<1x8x128xf32> to vector<8x8x128xf32>
    %824 = arith.mulf %822, %823 : vector<8x8x128xf32>
    %825 = vector.extract_strided_slice %7 {offsets = [0, 1, 0], sizes = [8, 1, 128], strides = [1, 1, 1]} : vector<8x8x128xf32> to vector<8x1x128xf32>
    %826 = vector.extract_strided_slice %772 {offsets = [1, 0, 0], sizes = [1, 8, 128], strides = [1, 1, 1]} : vector<8x8x128xf32> to vector<1x8x128xf32>
    %827 = vector.broadcast %825 : vector<8x1x128xf32> to vector<8x8x128xf32>
    %828 = vector.broadcast %826 : vector<1x8x128xf32> to vector<8x8x128xf32>
    %829 = arith.mulf %827, %828 : vector<8x8x128xf32>
    %830 = arith.addf %824, %829 : vector<8x8x128xf32>
    %831 = vector.extract_strided_slice %7 {offsets = [0, 2, 0], sizes = [8, 1, 128], strides = [1, 1, 1]} : vector<8x8x128xf32> to vector<8x1x128xf32>
    %832 = vector.extract_strided_slice %772 {offsets = [2, 0, 0], sizes = [1, 8, 128], strides = [1, 1, 1]} : vector<8x8x128xf32> to vector<1x8x128xf32>
    %833 = vector.broadcast %831 : vector<8x1x128xf32> to vector<8x8x128xf32>
    %834 = vector.broadcast %832 : vector<1x8x128xf32> to vector<8x8x128xf32>
    %835 = arith.mulf %833, %834 : vector<8x8x128xf32>
    %836 = arith.addf %830, %835 : vector<8x8x128xf32>
    %837 = vector.extract_strided_slice %7 {offsets = [0, 3, 0], sizes = [8, 1, 128], strides = [1, 1, 1]} : vector<8x8x128xf32> to vector<8x1x128xf32>
    %838 = vector.extract_strided_slice %772 {offsets = [3, 0, 0], sizes = [1, 8, 128], strides = [1, 1, 1]} : vector<8x8x128xf32> to vector<1x8x128xf32>
    %839 = vector.broadcast %837 : vector<8x1x128xf32> to vector<8x8x128xf32>
    %840 = vector.broadcast %838 : vector<1x8x128xf32> to vector<8x8x128xf32>
    %841 = arith.mulf %839, %840 : vector<8x8x128xf32>
    %842 = arith.addf %836, %841 : vector<8x8x128xf32>
    %843 = vector.extract_strided_slice %7 {offsets = [0, 4, 0], sizes = [8, 1, 128], strides = [1, 1, 1]} : vector<8x8x128xf32> to vector<8x1x128xf32>
    %844 = vector.extract_strided_slice %772 {offsets = [4, 0, 0], sizes = [1, 8, 128], strides = [1, 1, 1]} : vector<8x8x128xf32> to vector<1x8x128xf32>
    %845 = vector.broadcast %843 : vector<8x1x128xf32> to vector<8x8x128xf32>
    %846 = vector.broadcast %844 : vector<1x8x128xf32> to vector<8x8x128xf32>
    %847 = arith.mulf %845, %846 : vector<8x8x128xf32>
    %848 = arith.addf %842, %847 : vector<8x8x128xf32>
    %849 = vector.extract_strided_slice %7 {offsets = [0, 5, 0], sizes = [8, 1, 128], strides = [1, 1, 1]} : vector<8x8x128xf32> to vector<8x1x128xf32>
    %850 = vector.extract_strided_slice %772 {offsets = [5, 0, 0], sizes = [1, 8, 128], strides = [1, 1, 1]} : vector<8x8x128xf32> to vector<1x8x128xf32>
    %851 = vector.broadcast %849 : vector<8x1x128xf32> to vector<8x8x128xf32>
    %852 = vector.broadcast %850 : vector<1x8x128xf32> to vector<8x8x128xf32>
    %853 = arith.mulf %851, %852 : vector<8x8x128xf32>
    %854 = arith.addf %848, %853 : vector<8x8x128xf32>
    %855 = vector.extract_strided_slice %7 {offsets = [0, 6, 0], sizes = [8, 1, 128], strides = [1, 1, 1]} : vector<8x8x128xf32> to vector<8x1x128xf32>
    %856 = vector.extract_strided_slice %772 {offsets = [6, 0, 0], sizes = [1, 8, 128], strides = [1, 1, 1]} : vector<8x8x128xf32> to vector<1x8x128xf32>
    %857 = vector.broadcast %855 : vector<8x1x128xf32> to vector<8x8x128xf32>
    %858 = vector.broadcast %856 : vector<1x8x128xf32> to vector<8x8x128xf32>
    %859 = arith.mulf %857, %858 : vector<8x8x128xf32>
    %860 = arith.addf %854, %859 : vector<8x8x128xf32>
    %861 = vector.extract_strided_slice %7 {offsets = [0, 7, 0], sizes = [8, 1, 128], strides = [1, 1, 1]} : vector<8x8x128xf32> to vector<8x1x128xf32>
    %862 = vector.extract_strided_slice %772 {offsets = [7, 0, 0], sizes = [1, 8, 128], strides = [1, 1, 1]} : vector<8x8x128xf32> to vector<1x8x128xf32>
    %863 = vector.broadcast %861 : vector<8x1x128xf32> to vector<8x8x128xf32>
    %864 = vector.broadcast %862 : vector<1x8x128xf32> to vector<8x8x128xf32>
    %865 = arith.mulf %863, %864 : vector<8x8x128xf32>
    %866 = arith.addf %860, %865 : vector<8x8x128xf32>
    %867 = arith.addf %5, %7 : vector<8x8x128xf32>
    %868 = arith.addf %770, %772 : vector<8x8x128xf32>
    %869 = vector.extract_strided_slice %867 {offsets = [0, 0, 0], sizes = [8, 1, 128], strides = [1, 1, 1]} : vector<8x8x128xf32> to vector<8x1x128xf32>
    %870 = vector.extract_strided_slice %868 {offsets = [0, 0, 0], sizes = [1, 8, 128], strides = [1, 1, 1]} : vector<8x8x128xf32> to vector<1x8x128xf32>
    %871 = vector.broadcast %869 : vector<8x1x128xf32> to vector<8x8x128xf32>
    %872 = vector.broadcast %870 : vector<1x8x128xf32> to vector<8x8x128xf32>
    %873 = arith.mulf %871, %872 : vector<8x8x128xf32>
    %874 = vector.extract_strided_slice %867 {offsets = [0, 1, 0], sizes = [8, 1, 128], strides = [1, 1, 1]} : vector<8x8x128xf32> to vector<8x1x128xf32>
    %875 = vector.extract_strided_slice %868 {offsets = [1, 0, 0], sizes = [1, 8, 128], strides = [1, 1, 1]} : vector<8x8x128xf32> to vector<1x8x128xf32>
    %876 = vector.broadcast %874 : vector<8x1x128xf32> to vector<8x8x128xf32>
    %877 = vector.broadcast %875 : vector<1x8x128xf32> to vector<8x8x128xf32>
    %878 = arith.mulf %876, %877 : vector<8x8x128xf32>
    %879 = arith.addf %873, %878 : vector<8x8x128xf32>
    %880 = vector.extract_strided_slice %867 {offsets = [0, 2, 0], sizes = [8, 1, 128], strides = [1, 1, 1]} : vector<8x8x128xf32> to vector<8x1x128xf32>
    %881 = vector.extract_strided_slice %868 {offsets = [2, 0, 0], sizes = [1, 8, 128], strides = [1, 1, 1]} : vector<8x8x128xf32> to vector<1x8x128xf32>
    %882 = vector.broadcast %880 : vector<8x1x128xf32> to vector<8x8x128xf32>
    %883 = vector.broadcast %881 : vector<1x8x128xf32> to vector<8x8x128xf32>
    %884 = arith.mulf %882, %883 : vector<8x8x128xf32>
    %885 = arith.addf %879, %884 : vector<8x8x128xf32>
    %886 = vector.extract_strided_slice %867 {offsets = [0, 3, 0], sizes = [8, 1, 128], strides = [1, 1, 1]} : vector<8x8x128xf32> to vector<8x1x128xf32>
    %887 = vector.extract_strided_slice %868 {offsets = [3, 0, 0], sizes = [1, 8, 128], strides = [1, 1, 1]} : vector<8x8x128xf32> to vector<1x8x128xf32>
    %888 = vector.broadcast %886 : vector<8x1x128xf32> to vector<8x8x128xf32>
    %889 = vector.broadcast %887 : vector<1x8x128xf32> to vector<8x8x128xf32>
    %890 = arith.mulf %888, %889 : vector<8x8x128xf32>
    %891 = arith.addf %885, %890 : vector<8x8x128xf32>
    %892 = vector.extract_strided_slice %867 {offsets = [0, 4, 0], sizes = [8, 1, 128], strides = [1, 1, 1]} : vector<8x8x128xf32> to vector<8x1x128xf32>
    %893 = vector.extract_strided_slice %868 {offsets = [4, 0, 0], sizes = [1, 8, 128], strides = [1, 1, 1]} : vector<8x8x128xf32> to vector<1x8x128xf32>
    %894 = vector.broadcast %892 : vector<8x1x128xf32> to vector<8x8x128xf32>
    %895 = vector.broadcast %893 : vector<1x8x128xf32> to vector<8x8x128xf32>
    %896 = arith.mulf %894, %895 : vector<8x8x128xf32>
    %897 = arith.addf %891, %896 : vector<8x8x128xf32>
    %898 = vector.extract_strided_slice %867 {offsets = [0, 5, 0], sizes = [8, 1, 128], strides = [1, 1, 1]} : vector<8x8x128xf32> to vector<8x1x128xf32>
    %899 = vector.extract_strided_slice %868 {offsets = [5, 0, 0], sizes = [1, 8, 128], strides = [1, 1, 1]} : vector<8x8x128xf32> to vector<1x8x128xf32>
    %900 = vector.broadcast %898 : vector<8x1x128xf32> to vector<8x8x128xf32>
    %901 = vector.broadcast %899 : vector<1x8x128xf32> to vector<8x8x128xf32>
    %902 = arith.mulf %900, %901 : vector<8x8x128xf32>
    %903 = arith.addf %897, %902 : vector<8x8x128xf32>
    %904 = vector.extract_strided_slice %867 {offsets = [0, 6, 0], sizes = [8, 1, 128], strides = [1, 1, 1]} : vector<8x8x128xf32> to vector<8x1x128xf32>
    %905 = vector.extract_strided_slice %868 {offsets = [6, 0, 0], sizes = [1, 8, 128], strides = [1, 1, 1]} : vector<8x8x128xf32> to vector<1x8x128xf32>
    %906 = vector.broadcast %904 : vector<8x1x128xf32> to vector<8x8x128xf32>
    %907 = vector.broadcast %905 : vector<1x8x128xf32> to vector<8x8x128xf32>
    %908 = arith.mulf %906, %907 : vector<8x8x128xf32>
    %909 = arith.addf %903, %908 : vector<8x8x128xf32>
    %910 = vector.extract_strided_slice %867 {offsets = [0, 7, 0], sizes = [8, 1, 128], strides = [1, 1, 1]} : vector<8x8x128xf32> to vector<8x1x128xf32>
    %911 = vector.extract_strided_slice %868 {offsets = [7, 0, 0], sizes = [1, 8, 128], strides = [1, 1, 1]} : vector<8x8x128xf32> to vector<1x8x128xf32>
    %912 = vector.broadcast %910 : vector<8x1x128xf32> to vector<8x8x128xf32>
    %913 = vector.broadcast %911 : vector<1x8x128xf32> to vector<8x8x128xf32>
    %914 = arith.mulf %912, %913 : vector<8x8x128xf32>
    %915 = arith.addf %909, %914 : vector<8x8x128xf32>
    %916 = arith.subf %819, %866 : vector<8x8x128xf32>
    %917 = arith.subf %915, %819 : vector<8x8x128xf32>
    %918 = arith.subf %917, %866 : vector<8x8x128xf32>
    %cst_18 = arith.constant 0.142857149 : f32
    %919 = vector.broadcast %cst_18 : f32 to vector<8x8x128xf32>
    %920 = arith.mulf %916, %919 : vector<8x8x128xf32>
    %921 = arith.addf %12, %920 : vector<8x8x128xf32>
    %cst_19 = arith.constant 0.142857149 : f32
    %922 = vector.broadcast %cst_19 : f32 to vector<8x8x128xf32>
    %923 = arith.mulf %918, %922 : vector<8x8x128xf32>
    %924 = vector.extract_strided_slice %5 {offsets = [0, 0, 0], sizes = [8, 1, 128], strides = [1, 1, 1]} : vector<8x8x128xf32> to vector<8x1x128xf32>
    %925 = vector.extract_strided_slice %921 {offsets = [0, 0, 0], sizes = [1, 8, 128], strides = [1, 1, 1]} : vector<8x8x128xf32> to vector<1x8x128xf32>
    %926 = vector.broadcast %924 : vector<8x1x128xf32> to vector<8x8x128xf32>
    %927 = vector.broadcast %925 : vector<1x8x128xf32> to vector<8x8x128xf32>
    %928 = arith.mulf %926, %927 : vector<8x8x128xf32>
    %929 = vector.extract_strided_slice %5 {offsets = [0, 1, 0], sizes = [8, 1, 128], strides = [1, 1, 1]} : vector<8x8x128xf32> to vector<8x1x128xf32>
    %930 = vector.extract_strided_slice %921 {offsets = [1, 0, 0], sizes = [1, 8, 128], strides = [1, 1, 1]} : vector<8x8x128xf32> to vector<1x8x128xf32>
    %931 = vector.broadcast %929 : vector<8x1x128xf32> to vector<8x8x128xf32>
    %932 = vector.broadcast %930 : vector<1x8x128xf32> to vector<8x8x128xf32>
    %933 = arith.mulf %931, %932 : vector<8x8x128xf32>
    %934 = arith.addf %928, %933 : vector<8x8x128xf32>
    %935 = vector.extract_strided_slice %5 {offsets = [0, 2, 0], sizes = [8, 1, 128], strides = [1, 1, 1]} : vector<8x8x128xf32> to vector<8x1x128xf32>
    %936 = vector.extract_strided_slice %921 {offsets = [2, 0, 0], sizes = [1, 8, 128], strides = [1, 1, 1]} : vector<8x8x128xf32> to vector<1x8x128xf32>
    %937 = vector.broadcast %935 : vector<8x1x128xf32> to vector<8x8x128xf32>
    %938 = vector.broadcast %936 : vector<1x8x128xf32> to vector<8x8x128xf32>
    %939 = arith.mulf %937, %938 : vector<8x8x128xf32>
    %940 = arith.addf %934, %939 : vector<8x8x128xf32>
    %941 = vector.extract_strided_slice %5 {offsets = [0, 3, 0], sizes = [8, 1, 128], strides = [1, 1, 1]} : vector<8x8x128xf32> to vector<8x1x128xf32>
    %942 = vector.extract_strided_slice %921 {offsets = [3, 0, 0], sizes = [1, 8, 128], strides = [1, 1, 1]} : vector<8x8x128xf32> to vector<1x8x128xf32>
    %943 = vector.broadcast %941 : vector<8x1x128xf32> to vector<8x8x128xf32>
    %944 = vector.broadcast %942 : vector<1x8x128xf32> to vector<8x8x128xf32>
    %945 = arith.mulf %943, %944 : vector<8x8x128xf32>
    %946 = arith.addf %940, %945 : vector<8x8x128xf32>
    %947 = vector.extract_strided_slice %5 {offsets = [0, 4, 0], sizes = [8, 1, 128], strides = [1, 1, 1]} : vector<8x8x128xf32> to vector<8x1x128xf32>
    %948 = vector.extract_strided_slice %921 {offsets = [4, 0, 0], sizes = [1, 8, 128], strides = [1, 1, 1]} : vector<8x8x128xf32> to vector<1x8x128xf32>
    %949 = vector.broadcast %947 : vector<8x1x128xf32> to vector<8x8x128xf32>
    %950 = vector.broadcast %948 : vector<1x8x128xf32> to vector<8x8x128xf32>
    %951 = arith.mulf %949, %950 : vector<8x8x128xf32>
    %952 = arith.addf %946, %951 : vector<8x8x128xf32>
    %953 = vector.extract_strided_slice %5 {offsets = [0, 5, 0], sizes = [8, 1, 128], strides = [1, 1, 1]} : vector<8x8x128xf32> to vector<8x1x128xf32>
    %954 = vector.extract_strided_slice %921 {offsets = [5, 0, 0], sizes = [1, 8, 128], strides = [1, 1, 1]} : vector<8x8x128xf32> to vector<1x8x128xf32>
    %955 = vector.broadcast %953 : vector<8x1x128xf32> to vector<8x8x128xf32>
    %956 = vector.broadcast %954 : vector<1x8x128xf32> to vector<8x8x128xf32>
    %957 = arith.mulf %955, %956 : vector<8x8x128xf32>
    %958 = arith.addf %952, %957 : vector<8x8x128xf32>
    %959 = vector.extract_strided_slice %5 {offsets = [0, 6, 0], sizes = [8, 1, 128], strides = [1, 1, 1]} : vector<8x8x128xf32> to vector<8x1x128xf32>
    %960 = vector.extract_strided_slice %921 {offsets = [6, 0, 0], sizes = [1, 8, 128], strides = [1, 1, 1]} : vector<8x8x128xf32> to vector<1x8x128xf32>
    %961 = vector.broadcast %959 : vector<8x1x128xf32> to vector<8x8x128xf32>
    %962 = vector.broadcast %960 : vector<1x8x128xf32> to vector<8x8x128xf32>
    %963 = arith.mulf %961, %962 : vector<8x8x128xf32>
    %964 = arith.addf %958, %963 : vector<8x8x128xf32>
    %965 = vector.extract_strided_slice %5 {offsets = [0, 7, 0], sizes = [8, 1, 128], strides = [1, 1, 1]} : vector<8x8x128xf32> to vector<8x1x128xf32>
    %966 = vector.extract_strided_slice %921 {offsets = [7, 0, 0], sizes = [1, 8, 128], strides = [1, 1, 1]} : vector<8x8x128xf32> to vector<1x8x128xf32>
    %967 = vector.broadcast %965 : vector<8x1x128xf32> to vector<8x8x128xf32>
    %968 = vector.broadcast %966 : vector<1x8x128xf32> to vector<8x8x128xf32>
    %969 = arith.mulf %967, %968 : vector<8x8x128xf32>
    %970 = arith.addf %964, %969 : vector<8x8x128xf32>
    %971 = vector.extract_strided_slice %7 {offsets = [0, 0, 0], sizes = [8, 1, 128], strides = [1, 1, 1]} : vector<8x8x128xf32> to vector<8x1x128xf32>
    %972 = vector.extract_strided_slice %923 {offsets = [0, 0, 0], sizes = [1, 8, 128], strides = [1, 1, 1]} : vector<8x8x128xf32> to vector<1x8x128xf32>
    %973 = vector.broadcast %971 : vector<8x1x128xf32> to vector<8x8x128xf32>
    %974 = vector.broadcast %972 : vector<1x8x128xf32> to vector<8x8x128xf32>
    %975 = arith.mulf %973, %974 : vector<8x8x128xf32>
    %976 = vector.extract_strided_slice %7 {offsets = [0, 1, 0], sizes = [8, 1, 128], strides = [1, 1, 1]} : vector<8x8x128xf32> to vector<8x1x128xf32>
    %977 = vector.extract_strided_slice %923 {offsets = [1, 0, 0], sizes = [1, 8, 128], strides = [1, 1, 1]} : vector<8x8x128xf32> to vector<1x8x128xf32>
    %978 = vector.broadcast %976 : vector<8x1x128xf32> to vector<8x8x128xf32>
    %979 = vector.broadcast %977 : vector<1x8x128xf32> to vector<8x8x128xf32>
    %980 = arith.mulf %978, %979 : vector<8x8x128xf32>
    %981 = arith.addf %975, %980 : vector<8x8x128xf32>
    %982 = vector.extract_strided_slice %7 {offsets = [0, 2, 0], sizes = [8, 1, 128], strides = [1, 1, 1]} : vector<8x8x128xf32> to vector<8x1x128xf32>
    %983 = vector.extract_strided_slice %923 {offsets = [2, 0, 0], sizes = [1, 8, 128], strides = [1, 1, 1]} : vector<8x8x128xf32> to vector<1x8x128xf32>
    %984 = vector.broadcast %982 : vector<8x1x128xf32> to vector<8x8x128xf32>
    %985 = vector.broadcast %983 : vector<1x8x128xf32> to vector<8x8x128xf32>
    %986 = arith.mulf %984, %985 : vector<8x8x128xf32>
    %987 = arith.addf %981, %986 : vector<8x8x128xf32>
    %988 = vector.extract_strided_slice %7 {offsets = [0, 3, 0], sizes = [8, 1, 128], strides = [1, 1, 1]} : vector<8x8x128xf32> to vector<8x1x128xf32>
    %989 = vector.extract_strided_slice %923 {offsets = [3, 0, 0], sizes = [1, 8, 128], strides = [1, 1, 1]} : vector<8x8x128xf32> to vector<1x8x128xf32>
    %990 = vector.broadcast %988 : vector<8x1x128xf32> to vector<8x8x128xf32>
    %991 = vector.broadcast %989 : vector<1x8x128xf32> to vector<8x8x128xf32>
    %992 = arith.mulf %990, %991 : vector<8x8x128xf32>
    %993 = arith.addf %987, %992 : vector<8x8x128xf32>
    %994 = vector.extract_strided_slice %7 {offsets = [0, 4, 0], sizes = [8, 1, 128], strides = [1, 1, 1]} : vector<8x8x128xf32> to vector<8x1x128xf32>
    %995 = vector.extract_strided_slice %923 {offsets = [4, 0, 0], sizes = [1, 8, 128], strides = [1, 1, 1]} : vector<8x8x128xf32> to vector<1x8x128xf32>
    %996 = vector.broadcast %994 : vector<8x1x128xf32> to vector<8x8x128xf32>
    %997 = vector.broadcast %995 : vector<1x8x128xf32> to vector<8x8x128xf32>
    %998 = arith.mulf %996, %997 : vector<8x8x128xf32>
    %999 = arith.addf %993, %998 : vector<8x8x128xf32>
    %1000 = vector.extract_strided_slice %7 {offsets = [0, 5, 0], sizes = [8, 1, 128], strides = [1, 1, 1]} : vector<8x8x128xf32> to vector<8x1x128xf32>
    %1001 = vector.extract_strided_slice %923 {offsets = [5, 0, 0], sizes = [1, 8, 128], strides = [1, 1, 1]} : vector<8x8x128xf32> to vector<1x8x128xf32>
    %1002 = vector.broadcast %1000 : vector<8x1x128xf32> to vector<8x8x128xf32>
    %1003 = vector.broadcast %1001 : vector<1x8x128xf32> to vector<8x8x128xf32>
    %1004 = arith.mulf %1002, %1003 : vector<8x8x128xf32>
    %1005 = arith.addf %999, %1004 : vector<8x8x128xf32>
    %1006 = vector.extract_strided_slice %7 {offsets = [0, 6, 0], sizes = [8, 1, 128], strides = [1, 1, 1]} : vector<8x8x128xf32> to vector<8x1x128xf32>
    %1007 = vector.extract_strided_slice %923 {offsets = [6, 0, 0], sizes = [1, 8, 128], strides = [1, 1, 1]} : vector<8x8x128xf32> to vector<1x8x128xf32>
    %1008 = vector.broadcast %1006 : vector<8x1x128xf32> to vector<8x8x128xf32>
    %1009 = vector.broadcast %1007 : vector<1x8x128xf32> to vector<8x8x128xf32>
    %1010 = arith.mulf %1008, %1009 : vector<8x8x128xf32>
    %1011 = arith.addf %1005, %1010 : vector<8x8x128xf32>
    %1012 = vector.extract_strided_slice %7 {offsets = [0, 7, 0], sizes = [8, 1, 128], strides = [1, 1, 1]} : vector<8x8x128xf32> to vector<8x1x128xf32>
    %1013 = vector.extract_strided_slice %923 {offsets = [7, 0, 0], sizes = [1, 8, 128], strides = [1, 1, 1]} : vector<8x8x128xf32> to vector<1x8x128xf32>
    %1014 = vector.broadcast %1012 : vector<8x1x128xf32> to vector<8x8x128xf32>
    %1015 = vector.broadcast %1013 : vector<1x8x128xf32> to vector<8x8x128xf32>
    %1016 = arith.mulf %1014, %1015 : vector<8x8x128xf32>
    %1017 = arith.addf %1011, %1016 : vector<8x8x128xf32>
    %1018 = arith.addf %5, %7 : vector<8x8x128xf32>
    %1019 = arith.addf %921, %923 : vector<8x8x128xf32>
    %1020 = vector.extract_strided_slice %1018 {offsets = [0, 0, 0], sizes = [8, 1, 128], strides = [1, 1, 1]} : vector<8x8x128xf32> to vector<8x1x128xf32>
    %1021 = vector.extract_strided_slice %1019 {offsets = [0, 0, 0], sizes = [1, 8, 128], strides = [1, 1, 1]} : vector<8x8x128xf32> to vector<1x8x128xf32>
    %1022 = vector.broadcast %1020 : vector<8x1x128xf32> to vector<8x8x128xf32>
    %1023 = vector.broadcast %1021 : vector<1x8x128xf32> to vector<8x8x128xf32>
    %1024 = arith.mulf %1022, %1023 : vector<8x8x128xf32>
    %1025 = vector.extract_strided_slice %1018 {offsets = [0, 1, 0], sizes = [8, 1, 128], strides = [1, 1, 1]} : vector<8x8x128xf32> to vector<8x1x128xf32>
    %1026 = vector.extract_strided_slice %1019 {offsets = [1, 0, 0], sizes = [1, 8, 128], strides = [1, 1, 1]} : vector<8x8x128xf32> to vector<1x8x128xf32>
    %1027 = vector.broadcast %1025 : vector<8x1x128xf32> to vector<8x8x128xf32>
    %1028 = vector.broadcast %1026 : vector<1x8x128xf32> to vector<8x8x128xf32>
    %1029 = arith.mulf %1027, %1028 : vector<8x8x128xf32>
    %1030 = arith.addf %1024, %1029 : vector<8x8x128xf32>
    %1031 = vector.extract_strided_slice %1018 {offsets = [0, 2, 0], sizes = [8, 1, 128], strides = [1, 1, 1]} : vector<8x8x128xf32> to vector<8x1x128xf32>
    %1032 = vector.extract_strided_slice %1019 {offsets = [2, 0, 0], sizes = [1, 8, 128], strides = [1, 1, 1]} : vector<8x8x128xf32> to vector<1x8x128xf32>
    %1033 = vector.broadcast %1031 : vector<8x1x128xf32> to vector<8x8x128xf32>
    %1034 = vector.broadcast %1032 : vector<1x8x128xf32> to vector<8x8x128xf32>
    %1035 = arith.mulf %1033, %1034 : vector<8x8x128xf32>
    %1036 = arith.addf %1030, %1035 : vector<8x8x128xf32>
    %1037 = vector.extract_strided_slice %1018 {offsets = [0, 3, 0], sizes = [8, 1, 128], strides = [1, 1, 1]} : vector<8x8x128xf32> to vector<8x1x128xf32>
    %1038 = vector.extract_strided_slice %1019 {offsets = [3, 0, 0], sizes = [1, 8, 128], strides = [1, 1, 1]} : vector<8x8x128xf32> to vector<1x8x128xf32>
    %1039 = vector.broadcast %1037 : vector<8x1x128xf32> to vector<8x8x128xf32>
    %1040 = vector.broadcast %1038 : vector<1x8x128xf32> to vector<8x8x128xf32>
    %1041 = arith.mulf %1039, %1040 : vector<8x8x128xf32>
    %1042 = arith.addf %1036, %1041 : vector<8x8x128xf32>
    %1043 = vector.extract_strided_slice %1018 {offsets = [0, 4, 0], sizes = [8, 1, 128], strides = [1, 1, 1]} : vector<8x8x128xf32> to vector<8x1x128xf32>
    %1044 = vector.extract_strided_slice %1019 {offsets = [4, 0, 0], sizes = [1, 8, 128], strides = [1, 1, 1]} : vector<8x8x128xf32> to vector<1x8x128xf32>
    %1045 = vector.broadcast %1043 : vector<8x1x128xf32> to vector<8x8x128xf32>
    %1046 = vector.broadcast %1044 : vector<1x8x128xf32> to vector<8x8x128xf32>
    %1047 = arith.mulf %1045, %1046 : vector<8x8x128xf32>
    %1048 = arith.addf %1042, %1047 : vector<8x8x128xf32>
    %1049 = vector.extract_strided_slice %1018 {offsets = [0, 5, 0], sizes = [8, 1, 128], strides = [1, 1, 1]} : vector<8x8x128xf32> to vector<8x1x128xf32>
    %1050 = vector.extract_strided_slice %1019 {offsets = [5, 0, 0], sizes = [1, 8, 128], strides = [1, 1, 1]} : vector<8x8x128xf32> to vector<1x8x128xf32>
    %1051 = vector.broadcast %1049 : vector<8x1x128xf32> to vector<8x8x128xf32>
    %1052 = vector.broadcast %1050 : vector<1x8x128xf32> to vector<8x8x128xf32>
    %1053 = arith.mulf %1051, %1052 : vector<8x8x128xf32>
    %1054 = arith.addf %1048, %1053 : vector<8x8x128xf32>
    %1055 = vector.extract_strided_slice %1018 {offsets = [0, 6, 0], sizes = [8, 1, 128], strides = [1, 1, 1]} : vector<8x8x128xf32> to vector<8x1x128xf32>
    %1056 = vector.extract_strided_slice %1019 {offsets = [6, 0, 0], sizes = [1, 8, 128], strides = [1, 1, 1]} : vector<8x8x128xf32> to vector<1x8x128xf32>
    %1057 = vector.broadcast %1055 : vector<8x1x128xf32> to vector<8x8x128xf32>
    %1058 = vector.broadcast %1056 : vector<1x8x128xf32> to vector<8x8x128xf32>
    %1059 = arith.mulf %1057, %1058 : vector<8x8x128xf32>
    %1060 = arith.addf %1054, %1059 : vector<8x8x128xf32>
    %1061 = vector.extract_strided_slice %1018 {offsets = [0, 7, 0], sizes = [8, 1, 128], strides = [1, 1, 1]} : vector<8x8x128xf32> to vector<8x1x128xf32>
    %1062 = vector.extract_strided_slice %1019 {offsets = [7, 0, 0], sizes = [1, 8, 128], strides = [1, 1, 1]} : vector<8x8x128xf32> to vector<1x8x128xf32>
    %1063 = vector.broadcast %1061 : vector<8x1x128xf32> to vector<8x8x128xf32>
    %1064 = vector.broadcast %1062 : vector<1x8x128xf32> to vector<8x8x128xf32>
    %1065 = arith.mulf %1063, %1064 : vector<8x8x128xf32>
    %1066 = arith.addf %1060, %1065 : vector<8x8x128xf32>
    %1067 = arith.subf %970, %1017 : vector<8x8x128xf32>
    %1068 = arith.subf %1066, %970 : vector<8x8x128xf32>
    %1069 = arith.subf %1068, %1017 : vector<8x8x128xf32>
    %cst_20 = arith.constant 0.166666672 : f32
    %1070 = vector.broadcast %cst_20 : f32 to vector<8x8x128xf32>
    %1071 = arith.mulf %1067, %1070 : vector<8x8x128xf32>
    %1072 = arith.addf %12, %1071 : vector<8x8x128xf32>
    %cst_21 = arith.constant 0.166666672 : f32
    %1073 = vector.broadcast %cst_21 : f32 to vector<8x8x128xf32>
    %1074 = arith.mulf %1069, %1073 : vector<8x8x128xf32>
    %1075 = vector.extract_strided_slice %5 {offsets = [0, 0, 0], sizes = [8, 1, 128], strides = [1, 1, 1]} : vector<8x8x128xf32> to vector<8x1x128xf32>
    %1076 = vector.extract_strided_slice %1072 {offsets = [0, 0, 0], sizes = [1, 8, 128], strides = [1, 1, 1]} : vector<8x8x128xf32> to vector<1x8x128xf32>
    %1077 = vector.broadcast %1075 : vector<8x1x128xf32> to vector<8x8x128xf32>
    %1078 = vector.broadcast %1076 : vector<1x8x128xf32> to vector<8x8x128xf32>
    %1079 = arith.mulf %1077, %1078 : vector<8x8x128xf32>
    %1080 = vector.extract_strided_slice %5 {offsets = [0, 1, 0], sizes = [8, 1, 128], strides = [1, 1, 1]} : vector<8x8x128xf32> to vector<8x1x128xf32>
    %1081 = vector.extract_strided_slice %1072 {offsets = [1, 0, 0], sizes = [1, 8, 128], strides = [1, 1, 1]} : vector<8x8x128xf32> to vector<1x8x128xf32>
    %1082 = vector.broadcast %1080 : vector<8x1x128xf32> to vector<8x8x128xf32>
    %1083 = vector.broadcast %1081 : vector<1x8x128xf32> to vector<8x8x128xf32>
    %1084 = arith.mulf %1082, %1083 : vector<8x8x128xf32>
    %1085 = arith.addf %1079, %1084 : vector<8x8x128xf32>
    %1086 = vector.extract_strided_slice %5 {offsets = [0, 2, 0], sizes = [8, 1, 128], strides = [1, 1, 1]} : vector<8x8x128xf32> to vector<8x1x128xf32>
    %1087 = vector.extract_strided_slice %1072 {offsets = [2, 0, 0], sizes = [1, 8, 128], strides = [1, 1, 1]} : vector<8x8x128xf32> to vector<1x8x128xf32>
    %1088 = vector.broadcast %1086 : vector<8x1x128xf32> to vector<8x8x128xf32>
    %1089 = vector.broadcast %1087 : vector<1x8x128xf32> to vector<8x8x128xf32>
    %1090 = arith.mulf %1088, %1089 : vector<8x8x128xf32>
    %1091 = arith.addf %1085, %1090 : vector<8x8x128xf32>
    %1092 = vector.extract_strided_slice %5 {offsets = [0, 3, 0], sizes = [8, 1, 128], strides = [1, 1, 1]} : vector<8x8x128xf32> to vector<8x1x128xf32>
    %1093 = vector.extract_strided_slice %1072 {offsets = [3, 0, 0], sizes = [1, 8, 128], strides = [1, 1, 1]} : vector<8x8x128xf32> to vector<1x8x128xf32>
    %1094 = vector.broadcast %1092 : vector<8x1x128xf32> to vector<8x8x128xf32>
    %1095 = vector.broadcast %1093 : vector<1x8x128xf32> to vector<8x8x128xf32>
    %1096 = arith.mulf %1094, %1095 : vector<8x8x128xf32>
    %1097 = arith.addf %1091, %1096 : vector<8x8x128xf32>
    %1098 = vector.extract_strided_slice %5 {offsets = [0, 4, 0], sizes = [8, 1, 128], strides = [1, 1, 1]} : vector<8x8x128xf32> to vector<8x1x128xf32>
    %1099 = vector.extract_strided_slice %1072 {offsets = [4, 0, 0], sizes = [1, 8, 128], strides = [1, 1, 1]} : vector<8x8x128xf32> to vector<1x8x128xf32>
    %1100 = vector.broadcast %1098 : vector<8x1x128xf32> to vector<8x8x128xf32>
    %1101 = vector.broadcast %1099 : vector<1x8x128xf32> to vector<8x8x128xf32>
    %1102 = arith.mulf %1100, %1101 : vector<8x8x128xf32>
    %1103 = arith.addf %1097, %1102 : vector<8x8x128xf32>
    %1104 = vector.extract_strided_slice %5 {offsets = [0, 5, 0], sizes = [8, 1, 128], strides = [1, 1, 1]} : vector<8x8x128xf32> to vector<8x1x128xf32>
    %1105 = vector.extract_strided_slice %1072 {offsets = [5, 0, 0], sizes = [1, 8, 128], strides = [1, 1, 1]} : vector<8x8x128xf32> to vector<1x8x128xf32>
    %1106 = vector.broadcast %1104 : vector<8x1x128xf32> to vector<8x8x128xf32>
    %1107 = vector.broadcast %1105 : vector<1x8x128xf32> to vector<8x8x128xf32>
    %1108 = arith.mulf %1106, %1107 : vector<8x8x128xf32>
    %1109 = arith.addf %1103, %1108 : vector<8x8x128xf32>
    %1110 = vector.extract_strided_slice %5 {offsets = [0, 6, 0], sizes = [8, 1, 128], strides = [1, 1, 1]} : vector<8x8x128xf32> to vector<8x1x128xf32>
    %1111 = vector.extract_strided_slice %1072 {offsets = [6, 0, 0], sizes = [1, 8, 128], strides = [1, 1, 1]} : vector<8x8x128xf32> to vector<1x8x128xf32>
    %1112 = vector.broadcast %1110 : vector<8x1x128xf32> to vector<8x8x128xf32>
    %1113 = vector.broadcast %1111 : vector<1x8x128xf32> to vector<8x8x128xf32>
    %1114 = arith.mulf %1112, %1113 : vector<8x8x128xf32>
    %1115 = arith.addf %1109, %1114 : vector<8x8x128xf32>
    %1116 = vector.extract_strided_slice %5 {offsets = [0, 7, 0], sizes = [8, 1, 128], strides = [1, 1, 1]} : vector<8x8x128xf32> to vector<8x1x128xf32>
    %1117 = vector.extract_strided_slice %1072 {offsets = [7, 0, 0], sizes = [1, 8, 128], strides = [1, 1, 1]} : vector<8x8x128xf32> to vector<1x8x128xf32>
    %1118 = vector.broadcast %1116 : vector<8x1x128xf32> to vector<8x8x128xf32>
    %1119 = vector.broadcast %1117 : vector<1x8x128xf32> to vector<8x8x128xf32>
    %1120 = arith.mulf %1118, %1119 : vector<8x8x128xf32>
    %1121 = arith.addf %1115, %1120 : vector<8x8x128xf32>
    %1122 = vector.extract_strided_slice %7 {offsets = [0, 0, 0], sizes = [8, 1, 128], strides = [1, 1, 1]} : vector<8x8x128xf32> to vector<8x1x128xf32>
    %1123 = vector.extract_strided_slice %1074 {offsets = [0, 0, 0], sizes = [1, 8, 128], strides = [1, 1, 1]} : vector<8x8x128xf32> to vector<1x8x128xf32>
    %1124 = vector.broadcast %1122 : vector<8x1x128xf32> to vector<8x8x128xf32>
    %1125 = vector.broadcast %1123 : vector<1x8x128xf32> to vector<8x8x128xf32>
    %1126 = arith.mulf %1124, %1125 : vector<8x8x128xf32>
    %1127 = vector.extract_strided_slice %7 {offsets = [0, 1, 0], sizes = [8, 1, 128], strides = [1, 1, 1]} : vector<8x8x128xf32> to vector<8x1x128xf32>
    %1128 = vector.extract_strided_slice %1074 {offsets = [1, 0, 0], sizes = [1, 8, 128], strides = [1, 1, 1]} : vector<8x8x128xf32> to vector<1x8x128xf32>
    %1129 = vector.broadcast %1127 : vector<8x1x128xf32> to vector<8x8x128xf32>
    %1130 = vector.broadcast %1128 : vector<1x8x128xf32> to vector<8x8x128xf32>
    %1131 = arith.mulf %1129, %1130 : vector<8x8x128xf32>
    %1132 = arith.addf %1126, %1131 : vector<8x8x128xf32>
    %1133 = vector.extract_strided_slice %7 {offsets = [0, 2, 0], sizes = [8, 1, 128], strides = [1, 1, 1]} : vector<8x8x128xf32> to vector<8x1x128xf32>
    %1134 = vector.extract_strided_slice %1074 {offsets = [2, 0, 0], sizes = [1, 8, 128], strides = [1, 1, 1]} : vector<8x8x128xf32> to vector<1x8x128xf32>
    %1135 = vector.broadcast %1133 : vector<8x1x128xf32> to vector<8x8x128xf32>
    %1136 = vector.broadcast %1134 : vector<1x8x128xf32> to vector<8x8x128xf32>
    %1137 = arith.mulf %1135, %1136 : vector<8x8x128xf32>
    %1138 = arith.addf %1132, %1137 : vector<8x8x128xf32>
    %1139 = vector.extract_strided_slice %7 {offsets = [0, 3, 0], sizes = [8, 1, 128], strides = [1, 1, 1]} : vector<8x8x128xf32> to vector<8x1x128xf32>
    %1140 = vector.extract_strided_slice %1074 {offsets = [3, 0, 0], sizes = [1, 8, 128], strides = [1, 1, 1]} : vector<8x8x128xf32> to vector<1x8x128xf32>
    %1141 = vector.broadcast %1139 : vector<8x1x128xf32> to vector<8x8x128xf32>
    %1142 = vector.broadcast %1140 : vector<1x8x128xf32> to vector<8x8x128xf32>
    %1143 = arith.mulf %1141, %1142 : vector<8x8x128xf32>
    %1144 = arith.addf %1138, %1143 : vector<8x8x128xf32>
    %1145 = vector.extract_strided_slice %7 {offsets = [0, 4, 0], sizes = [8, 1, 128], strides = [1, 1, 1]} : vector<8x8x128xf32> to vector<8x1x128xf32>
    %1146 = vector.extract_strided_slice %1074 {offsets = [4, 0, 0], sizes = [1, 8, 128], strides = [1, 1, 1]} : vector<8x8x128xf32> to vector<1x8x128xf32>
    %1147 = vector.broadcast %1145 : vector<8x1x128xf32> to vector<8x8x128xf32>
    %1148 = vector.broadcast %1146 : vector<1x8x128xf32> to vector<8x8x128xf32>
    %1149 = arith.mulf %1147, %1148 : vector<8x8x128xf32>
    %1150 = arith.addf %1144, %1149 : vector<8x8x128xf32>
    %1151 = vector.extract_strided_slice %7 {offsets = [0, 5, 0], sizes = [8, 1, 128], strides = [1, 1, 1]} : vector<8x8x128xf32> to vector<8x1x128xf32>
    %1152 = vector.extract_strided_slice %1074 {offsets = [5, 0, 0], sizes = [1, 8, 128], strides = [1, 1, 1]} : vector<8x8x128xf32> to vector<1x8x128xf32>
    %1153 = vector.broadcast %1151 : vector<8x1x128xf32> to vector<8x8x128xf32>
    %1154 = vector.broadcast %1152 : vector<1x8x128xf32> to vector<8x8x128xf32>
    %1155 = arith.mulf %1153, %1154 : vector<8x8x128xf32>
    %1156 = arith.addf %1150, %1155 : vector<8x8x128xf32>
    %1157 = vector.extract_strided_slice %7 {offsets = [0, 6, 0], sizes = [8, 1, 128], strides = [1, 1, 1]} : vector<8x8x128xf32> to vector<8x1x128xf32>
    %1158 = vector.extract_strided_slice %1074 {offsets = [6, 0, 0], sizes = [1, 8, 128], strides = [1, 1, 1]} : vector<8x8x128xf32> to vector<1x8x128xf32>
    %1159 = vector.broadcast %1157 : vector<8x1x128xf32> to vector<8x8x128xf32>
    %1160 = vector.broadcast %1158 : vector<1x8x128xf32> to vector<8x8x128xf32>
    %1161 = arith.mulf %1159, %1160 : vector<8x8x128xf32>
    %1162 = arith.addf %1156, %1161 : vector<8x8x128xf32>
    %1163 = vector.extract_strided_slice %7 {offsets = [0, 7, 0], sizes = [8, 1, 128], strides = [1, 1, 1]} : vector<8x8x128xf32> to vector<8x1x128xf32>
    %1164 = vector.extract_strided_slice %1074 {offsets = [7, 0, 0], sizes = [1, 8, 128], strides = [1, 1, 1]} : vector<8x8x128xf32> to vector<1x8x128xf32>
    %1165 = vector.broadcast %1163 : vector<8x1x128xf32> to vector<8x8x128xf32>
    %1166 = vector.broadcast %1164 : vector<1x8x128xf32> to vector<8x8x128xf32>
    %1167 = arith.mulf %1165, %1166 : vector<8x8x128xf32>
    %1168 = arith.addf %1162, %1167 : vector<8x8x128xf32>
    %1169 = arith.addf %5, %7 : vector<8x8x128xf32>
    %1170 = arith.addf %1072, %1074 : vector<8x8x128xf32>
    %1171 = vector.extract_strided_slice %1169 {offsets = [0, 0, 0], sizes = [8, 1, 128], strides = [1, 1, 1]} : vector<8x8x128xf32> to vector<8x1x128xf32>
    %1172 = vector.extract_strided_slice %1170 {offsets = [0, 0, 0], sizes = [1, 8, 128], strides = [1, 1, 1]} : vector<8x8x128xf32> to vector<1x8x128xf32>
    %1173 = vector.broadcast %1171 : vector<8x1x128xf32> to vector<8x8x128xf32>
    %1174 = vector.broadcast %1172 : vector<1x8x128xf32> to vector<8x8x128xf32>
    %1175 = arith.mulf %1173, %1174 : vector<8x8x128xf32>
    %1176 = vector.extract_strided_slice %1169 {offsets = [0, 1, 0], sizes = [8, 1, 128], strides = [1, 1, 1]} : vector<8x8x128xf32> to vector<8x1x128xf32>
    %1177 = vector.extract_strided_slice %1170 {offsets = [1, 0, 0], sizes = [1, 8, 128], strides = [1, 1, 1]} : vector<8x8x128xf32> to vector<1x8x128xf32>
    %1178 = vector.broadcast %1176 : vector<8x1x128xf32> to vector<8x8x128xf32>
    %1179 = vector.broadcast %1177 : vector<1x8x128xf32> to vector<8x8x128xf32>
    %1180 = arith.mulf %1178, %1179 : vector<8x8x128xf32>
    %1181 = arith.addf %1175, %1180 : vector<8x8x128xf32>
    %1182 = vector.extract_strided_slice %1169 {offsets = [0, 2, 0], sizes = [8, 1, 128], strides = [1, 1, 1]} : vector<8x8x128xf32> to vector<8x1x128xf32>
    %1183 = vector.extract_strided_slice %1170 {offsets = [2, 0, 0], sizes = [1, 8, 128], strides = [1, 1, 1]} : vector<8x8x128xf32> to vector<1x8x128xf32>
    %1184 = vector.broadcast %1182 : vector<8x1x128xf32> to vector<8x8x128xf32>
    %1185 = vector.broadcast %1183 : vector<1x8x128xf32> to vector<8x8x128xf32>
    %1186 = arith.mulf %1184, %1185 : vector<8x8x128xf32>
    %1187 = arith.addf %1181, %1186 : vector<8x8x128xf32>
    %1188 = vector.extract_strided_slice %1169 {offsets = [0, 3, 0], sizes = [8, 1, 128], strides = [1, 1, 1]} : vector<8x8x128xf32> to vector<8x1x128xf32>
    %1189 = vector.extract_strided_slice %1170 {offsets = [3, 0, 0], sizes = [1, 8, 128], strides = [1, 1, 1]} : vector<8x8x128xf32> to vector<1x8x128xf32>
    %1190 = vector.broadcast %1188 : vector<8x1x128xf32> to vector<8x8x128xf32>
    %1191 = vector.broadcast %1189 : vector<1x8x128xf32> to vector<8x8x128xf32>
    %1192 = arith.mulf %1190, %1191 : vector<8x8x128xf32>
    %1193 = arith.addf %1187, %1192 : vector<8x8x128xf32>
    %1194 = vector.extract_strided_slice %1169 {offsets = [0, 4, 0], sizes = [8, 1, 128], strides = [1, 1, 1]} : vector<8x8x128xf32> to vector<8x1x128xf32>
    %1195 = vector.extract_strided_slice %1170 {offsets = [4, 0, 0], sizes = [1, 8, 128], strides = [1, 1, 1]} : vector<8x8x128xf32> to vector<1x8x128xf32>
    %1196 = vector.broadcast %1194 : vector<8x1x128xf32> to vector<8x8x128xf32>
    %1197 = vector.broadcast %1195 : vector<1x8x128xf32> to vector<8x8x128xf32>
    %1198 = arith.mulf %1196, %1197 : vector<8x8x128xf32>
    %1199 = arith.addf %1193, %1198 : vector<8x8x128xf32>
    %1200 = vector.extract_strided_slice %1169 {offsets = [0, 5, 0], sizes = [8, 1, 128], strides = [1, 1, 1]} : vector<8x8x128xf32> to vector<8x1x128xf32>
    %1201 = vector.extract_strided_slice %1170 {offsets = [5, 0, 0], sizes = [1, 8, 128], strides = [1, 1, 1]} : vector<8x8x128xf32> to vector<1x8x128xf32>
    %1202 = vector.broadcast %1200 : vector<8x1x128xf32> to vector<8x8x128xf32>
    %1203 = vector.broadcast %1201 : vector<1x8x128xf32> to vector<8x8x128xf32>
    %1204 = arith.mulf %1202, %1203 : vector<8x8x128xf32>
    %1205 = arith.addf %1199, %1204 : vector<8x8x128xf32>
    %1206 = vector.extract_strided_slice %1169 {offsets = [0, 6, 0], sizes = [8, 1, 128], strides = [1, 1, 1]} : vector<8x8x128xf32> to vector<8x1x128xf32>
    %1207 = vector.extract_strided_slice %1170 {offsets = [6, 0, 0], sizes = [1, 8, 128], strides = [1, 1, 1]} : vector<8x8x128xf32> to vector<1x8x128xf32>
    %1208 = vector.broadcast %1206 : vector<8x1x128xf32> to vector<8x8x128xf32>
    %1209 = vector.broadcast %1207 : vector<1x8x128xf32> to vector<8x8x128xf32>
    %1210 = arith.mulf %1208, %1209 : vector<8x8x128xf32>
    %1211 = arith.addf %1205, %1210 : vector<8x8x128xf32>
    %1212 = vector.extract_strided_slice %1169 {offsets = [0, 7, 0], sizes = [8, 1, 128], strides = [1, 1, 1]} : vector<8x8x128xf32> to vector<8x1x128xf32>
    %1213 = vector.extract_strided_slice %1170 {offsets = [7, 0, 0], sizes = [1, 8, 128], strides = [1, 1, 1]} : vector<8x8x128xf32> to vector<1x8x128xf32>
    %1214 = vector.broadcast %1212 : vector<8x1x128xf32> to vector<8x8x128xf32>
    %1215 = vector.broadcast %1213 : vector<1x8x128xf32> to vector<8x8x128xf32>
    %1216 = arith.mulf %1214, %1215 : vector<8x8x128xf32>
    %1217 = arith.addf %1211, %1216 : vector<8x8x128xf32>
    %1218 = arith.subf %1121, %1168 : vector<8x8x128xf32>
    %1219 = arith.subf %1217, %1121 : vector<8x8x128xf32>
    %1220 = arith.subf %1219, %1168 : vector<8x8x128xf32>
    %cst_22 = arith.constant 2.000000e-01 : f32
    %1221 = vector.broadcast %cst_22 : f32 to vector<8x8x128xf32>
    %1222 = arith.mulf %1218, %1221 : vector<8x8x128xf32>
    %1223 = arith.addf %12, %1222 : vector<8x8x128xf32>
    %cst_23 = arith.constant 2.000000e-01 : f32
    %1224 = vector.broadcast %cst_23 : f32 to vector<8x8x128xf32>
    %1225 = arith.mulf %1220, %1224 : vector<8x8x128xf32>
    %1226 = vector.extract_strided_slice %5 {offsets = [0, 0, 0], sizes = [8, 1, 128], strides = [1, 1, 1]} : vector<8x8x128xf32> to vector<8x1x128xf32>
    %1227 = vector.extract_strided_slice %1223 {offsets = [0, 0, 0], sizes = [1, 8, 128], strides = [1, 1, 1]} : vector<8x8x128xf32> to vector<1x8x128xf32>
    %1228 = vector.broadcast %1226 : vector<8x1x128xf32> to vector<8x8x128xf32>
    %1229 = vector.broadcast %1227 : vector<1x8x128xf32> to vector<8x8x128xf32>
    %1230 = arith.mulf %1228, %1229 : vector<8x8x128xf32>
    %1231 = vector.extract_strided_slice %5 {offsets = [0, 1, 0], sizes = [8, 1, 128], strides = [1, 1, 1]} : vector<8x8x128xf32> to vector<8x1x128xf32>
    %1232 = vector.extract_strided_slice %1223 {offsets = [1, 0, 0], sizes = [1, 8, 128], strides = [1, 1, 1]} : vector<8x8x128xf32> to vector<1x8x128xf32>
    %1233 = vector.broadcast %1231 : vector<8x1x128xf32> to vector<8x8x128xf32>
    %1234 = vector.broadcast %1232 : vector<1x8x128xf32> to vector<8x8x128xf32>
    %1235 = arith.mulf %1233, %1234 : vector<8x8x128xf32>
    %1236 = arith.addf %1230, %1235 : vector<8x8x128xf32>
    %1237 = vector.extract_strided_slice %5 {offsets = [0, 2, 0], sizes = [8, 1, 128], strides = [1, 1, 1]} : vector<8x8x128xf32> to vector<8x1x128xf32>
    %1238 = vector.extract_strided_slice %1223 {offsets = [2, 0, 0], sizes = [1, 8, 128], strides = [1, 1, 1]} : vector<8x8x128xf32> to vector<1x8x128xf32>
    %1239 = vector.broadcast %1237 : vector<8x1x128xf32> to vector<8x8x128xf32>
    %1240 = vector.broadcast %1238 : vector<1x8x128xf32> to vector<8x8x128xf32>
    %1241 = arith.mulf %1239, %1240 : vector<8x8x128xf32>
    %1242 = arith.addf %1236, %1241 : vector<8x8x128xf32>
    %1243 = vector.extract_strided_slice %5 {offsets = [0, 3, 0], sizes = [8, 1, 128], strides = [1, 1, 1]} : vector<8x8x128xf32> to vector<8x1x128xf32>
    %1244 = vector.extract_strided_slice %1223 {offsets = [3, 0, 0], sizes = [1, 8, 128], strides = [1, 1, 1]} : vector<8x8x128xf32> to vector<1x8x128xf32>
    %1245 = vector.broadcast %1243 : vector<8x1x128xf32> to vector<8x8x128xf32>
    %1246 = vector.broadcast %1244 : vector<1x8x128xf32> to vector<8x8x128xf32>
    %1247 = arith.mulf %1245, %1246 : vector<8x8x128xf32>
    %1248 = arith.addf %1242, %1247 : vector<8x8x128xf32>
    %1249 = vector.extract_strided_slice %5 {offsets = [0, 4, 0], sizes = [8, 1, 128], strides = [1, 1, 1]} : vector<8x8x128xf32> to vector<8x1x128xf32>
    %1250 = vector.extract_strided_slice %1223 {offsets = [4, 0, 0], sizes = [1, 8, 128], strides = [1, 1, 1]} : vector<8x8x128xf32> to vector<1x8x128xf32>
    %1251 = vector.broadcast %1249 : vector<8x1x128xf32> to vector<8x8x128xf32>
    %1252 = vector.broadcast %1250 : vector<1x8x128xf32> to vector<8x8x128xf32>
    %1253 = arith.mulf %1251, %1252 : vector<8x8x128xf32>
    %1254 = arith.addf %1248, %1253 : vector<8x8x128xf32>
    %1255 = vector.extract_strided_slice %5 {offsets = [0, 5, 0], sizes = [8, 1, 128], strides = [1, 1, 1]} : vector<8x8x128xf32> to vector<8x1x128xf32>
    %1256 = vector.extract_strided_slice %1223 {offsets = [5, 0, 0], sizes = [1, 8, 128], strides = [1, 1, 1]} : vector<8x8x128xf32> to vector<1x8x128xf32>
    %1257 = vector.broadcast %1255 : vector<8x1x128xf32> to vector<8x8x128xf32>
    %1258 = vector.broadcast %1256 : vector<1x8x128xf32> to vector<8x8x128xf32>
    %1259 = arith.mulf %1257, %1258 : vector<8x8x128xf32>
    %1260 = arith.addf %1254, %1259 : vector<8x8x128xf32>
    %1261 = vector.extract_strided_slice %5 {offsets = [0, 6, 0], sizes = [8, 1, 128], strides = [1, 1, 1]} : vector<8x8x128xf32> to vector<8x1x128xf32>
    %1262 = vector.extract_strided_slice %1223 {offsets = [6, 0, 0], sizes = [1, 8, 128], strides = [1, 1, 1]} : vector<8x8x128xf32> to vector<1x8x128xf32>
    %1263 = vector.broadcast %1261 : vector<8x1x128xf32> to vector<8x8x128xf32>
    %1264 = vector.broadcast %1262 : vector<1x8x128xf32> to vector<8x8x128xf32>
    %1265 = arith.mulf %1263, %1264 : vector<8x8x128xf32>
    %1266 = arith.addf %1260, %1265 : vector<8x8x128xf32>
    %1267 = vector.extract_strided_slice %5 {offsets = [0, 7, 0], sizes = [8, 1, 128], strides = [1, 1, 1]} : vector<8x8x128xf32> to vector<8x1x128xf32>
    %1268 = vector.extract_strided_slice %1223 {offsets = [7, 0, 0], sizes = [1, 8, 128], strides = [1, 1, 1]} : vector<8x8x128xf32> to vector<1x8x128xf32>
    %1269 = vector.broadcast %1267 : vector<8x1x128xf32> to vector<8x8x128xf32>
    %1270 = vector.broadcast %1268 : vector<1x8x128xf32> to vector<8x8x128xf32>
    %1271 = arith.mulf %1269, %1270 : vector<8x8x128xf32>
    %1272 = arith.addf %1266, %1271 : vector<8x8x128xf32>
    %1273 = vector.extract_strided_slice %7 {offsets = [0, 0, 0], sizes = [8, 1, 128], strides = [1, 1, 1]} : vector<8x8x128xf32> to vector<8x1x128xf32>
    %1274 = vector.extract_strided_slice %1225 {offsets = [0, 0, 0], sizes = [1, 8, 128], strides = [1, 1, 1]} : vector<8x8x128xf32> to vector<1x8x128xf32>
    %1275 = vector.broadcast %1273 : vector<8x1x128xf32> to vector<8x8x128xf32>
    %1276 = vector.broadcast %1274 : vector<1x8x128xf32> to vector<8x8x128xf32>
    %1277 = arith.mulf %1275, %1276 : vector<8x8x128xf32>
    %1278 = vector.extract_strided_slice %7 {offsets = [0, 1, 0], sizes = [8, 1, 128], strides = [1, 1, 1]} : vector<8x8x128xf32> to vector<8x1x128xf32>
    %1279 = vector.extract_strided_slice %1225 {offsets = [1, 0, 0], sizes = [1, 8, 128], strides = [1, 1, 1]} : vector<8x8x128xf32> to vector<1x8x128xf32>
    %1280 = vector.broadcast %1278 : vector<8x1x128xf32> to vector<8x8x128xf32>
    %1281 = vector.broadcast %1279 : vector<1x8x128xf32> to vector<8x8x128xf32>
    %1282 = arith.mulf %1280, %1281 : vector<8x8x128xf32>
    %1283 = arith.addf %1277, %1282 : vector<8x8x128xf32>
    %1284 = vector.extract_strided_slice %7 {offsets = [0, 2, 0], sizes = [8, 1, 128], strides = [1, 1, 1]} : vector<8x8x128xf32> to vector<8x1x128xf32>
    %1285 = vector.extract_strided_slice %1225 {offsets = [2, 0, 0], sizes = [1, 8, 128], strides = [1, 1, 1]} : vector<8x8x128xf32> to vector<1x8x128xf32>
    %1286 = vector.broadcast %1284 : vector<8x1x128xf32> to vector<8x8x128xf32>
    %1287 = vector.broadcast %1285 : vector<1x8x128xf32> to vector<8x8x128xf32>
    %1288 = arith.mulf %1286, %1287 : vector<8x8x128xf32>
    %1289 = arith.addf %1283, %1288 : vector<8x8x128xf32>
    %1290 = vector.extract_strided_slice %7 {offsets = [0, 3, 0], sizes = [8, 1, 128], strides = [1, 1, 1]} : vector<8x8x128xf32> to vector<8x1x128xf32>
    %1291 = vector.extract_strided_slice %1225 {offsets = [3, 0, 0], sizes = [1, 8, 128], strides = [1, 1, 1]} : vector<8x8x128xf32> to vector<1x8x128xf32>
    %1292 = vector.broadcast %1290 : vector<8x1x128xf32> to vector<8x8x128xf32>
    %1293 = vector.broadcast %1291 : vector<1x8x128xf32> to vector<8x8x128xf32>
    %1294 = arith.mulf %1292, %1293 : vector<8x8x128xf32>
    %1295 = arith.addf %1289, %1294 : vector<8x8x128xf32>
    %1296 = vector.extract_strided_slice %7 {offsets = [0, 4, 0], sizes = [8, 1, 128], strides = [1, 1, 1]} : vector<8x8x128xf32> to vector<8x1x128xf32>
    %1297 = vector.extract_strided_slice %1225 {offsets = [4, 0, 0], sizes = [1, 8, 128], strides = [1, 1, 1]} : vector<8x8x128xf32> to vector<1x8x128xf32>
    %1298 = vector.broadcast %1296 : vector<8x1x128xf32> to vector<8x8x128xf32>
    %1299 = vector.broadcast %1297 : vector<1x8x128xf32> to vector<8x8x128xf32>
    %1300 = arith.mulf %1298, %1299 : vector<8x8x128xf32>
    %1301 = arith.addf %1295, %1300 : vector<8x8x128xf32>
    %1302 = vector.extract_strided_slice %7 {offsets = [0, 5, 0], sizes = [8, 1, 128], strides = [1, 1, 1]} : vector<8x8x128xf32> to vector<8x1x128xf32>
    %1303 = vector.extract_strided_slice %1225 {offsets = [5, 0, 0], sizes = [1, 8, 128], strides = [1, 1, 1]} : vector<8x8x128xf32> to vector<1x8x128xf32>
    %1304 = vector.broadcast %1302 : vector<8x1x128xf32> to vector<8x8x128xf32>
    %1305 = vector.broadcast %1303 : vector<1x8x128xf32> to vector<8x8x128xf32>
    %1306 = arith.mulf %1304, %1305 : vector<8x8x128xf32>
    %1307 = arith.addf %1301, %1306 : vector<8x8x128xf32>
    %1308 = vector.extract_strided_slice %7 {offsets = [0, 6, 0], sizes = [8, 1, 128], strides = [1, 1, 1]} : vector<8x8x128xf32> to vector<8x1x128xf32>
    %1309 = vector.extract_strided_slice %1225 {offsets = [6, 0, 0], sizes = [1, 8, 128], strides = [1, 1, 1]} : vector<8x8x128xf32> to vector<1x8x128xf32>
    %1310 = vector.broadcast %1308 : vector<8x1x128xf32> to vector<8x8x128xf32>
    %1311 = vector.broadcast %1309 : vector<1x8x128xf32> to vector<8x8x128xf32>
    %1312 = arith.mulf %1310, %1311 : vector<8x8x128xf32>
    %1313 = arith.addf %1307, %1312 : vector<8x8x128xf32>
    %1314 = vector.extract_strided_slice %7 {offsets = [0, 7, 0], sizes = [8, 1, 128], strides = [1, 1, 1]} : vector<8x8x128xf32> to vector<8x1x128xf32>
    %1315 = vector.extract_strided_slice %1225 {offsets = [7, 0, 0], sizes = [1, 8, 128], strides = [1, 1, 1]} : vector<8x8x128xf32> to vector<1x8x128xf32>
    %1316 = vector.broadcast %1314 : vector<8x1x128xf32> to vector<8x8x128xf32>
    %1317 = vector.broadcast %1315 : vector<1x8x128xf32> to vector<8x8x128xf32>
    %1318 = arith.mulf %1316, %1317 : vector<8x8x128xf32>
    %1319 = arith.addf %1313, %1318 : vector<8x8x128xf32>
    %1320 = arith.addf %5, %7 : vector<8x8x128xf32>
    %1321 = arith.addf %1223, %1225 : vector<8x8x128xf32>
    %1322 = vector.extract_strided_slice %1320 {offsets = [0, 0, 0], sizes = [8, 1, 128], strides = [1, 1, 1]} : vector<8x8x128xf32> to vector<8x1x128xf32>
    %1323 = vector.extract_strided_slice %1321 {offsets = [0, 0, 0], sizes = [1, 8, 128], strides = [1, 1, 1]} : vector<8x8x128xf32> to vector<1x8x128xf32>
    %1324 = vector.broadcast %1322 : vector<8x1x128xf32> to vector<8x8x128xf32>
    %1325 = vector.broadcast %1323 : vector<1x8x128xf32> to vector<8x8x128xf32>
    %1326 = arith.mulf %1324, %1325 : vector<8x8x128xf32>
    %1327 = vector.extract_strided_slice %1320 {offsets = [0, 1, 0], sizes = [8, 1, 128], strides = [1, 1, 1]} : vector<8x8x128xf32> to vector<8x1x128xf32>
    %1328 = vector.extract_strided_slice %1321 {offsets = [1, 0, 0], sizes = [1, 8, 128], strides = [1, 1, 1]} : vector<8x8x128xf32> to vector<1x8x128xf32>
    %1329 = vector.broadcast %1327 : vector<8x1x128xf32> to vector<8x8x128xf32>
    %1330 = vector.broadcast %1328 : vector<1x8x128xf32> to vector<8x8x128xf32>
    %1331 = arith.mulf %1329, %1330 : vector<8x8x128xf32>
    %1332 = arith.addf %1326, %1331 : vector<8x8x128xf32>
    %1333 = vector.extract_strided_slice %1320 {offsets = [0, 2, 0], sizes = [8, 1, 128], strides = [1, 1, 1]} : vector<8x8x128xf32> to vector<8x1x128xf32>
    %1334 = vector.extract_strided_slice %1321 {offsets = [2, 0, 0], sizes = [1, 8, 128], strides = [1, 1, 1]} : vector<8x8x128xf32> to vector<1x8x128xf32>
    %1335 = vector.broadcast %1333 : vector<8x1x128xf32> to vector<8x8x128xf32>
    %1336 = vector.broadcast %1334 : vector<1x8x128xf32> to vector<8x8x128xf32>
    %1337 = arith.mulf %1335, %1336 : vector<8x8x128xf32>
    %1338 = arith.addf %1332, %1337 : vector<8x8x128xf32>
    %1339 = vector.extract_strided_slice %1320 {offsets = [0, 3, 0], sizes = [8, 1, 128], strides = [1, 1, 1]} : vector<8x8x128xf32> to vector<8x1x128xf32>
    %1340 = vector.extract_strided_slice %1321 {offsets = [3, 0, 0], sizes = [1, 8, 128], strides = [1, 1, 1]} : vector<8x8x128xf32> to vector<1x8x128xf32>
    %1341 = vector.broadcast %1339 : vector<8x1x128xf32> to vector<8x8x128xf32>
    %1342 = vector.broadcast %1340 : vector<1x8x128xf32> to vector<8x8x128xf32>
    %1343 = arith.mulf %1341, %1342 : vector<8x8x128xf32>
    %1344 = arith.addf %1338, %1343 : vector<8x8x128xf32>
    %1345 = vector.extract_strided_slice %1320 {offsets = [0, 4, 0], sizes = [8, 1, 128], strides = [1, 1, 1]} : vector<8x8x128xf32> to vector<8x1x128xf32>
    %1346 = vector.extract_strided_slice %1321 {offsets = [4, 0, 0], sizes = [1, 8, 128], strides = [1, 1, 1]} : vector<8x8x128xf32> to vector<1x8x128xf32>
    %1347 = vector.broadcast %1345 : vector<8x1x128xf32> to vector<8x8x128xf32>
    %1348 = vector.broadcast %1346 : vector<1x8x128xf32> to vector<8x8x128xf32>
    %1349 = arith.mulf %1347, %1348 : vector<8x8x128xf32>
    %1350 = arith.addf %1344, %1349 : vector<8x8x128xf32>
    %1351 = vector.extract_strided_slice %1320 {offsets = [0, 5, 0], sizes = [8, 1, 128], strides = [1, 1, 1]} : vector<8x8x128xf32> to vector<8x1x128xf32>
    %1352 = vector.extract_strided_slice %1321 {offsets = [5, 0, 0], sizes = [1, 8, 128], strides = [1, 1, 1]} : vector<8x8x128xf32> to vector<1x8x128xf32>
    %1353 = vector.broadcast %1351 : vector<8x1x128xf32> to vector<8x8x128xf32>
    %1354 = vector.broadcast %1352 : vector<1x8x128xf32> to vector<8x8x128xf32>
    %1355 = arith.mulf %1353, %1354 : vector<8x8x128xf32>
    %1356 = arith.addf %1350, %1355 : vector<8x8x128xf32>
    %1357 = vector.extract_strided_slice %1320 {offsets = [0, 6, 0], sizes = [8, 1, 128], strides = [1, 1, 1]} : vector<8x8x128xf32> to vector<8x1x128xf32>
    %1358 = vector.extract_strided_slice %1321 {offsets = [6, 0, 0], sizes = [1, 8, 128], strides = [1, 1, 1]} : vector<8x8x128xf32> to vector<1x8x128xf32>
    %1359 = vector.broadcast %1357 : vector<8x1x128xf32> to vector<8x8x128xf32>
    %1360 = vector.broadcast %1358 : vector<1x8x128xf32> to vector<8x8x128xf32>
    %1361 = arith.mulf %1359, %1360 : vector<8x8x128xf32>
    %1362 = arith.addf %1356, %1361 : vector<8x8x128xf32>
    %1363 = vector.extract_strided_slice %1320 {offsets = [0, 7, 0], sizes = [8, 1, 128], strides = [1, 1, 1]} : vector<8x8x128xf32> to vector<8x1x128xf32>
    %1364 = vector.extract_strided_slice %1321 {offsets = [7, 0, 0], sizes = [1, 8, 128], strides = [1, 1, 1]} : vector<8x8x128xf32> to vector<1x8x128xf32>
    %1365 = vector.broadcast %1363 : vector<8x1x128xf32> to vector<8x8x128xf32>
    %1366 = vector.broadcast %1364 : vector<1x8x128xf32> to vector<8x8x128xf32>
    %1367 = arith.mulf %1365, %1366 : vector<8x8x128xf32>
    %1368 = arith.addf %1362, %1367 : vector<8x8x128xf32>
    %1369 = arith.subf %1272, %1319 : vector<8x8x128xf32>
    %1370 = arith.subf %1368, %1272 : vector<8x8x128xf32>
    %1371 = arith.subf %1370, %1319 : vector<8x8x128xf32>
    %cst_24 = arith.constant 2.500000e-01 : f32
    %1372 = vector.broadcast %cst_24 : f32 to vector<8x8x128xf32>
    %1373 = arith.mulf %1369, %1372 : vector<8x8x128xf32>
    %1374 = arith.addf %12, %1373 : vector<8x8x128xf32>
    %cst_25 = arith.constant 2.500000e-01 : f32
    %1375 = vector.broadcast %cst_25 : f32 to vector<8x8x128xf32>
    %1376 = arith.mulf %1371, %1375 : vector<8x8x128xf32>
    %1377 = vector.extract_strided_slice %5 {offsets = [0, 0, 0], sizes = [8, 1, 128], strides = [1, 1, 1]} : vector<8x8x128xf32> to vector<8x1x128xf32>
    %1378 = vector.extract_strided_slice %1374 {offsets = [0, 0, 0], sizes = [1, 8, 128], strides = [1, 1, 1]} : vector<8x8x128xf32> to vector<1x8x128xf32>
    %1379 = vector.broadcast %1377 : vector<8x1x128xf32> to vector<8x8x128xf32>
    %1380 = vector.broadcast %1378 : vector<1x8x128xf32> to vector<8x8x128xf32>
    %1381 = arith.mulf %1379, %1380 : vector<8x8x128xf32>
    %1382 = vector.extract_strided_slice %5 {offsets = [0, 1, 0], sizes = [8, 1, 128], strides = [1, 1, 1]} : vector<8x8x128xf32> to vector<8x1x128xf32>
    %1383 = vector.extract_strided_slice %1374 {offsets = [1, 0, 0], sizes = [1, 8, 128], strides = [1, 1, 1]} : vector<8x8x128xf32> to vector<1x8x128xf32>
    %1384 = vector.broadcast %1382 : vector<8x1x128xf32> to vector<8x8x128xf32>
    %1385 = vector.broadcast %1383 : vector<1x8x128xf32> to vector<8x8x128xf32>
    %1386 = arith.mulf %1384, %1385 : vector<8x8x128xf32>
    %1387 = arith.addf %1381, %1386 : vector<8x8x128xf32>
    %1388 = vector.extract_strided_slice %5 {offsets = [0, 2, 0], sizes = [8, 1, 128], strides = [1, 1, 1]} : vector<8x8x128xf32> to vector<8x1x128xf32>
    %1389 = vector.extract_strided_slice %1374 {offsets = [2, 0, 0], sizes = [1, 8, 128], strides = [1, 1, 1]} : vector<8x8x128xf32> to vector<1x8x128xf32>
    %1390 = vector.broadcast %1388 : vector<8x1x128xf32> to vector<8x8x128xf32>
    %1391 = vector.broadcast %1389 : vector<1x8x128xf32> to vector<8x8x128xf32>
    %1392 = arith.mulf %1390, %1391 : vector<8x8x128xf32>
    %1393 = arith.addf %1387, %1392 : vector<8x8x128xf32>
    %1394 = vector.extract_strided_slice %5 {offsets = [0, 3, 0], sizes = [8, 1, 128], strides = [1, 1, 1]} : vector<8x8x128xf32> to vector<8x1x128xf32>
    %1395 = vector.extract_strided_slice %1374 {offsets = [3, 0, 0], sizes = [1, 8, 128], strides = [1, 1, 1]} : vector<8x8x128xf32> to vector<1x8x128xf32>
    %1396 = vector.broadcast %1394 : vector<8x1x128xf32> to vector<8x8x128xf32>
    %1397 = vector.broadcast %1395 : vector<1x8x128xf32> to vector<8x8x128xf32>
    %1398 = arith.mulf %1396, %1397 : vector<8x8x128xf32>
    %1399 = arith.addf %1393, %1398 : vector<8x8x128xf32>
    %1400 = vector.extract_strided_slice %5 {offsets = [0, 4, 0], sizes = [8, 1, 128], strides = [1, 1, 1]} : vector<8x8x128xf32> to vector<8x1x128xf32>
    %1401 = vector.extract_strided_slice %1374 {offsets = [4, 0, 0], sizes = [1, 8, 128], strides = [1, 1, 1]} : vector<8x8x128xf32> to vector<1x8x128xf32>
    %1402 = vector.broadcast %1400 : vector<8x1x128xf32> to vector<8x8x128xf32>
    %1403 = vector.broadcast %1401 : vector<1x8x128xf32> to vector<8x8x128xf32>
    %1404 = arith.mulf %1402, %1403 : vector<8x8x128xf32>
    %1405 = arith.addf %1399, %1404 : vector<8x8x128xf32>
    %1406 = vector.extract_strided_slice %5 {offsets = [0, 5, 0], sizes = [8, 1, 128], strides = [1, 1, 1]} : vector<8x8x128xf32> to vector<8x1x128xf32>
    %1407 = vector.extract_strided_slice %1374 {offsets = [5, 0, 0], sizes = [1, 8, 128], strides = [1, 1, 1]} : vector<8x8x128xf32> to vector<1x8x128xf32>
    %1408 = vector.broadcast %1406 : vector<8x1x128xf32> to vector<8x8x128xf32>
    %1409 = vector.broadcast %1407 : vector<1x8x128xf32> to vector<8x8x128xf32>
    %1410 = arith.mulf %1408, %1409 : vector<8x8x128xf32>
    %1411 = arith.addf %1405, %1410 : vector<8x8x128xf32>
    %1412 = vector.extract_strided_slice %5 {offsets = [0, 6, 0], sizes = [8, 1, 128], strides = [1, 1, 1]} : vector<8x8x128xf32> to vector<8x1x128xf32>
    %1413 = vector.extract_strided_slice %1374 {offsets = [6, 0, 0], sizes = [1, 8, 128], strides = [1, 1, 1]} : vector<8x8x128xf32> to vector<1x8x128xf32>
    %1414 = vector.broadcast %1412 : vector<8x1x128xf32> to vector<8x8x128xf32>
    %1415 = vector.broadcast %1413 : vector<1x8x128xf32> to vector<8x8x128xf32>
    %1416 = arith.mulf %1414, %1415 : vector<8x8x128xf32>
    %1417 = arith.addf %1411, %1416 : vector<8x8x128xf32>
    %1418 = vector.extract_strided_slice %5 {offsets = [0, 7, 0], sizes = [8, 1, 128], strides = [1, 1, 1]} : vector<8x8x128xf32> to vector<8x1x128xf32>
    %1419 = vector.extract_strided_slice %1374 {offsets = [7, 0, 0], sizes = [1, 8, 128], strides = [1, 1, 1]} : vector<8x8x128xf32> to vector<1x8x128xf32>
    %1420 = vector.broadcast %1418 : vector<8x1x128xf32> to vector<8x8x128xf32>
    %1421 = vector.broadcast %1419 : vector<1x8x128xf32> to vector<8x8x128xf32>
    %1422 = arith.mulf %1420, %1421 : vector<8x8x128xf32>
    %1423 = arith.addf %1417, %1422 : vector<8x8x128xf32>
    %1424 = vector.extract_strided_slice %7 {offsets = [0, 0, 0], sizes = [8, 1, 128], strides = [1, 1, 1]} : vector<8x8x128xf32> to vector<8x1x128xf32>
    %1425 = vector.extract_strided_slice %1376 {offsets = [0, 0, 0], sizes = [1, 8, 128], strides = [1, 1, 1]} : vector<8x8x128xf32> to vector<1x8x128xf32>
    %1426 = vector.broadcast %1424 : vector<8x1x128xf32> to vector<8x8x128xf32>
    %1427 = vector.broadcast %1425 : vector<1x8x128xf32> to vector<8x8x128xf32>
    %1428 = arith.mulf %1426, %1427 : vector<8x8x128xf32>
    %1429 = vector.extract_strided_slice %7 {offsets = [0, 1, 0], sizes = [8, 1, 128], strides = [1, 1, 1]} : vector<8x8x128xf32> to vector<8x1x128xf32>
    %1430 = vector.extract_strided_slice %1376 {offsets = [1, 0, 0], sizes = [1, 8, 128], strides = [1, 1, 1]} : vector<8x8x128xf32> to vector<1x8x128xf32>
    %1431 = vector.broadcast %1429 : vector<8x1x128xf32> to vector<8x8x128xf32>
    %1432 = vector.broadcast %1430 : vector<1x8x128xf32> to vector<8x8x128xf32>
    %1433 = arith.mulf %1431, %1432 : vector<8x8x128xf32>
    %1434 = arith.addf %1428, %1433 : vector<8x8x128xf32>
    %1435 = vector.extract_strided_slice %7 {offsets = [0, 2, 0], sizes = [8, 1, 128], strides = [1, 1, 1]} : vector<8x8x128xf32> to vector<8x1x128xf32>
    %1436 = vector.extract_strided_slice %1376 {offsets = [2, 0, 0], sizes = [1, 8, 128], strides = [1, 1, 1]} : vector<8x8x128xf32> to vector<1x8x128xf32>
    %1437 = vector.broadcast %1435 : vector<8x1x128xf32> to vector<8x8x128xf32>
    %1438 = vector.broadcast %1436 : vector<1x8x128xf32> to vector<8x8x128xf32>
    %1439 = arith.mulf %1437, %1438 : vector<8x8x128xf32>
    %1440 = arith.addf %1434, %1439 : vector<8x8x128xf32>
    %1441 = vector.extract_strided_slice %7 {offsets = [0, 3, 0], sizes = [8, 1, 128], strides = [1, 1, 1]} : vector<8x8x128xf32> to vector<8x1x128xf32>
    %1442 = vector.extract_strided_slice %1376 {offsets = [3, 0, 0], sizes = [1, 8, 128], strides = [1, 1, 1]} : vector<8x8x128xf32> to vector<1x8x128xf32>
    %1443 = vector.broadcast %1441 : vector<8x1x128xf32> to vector<8x8x128xf32>
    %1444 = vector.broadcast %1442 : vector<1x8x128xf32> to vector<8x8x128xf32>
    %1445 = arith.mulf %1443, %1444 : vector<8x8x128xf32>
    %1446 = arith.addf %1440, %1445 : vector<8x8x128xf32>
    %1447 = vector.extract_strided_slice %7 {offsets = [0, 4, 0], sizes = [8, 1, 128], strides = [1, 1, 1]} : vector<8x8x128xf32> to vector<8x1x128xf32>
    %1448 = vector.extract_strided_slice %1376 {offsets = [4, 0, 0], sizes = [1, 8, 128], strides = [1, 1, 1]} : vector<8x8x128xf32> to vector<1x8x128xf32>
    %1449 = vector.broadcast %1447 : vector<8x1x128xf32> to vector<8x8x128xf32>
    %1450 = vector.broadcast %1448 : vector<1x8x128xf32> to vector<8x8x128xf32>
    %1451 = arith.mulf %1449, %1450 : vector<8x8x128xf32>
    %1452 = arith.addf %1446, %1451 : vector<8x8x128xf32>
    %1453 = vector.extract_strided_slice %7 {offsets = [0, 5, 0], sizes = [8, 1, 128], strides = [1, 1, 1]} : vector<8x8x128xf32> to vector<8x1x128xf32>
    %1454 = vector.extract_strided_slice %1376 {offsets = [5, 0, 0], sizes = [1, 8, 128], strides = [1, 1, 1]} : vector<8x8x128xf32> to vector<1x8x128xf32>
    %1455 = vector.broadcast %1453 : vector<8x1x128xf32> to vector<8x8x128xf32>
    %1456 = vector.broadcast %1454 : vector<1x8x128xf32> to vector<8x8x128xf32>
    %1457 = arith.mulf %1455, %1456 : vector<8x8x128xf32>
    %1458 = arith.addf %1452, %1457 : vector<8x8x128xf32>
    %1459 = vector.extract_strided_slice %7 {offsets = [0, 6, 0], sizes = [8, 1, 128], strides = [1, 1, 1]} : vector<8x8x128xf32> to vector<8x1x128xf32>
    %1460 = vector.extract_strided_slice %1376 {offsets = [6, 0, 0], sizes = [1, 8, 128], strides = [1, 1, 1]} : vector<8x8x128xf32> to vector<1x8x128xf32>
    %1461 = vector.broadcast %1459 : vector<8x1x128xf32> to vector<8x8x128xf32>
    %1462 = vector.broadcast %1460 : vector<1x8x128xf32> to vector<8x8x128xf32>
    %1463 = arith.mulf %1461, %1462 : vector<8x8x128xf32>
    %1464 = arith.addf %1458, %1463 : vector<8x8x128xf32>
    %1465 = vector.extract_strided_slice %7 {offsets = [0, 7, 0], sizes = [8, 1, 128], strides = [1, 1, 1]} : vector<8x8x128xf32> to vector<8x1x128xf32>
    %1466 = vector.extract_strided_slice %1376 {offsets = [7, 0, 0], sizes = [1, 8, 128], strides = [1, 1, 1]} : vector<8x8x128xf32> to vector<1x8x128xf32>
    %1467 = vector.broadcast %1465 : vector<8x1x128xf32> to vector<8x8x128xf32>
    %1468 = vector.broadcast %1466 : vector<1x8x128xf32> to vector<8x8x128xf32>
    %1469 = arith.mulf %1467, %1468 : vector<8x8x128xf32>
    %1470 = arith.addf %1464, %1469 : vector<8x8x128xf32>
    %1471 = arith.addf %5, %7 : vector<8x8x128xf32>
    %1472 = arith.addf %1374, %1376 : vector<8x8x128xf32>
    %1473 = vector.extract_strided_slice %1471 {offsets = [0, 0, 0], sizes = [8, 1, 128], strides = [1, 1, 1]} : vector<8x8x128xf32> to vector<8x1x128xf32>
    %1474 = vector.extract_strided_slice %1472 {offsets = [0, 0, 0], sizes = [1, 8, 128], strides = [1, 1, 1]} : vector<8x8x128xf32> to vector<1x8x128xf32>
    %1475 = vector.broadcast %1473 : vector<8x1x128xf32> to vector<8x8x128xf32>
    %1476 = vector.broadcast %1474 : vector<1x8x128xf32> to vector<8x8x128xf32>
    %1477 = arith.mulf %1475, %1476 : vector<8x8x128xf32>
    %1478 = vector.extract_strided_slice %1471 {offsets = [0, 1, 0], sizes = [8, 1, 128], strides = [1, 1, 1]} : vector<8x8x128xf32> to vector<8x1x128xf32>
    %1479 = vector.extract_strided_slice %1472 {offsets = [1, 0, 0], sizes = [1, 8, 128], strides = [1, 1, 1]} : vector<8x8x128xf32> to vector<1x8x128xf32>
    %1480 = vector.broadcast %1478 : vector<8x1x128xf32> to vector<8x8x128xf32>
    %1481 = vector.broadcast %1479 : vector<1x8x128xf32> to vector<8x8x128xf32>
    %1482 = arith.mulf %1480, %1481 : vector<8x8x128xf32>
    %1483 = arith.addf %1477, %1482 : vector<8x8x128xf32>
    %1484 = vector.extract_strided_slice %1471 {offsets = [0, 2, 0], sizes = [8, 1, 128], strides = [1, 1, 1]} : vector<8x8x128xf32> to vector<8x1x128xf32>
    %1485 = vector.extract_strided_slice %1472 {offsets = [2, 0, 0], sizes = [1, 8, 128], strides = [1, 1, 1]} : vector<8x8x128xf32> to vector<1x8x128xf32>
    %1486 = vector.broadcast %1484 : vector<8x1x128xf32> to vector<8x8x128xf32>
    %1487 = vector.broadcast %1485 : vector<1x8x128xf32> to vector<8x8x128xf32>
    %1488 = arith.mulf %1486, %1487 : vector<8x8x128xf32>
    %1489 = arith.addf %1483, %1488 : vector<8x8x128xf32>
    %1490 = vector.extract_strided_slice %1471 {offsets = [0, 3, 0], sizes = [8, 1, 128], strides = [1, 1, 1]} : vector<8x8x128xf32> to vector<8x1x128xf32>
    %1491 = vector.extract_strided_slice %1472 {offsets = [3, 0, 0], sizes = [1, 8, 128], strides = [1, 1, 1]} : vector<8x8x128xf32> to vector<1x8x128xf32>
    %1492 = vector.broadcast %1490 : vector<8x1x128xf32> to vector<8x8x128xf32>
    %1493 = vector.broadcast %1491 : vector<1x8x128xf32> to vector<8x8x128xf32>
    %1494 = arith.mulf %1492, %1493 : vector<8x8x128xf32>
    %1495 = arith.addf %1489, %1494 : vector<8x8x128xf32>
    %1496 = vector.extract_strided_slice %1471 {offsets = [0, 4, 0], sizes = [8, 1, 128], strides = [1, 1, 1]} : vector<8x8x128xf32> to vector<8x1x128xf32>
    %1497 = vector.extract_strided_slice %1472 {offsets = [4, 0, 0], sizes = [1, 8, 128], strides = [1, 1, 1]} : vector<8x8x128xf32> to vector<1x8x128xf32>
    %1498 = vector.broadcast %1496 : vector<8x1x128xf32> to vector<8x8x128xf32>
    %1499 = vector.broadcast %1497 : vector<1x8x128xf32> to vector<8x8x128xf32>
    %1500 = arith.mulf %1498, %1499 : vector<8x8x128xf32>
    %1501 = arith.addf %1495, %1500 : vector<8x8x128xf32>
    %1502 = vector.extract_strided_slice %1471 {offsets = [0, 5, 0], sizes = [8, 1, 128], strides = [1, 1, 1]} : vector<8x8x128xf32> to vector<8x1x128xf32>
    %1503 = vector.extract_strided_slice %1472 {offsets = [5, 0, 0], sizes = [1, 8, 128], strides = [1, 1, 1]} : vector<8x8x128xf32> to vector<1x8x128xf32>
    %1504 = vector.broadcast %1502 : vector<8x1x128xf32> to vector<8x8x128xf32>
    %1505 = vector.broadcast %1503 : vector<1x8x128xf32> to vector<8x8x128xf32>
    %1506 = arith.mulf %1504, %1505 : vector<8x8x128xf32>
    %1507 = arith.addf %1501, %1506 : vector<8x8x128xf32>
    %1508 = vector.extract_strided_slice %1471 {offsets = [0, 6, 0], sizes = [8, 1, 128], strides = [1, 1, 1]} : vector<8x8x128xf32> to vector<8x1x128xf32>
    %1509 = vector.extract_strided_slice %1472 {offsets = [6, 0, 0], sizes = [1, 8, 128], strides = [1, 1, 1]} : vector<8x8x128xf32> to vector<1x8x128xf32>
    %1510 = vector.broadcast %1508 : vector<8x1x128xf32> to vector<8x8x128xf32>
    %1511 = vector.broadcast %1509 : vector<1x8x128xf32> to vector<8x8x128xf32>
    %1512 = arith.mulf %1510, %1511 : vector<8x8x128xf32>
    %1513 = arith.addf %1507, %1512 : vector<8x8x128xf32>
    %1514 = vector.extract_strided_slice %1471 {offsets = [0, 7, 0], sizes = [8, 1, 128], strides = [1, 1, 1]} : vector<8x8x128xf32> to vector<8x1x128xf32>
    %1515 = vector.extract_strided_slice %1472 {offsets = [7, 0, 0], sizes = [1, 8, 128], strides = [1, 1, 1]} : vector<8x8x128xf32> to vector<1x8x128xf32>
    %1516 = vector.broadcast %1514 : vector<8x1x128xf32> to vector<8x8x128xf32>
    %1517 = vector.broadcast %1515 : vector<1x8x128xf32> to vector<8x8x128xf32>
    %1518 = arith.mulf %1516, %1517 : vector<8x8x128xf32>
    %1519 = arith.addf %1513, %1518 : vector<8x8x128xf32>
    %1520 = arith.subf %1423, %1470 : vector<8x8x128xf32>
    %1521 = arith.subf %1519, %1423 : vector<8x8x128xf32>
    %1522 = arith.subf %1521, %1470 : vector<8x8x128xf32>
    %cst_26 = arith.constant 0.333333343 : f32
    %1523 = vector.broadcast %cst_26 : f32 to vector<8x8x128xf32>
    %1524 = arith.mulf %1520, %1523 : vector<8x8x128xf32>
    %1525 = arith.addf %12, %1524 : vector<8x8x128xf32>
    %cst_27 = arith.constant 0.333333343 : f32
    %1526 = vector.broadcast %cst_27 : f32 to vector<8x8x128xf32>
    %1527 = arith.mulf %1522, %1526 : vector<8x8x128xf32>
    %1528 = vector.extract_strided_slice %5 {offsets = [0, 0, 0], sizes = [8, 1, 128], strides = [1, 1, 1]} : vector<8x8x128xf32> to vector<8x1x128xf32>
    %1529 = vector.extract_strided_slice %1525 {offsets = [0, 0, 0], sizes = [1, 8, 128], strides = [1, 1, 1]} : vector<8x8x128xf32> to vector<1x8x128xf32>
    %1530 = vector.broadcast %1528 : vector<8x1x128xf32> to vector<8x8x128xf32>
    %1531 = vector.broadcast %1529 : vector<1x8x128xf32> to vector<8x8x128xf32>
    %1532 = arith.mulf %1530, %1531 : vector<8x8x128xf32>
    %1533 = vector.extract_strided_slice %5 {offsets = [0, 1, 0], sizes = [8, 1, 128], strides = [1, 1, 1]} : vector<8x8x128xf32> to vector<8x1x128xf32>
    %1534 = vector.extract_strided_slice %1525 {offsets = [1, 0, 0], sizes = [1, 8, 128], strides = [1, 1, 1]} : vector<8x8x128xf32> to vector<1x8x128xf32>
    %1535 = vector.broadcast %1533 : vector<8x1x128xf32> to vector<8x8x128xf32>
    %1536 = vector.broadcast %1534 : vector<1x8x128xf32> to vector<8x8x128xf32>
    %1537 = arith.mulf %1535, %1536 : vector<8x8x128xf32>
    %1538 = arith.addf %1532, %1537 : vector<8x8x128xf32>
    %1539 = vector.extract_strided_slice %5 {offsets = [0, 2, 0], sizes = [8, 1, 128], strides = [1, 1, 1]} : vector<8x8x128xf32> to vector<8x1x128xf32>
    %1540 = vector.extract_strided_slice %1525 {offsets = [2, 0, 0], sizes = [1, 8, 128], strides = [1, 1, 1]} : vector<8x8x128xf32> to vector<1x8x128xf32>
    %1541 = vector.broadcast %1539 : vector<8x1x128xf32> to vector<8x8x128xf32>
    %1542 = vector.broadcast %1540 : vector<1x8x128xf32> to vector<8x8x128xf32>
    %1543 = arith.mulf %1541, %1542 : vector<8x8x128xf32>
    %1544 = arith.addf %1538, %1543 : vector<8x8x128xf32>
    %1545 = vector.extract_strided_slice %5 {offsets = [0, 3, 0], sizes = [8, 1, 128], strides = [1, 1, 1]} : vector<8x8x128xf32> to vector<8x1x128xf32>
    %1546 = vector.extract_strided_slice %1525 {offsets = [3, 0, 0], sizes = [1, 8, 128], strides = [1, 1, 1]} : vector<8x8x128xf32> to vector<1x8x128xf32>
    %1547 = vector.broadcast %1545 : vector<8x1x128xf32> to vector<8x8x128xf32>
    %1548 = vector.broadcast %1546 : vector<1x8x128xf32> to vector<8x8x128xf32>
    %1549 = arith.mulf %1547, %1548 : vector<8x8x128xf32>
    %1550 = arith.addf %1544, %1549 : vector<8x8x128xf32>
    %1551 = vector.extract_strided_slice %5 {offsets = [0, 4, 0], sizes = [8, 1, 128], strides = [1, 1, 1]} : vector<8x8x128xf32> to vector<8x1x128xf32>
    %1552 = vector.extract_strided_slice %1525 {offsets = [4, 0, 0], sizes = [1, 8, 128], strides = [1, 1, 1]} : vector<8x8x128xf32> to vector<1x8x128xf32>
    %1553 = vector.broadcast %1551 : vector<8x1x128xf32> to vector<8x8x128xf32>
    %1554 = vector.broadcast %1552 : vector<1x8x128xf32> to vector<8x8x128xf32>
    %1555 = arith.mulf %1553, %1554 : vector<8x8x128xf32>
    %1556 = arith.addf %1550, %1555 : vector<8x8x128xf32>
    %1557 = vector.extract_strided_slice %5 {offsets = [0, 5, 0], sizes = [8, 1, 128], strides = [1, 1, 1]} : vector<8x8x128xf32> to vector<8x1x128xf32>
    %1558 = vector.extract_strided_slice %1525 {offsets = [5, 0, 0], sizes = [1, 8, 128], strides = [1, 1, 1]} : vector<8x8x128xf32> to vector<1x8x128xf32>
    %1559 = vector.broadcast %1557 : vector<8x1x128xf32> to vector<8x8x128xf32>
    %1560 = vector.broadcast %1558 : vector<1x8x128xf32> to vector<8x8x128xf32>
    %1561 = arith.mulf %1559, %1560 : vector<8x8x128xf32>
    %1562 = arith.addf %1556, %1561 : vector<8x8x128xf32>
    %1563 = vector.extract_strided_slice %5 {offsets = [0, 6, 0], sizes = [8, 1, 128], strides = [1, 1, 1]} : vector<8x8x128xf32> to vector<8x1x128xf32>
    %1564 = vector.extract_strided_slice %1525 {offsets = [6, 0, 0], sizes = [1, 8, 128], strides = [1, 1, 1]} : vector<8x8x128xf32> to vector<1x8x128xf32>
    %1565 = vector.broadcast %1563 : vector<8x1x128xf32> to vector<8x8x128xf32>
    %1566 = vector.broadcast %1564 : vector<1x8x128xf32> to vector<8x8x128xf32>
    %1567 = arith.mulf %1565, %1566 : vector<8x8x128xf32>
    %1568 = arith.addf %1562, %1567 : vector<8x8x128xf32>
    %1569 = vector.extract_strided_slice %5 {offsets = [0, 7, 0], sizes = [8, 1, 128], strides = [1, 1, 1]} : vector<8x8x128xf32> to vector<8x1x128xf32>
    %1570 = vector.extract_strided_slice %1525 {offsets = [7, 0, 0], sizes = [1, 8, 128], strides = [1, 1, 1]} : vector<8x8x128xf32> to vector<1x8x128xf32>
    %1571 = vector.broadcast %1569 : vector<8x1x128xf32> to vector<8x8x128xf32>
    %1572 = vector.broadcast %1570 : vector<1x8x128xf32> to vector<8x8x128xf32>
    %1573 = arith.mulf %1571, %1572 : vector<8x8x128xf32>
    %1574 = arith.addf %1568, %1573 : vector<8x8x128xf32>
    %1575 = vector.extract_strided_slice %7 {offsets = [0, 0, 0], sizes = [8, 1, 128], strides = [1, 1, 1]} : vector<8x8x128xf32> to vector<8x1x128xf32>
    %1576 = vector.extract_strided_slice %1527 {offsets = [0, 0, 0], sizes = [1, 8, 128], strides = [1, 1, 1]} : vector<8x8x128xf32> to vector<1x8x128xf32>
    %1577 = vector.broadcast %1575 : vector<8x1x128xf32> to vector<8x8x128xf32>
    %1578 = vector.broadcast %1576 : vector<1x8x128xf32> to vector<8x8x128xf32>
    %1579 = arith.mulf %1577, %1578 : vector<8x8x128xf32>
    %1580 = vector.extract_strided_slice %7 {offsets = [0, 1, 0], sizes = [8, 1, 128], strides = [1, 1, 1]} : vector<8x8x128xf32> to vector<8x1x128xf32>
    %1581 = vector.extract_strided_slice %1527 {offsets = [1, 0, 0], sizes = [1, 8, 128], strides = [1, 1, 1]} : vector<8x8x128xf32> to vector<1x8x128xf32>
    %1582 = vector.broadcast %1580 : vector<8x1x128xf32> to vector<8x8x128xf32>
    %1583 = vector.broadcast %1581 : vector<1x8x128xf32> to vector<8x8x128xf32>
    %1584 = arith.mulf %1582, %1583 : vector<8x8x128xf32>
    %1585 = arith.addf %1579, %1584 : vector<8x8x128xf32>
    %1586 = vector.extract_strided_slice %7 {offsets = [0, 2, 0], sizes = [8, 1, 128], strides = [1, 1, 1]} : vector<8x8x128xf32> to vector<8x1x128xf32>
    %1587 = vector.extract_strided_slice %1527 {offsets = [2, 0, 0], sizes = [1, 8, 128], strides = [1, 1, 1]} : vector<8x8x128xf32> to vector<1x8x128xf32>
    %1588 = vector.broadcast %1586 : vector<8x1x128xf32> to vector<8x8x128xf32>
    %1589 = vector.broadcast %1587 : vector<1x8x128xf32> to vector<8x8x128xf32>
    %1590 = arith.mulf %1588, %1589 : vector<8x8x128xf32>
    %1591 = arith.addf %1585, %1590 : vector<8x8x128xf32>
    %1592 = vector.extract_strided_slice %7 {offsets = [0, 3, 0], sizes = [8, 1, 128], strides = [1, 1, 1]} : vector<8x8x128xf32> to vector<8x1x128xf32>
    %1593 = vector.extract_strided_slice %1527 {offsets = [3, 0, 0], sizes = [1, 8, 128], strides = [1, 1, 1]} : vector<8x8x128xf32> to vector<1x8x128xf32>
    %1594 = vector.broadcast %1592 : vector<8x1x128xf32> to vector<8x8x128xf32>
    %1595 = vector.broadcast %1593 : vector<1x8x128xf32> to vector<8x8x128xf32>
    %1596 = arith.mulf %1594, %1595 : vector<8x8x128xf32>
    %1597 = arith.addf %1591, %1596 : vector<8x8x128xf32>
    %1598 = vector.extract_strided_slice %7 {offsets = [0, 4, 0], sizes = [8, 1, 128], strides = [1, 1, 1]} : vector<8x8x128xf32> to vector<8x1x128xf32>
    %1599 = vector.extract_strided_slice %1527 {offsets = [4, 0, 0], sizes = [1, 8, 128], strides = [1, 1, 1]} : vector<8x8x128xf32> to vector<1x8x128xf32>
    %1600 = vector.broadcast %1598 : vector<8x1x128xf32> to vector<8x8x128xf32>
    %1601 = vector.broadcast %1599 : vector<1x8x128xf32> to vector<8x8x128xf32>
    %1602 = arith.mulf %1600, %1601 : vector<8x8x128xf32>
    %1603 = arith.addf %1597, %1602 : vector<8x8x128xf32>
    %1604 = vector.extract_strided_slice %7 {offsets = [0, 5, 0], sizes = [8, 1, 128], strides = [1, 1, 1]} : vector<8x8x128xf32> to vector<8x1x128xf32>
    %1605 = vector.extract_strided_slice %1527 {offsets = [5, 0, 0], sizes = [1, 8, 128], strides = [1, 1, 1]} : vector<8x8x128xf32> to vector<1x8x128xf32>
    %1606 = vector.broadcast %1604 : vector<8x1x128xf32> to vector<8x8x128xf32>
    %1607 = vector.broadcast %1605 : vector<1x8x128xf32> to vector<8x8x128xf32>
    %1608 = arith.mulf %1606, %1607 : vector<8x8x128xf32>
    %1609 = arith.addf %1603, %1608 : vector<8x8x128xf32>
    %1610 = vector.extract_strided_slice %7 {offsets = [0, 6, 0], sizes = [8, 1, 128], strides = [1, 1, 1]} : vector<8x8x128xf32> to vector<8x1x128xf32>
    %1611 = vector.extract_strided_slice %1527 {offsets = [6, 0, 0], sizes = [1, 8, 128], strides = [1, 1, 1]} : vector<8x8x128xf32> to vector<1x8x128xf32>
    %1612 = vector.broadcast %1610 : vector<8x1x128xf32> to vector<8x8x128xf32>
    %1613 = vector.broadcast %1611 : vector<1x8x128xf32> to vector<8x8x128xf32>
    %1614 = arith.mulf %1612, %1613 : vector<8x8x128xf32>
    %1615 = arith.addf %1609, %1614 : vector<8x8x128xf32>
    %1616 = vector.extract_strided_slice %7 {offsets = [0, 7, 0], sizes = [8, 1, 128], strides = [1, 1, 1]} : vector<8x8x128xf32> to vector<8x1x128xf32>
    %1617 = vector.extract_strided_slice %1527 {offsets = [7, 0, 0], sizes = [1, 8, 128], strides = [1, 1, 1]} : vector<8x8x128xf32> to vector<1x8x128xf32>
    %1618 = vector.broadcast %1616 : vector<8x1x128xf32> to vector<8x8x128xf32>
    %1619 = vector.broadcast %1617 : vector<1x8x128xf32> to vector<8x8x128xf32>
    %1620 = arith.mulf %1618, %1619 : vector<8x8x128xf32>
    %1621 = arith.addf %1615, %1620 : vector<8x8x128xf32>
    %1622 = arith.addf %5, %7 : vector<8x8x128xf32>
    %1623 = arith.addf %1525, %1527 : vector<8x8x128xf32>
    %1624 = vector.extract_strided_slice %1622 {offsets = [0, 0, 0], sizes = [8, 1, 128], strides = [1, 1, 1]} : vector<8x8x128xf32> to vector<8x1x128xf32>
    %1625 = vector.extract_strided_slice %1623 {offsets = [0, 0, 0], sizes = [1, 8, 128], strides = [1, 1, 1]} : vector<8x8x128xf32> to vector<1x8x128xf32>
    %1626 = vector.broadcast %1624 : vector<8x1x128xf32> to vector<8x8x128xf32>
    %1627 = vector.broadcast %1625 : vector<1x8x128xf32> to vector<8x8x128xf32>
    %1628 = arith.mulf %1626, %1627 : vector<8x8x128xf32>
    %1629 = vector.extract_strided_slice %1622 {offsets = [0, 1, 0], sizes = [8, 1, 128], strides = [1, 1, 1]} : vector<8x8x128xf32> to vector<8x1x128xf32>
    %1630 = vector.extract_strided_slice %1623 {offsets = [1, 0, 0], sizes = [1, 8, 128], strides = [1, 1, 1]} : vector<8x8x128xf32> to vector<1x8x128xf32>
    %1631 = vector.broadcast %1629 : vector<8x1x128xf32> to vector<8x8x128xf32>
    %1632 = vector.broadcast %1630 : vector<1x8x128xf32> to vector<8x8x128xf32>
    %1633 = arith.mulf %1631, %1632 : vector<8x8x128xf32>
    %1634 = arith.addf %1628, %1633 : vector<8x8x128xf32>
    %1635 = vector.extract_strided_slice %1622 {offsets = [0, 2, 0], sizes = [8, 1, 128], strides = [1, 1, 1]} : vector<8x8x128xf32> to vector<8x1x128xf32>
    %1636 = vector.extract_strided_slice %1623 {offsets = [2, 0, 0], sizes = [1, 8, 128], strides = [1, 1, 1]} : vector<8x8x128xf32> to vector<1x8x128xf32>
    %1637 = vector.broadcast %1635 : vector<8x1x128xf32> to vector<8x8x128xf32>
    %1638 = vector.broadcast %1636 : vector<1x8x128xf32> to vector<8x8x128xf32>
    %1639 = arith.mulf %1637, %1638 : vector<8x8x128xf32>
    %1640 = arith.addf %1634, %1639 : vector<8x8x128xf32>
    %1641 = vector.extract_strided_slice %1622 {offsets = [0, 3, 0], sizes = [8, 1, 128], strides = [1, 1, 1]} : vector<8x8x128xf32> to vector<8x1x128xf32>
    %1642 = vector.extract_strided_slice %1623 {offsets = [3, 0, 0], sizes = [1, 8, 128], strides = [1, 1, 1]} : vector<8x8x128xf32> to vector<1x8x128xf32>
    %1643 = vector.broadcast %1641 : vector<8x1x128xf32> to vector<8x8x128xf32>
    %1644 = vector.broadcast %1642 : vector<1x8x128xf32> to vector<8x8x128xf32>
    %1645 = arith.mulf %1643, %1644 : vector<8x8x128xf32>
    %1646 = arith.addf %1640, %1645 : vector<8x8x128xf32>
    %1647 = vector.extract_strided_slice %1622 {offsets = [0, 4, 0], sizes = [8, 1, 128], strides = [1, 1, 1]} : vector<8x8x128xf32> to vector<8x1x128xf32>
    %1648 = vector.extract_strided_slice %1623 {offsets = [4, 0, 0], sizes = [1, 8, 128], strides = [1, 1, 1]} : vector<8x8x128xf32> to vector<1x8x128xf32>
    %1649 = vector.broadcast %1647 : vector<8x1x128xf32> to vector<8x8x128xf32>
    %1650 = vector.broadcast %1648 : vector<1x8x128xf32> to vector<8x8x128xf32>
    %1651 = arith.mulf %1649, %1650 : vector<8x8x128xf32>
    %1652 = arith.addf %1646, %1651 : vector<8x8x128xf32>
    %1653 = vector.extract_strided_slice %1622 {offsets = [0, 5, 0], sizes = [8, 1, 128], strides = [1, 1, 1]} : vector<8x8x128xf32> to vector<8x1x128xf32>
    %1654 = vector.extract_strided_slice %1623 {offsets = [5, 0, 0], sizes = [1, 8, 128], strides = [1, 1, 1]} : vector<8x8x128xf32> to vector<1x8x128xf32>
    %1655 = vector.broadcast %1653 : vector<8x1x128xf32> to vector<8x8x128xf32>
    %1656 = vector.broadcast %1654 : vector<1x8x128xf32> to vector<8x8x128xf32>
    %1657 = arith.mulf %1655, %1656 : vector<8x8x128xf32>
    %1658 = arith.addf %1652, %1657 : vector<8x8x128xf32>
    %1659 = vector.extract_strided_slice %1622 {offsets = [0, 6, 0], sizes = [8, 1, 128], strides = [1, 1, 1]} : vector<8x8x128xf32> to vector<8x1x128xf32>
    %1660 = vector.extract_strided_slice %1623 {offsets = [6, 0, 0], sizes = [1, 8, 128], strides = [1, 1, 1]} : vector<8x8x128xf32> to vector<1x8x128xf32>
    %1661 = vector.broadcast %1659 : vector<8x1x128xf32> to vector<8x8x128xf32>
    %1662 = vector.broadcast %1660 : vector<1x8x128xf32> to vector<8x8x128xf32>
    %1663 = arith.mulf %1661, %1662 : vector<8x8x128xf32>
    %1664 = arith.addf %1658, %1663 : vector<8x8x128xf32>
    %1665 = vector.extract_strided_slice %1622 {offsets = [0, 7, 0], sizes = [8, 1, 128], strides = [1, 1, 1]} : vector<8x8x128xf32> to vector<8x1x128xf32>
    %1666 = vector.extract_strided_slice %1623 {offsets = [7, 0, 0], sizes = [1, 8, 128], strides = [1, 1, 1]} : vector<8x8x128xf32> to vector<1x8x128xf32>
    %1667 = vector.broadcast %1665 : vector<8x1x128xf32> to vector<8x8x128xf32>
    %1668 = vector.broadcast %1666 : vector<1x8x128xf32> to vector<8x8x128xf32>
    %1669 = arith.mulf %1667, %1668 : vector<8x8x128xf32>
    %1670 = arith.addf %1664, %1669 : vector<8x8x128xf32>
    %1671 = arith.subf %1574, %1621 : vector<8x8x128xf32>
    %1672 = arith.subf %1670, %1574 : vector<8x8x128xf32>
    %1673 = arith.subf %1672, %1621 : vector<8x8x128xf32>
    %cst_28 = arith.constant 5.000000e-01 : f32
    %1674 = vector.broadcast %cst_28 : f32 to vector<8x8x128xf32>
    %1675 = arith.mulf %1671, %1674 : vector<8x8x128xf32>
    %1676 = arith.addf %12, %1675 : vector<8x8x128xf32>
    %cst_29 = arith.constant 5.000000e-01 : f32
    %1677 = vector.broadcast %cst_29 : f32 to vector<8x8x128xf32>
    %1678 = arith.mulf %1673, %1677 : vector<8x8x128xf32>
    %1679 = vector.extract_strided_slice %5 {offsets = [0, 0, 0], sizes = [8, 1, 128], strides = [1, 1, 1]} : vector<8x8x128xf32> to vector<8x1x128xf32>
    %1680 = vector.extract_strided_slice %1676 {offsets = [0, 0, 0], sizes = [1, 8, 128], strides = [1, 1, 1]} : vector<8x8x128xf32> to vector<1x8x128xf32>
    %1681 = vector.broadcast %1679 : vector<8x1x128xf32> to vector<8x8x128xf32>
    %1682 = vector.broadcast %1680 : vector<1x8x128xf32> to vector<8x8x128xf32>
    %1683 = arith.mulf %1681, %1682 : vector<8x8x128xf32>
    %1684 = vector.extract_strided_slice %5 {offsets = [0, 1, 0], sizes = [8, 1, 128], strides = [1, 1, 1]} : vector<8x8x128xf32> to vector<8x1x128xf32>
    %1685 = vector.extract_strided_slice %1676 {offsets = [1, 0, 0], sizes = [1, 8, 128], strides = [1, 1, 1]} : vector<8x8x128xf32> to vector<1x8x128xf32>
    %1686 = vector.broadcast %1684 : vector<8x1x128xf32> to vector<8x8x128xf32>
    %1687 = vector.broadcast %1685 : vector<1x8x128xf32> to vector<8x8x128xf32>
    %1688 = arith.mulf %1686, %1687 : vector<8x8x128xf32>
    %1689 = arith.addf %1683, %1688 : vector<8x8x128xf32>
    %1690 = vector.extract_strided_slice %5 {offsets = [0, 2, 0], sizes = [8, 1, 128], strides = [1, 1, 1]} : vector<8x8x128xf32> to vector<8x1x128xf32>
    %1691 = vector.extract_strided_slice %1676 {offsets = [2, 0, 0], sizes = [1, 8, 128], strides = [1, 1, 1]} : vector<8x8x128xf32> to vector<1x8x128xf32>
    %1692 = vector.broadcast %1690 : vector<8x1x128xf32> to vector<8x8x128xf32>
    %1693 = vector.broadcast %1691 : vector<1x8x128xf32> to vector<8x8x128xf32>
    %1694 = arith.mulf %1692, %1693 : vector<8x8x128xf32>
    %1695 = arith.addf %1689, %1694 : vector<8x8x128xf32>
    %1696 = vector.extract_strided_slice %5 {offsets = [0, 3, 0], sizes = [8, 1, 128], strides = [1, 1, 1]} : vector<8x8x128xf32> to vector<8x1x128xf32>
    %1697 = vector.extract_strided_slice %1676 {offsets = [3, 0, 0], sizes = [1, 8, 128], strides = [1, 1, 1]} : vector<8x8x128xf32> to vector<1x8x128xf32>
    %1698 = vector.broadcast %1696 : vector<8x1x128xf32> to vector<8x8x128xf32>
    %1699 = vector.broadcast %1697 : vector<1x8x128xf32> to vector<8x8x128xf32>
    %1700 = arith.mulf %1698, %1699 : vector<8x8x128xf32>
    %1701 = arith.addf %1695, %1700 : vector<8x8x128xf32>
    %1702 = vector.extract_strided_slice %5 {offsets = [0, 4, 0], sizes = [8, 1, 128], strides = [1, 1, 1]} : vector<8x8x128xf32> to vector<8x1x128xf32>
    %1703 = vector.extract_strided_slice %1676 {offsets = [4, 0, 0], sizes = [1, 8, 128], strides = [1, 1, 1]} : vector<8x8x128xf32> to vector<1x8x128xf32>
    %1704 = vector.broadcast %1702 : vector<8x1x128xf32> to vector<8x8x128xf32>
    %1705 = vector.broadcast %1703 : vector<1x8x128xf32> to vector<8x8x128xf32>
    %1706 = arith.mulf %1704, %1705 : vector<8x8x128xf32>
    %1707 = arith.addf %1701, %1706 : vector<8x8x128xf32>
    %1708 = vector.extract_strided_slice %5 {offsets = [0, 5, 0], sizes = [8, 1, 128], strides = [1, 1, 1]} : vector<8x8x128xf32> to vector<8x1x128xf32>
    %1709 = vector.extract_strided_slice %1676 {offsets = [5, 0, 0], sizes = [1, 8, 128], strides = [1, 1, 1]} : vector<8x8x128xf32> to vector<1x8x128xf32>
    %1710 = vector.broadcast %1708 : vector<8x1x128xf32> to vector<8x8x128xf32>
    %1711 = vector.broadcast %1709 : vector<1x8x128xf32> to vector<8x8x128xf32>
    %1712 = arith.mulf %1710, %1711 : vector<8x8x128xf32>
    %1713 = arith.addf %1707, %1712 : vector<8x8x128xf32>
    %1714 = vector.extract_strided_slice %5 {offsets = [0, 6, 0], sizes = [8, 1, 128], strides = [1, 1, 1]} : vector<8x8x128xf32> to vector<8x1x128xf32>
    %1715 = vector.extract_strided_slice %1676 {offsets = [6, 0, 0], sizes = [1, 8, 128], strides = [1, 1, 1]} : vector<8x8x128xf32> to vector<1x8x128xf32>
    %1716 = vector.broadcast %1714 : vector<8x1x128xf32> to vector<8x8x128xf32>
    %1717 = vector.broadcast %1715 : vector<1x8x128xf32> to vector<8x8x128xf32>
    %1718 = arith.mulf %1716, %1717 : vector<8x8x128xf32>
    %1719 = arith.addf %1713, %1718 : vector<8x8x128xf32>
    %1720 = vector.extract_strided_slice %5 {offsets = [0, 7, 0], sizes = [8, 1, 128], strides = [1, 1, 1]} : vector<8x8x128xf32> to vector<8x1x128xf32>
    %1721 = vector.extract_strided_slice %1676 {offsets = [7, 0, 0], sizes = [1, 8, 128], strides = [1, 1, 1]} : vector<8x8x128xf32> to vector<1x8x128xf32>
    %1722 = vector.broadcast %1720 : vector<8x1x128xf32> to vector<8x8x128xf32>
    %1723 = vector.broadcast %1721 : vector<1x8x128xf32> to vector<8x8x128xf32>
    %1724 = arith.mulf %1722, %1723 : vector<8x8x128xf32>
    %1725 = arith.addf %1719, %1724 : vector<8x8x128xf32>
    %1726 = vector.extract_strided_slice %7 {offsets = [0, 0, 0], sizes = [8, 1, 128], strides = [1, 1, 1]} : vector<8x8x128xf32> to vector<8x1x128xf32>
    %1727 = vector.extract_strided_slice %1678 {offsets = [0, 0, 0], sizes = [1, 8, 128], strides = [1, 1, 1]} : vector<8x8x128xf32> to vector<1x8x128xf32>
    %1728 = vector.broadcast %1726 : vector<8x1x128xf32> to vector<8x8x128xf32>
    %1729 = vector.broadcast %1727 : vector<1x8x128xf32> to vector<8x8x128xf32>
    %1730 = arith.mulf %1728, %1729 : vector<8x8x128xf32>
    %1731 = vector.extract_strided_slice %7 {offsets = [0, 1, 0], sizes = [8, 1, 128], strides = [1, 1, 1]} : vector<8x8x128xf32> to vector<8x1x128xf32>
    %1732 = vector.extract_strided_slice %1678 {offsets = [1, 0, 0], sizes = [1, 8, 128], strides = [1, 1, 1]} : vector<8x8x128xf32> to vector<1x8x128xf32>
    %1733 = vector.broadcast %1731 : vector<8x1x128xf32> to vector<8x8x128xf32>
    %1734 = vector.broadcast %1732 : vector<1x8x128xf32> to vector<8x8x128xf32>
    %1735 = arith.mulf %1733, %1734 : vector<8x8x128xf32>
    %1736 = arith.addf %1730, %1735 : vector<8x8x128xf32>
    %1737 = vector.extract_strided_slice %7 {offsets = [0, 2, 0], sizes = [8, 1, 128], strides = [1, 1, 1]} : vector<8x8x128xf32> to vector<8x1x128xf32>
    %1738 = vector.extract_strided_slice %1678 {offsets = [2, 0, 0], sizes = [1, 8, 128], strides = [1, 1, 1]} : vector<8x8x128xf32> to vector<1x8x128xf32>
    %1739 = vector.broadcast %1737 : vector<8x1x128xf32> to vector<8x8x128xf32>
    %1740 = vector.broadcast %1738 : vector<1x8x128xf32> to vector<8x8x128xf32>
    %1741 = arith.mulf %1739, %1740 : vector<8x8x128xf32>
    %1742 = arith.addf %1736, %1741 : vector<8x8x128xf32>
    %1743 = vector.extract_strided_slice %7 {offsets = [0, 3, 0], sizes = [8, 1, 128], strides = [1, 1, 1]} : vector<8x8x128xf32> to vector<8x1x128xf32>
    %1744 = vector.extract_strided_slice %1678 {offsets = [3, 0, 0], sizes = [1, 8, 128], strides = [1, 1, 1]} : vector<8x8x128xf32> to vector<1x8x128xf32>
    %1745 = vector.broadcast %1743 : vector<8x1x128xf32> to vector<8x8x128xf32>
    %1746 = vector.broadcast %1744 : vector<1x8x128xf32> to vector<8x8x128xf32>
    %1747 = arith.mulf %1745, %1746 : vector<8x8x128xf32>
    %1748 = arith.addf %1742, %1747 : vector<8x8x128xf32>
    %1749 = vector.extract_strided_slice %7 {offsets = [0, 4, 0], sizes = [8, 1, 128], strides = [1, 1, 1]} : vector<8x8x128xf32> to vector<8x1x128xf32>
    %1750 = vector.extract_strided_slice %1678 {offsets = [4, 0, 0], sizes = [1, 8, 128], strides = [1, 1, 1]} : vector<8x8x128xf32> to vector<1x8x128xf32>
    %1751 = vector.broadcast %1749 : vector<8x1x128xf32> to vector<8x8x128xf32>
    %1752 = vector.broadcast %1750 : vector<1x8x128xf32> to vector<8x8x128xf32>
    %1753 = arith.mulf %1751, %1752 : vector<8x8x128xf32>
    %1754 = arith.addf %1748, %1753 : vector<8x8x128xf32>
    %1755 = vector.extract_strided_slice %7 {offsets = [0, 5, 0], sizes = [8, 1, 128], strides = [1, 1, 1]} : vector<8x8x128xf32> to vector<8x1x128xf32>
    %1756 = vector.extract_strided_slice %1678 {offsets = [5, 0, 0], sizes = [1, 8, 128], strides = [1, 1, 1]} : vector<8x8x128xf32> to vector<1x8x128xf32>
    %1757 = vector.broadcast %1755 : vector<8x1x128xf32> to vector<8x8x128xf32>
    %1758 = vector.broadcast %1756 : vector<1x8x128xf32> to vector<8x8x128xf32>
    %1759 = arith.mulf %1757, %1758 : vector<8x8x128xf32>
    %1760 = arith.addf %1754, %1759 : vector<8x8x128xf32>
    %1761 = vector.extract_strided_slice %7 {offsets = [0, 6, 0], sizes = [8, 1, 128], strides = [1, 1, 1]} : vector<8x8x128xf32> to vector<8x1x128xf32>
    %1762 = vector.extract_strided_slice %1678 {offsets = [6, 0, 0], sizes = [1, 8, 128], strides = [1, 1, 1]} : vector<8x8x128xf32> to vector<1x8x128xf32>
    %1763 = vector.broadcast %1761 : vector<8x1x128xf32> to vector<8x8x128xf32>
    %1764 = vector.broadcast %1762 : vector<1x8x128xf32> to vector<8x8x128xf32>
    %1765 = arith.mulf %1763, %1764 : vector<8x8x128xf32>
    %1766 = arith.addf %1760, %1765 : vector<8x8x128xf32>
    %1767 = vector.extract_strided_slice %7 {offsets = [0, 7, 0], sizes = [8, 1, 128], strides = [1, 1, 1]} : vector<8x8x128xf32> to vector<8x1x128xf32>
    %1768 = vector.extract_strided_slice %1678 {offsets = [7, 0, 0], sizes = [1, 8, 128], strides = [1, 1, 1]} : vector<8x8x128xf32> to vector<1x8x128xf32>
    %1769 = vector.broadcast %1767 : vector<8x1x128xf32> to vector<8x8x128xf32>
    %1770 = vector.broadcast %1768 : vector<1x8x128xf32> to vector<8x8x128xf32>
    %1771 = arith.mulf %1769, %1770 : vector<8x8x128xf32>
    %1772 = arith.addf %1766, %1771 : vector<8x8x128xf32>
    %1773 = arith.addf %5, %7 : vector<8x8x128xf32>
    %1774 = arith.addf %1676, %1678 : vector<8x8x128xf32>
    %1775 = vector.extract_strided_slice %1773 {offsets = [0, 0, 0], sizes = [8, 1, 128], strides = [1, 1, 1]} : vector<8x8x128xf32> to vector<8x1x128xf32>
    %1776 = vector.extract_strided_slice %1774 {offsets = [0, 0, 0], sizes = [1, 8, 128], strides = [1, 1, 1]} : vector<8x8x128xf32> to vector<1x8x128xf32>
    %1777 = vector.broadcast %1775 : vector<8x1x128xf32> to vector<8x8x128xf32>
    %1778 = vector.broadcast %1776 : vector<1x8x128xf32> to vector<8x8x128xf32>
    %1779 = arith.mulf %1777, %1778 : vector<8x8x128xf32>
    %1780 = vector.extract_strided_slice %1773 {offsets = [0, 1, 0], sizes = [8, 1, 128], strides = [1, 1, 1]} : vector<8x8x128xf32> to vector<8x1x128xf32>
    %1781 = vector.extract_strided_slice %1774 {offsets = [1, 0, 0], sizes = [1, 8, 128], strides = [1, 1, 1]} : vector<8x8x128xf32> to vector<1x8x128xf32>
    %1782 = vector.broadcast %1780 : vector<8x1x128xf32> to vector<8x8x128xf32>
    %1783 = vector.broadcast %1781 : vector<1x8x128xf32> to vector<8x8x128xf32>
    %1784 = arith.mulf %1782, %1783 : vector<8x8x128xf32>
    %1785 = arith.addf %1779, %1784 : vector<8x8x128xf32>
    %1786 = vector.extract_strided_slice %1773 {offsets = [0, 2, 0], sizes = [8, 1, 128], strides = [1, 1, 1]} : vector<8x8x128xf32> to vector<8x1x128xf32>
    %1787 = vector.extract_strided_slice %1774 {offsets = [2, 0, 0], sizes = [1, 8, 128], strides = [1, 1, 1]} : vector<8x8x128xf32> to vector<1x8x128xf32>
    %1788 = vector.broadcast %1786 : vector<8x1x128xf32> to vector<8x8x128xf32>
    %1789 = vector.broadcast %1787 : vector<1x8x128xf32> to vector<8x8x128xf32>
    %1790 = arith.mulf %1788, %1789 : vector<8x8x128xf32>
    %1791 = arith.addf %1785, %1790 : vector<8x8x128xf32>
    %1792 = vector.extract_strided_slice %1773 {offsets = [0, 3, 0], sizes = [8, 1, 128], strides = [1, 1, 1]} : vector<8x8x128xf32> to vector<8x1x128xf32>
    %1793 = vector.extract_strided_slice %1774 {offsets = [3, 0, 0], sizes = [1, 8, 128], strides = [1, 1, 1]} : vector<8x8x128xf32> to vector<1x8x128xf32>
    %1794 = vector.broadcast %1792 : vector<8x1x128xf32> to vector<8x8x128xf32>
    %1795 = vector.broadcast %1793 : vector<1x8x128xf32> to vector<8x8x128xf32>
    %1796 = arith.mulf %1794, %1795 : vector<8x8x128xf32>
    %1797 = arith.addf %1791, %1796 : vector<8x8x128xf32>
    %1798 = vector.extract_strided_slice %1773 {offsets = [0, 4, 0], sizes = [8, 1, 128], strides = [1, 1, 1]} : vector<8x8x128xf32> to vector<8x1x128xf32>
    %1799 = vector.extract_strided_slice %1774 {offsets = [4, 0, 0], sizes = [1, 8, 128], strides = [1, 1, 1]} : vector<8x8x128xf32> to vector<1x8x128xf32>
    %1800 = vector.broadcast %1798 : vector<8x1x128xf32> to vector<8x8x128xf32>
    %1801 = vector.broadcast %1799 : vector<1x8x128xf32> to vector<8x8x128xf32>
    %1802 = arith.mulf %1800, %1801 : vector<8x8x128xf32>
    %1803 = arith.addf %1797, %1802 : vector<8x8x128xf32>
    %1804 = vector.extract_strided_slice %1773 {offsets = [0, 5, 0], sizes = [8, 1, 128], strides = [1, 1, 1]} : vector<8x8x128xf32> to vector<8x1x128xf32>
    %1805 = vector.extract_strided_slice %1774 {offsets = [5, 0, 0], sizes = [1, 8, 128], strides = [1, 1, 1]} : vector<8x8x128xf32> to vector<1x8x128xf32>
    %1806 = vector.broadcast %1804 : vector<8x1x128xf32> to vector<8x8x128xf32>
    %1807 = vector.broadcast %1805 : vector<1x8x128xf32> to vector<8x8x128xf32>
    %1808 = arith.mulf %1806, %1807 : vector<8x8x128xf32>
    %1809 = arith.addf %1803, %1808 : vector<8x8x128xf32>
    %1810 = vector.extract_strided_slice %1773 {offsets = [0, 6, 0], sizes = [8, 1, 128], strides = [1, 1, 1]} : vector<8x8x128xf32> to vector<8x1x128xf32>
    %1811 = vector.extract_strided_slice %1774 {offsets = [6, 0, 0], sizes = [1, 8, 128], strides = [1, 1, 1]} : vector<8x8x128xf32> to vector<1x8x128xf32>
    %1812 = vector.broadcast %1810 : vector<8x1x128xf32> to vector<8x8x128xf32>
    %1813 = vector.broadcast %1811 : vector<1x8x128xf32> to vector<8x8x128xf32>
    %1814 = arith.mulf %1812, %1813 : vector<8x8x128xf32>
    %1815 = arith.addf %1809, %1814 : vector<8x8x128xf32>
    %1816 = vector.extract_strided_slice %1773 {offsets = [0, 7, 0], sizes = [8, 1, 128], strides = [1, 1, 1]} : vector<8x8x128xf32> to vector<8x1x128xf32>
    %1817 = vector.extract_strided_slice %1774 {offsets = [7, 0, 0], sizes = [1, 8, 128], strides = [1, 1, 1]} : vector<8x8x128xf32> to vector<1x8x128xf32>
    %1818 = vector.broadcast %1816 : vector<8x1x128xf32> to vector<8x8x128xf32>
    %1819 = vector.broadcast %1817 : vector<1x8x128xf32> to vector<8x8x128xf32>
    %1820 = arith.mulf %1818, %1819 : vector<8x8x128xf32>
    %1821 = arith.addf %1815, %1820 : vector<8x8x128xf32>
    %1822 = arith.subf %1725, %1772 : vector<8x8x128xf32>
    %1823 = arith.subf %1821, %1725 : vector<8x8x128xf32>
    %1824 = arith.subf %1823, %1772 : vector<8x8x128xf32>
    %cst_30 = arith.constant 1.000000e+00 : f32
    %1825 = vector.broadcast %cst_30 : f32 to vector<8x8x128xf32>
    %1826 = arith.mulf %1822, %1825 : vector<8x8x128xf32>
    %1827 = arith.addf %12, %1826 : vector<8x8x128xf32>
    %cst_31 = arith.constant 1.000000e+00 : f32
    %1828 = vector.broadcast %cst_31 : f32 to vector<8x8x128xf32>
    %1829 = arith.mulf %1824, %1828 : vector<8x8x128xf32>
    %c0_32 = arith.constant 0 : index
    %c0_33 = arith.constant 0 : index
    %c0_34 = arith.constant 0 : index
    %1830 = vector.load %arg6[%c0_32, %c0_33, %c0_34] : memref<8x8x128xf32, #tpu.memory_space<vmem>>, vector<8x8x128xf32>
    tpu.vector_store %arg6[%c0_32, %c0_33, %c0_34], %1827 {strides = array<i32>} : memref<8x8x128xf32, #tpu.memory_space<vmem>>, vector<8x8x128xf32>,
    %c0_35 = arith.constant 0 : index
    %c0_36 = arith.constant 0 : index
    %c0_37 = arith.constant 0 : index
    %1831 = vector.load %arg7[%c0_35, %c0_36, %c0_37] : memref<8x8x128xf32, #tpu.memory_space<vmem>>, vector<8x8x128xf32>
    tpu.vector_store %arg7[%c0_35, %c0_36, %c0_37], %1829 {strides = array<i32>} : memref<8x8x128xf32, #tpu.memory_space<vmem>>, vector<8x8x128xf32>,
    %1832 = arith.index_cast %arg0 : i32 to index
    %1833 = memref.load %arg1[%1832] : memref<1xi32, #tpu.memory_space<smem>>
    %c0_i32 = arith.constant 0 : i32
    %1834 = arith.subi %1833, %c0_i32 : i32
    %c1_i32 = arith.constant 1 : i32
    %c1_i32_38 = arith.constant 1 : i32
    %1835 = arith.subi %c1_i32, %c1_i32_38 : i32
    %1836 = arith.addi %1834, %1835 : i32
    %c1_i32_39 = arith.constant 1 : i32
    %1837 = arith.divsi %1836, %c1_i32_39 : i32
    %c1_i32_40 = arith.constant 1 : i32
    %c0_i32_41 = arith.constant 0 : i32
    %c0_i32_42 = arith.constant 0 : i32
    %1838 = arith.subi %1837, %c0_i32_42 : i32
    %1839 = arith.addi %c0_i32_42, %1838 : i32
    %c1_i32_43 = arith.constant 1 : i32
    scf.for %arg8 = %c0_i32_42 to %1839 step %c1_i32_43  : i32 {
      %1840 = arith.muli %arg8, %c1_i32_40 : i32
      %1841 = arith.addi %c0_i32_41, %1840 : i32
      %c0_44 = arith.constant 0 : index
      %c0_45 = arith.constant 0 : index
      %c0_46 = arith.constant 0 : index
      %1842 = vector.load %arg6[%c0_44, %c0_45, %c0_46] : memref<8x8x128xf32, #tpu.memory_space<vmem>>, vector<8x8x128xf32>
      %c0_47 = arith.constant 0 : index
      %c0_48 = arith.constant 0 : index
      %c0_49 = arith.constant 0 : index
      %1843 = vector.load %arg7[%c0_47, %c0_48, %c0_49] : memref<8x8x128xf32, #tpu.memory_space<vmem>>, vector<8x8x128xf32>
      %1844 = vector.extract_strided_slice %1842 {offsets = [0, 0, 0], sizes = [8, 1, 128], strides = [1, 1, 1]} : vector<8x8x128xf32> to vector<8x1x128xf32>
      %1845 = vector.extract_strided_slice %1842 {offsets = [0, 0, 0], sizes = [1, 8, 128], strides = [1, 1, 1]} : vector<8x8x128xf32> to vector<1x8x128xf32>
      %1846 = vector.broadcast %1844 : vector<8x1x128xf32> to vector<8x8x128xf32>
      %1847 = vector.broadcast %1845 : vector<1x8x128xf32> to vector<8x8x128xf32>
      %1848 = arith.mulf %1846, %1847 : vector<8x8x128xf32>
      %1849 = vector.extract_strided_slice %1842 {offsets = [0, 1, 0], sizes = [8, 1, 128], strides = [1, 1, 1]} : vector<8x8x128xf32> to vector<8x1x128xf32>
      %1850 = vector.extract_strided_slice %1842 {offsets = [1, 0, 0], sizes = [1, 8, 128], strides = [1, 1, 1]} : vector<8x8x128xf32> to vector<1x8x128xf32>
      %1851 = vector.broadcast %1849 : vector<8x1x128xf32> to vector<8x8x128xf32>
      %1852 = vector.broadcast %1850 : vector<1x8x128xf32> to vector<8x8x128xf32>
      %1853 = arith.mulf %1851, %1852 : vector<8x8x128xf32>
      %1854 = arith.addf %1848, %1853 : vector<8x8x128xf32>
      %1855 = vector.extract_strided_slice %1842 {offsets = [0, 2, 0], sizes = [8, 1, 128], strides = [1, 1, 1]} : vector<8x8x128xf32> to vector<8x1x128xf32>
      %1856 = vector.extract_strided_slice %1842 {offsets = [2, 0, 0], sizes = [1, 8, 128], strides = [1, 1, 1]} : vector<8x8x128xf32> to vector<1x8x128xf32>
      %1857 = vector.broadcast %1855 : vector<8x1x128xf32> to vector<8x8x128xf32>
      %1858 = vector.broadcast %1856 : vector<1x8x128xf32> to vector<8x8x128xf32>
      %1859 = arith.mulf %1857, %1858 : vector<8x8x128xf32>
      %1860 = arith.addf %1854, %1859 : vector<8x8x128xf32>
      %1861 = vector.extract_strided_slice %1842 {offsets = [0, 3, 0], sizes = [8, 1, 128], strides = [1, 1, 1]} : vector<8x8x128xf32> to vector<8x1x128xf32>
      %1862 = vector.extract_strided_slice %1842 {offsets = [3, 0, 0], sizes = [1, 8, 128], strides = [1, 1, 1]} : vector<8x8x128xf32> to vector<1x8x128xf32>
      %1863 = vector.broadcast %1861 : vector<8x1x128xf32> to vector<8x8x128xf32>
      %1864 = vector.broadcast %1862 : vector<1x8x128xf32> to vector<8x8x128xf32>
      %1865 = arith.mulf %1863, %1864 : vector<8x8x128xf32>
      %1866 = arith.addf %1860, %1865 : vector<8x8x128xf32>
      %1867 = vector.extract_strided_slice %1842 {offsets = [0, 4, 0], sizes = [8, 1, 128], strides = [1, 1, 1]} : vector<8x8x128xf32> to vector<8x1x128xf32>
      %1868 = vector.extract_strided_slice %1842 {offsets = [4, 0, 0], sizes = [1, 8, 128], strides = [1, 1, 1]} : vector<8x8x128xf32> to vector<1x8x128xf32>
      %1869 = vector.broadcast %1867 : vector<8x1x128xf32> to vector<8x8x128xf32>
      %1870 = vector.broadcast %1868 : vector<1x8x128xf32> to vector<8x8x128xf32>
      %1871 = arith.mulf %1869, %1870 : vector<8x8x128xf32>
      %1872 = arith.addf %1866, %1871 : vector<8x8x128xf32>
      %1873 = vector.extract_strided_slice %1842 {offsets = [0, 5, 0], sizes = [8, 1, 128], strides = [1, 1, 1]} : vector<8x8x128xf32> to vector<8x1x128xf32>
      %1874 = vector.extract_strided_slice %1842 {offsets = [5, 0, 0], sizes = [1, 8, 128], strides = [1, 1, 1]} : vector<8x8x128xf32> to vector<1x8x128xf32>
      %1875 = vector.broadcast %1873 : vector<8x1x128xf32> to vector<8x8x128xf32>
      %1876 = vector.broadcast %1874 : vector<1x8x128xf32> to vector<8x8x128xf32>
      %1877 = arith.mulf %1875, %1876 : vector<8x8x128xf32>
      %1878 = arith.addf %1872, %1877 : vector<8x8x128xf32>
      %1879 = vector.extract_strided_slice %1842 {offsets = [0, 6, 0], sizes = [8, 1, 128], strides = [1, 1, 1]} : vector<8x8x128xf32> to vector<8x1x128xf32>
      %1880 = vector.extract_strided_slice %1842 {offsets = [6, 0, 0], sizes = [1, 8, 128], strides = [1, 1, 1]} : vector<8x8x128xf32> to vector<1x8x128xf32>
      %1881 = vector.broadcast %1879 : vector<8x1x128xf32> to vector<8x8x128xf32>
      %1882 = vector.broadcast %1880 : vector<1x8x128xf32> to vector<8x8x128xf32>
      %1883 = arith.mulf %1881, %1882 : vector<8x8x128xf32>
      %1884 = arith.addf %1878, %1883 : vector<8x8x128xf32>
      %1885 = vector.extract_strided_slice %1842 {offsets = [0, 7, 0], sizes = [8, 1, 128], strides = [1, 1, 1]} : vector<8x8x128xf32> to vector<8x1x128xf32>
      %1886 = vector.extract_strided_slice %1842 {offsets = [7, 0, 0], sizes = [1, 8, 128], strides = [1, 1, 1]} : vector<8x8x128xf32> to vector<1x8x128xf32>
      %1887 = vector.broadcast %1885 : vector<8x1x128xf32> to vector<8x8x128xf32>
      %1888 = vector.broadcast %1886 : vector<1x8x128xf32> to vector<8x8x128xf32>
      %1889 = arith.mulf %1887, %1888 : vector<8x8x128xf32>
      %1890 = arith.addf %1884, %1889 : vector<8x8x128xf32>
      %1891 = vector.extract_strided_slice %1843 {offsets = [0, 0, 0], sizes = [8, 1, 128], strides = [1, 1, 1]} : vector<8x8x128xf32> to vector<8x1x128xf32>
      %1892 = vector.extract_strided_slice %1843 {offsets = [0, 0, 0], sizes = [1, 8, 128], strides = [1, 1, 1]} : vector<8x8x128xf32> to vector<1x8x128xf32>
      %1893 = vector.broadcast %1891 : vector<8x1x128xf32> to vector<8x8x128xf32>
      %1894 = vector.broadcast %1892 : vector<1x8x128xf32> to vector<8x8x128xf32>
      %1895 = arith.mulf %1893, %1894 : vector<8x8x128xf32>
      %1896 = vector.extract_strided_slice %1843 {offsets = [0, 1, 0], sizes = [8, 1, 128], strides = [1, 1, 1]} : vector<8x8x128xf32> to vector<8x1x128xf32>
      %1897 = vector.extract_strided_slice %1843 {offsets = [1, 0, 0], sizes = [1, 8, 128], strides = [1, 1, 1]} : vector<8x8x128xf32> to vector<1x8x128xf32>
      %1898 = vector.broadcast %1896 : vector<8x1x128xf32> to vector<8x8x128xf32>
      %1899 = vector.broadcast %1897 : vector<1x8x128xf32> to vector<8x8x128xf32>
      %1900 = arith.mulf %1898, %1899 : vector<8x8x128xf32>
      %1901 = arith.addf %1895, %1900 : vector<8x8x128xf32>
      %1902 = vector.extract_strided_slice %1843 {offsets = [0, 2, 0], sizes = [8, 1, 128], strides = [1, 1, 1]} : vector<8x8x128xf32> to vector<8x1x128xf32>
      %1903 = vector.extract_strided_slice %1843 {offsets = [2, 0, 0], sizes = [1, 8, 128], strides = [1, 1, 1]} : vector<8x8x128xf32> to vector<1x8x128xf32>
      %1904 = vector.broadcast %1902 : vector<8x1x128xf32> to vector<8x8x128xf32>
      %1905 = vector.broadcast %1903 : vector<1x8x128xf32> to vector<8x8x128xf32>
      %1906 = arith.mulf %1904, %1905 : vector<8x8x128xf32>
      %1907 = arith.addf %1901, %1906 : vector<8x8x128xf32>
      %1908 = vector.extract_strided_slice %1843 {offsets = [0, 3, 0], sizes = [8, 1, 128], strides = [1, 1, 1]} : vector<8x8x128xf32> to vector<8x1x128xf32>
      %1909 = vector.extract_strided_slice %1843 {offsets = [3, 0, 0], sizes = [1, 8, 128], strides = [1, 1, 1]} : vector<8x8x128xf32> to vector<1x8x128xf32>
      %1910 = vector.broadcast %1908 : vector<8x1x128xf32> to vector<8x8x128xf32>
      %1911 = vector.broadcast %1909 : vector<1x8x128xf32> to vector<8x8x128xf32>
      %1912 = arith.mulf %1910, %1911 : vector<8x8x128xf32>
      %1913 = arith.addf %1907, %1912 : vector<8x8x128xf32>
      %1914 = vector.extract_strided_slice %1843 {offsets = [0, 4, 0], sizes = [8, 1, 128], strides = [1, 1, 1]} : vector<8x8x128xf32> to vector<8x1x128xf32>
      %1915 = vector.extract_strided_slice %1843 {offsets = [4, 0, 0], sizes = [1, 8, 128], strides = [1, 1, 1]} : vector<8x8x128xf32> to vector<1x8x128xf32>
      %1916 = vector.broadcast %1914 : vector<8x1x128xf32> to vector<8x8x128xf32>
      %1917 = vector.broadcast %1915 : vector<1x8x128xf32> to vector<8x8x128xf32>
      %1918 = arith.mulf %1916, %1917 : vector<8x8x128xf32>
      %1919 = arith.addf %1913, %1918 : vector<8x8x128xf32>
      %1920 = vector.extract_strided_slice %1843 {offsets = [0, 5, 0], sizes = [8, 1, 128], strides = [1, 1, 1]} : vector<8x8x128xf32> to vector<8x1x128xf32>
      %1921 = vector.extract_strided_slice %1843 {offsets = [5, 0, 0], sizes = [1, 8, 128], strides = [1, 1, 1]} : vector<8x8x128xf32> to vector<1x8x128xf32>
      %1922 = vector.broadcast %1920 : vector<8x1x128xf32> to vector<8x8x128xf32>
      %1923 = vector.broadcast %1921 : vector<1x8x128xf32> to vector<8x8x128xf32>
      %1924 = arith.mulf %1922, %1923 : vector<8x8x128xf32>
      %1925 = arith.addf %1919, %1924 : vector<8x8x128xf32>
      %1926 = vector.extract_strided_slice %1843 {offsets = [0, 6, 0], sizes = [8, 1, 128], strides = [1, 1, 1]} : vector<8x8x128xf32> to vector<8x1x128xf32>
      %1927 = vector.extract_strided_slice %1843 {offsets = [6, 0, 0], sizes = [1, 8, 128], strides = [1, 1, 1]} : vector<8x8x128xf32> to vector<1x8x128xf32>
      %1928 = vector.broadcast %1926 : vector<8x1x128xf32> to vector<8x8x128xf32>
      %1929 = vector.broadcast %1927 : vector<1x8x128xf32> to vector<8x8x128xf32>
      %1930 = arith.mulf %1928, %1929 : vector<8x8x128xf32>
      %1931 = arith.addf %1925, %1930 : vector<8x8x128xf32>
      %1932 = vector.extract_strided_slice %1843 {offsets = [0, 7, 0], sizes = [8, 1, 128], strides = [1, 1, 1]} : vector<8x8x128xf32> to vector<8x1x128xf32>
      %1933 = vector.extract_strided_slice %1843 {offsets = [7, 0, 0], sizes = [1, 8, 128], strides = [1, 1, 1]} : vector<8x8x128xf32> to vector<1x8x128xf32>
      %1934 = vector.broadcast %1932 : vector<8x1x128xf32> to vector<8x8x128xf32>
      %1935 = vector.broadcast %1933 : vector<1x8x128xf32> to vector<8x8x128xf32>
      %1936 = arith.mulf %1934, %1935 : vector<8x8x128xf32>
      %1937 = arith.addf %1931, %1936 : vector<8x8x128xf32>
      %1938 = arith.addf %1842, %1843 : vector<8x8x128xf32>
      %1939 = arith.addf %1842, %1843 : vector<8x8x128xf32>
      %1940 = vector.extract_strided_slice %1938 {offsets = [0, 0, 0], sizes = [8, 1, 128], strides = [1, 1, 1]} : vector<8x8x128xf32> to vector<8x1x128xf32>
      %1941 = vector.extract_strided_slice %1939 {offsets = [0, 0, 0], sizes = [1, 8, 128], strides = [1, 1, 1]} : vector<8x8x128xf32> to vector<1x8x128xf32>
      %1942 = vector.broadcast %1940 : vector<8x1x128xf32> to vector<8x8x128xf32>
      %1943 = vector.broadcast %1941 : vector<1x8x128xf32> to vector<8x8x128xf32>
      %1944 = arith.mulf %1942, %1943 : vector<8x8x128xf32>
      %1945 = vector.extract_strided_slice %1938 {offsets = [0, 1, 0], sizes = [8, 1, 128], strides = [1, 1, 1]} : vector<8x8x128xf32> to vector<8x1x128xf32>
      %1946 = vector.extract_strided_slice %1939 {offsets = [1, 0, 0], sizes = [1, 8, 128], strides = [1, 1, 1]} : vector<8x8x128xf32> to vector<1x8x128xf32>
      %1947 = vector.broadcast %1945 : vector<8x1x128xf32> to vector<8x8x128xf32>
      %1948 = vector.broadcast %1946 : vector<1x8x128xf32> to vector<8x8x128xf32>
      %1949 = arith.mulf %1947, %1948 : vector<8x8x128xf32>
      %1950 = arith.addf %1944, %1949 : vector<8x8x128xf32>
      %1951 = vector.extract_strided_slice %1938 {offsets = [0, 2, 0], sizes = [8, 1, 128], strides = [1, 1, 1]} : vector<8x8x128xf32> to vector<8x1x128xf32>
      %1952 = vector.extract_strided_slice %1939 {offsets = [2, 0, 0], sizes = [1, 8, 128], strides = [1, 1, 1]} : vector<8x8x128xf32> to vector<1x8x128xf32>
      %1953 = vector.broadcast %1951 : vector<8x1x128xf32> to vector<8x8x128xf32>
      %1954 = vector.broadcast %1952 : vector<1x8x128xf32> to vector<8x8x128xf32>
      %1955 = arith.mulf %1953, %1954 : vector<8x8x128xf32>
      %1956 = arith.addf %1950, %1955 : vector<8x8x128xf32>
      %1957 = vector.extract_strided_slice %1938 {offsets = [0, 3, 0], sizes = [8, 1, 128], strides = [1, 1, 1]} : vector<8x8x128xf32> to vector<8x1x128xf32>
      %1958 = vector.extract_strided_slice %1939 {offsets = [3, 0, 0], sizes = [1, 8, 128], strides = [1, 1, 1]} : vector<8x8x128xf32> to vector<1x8x128xf32>
      %1959 = vector.broadcast %1957 : vector<8x1x128xf32> to vector<8x8x128xf32>
      %1960 = vector.broadcast %1958 : vector<1x8x128xf32> to vector<8x8x128xf32>
      %1961 = arith.mulf %1959, %1960 : vector<8x8x128xf32>
      %1962 = arith.addf %1956, %1961 : vector<8x8x128xf32>
      %1963 = vector.extract_strided_slice %1938 {offsets = [0, 4, 0], sizes = [8, 1, 128], strides = [1, 1, 1]} : vector<8x8x128xf32> to vector<8x1x128xf32>
      %1964 = vector.extract_strided_slice %1939 {offsets = [4, 0, 0], sizes = [1, 8, 128], strides = [1, 1, 1]} : vector<8x8x128xf32> to vector<1x8x128xf32>
      %1965 = vector.broadcast %1963 : vector<8x1x128xf32> to vector<8x8x128xf32>
      %1966 = vector.broadcast %1964 : vector<1x8x128xf32> to vector<8x8x128xf32>
      %1967 = arith.mulf %1965, %1966 : vector<8x8x128xf32>
      %1968 = arith.addf %1962, %1967 : vector<8x8x128xf32>
      %1969 = vector.extract_strided_slice %1938 {offsets = [0, 5, 0], sizes = [8, 1, 128], strides = [1, 1, 1]} : vector<8x8x128xf32> to vector<8x1x128xf32>
      %1970 = vector.extract_strided_slice %1939 {offsets = [5, 0, 0], sizes = [1, 8, 128], strides = [1, 1, 1]} : vector<8x8x128xf32> to vector<1x8x128xf32>
      %1971 = vector.broadcast %1969 : vector<8x1x128xf32> to vector<8x8x128xf32>
      %1972 = vector.broadcast %1970 : vector<1x8x128xf32> to vector<8x8x128xf32>
      %1973 = arith.mulf %1971, %1972 : vector<8x8x128xf32>
      %1974 = arith.addf %1968, %1973 : vector<8x8x128xf32>
      %1975 = vector.extract_strided_slice %1938 {offsets = [0, 6, 0], sizes = [8, 1, 128], strides = [1, 1, 1]} : vector<8x8x128xf32> to vector<8x1x128xf32>
      %1976 = vector.extract_strided_slice %1939 {offsets = [6, 0, 0], sizes = [1, 8, 128], strides = [1, 1, 1]} : vector<8x8x128xf32> to vector<1x8x128xf32>
      %1977 = vector.broadcast %1975 : vector<8x1x128xf32> to vector<8x8x128xf32>
      %1978 = vector.broadcast %1976 : vector<1x8x128xf32> to vector<8x8x128xf32>
      %1979 = arith.mulf %1977, %1978 : vector<8x8x128xf32>
      %1980 = arith.addf %1974, %1979 : vector<8x8x128xf32>
      %1981 = vector.extract_strided_slice %1938 {offsets = [0, 7, 0], sizes = [8, 1, 128], strides = [1, 1, 1]} : vector<8x8x128xf32> to vector<8x1x128xf32>
      %1982 = vector.extract_strided_slice %1939 {offsets = [7, 0, 0], sizes = [1, 8, 128], strides = [1, 1, 1]} : vector<8x8x128xf32> to vector<1x8x128xf32>
      %1983 = vector.broadcast %1981 : vector<8x1x128xf32> to vector<8x8x128xf32>
      %1984 = vector.broadcast %1982 : vector<1x8x128xf32> to vector<8x8x128xf32>
      %1985 = arith.mulf %1983, %1984 : vector<8x8x128xf32>
      %1986 = arith.addf %1980, %1985 : vector<8x8x128xf32>
      %1987 = arith.subf %1890, %1937 : vector<8x8x128xf32>
      %1988 = arith.subf %1986, %1890 : vector<8x8x128xf32>
      %1989 = arith.subf %1988, %1937 : vector<8x8x128xf32>
      %c0_50 = arith.constant 0 : index
      %c0_51 = arith.constant 0 : index
      %1990 = vector.load %arg4[%c0_50, %c0_51] : memref<1x128xi32, #tpu.memory_space<vmem>>, vector<1x128xi32>
      %1991 = vector.shape_cast %1990 : vector<1x128xi32> to vector<1x1x128xi32>
      %1992 = vector.broadcast %1841 : i32 to vector<1x1x128xi32>
      %1993 = arith.cmpi slt, %1992, %1991 : vector<1x1x128xi32>
      %1994 = vector.shape_cast %1993 : vector<1x1x128xi1> to vector<1x1x128xi1>
      %1995 = vector.broadcast %1994 : vector<1x1x128xi1> to vector<8x8x128xi1>
      %1996 = arith.select %1995, %1987, %1842 : vector<8x8x128xi1>, vector<8x8x128xf32>
      %c0_52 = arith.constant 0 : index
      %c0_53 = arith.constant 0 : index
      %c0_54 = arith.constant 0 : index
      %1997 = vector.load %arg6[%c0_52, %c0_53, %c0_54] : memref<8x8x128xf32, #tpu.memory_space<vmem>>, vector<8x8x128xf32>
      tpu.vector_store %arg6[%c0_52, %c0_53, %c0_54], %1996 {strides = array<i32>} : memref<8x8x128xf32, #tpu.memory_space<vmem>>, vector<8x8x128xf32>,
      %1998 = vector.shape_cast %1993 : vector<1x1x128xi1> to vector<1x1x128xi1>
      %1999 = vector.broadcast %1998 : vector<1x1x128xi1> to vector<8x8x128xi1>
      %2000 = arith.select %1999, %1989, %1843 : vector<8x8x128xi1>, vector<8x8x128xf32>
      %c0_55 = arith.constant 0 : index
      %c0_56 = arith.constant 0 : index
      %c0_57 = arith.constant 0 : index
      %2001 = vector.load %arg7[%c0_55, %c0_56, %c0_57] : memref<8x8x128xf32, #tpu.memory_space<vmem>>, vector<8x8x128xf32>
      tpu.vector_store %arg7[%c0_55, %c0_56, %c0_57], %2000 {strides = array<i32>} : memref<8x8x128xf32, #tpu.memory_space<vmem>>, vector<8x8x128xf32>,
    }
    return
  }
  func.func @transform_0(%arg0: i32, %arg1: memref<1xi32, #tpu.memory_space<smem>>) -> (i32, i32, i32) {
    %c0_i32 = arith.constant 0 : i32
    %c0_i32_0 = arith.constant 0 : i32
    %c0_i32_1 = arith.constant 0 : i32
    return %c0_i32, %c0_i32_0, %arg0 : i32, i32, i32
  }
  func.func @transform_1(%arg0: i32, %arg1: memref<1xi32, #tpu.memory_space<smem>>) -> (i32, i32, i32) {
    %c0_i32 = arith.constant 0 : i32
    %c0_i32_0 = arith.constant 0 : i32
    %c0_i32_1 = arith.constant 0 : i32
    return %c0_i32, %c0_i32_0, %arg0 : i32, i32, i32
  }
  func.func @transform_2(%arg0: i32, %arg1: memref<1xi32, #tpu.memory_space<smem>>) -> (i32, i32) {
    %c0_i32 = arith.constant 0 : i32
    %c0_i32_0 = arith.constant 0 : i32
    return %c0_i32, %arg0 : i32, i32
  }
  func.func @transform_3(%arg0: i32, %arg1: memref<1xi32, #tpu.memory_space<smem>>) -> (i32, i32) {
    %c0_i32 = arith.constant 0 : i32
    %c0_i32_0 = arith.constant 0 : i32
    return %c0_i32, %arg0 : i32, i32
  }
  func.func @transform_4(%arg0: i32, %arg1: memref<1xi32, #tpu.memory_space<smem>>) -> (i32, i32, i32) {
    %c0_i32 = arith.constant 0 : i32
    %c0_i32_0 = arith.constant 0 : i32
    %c0_i32_1 = arith.constant 0 : i32
    return %c0_i32, %c0_i32_0, %arg0 : i32, i32, i32
  }
  func.func @transform_5(%arg0: i32, %arg1: memref<1xi32, #tpu.memory_space<smem>>) -> (i32, i32, i32) {
    %c0_i32 = arith.constant 0 : i32
    %c0_i32_0 = arith.constant 0 : i32
    %c0_i32_1 = arith.constant 0 : i32
    return %c0_i32, %c0_i32_0, %arg0 : i32, i32, i32
  }
}

</mosaic_0001>

<llo_original>
// kernel: base_projection_forward.2
$region0: #{base_projection_forward.2}
  #allocation0 [shape = 'u32[]', space=smem, size = 0x4, offset = 0x4, fixed_abs, tag = 'smem constant byte address 0x4 - core index']
  #allocation1 [shape = 'u32[144,128]{1,0:T(1,128)}', space=vmem, size = 0x12000, scoped, tag = 'internal scratch']
  %s0 = inlined_call_operand.vmem [shape: f32[8,6], index: 0, kind: input, shape index: {}]
  %s1 = inlined_call_operand.vmem [shape: f32[6,256], index: 1, kind: input, shape index: {}]
  %s2 = inlined_call_operand.vmem [shape: f32[8,256], index: 2, kind: output, shape index: {}]
  %s3 = sld [smem:[#allocation0]]
  $region18: #{base_projection_forward.2} parent=0
    _
  %s5 = ssub.s32 1, %s3
  %s6 = scalar_select 0, %s5, %s3
  // Predicated region
  $region2: #{base_projection_forward.2} parent=0 // pred_check
    _
  $region3: #{base_projection_forward.2} parent=0 // pred_check_branch
    %8 = sbr.rel (0) target = $region5
  $region4: #{base_projection_forward.2} parent=0 // pred_region
    _
  $region5: #{base_projection_forward.2} parent=0 // pred_fallthru
    _
  // Predicated region
  $region6: #{base_projection_forward.2} parent=0 // pred_check
    _
  $region7: #{base_projection_forward.2} parent=0 // pred_check_branch
    %10 = sbr.rel (0) target = $region9
  $region8: #{base_projection_forward.2} parent=0 // pred_region
    _
  $region9: #{base_projection_forward.2} parent=0 // pred_fallthru
    _
  %v11 = vld [vmem:[%s0] sm:$0xff]
  %v12 = vld [vmem:[%s1] sm:$0x3f]
  %v13 = vld [vmem:[%s1 + $0x8] sm:$0x3f]
  %vm14 = vcmask 48128
  %v16 = vsel %vm14, %v11, 0
  %vm18 = vcmask 1045504
  %v20 = vsel %vm18, %v12, 0
  %v23 = vsel %vm18, %v13, 0
  %25 = vmatprep.subr.mxu0 %v23
  %26 = vmatpush1.msra.mxu0 %v20
  %27 = vmatprep.subr.mxu0 0.0
  %28 = vmatpush1.msra.mxu0 0.0
  %29 = vmatprep.subr.mxu0 0.0
  %30 = vmatpush1.msra.mxu0 0.0
  %31 = vmatprep.subr.mxu0 0.0
  %32 = vmatpush1.msra.mxu0 0.0
  %33 = vmatprep.subr.mxu0 0.0
  %34 = vmatpush1.msra.mxu0 0.0
  %35 = vmatprep.subr.mxu0 0.0
  %36 = vmatpush1.msra.mxu0 0.0
  %37 = vmatprep.subr.mxu0 0.0
  %38 = vmatpush1.msra.mxu0 0.0
  %39 = vmatprep.subr.mxu0 0.0
  %40 = vmatpush1.msra.mxu0 0.0
  %41 = vmatprep.subr.mxu0 0.0
  %42 = vmatpush1.msra.mxu0 0.0
  %43 = vmatprep.subr.mxu0 0.0
  %44 = vmatpush1.msra.mxu0 0.0
  %45 = vmatprep.subr.mxu0 0.0
  %46 = vmatpush1.msra.mxu0 0.0
  %47 = vmatprep.subr.mxu0 0.0
  %48 = vmatpush1.msra.mxu0 0.0
  %49 = vmatprep.subr.mxu0 0.0
  %50 = vmatpush1.msra.mxu0 0.0
  %51 = vmatprep.subr.mxu0 0.0
  %52 = vmatpush1.msra.mxu0 0.0
  %53 = vmatprep.subr.mxu0 0.0
  %54 = vmatpush1.msra.mxu0 0.0
  %55 = vmatprep.subr.mxu0 0.0
  %56 = vmatpush1.msra.mxu0 0.0
  %57 = vmatprep.subr.mxu0 0.0
  %58 = vmatpush1.msra.mxu0 0.0
  %59 = vmatprep.subr.mxu0 0.0
  %60 = vmatpush1.msra.mxu0 0.0
  %61 = vmatprep.subr.mxu0 0.0
  %62 = vmatpush1.msra.mxu0 0.0
  %63 = vmatprep.subr.mxu0 0.0
  %64 = vmatpush1.msra.mxu0 0.0
  %65 = vmatprep.subr.mxu0 0.0
  %66 = vmatpush1.msra.mxu0 0.0
  %67 = vmatprep.subr.mxu0 0.0
  %68 = vmatpush1.msra.mxu0 0.0
  %69 = vmatprep.subr.mxu0 0.0
  %70 = vmatpush1.msra.mxu0 0.0
  %71 = vmatprep.subr.mxu0 0.0
  %72 = vmatpush1.msra.mxu0 0.0
  %73 = vmatprep.subr.mxu0 0.0
  %74 = vmatpush1.msra.mxu0 0.0
  %75 = vmatprep.subr.mxu0 0.0
  %76 = vmatpush1.msra.mxu0 0.0
  %77 = vmatprep.subr.mxu0 0.0
  %78 = vmatpush1.msra.mxu0 0.0
  %79 = vmatprep.subr.mxu0 0.0
  %80 = vmatpush1.msra.mxu0 0.0
  %81 = vmatprep.subr.mxu0 0.0
  %82 = vmatpush1.msra.mxu0 0.0
  %83 = vmatprep.subr.mxu0 0.0
  %84 = vmatpush1.msra.mxu0 0.0
  %85 = vmatprep.subr.mxu0 0.0
  %86 = vmatpush1.msra.mxu0 0.0
  %87 = vmatprep.subr.mxu0 0.0
  %88 = vmatpush1.msra.mxu0 0.0
  %89 = vmatprep.mubr.f32.mxu0 0.0
  %90 = vmatmul.mubr.f32.gmra.mrb[0].mxu0 %v16
  %v91 = vpop.f32.mrb[0].mxu0
  %v92 = vadd.f32 0.0, %v91
  %v93 = vpop.f32.mrb[0].mxu0
  %v94 = vadd.f32 0.0, %v93
  %95 = vdwg.mxu0
  %96 = vst [vmem:[%s2] sm:$0xff] %v92
  %97 = vst [vmem:[%s2 + $0x8] sm:$0xff] %v94
  // Predicated region
  $region10: #{base_projection_forward.2} parent=0 // pred_check
    _
  $region11: #{base_projection_forward.2} parent=0 // pred_check_branch
    %99 = sbr.rel (0) target = $region13
  $region12: #{base_projection_forward.2} parent=0 // pred_region
    _
  $region13: #{base_projection_forward.2} parent=0 // pred_fallthru
    _
  // Predicated region
  $region14: #{base_projection_forward.2} parent=0 // pred_check
    _
  $region15: #{base_projection_forward.2} parent=0 // pred_check_branch
    %101 = sbr.rel (0) target = $region17
  $region16: #{base_projection_forward.2} parent=0 // pred_region
    _
  $region17: #{base_projection_forward.2} parent=0 // pred_fallthru
    _

// kernel: base_projection_forward.3
$region0: #{base_projection_forward.3}
  #allocation0 [shape = 'u32[]', space=smem, size = 0x4, offset = 0x4, fixed_abs, tag = 'smem constant byte address 0x4 - core index']
  #allocation1 [shape = 'u32[144,128]{1,0:T(1,128)}', space=vmem, size = 0x12000, scoped, tag = 'internal scratch']
  #allocation2 [shape = 's32[1]{0}', space=sflag, size = 0x4, scoped, tag = 'scoped memory for base_projection_forward.3']
  #allocation3 [shape = 's32[1]{0:T(128)S(6)}', space=smem, size = 0x200, scoped, tag = 'prefetched SMEM operand 0']
  %s0 = inlined_call_operand.<no memory space> [shape: s32[1], index: 0, kind: input, shape index: {}]
  %s1 = inlined_call_operand.vmem [shape: f32[8,8,128], index: 1, kind: input, shape index: {}]
  %s2 = inlined_call_operand.vmem [shape: f32[8,8,128], index: 2, kind: input, shape index: {}]
  %s3 = inlined_call_operand.vmem [shape: s32[1,128], index: 3, kind: input, shape index: {}]
  %s4 = inlined_call_operand.vmem [shape: f32[1,128], index: 4, kind: input, shape index: {}]
  %s5 = inlined_call_operand.vmem [shape: f32[8,8,128], index: 5, kind: output, shape index: {0}]
  %s6 = inlined_call_operand.vmem [shape: f32[8,8,128], index: 6, kind: output, shape index: {1}]
  %7 = xla_tuple %s5, %s6
  %s8 = sld [smem:[#allocation0]]
  $region41: #{base_projection_forward.3} parent=0
    _
  %s10 = ssub.s32 1, %s8
  %s11 = scalar_select 0, %s10, %s8
  %12 = sst [smem:[#allocation3]] %s0
  // Predicated region
  $region2: #{base_projection_forward.3} parent=0 // pred_check
    _
  $region3: #{base_projection_forward.3} parent=0 // pred_check_branch
    %14 = sbr.rel (0) target = $region5
  $region4: #{base_projection_forward.3} parent=0 // pred_region
    _
  $region5: #{base_projection_forward.3} parent=0 // pred_fallthru
    _
  // Predicated region
  $region6: #{base_projection_forward.3} parent=0 // pred_check
    _
  $region7: #{base_projection_forward.3} parent=0 // pred_check_branch
    %16 = sbr.rel (0) target = $region9
  $region8: #{base_projection_forward.3} parent=0 // pred_region
    _
  $region9: #{base_projection_forward.3} parent=0 // pred_fallthru
    _
  // Predicated region
  $region10: #{base_projection_forward.3} parent=0 // pred_check
    _
  $region11: #{base_projection_forward.3} parent=0 // pred_check_branch
    %18 = sbr.rel (0) target = $region13
  $region12: #{base_projection_forward.3} parent=0 // pred_region
    _
  $region13: #{base_projection_forward.3} parent=0 // pred_fallthru
    _
  // Predicated region
  $region14: #{base_projection_forward.3} parent=0 // pred_check
    _
  $region15: #{base_projection_forward.3} parent=0 // pred_check_branch
    %20 = sbr.rel (0) target = $region17
  $region16: #{base_projection_forward.3} parent=0 // pred_region
    _
  $region17: #{base_projection_forward.3} parent=0 // pred_fallthru
    _
  %v21 = vld [vmem:[%s1] sm:$0xff]
  %v22 = vld [vmem:[%s1 + $0x8] sm:$0xff]
  %v23 = vld [vmem:[%s1 + $0x10] sm:$0xff]
  %v24 = vld [vmem:[%s1 + $0x18] sm:$0xff]
  %v25 = vld [vmem:[%s1 + $0x20] sm:$0xff]
  %v26 = vld [vmem:[%s1 + $0x28] sm:$0xff]
  %v27 = vld [vmem:[%s1 + $0x30] sm:$0xff]
  %v28 = vld [vmem:[%s1 + $0x38] sm:$0xff]
  %v29 = vld [vmem:[%s2] sm:$0xff]
  %v30 = vld [vmem:[%s2 + $0x8] sm:$0xff]
  %v31 = vld [vmem:[%s2 + $0x10] sm:$0xff]
  %v32 = vld [vmem:[%s2 + $0x18] sm:$0xff]
  %v33 = vld [vmem:[%s2 + $0x20] sm:$0xff]
  %v34 = vld [vmem:[%s2 + $0x28] sm:$0xff]
  %v35 = vld [vmem:[%s2 + $0x30] sm:$0xff]
  %v36 = vld [vmem:[%s2 + $0x38] sm:$0xff]
  %v37 = vld [vmem:[%s4] sm:$0x1]
  %v39 = vlaneseq
  %v40 = vshrl.u32 %v39, 7
  %v41 = vsub.s32 0, %v40
  %v42 = vrot.slane %v37, %v41
  %v44 = vmul.f32 %v21, %v42
  %v45 = vmul.f32 %v22, %v42
  %v46 = vmul.f32 %v23, %v42
  %v47 = vmul.f32 %v24, %v42
  %v48 = vmul.f32 %v25, %v42
  %v49 = vmul.f32 %v26, %v42
  %v50 = vmul.f32 %v27, %v42
  %v51 = vmul.f32 %v28, %v42
  %v52 = vmul.f32 %v29, %v42
  %v53 = vmul.f32 %v30, %v42
  %v54 = vmul.f32 %v31, %v42
  %v55 = vmul.f32 %v32, %v42
  %v56 = vmul.f32 %v33, %v42
  %v57 = vmul.f32 %v34, %v42
  %v58 = vmul.f32 %v35, %v42
  %v59 = vmul.f32 %v36, %v42
  %v60 = vlaneseq
  %v61 = vshrl.u32 %v60, 7
  %vm62 = vcmp.eq.s32.totalorder %v61, 0
  %vm63 = vcmp.eq.s32.totalorder %v61, 1
  %vm64 = vcmp.eq.s32.totalorder %v61, 2
  %vm65 = vcmp.eq.s32.totalorder %v61, 3
  %vm66 = vcmp.eq.s32.totalorder %v61, 4
  %vm67 = vcmp.eq.s32.totalorder %v61, 5
  %vm68 = vcmp.eq.s32.totalorder %v61, 6
  %vm69 = vcmp.eq.s32.totalorder %v61, 7
  %v70 = vsel %vm62, 1, 0
  %v71 = vsel %vm63, 1, 0
  %v72 = vsel %vm64, 1, 0
  %v73 = vsel %vm65, 1, 0
  %v74 = vsel %vm66, 1, 0
  %v75 = vsel %vm67, 1, 0
  %v76 = vsel %vm68, 1, 0
  %v77 = vsel %vm69, 1, 0
  %v78 = vcvt.s32.f32 %v70
  %v79 = vcvt.s32.f32 %v71
  %v80 = vcvt.s32.f32 %v72
  %v81 = vcvt.s32.f32 %v73
  %v82 = vcvt.s32.f32 %v74
  %v83 = vcvt.s32.f32 %v75
  %v84 = vcvt.s32.f32 %v76
  %v85 = vcvt.s32.f32 %v77
  %v86 = vmul.f32 %v44, 0.07692308
  %v87 = vmul.f32 %v45, 0.07692308
  %v88 = vmul.f32 %v46, 0.07692308
  %v89 = vmul.f32 %v47, 0.07692308
  %v90 = vmul.f32 %v48, 0.07692308
  %v91 = vmul.f32 %v49, 0.07692308
  %v92 = vmul.f32 %v50, 0.07692308
  %v93 = vmul.f32 %v51, 0.07692308
  %v94 = vadd.f32 %v78, %v86
  %v95 = vadd.f32 %v79, %v87
  %v96 = vadd.f32 %v80, %v88
  %v97 = vadd.f32 %v81, %v89
  %v98 = vadd.f32 %v82, %v90
  %v99 = vadd.f32 %v83, %v91
  %v100 = vadd.f32 %v84, %v92
  %v101 = vadd.f32 %v85, %v93
  %v102 = vmul.f32 %v52, 0.07692308
  %v103 = vmul.f32 %v53, 0.07692308
  %v104 = vmul.f32 %v54, 0.07692308
  %v105 = vmul.f32 %v55, 0.07692308
  %v106 = vmul.f32 %v56, 0.07692308
  %v107 = vmul.f32 %v57, 0.07692308
  %v108 = vmul.f32 %v58, 0.07692308
  %v109 = vmul.f32 %v59, 0.07692308
  %v110 = vlaneseq
  %v111 = vshrl.u32 %v110, 7
  %v112 = vsub.s32 0, %v111
  %v113 = vrot.slane %v44, %v112
  %v114 = vlaneseq
  %v115 = vshrl.u32 %v114, 7
  %v116 = vsub.s32 0, %v115
  %v117 = vrot.slane %v45, %v116
  %v118 = vlaneseq
  %v119 = vshrl.u32 %v118, 7
  %v120 = vsub.s32 0, %v119
  %v121 = vrot.slane %v46, %v120
  %v122 = vlaneseq
  %v123 = vshrl.u32 %v122, 7
  %v124 = vsub.s32 0, %v123
  %v125 = vrot.slane %v47, %v124
  %v126 = vlaneseq
  %v127 = vshrl.u32 %v126, 7
  %v128 = vsub.s32 0, %v127
  %v129 = vrot.slane %v48, %v128
  %v130 = vlaneseq
  %v131 = vshrl.u32 %v130, 7
  %v132 = vsub.s32 0, %v131
  %v133 = vrot.slane %v49, %v132
  %v134 = vlaneseq
  %v135 = vshrl.u32 %v134, 7
  %v136 = vsub.s32 0, %v135
  %v137 = vrot.slane %v50, %v136
  %v138 = vlaneseq
  %v139 = vshrl.u32 %v138, 7
  %v140 = vsub.s32 0, %v139
  %v141 = vrot.slane %v51, %v140
  %v142 = vmul.f32 %v113, %v94
  %v143 = vmul.f32 %v117, %v94
  %v144 = vmul.f32 %v121, %v94
  %v145 = vmul.f32 %v125, %v94
  %v146 = vmul.f32 %v129, %v94
  %v147 = vmul.f32 %v133, %v94
  %v148 = vmul.f32 %v137, %v94
  %v149 = vmul.f32 %v141, %v94
  %v150 = vlaneseq
  %v151 = vshrl.u32 %v150, 7
  %v152 = vsub.s32 1, %v151
  %v153 = vrot.slane %v44, %v152
  %v154 = vlaneseq
  %v155 = vshrl.u32 %v154, 7
  %v156 = vsub.s32 1, %v155
  %v157 = vrot.slane %v45, %v156
  %v158 = vlaneseq
  %v159 = vshrl.u32 %v158, 7
  %v160 = vsub.s32 1, %v159
  %v161 = vrot.slane %v46, %v160
  %v162 = vlaneseq
  %v163 = vshrl.u32 %v162, 7
  %v164 = vsub.s32 1, %v163
  %v165 = vrot.slane %v47, %v164
  %v166 = vlaneseq
  %v167 = vshrl.u32 %v166, 7
  %v168 = vsub.s32 1, %v167
  %v169 = vrot.slane %v48, %v168
  %v170 = vlaneseq
  %v171 = vshrl.u32 %v170, 7
  %v172 = vsub.s32 1, %v171
  %v173 = vrot.slane %v49, %v172
  %v174 = vlaneseq
  %v175 = vshrl.u32 %v174, 7
  %v176 = vsub.s32 1, %v175
  %v177 = vrot.slane %v50, %v176
  %v178 = vlaneseq
  %v179 = vshrl.u32 %v178, 7
  %v180 = vsub.s32 1, %v179
  %v181 = vrot.slane %v51, %v180
  %v182 = vmul.f32 %v153, %v95
  %v183 = vmul.f32 %v157, %v95
  %v184 = vmul.f32 %v161, %v95
  %v185 = vmul.f32 %v165, %v95
  %v186 = vmul.f32 %v169, %v95
  %v187 = vmul.f32 %v173, %v95
  %v188 = vmul.f32 %v177, %v95
  %v189 = vmul.f32 %v181, %v95
  %v190 = vadd.f32 %v142, %v182
  %v191 = vadd.f32 %v143, %v183
  %v192 = vadd.f32 %v144, %v184
  %v193 = vadd.f32 %v145, %v185
  %v194 = vadd.f32 %v146, %v186
  %v195 = vadd.f32 %v147, %v187
  %v196 = vadd.f32 %v148, %v188
  %v197 = vadd.f32 %v149, %v189
  %v198 = vlaneseq
  %v199 = vshrl.u32 %v198, 7
  %v200 = vsub.s32 2, %v199
  %v201 = vrot.slane %v44, %v200
  %v202 = vlaneseq
  %v203 = vshrl.u32 %v202, 7
  %v204 = vsub.s32 2, %v203
  %v205 = vrot.slane %v45, %v204
  %v206 = vlaneseq
  %v207 = vshrl.u32 %v206, 7
  %v208 = vsub.s32 2, %v207
  %v209 = vrot.slane %v46, %v208
  %v210 = vlaneseq
  %v211 = vshrl.u32 %v210, 7
  %v212 = vsub.s32 2, %v211
  %v213 = vrot.slane %v47, %v212
  %v214 = vlaneseq
  %v215 = vshrl.u32 %v214, 7
  %v216 = vsub.s32 2, %v215
  %v217 = vrot.slane %v48, %v216
  %v218 = vlaneseq
  %v219 = vshrl.u32 %v218, 7
  %v220 = vsub.s32 2, %v219
  %v221 = vrot.slane %v49, %v220
  %v222 = vlaneseq
  %v223 = vshrl.u32 %v222, 7
  %v224 = vsub.s32 2, %v223
  %v225 = vrot.slane %v50, %v224
  %v226 = vlaneseq
  %v227 = vshrl.u32 %v226, 7
  %v228 = vsub.s32 2, %v227
  %v229 = vrot.slane %v51, %v228
  %v230 = vmul.f32 %v201, %v96
  %v231 = vmul.f32 %v205, %v96
  %v232 = vmul.f32 %v209, %v96
  %v233 = vmul.f32 %v213, %v96
  %v234 = vmul.f32 %v217, %v96
  %v235 = vmul.f32 %v221, %v96
  %v236 = vmul.f32 %v225, %v96
  %v237 = vmul.f32 %v229, %v96
  %v238 = vadd.f32 %v190, %v230
  %v239 = vadd.f32 %v191, %v231
  %v240 = vadd.f32 %v192, %v232
  %v241 = vadd.f32 %v193, %v233
  %v242 = vadd.f32 %v194, %v234
  %v243 = vadd.f32 %v195, %v235
  %v244 = vadd.f32 %v196, %v236
  %v245 = vadd.f32 %v197, %v237
  %v246 = vlaneseq
  %v247 = vshrl.u32 %v246, 7
  %v248 = vsub.s32 3, %v247
  %v249 = vrot.slane %v44, %v248
  %v250 = vlaneseq
  %v251 = vshrl.u32 %v250, 7
  %v252 = vsub.s32 3, %v251
  %v253 = vrot.slane %v45, %v252
  %v254 = vlaneseq
  %v255 = vshrl.u32 %v254, 7
  %v256 = vsub.s32 3, %v255
  %v257 = vrot.slane %v46, %v256
  %v258 = vlaneseq
  %v259 = vshrl.u32 %v258, 7
  %v260 = vsub.s32 3, %v259
  %v261 = vrot.slane %v47, %v260
  %v262 = vlaneseq
  %v263 = vshrl.u32 %v262, 7
  %v264 = vsub.s32 3, %v263
  %v265 = vrot.slane %v48, %v264
  %v266 = vlaneseq
  %v267 = vshrl.u32 %v266, 7
  %v268 = vsub.s32 3, %v267
  %v269 = vrot.slane %v49, %v268
  %v270 = vlaneseq
  %v271 = vshrl.u32 %v270, 7
  %v272 = vsub.s32 3, %v271
  %v273 = vrot.slane %v50, %v272
  %v274 = vlaneseq
  %v275 = vshrl.u32 %v274, 7
  %v276 = vsub.s32 3, %v275
  %v277 = vrot.slane %v51, %v276
  %v278 = vmul.f32 %v249, %v97
  %v279 = vmul.f32 %v253, %v97
  %v280 = vmul.f32 %v257, %v97
  %v281 = vmul.f32 %v261, %v97
  %v282 = vmul.f32 %v265, %v97
  %v283 = vmul.f32 %v269, %v97
  %v284 = vmul.f32 %v273, %v97
  %v285 = vmul.f32 %v277, %v97
  %v286 = vadd.f32 %v238, %v278
  %v287 = vadd.f32 %v239, %v279
  %v288 = vadd.f32 %v240, %v280
  %v289 = vadd.f32 %v241, %v281
  %v290 = vadd.f32 %v242, %v282
  %v291 = vadd.f32 %v243, %v283
  %v292 = vadd.f32 %v244, %v284
  %v293 = vadd.f32 %v245, %v285
  %v294 = vlaneseq
  %v295 = vshrl.u32 %v294, 7
  %v296 = vsub.s32 4, %v295
  %v297 = vrot.slane %v44, %v296
  %v298 = vlaneseq
  %v299 = vshrl.u32 %v298, 7
  %v300 = vsub.s32 4, %v299
  %v301 = vrot.slane %v45, %v300
  %v302 = vlaneseq
  %v303 = vshrl.u32 %v302, 7
  %v304 = vsub.s32 4, %v303
  %v305 = vrot.slane %v46, %v304
  %v306 = vlaneseq
  %v307 = vshrl.u32 %v306, 7
  %v308 = vsub.s32 4, %v307
  %v309 = vrot.slane %v47, %v308
  %v310 = vlaneseq
  %v311 = vshrl.u32 %v310, 7
  %v312 = vsub.s32 4, %v311
  %v313 = vrot.slane %v48, %v312
  %v314 = vlaneseq
  %v315 = vshrl.u32 %v314, 7
  %v316 = vsub.s32 4, %v315
  %v317 = vrot.slane %v49, %v316
  %v318 = vlaneseq
  %v319 = vshrl.u32 %v318, 7
  %v320 = vsub.s32 4, %v319
  %v321 = vrot.slane %v50, %v320
  %v322 = vlaneseq
  %v323 = vshrl.u32 %v322, 7
  %v324 = vsub.s32 4, %v323
  %v325 = vrot.slane %v51, %v324
  %v326 = vmul.f32 %v297, %v98
  %v327 = vmul.f32 %v301, %v98
  %v328 = vmul.f32 %v305, %v98
  %v329 = vmul.f32 %v309, %v98
  %v330 = vmul.f32 %v313, %v98
  %v331 = vmul.f32 %v317, %v98
  %v332 = vmul.f32 %v321, %v98
  %v333 = vmul.f32 %v325, %v98
  %v334 = vadd.f32 %v286, %v326
  %v335 = vadd.f32 %v287, %v327
  %v336 = vadd.f32 %v288, %v328
  %v337 = vadd.f32 %v289, %v329
  %v338 = vadd.f32 %v290, %v330
  %v339 = vadd.f32 %v291, %v331
  %v340 = vadd.f32 %v292, %v332
  %v341 = vadd.f32 %v293, %v333
  %v342 = vlaneseq
  %v343 = vshrl.u32 %v342, 7
  %v344 = vsub.s32 5, %v343
  %v345 = vrot.slane %v44, %v344
  %v346 = vlaneseq
  %v347 = vshrl.u32 %v346, 7
  %v348 = vsub.s32 5, %v347
  %v349 = vrot.slane %v45, %v348
  %v350 = vlaneseq
  %v351 = vshrl.u32 %v350, 7
  %v352 = vsub.s32 5, %v351
  %v353 = vrot.slane %v46, %v352
  %v354 = vlaneseq
  %v355 = vshrl.u32 %v354, 7
  %v356 = vsub.s32 5, %v355
  %v357 = vrot.slane %v47, %v356
  %v358 = vlaneseq
  %v359 = vshrl.u32 %v358, 7
  %v360 = vsub.s32 5, %v359
  %v361 = vrot.slane %v48, %v360
  %v362 = vlaneseq
  %v363 = vshrl.u32 %v362, 7
  %v364 = vsub.s32 5, %v363
  %v365 = vrot.slane %v49, %v364
  %v366 = vlaneseq
  %v367 = vshrl.u32 %v366, 7
  %v368 = vsub.s32 5, %v367
  %v369 = vrot.slane %v50, %v368
  %v370 = vlaneseq
  %v371 = vshrl.u32 %v370, 7
  %v372 = vsub.s32 5, %v371
  %v373 = vrot.slane %v51, %v372
  %v374 = vmul.f32 %v345, %v99
  %v375 = vmul.f32 %v349, %v99
  %v376 = vmul.f32 %v353, %v99
  %v377 = vmul.f32 %v357, %v99
  %v378 = vmul.f32 %v361, %v99
  %v379 = vmul.f32 %v365, %v99
  %v380 = vmul.f32 %v369, %v99
  %v381 = vmul.f32 %v373, %v99
  %v382 = vadd.f32 %v334, %v374
  %v383 = vadd.f32 %v335, %v375
  %v384 = vadd.f32 %v336, %v376
  %v385 = vadd.f32 %v337, %v377
  %v386 = vadd.f32 %v338, %v378
  %v387 = vadd.f32 %v339, %v379
  %v388 = vadd.f32 %v340, %v380
  %v389 = vadd.f32 %v341, %v381
  %v390 = vlaneseq
  %v391 = vshrl.u32 %v390, 7
  %v392 = vsub.s32 6, %v391
  %v393 = vrot.slane %v44, %v392
  %v394 = vlaneseq
  %v395 = vshrl.u32 %v394, 7
  %v396 = vsub.s32 6, %v395
  %v397 = vrot.slane %v45, %v396
  %v398 = vlaneseq
  %v399 = vshrl.u32 %v398, 7
  %v400 = vsub.s32 6, %v399
  %v401 = vrot.slane %v46, %v400
  %v402 = vlaneseq
  %v403 = vshrl.u32 %v402, 7
  %v404 = vsub.s32 6, %v403
  %v405 = vrot.slane %v47, %v404
  %v406 = vlaneseq
  %v407 = vshrl.u32 %v406, 7
  %v408 = vsub.s32 6, %v407
  %v409 = vrot.slane %v48, %v408
  %v410 = vlaneseq
  %v411 = vshrl.u32 %v410, 7
  %v412 = vsub.s32 6, %v411
  %v413 = vrot.slane %v49, %v412
  %v414 = vlaneseq
  %v415 = vshrl.u32 %v414, 7
  %v416 = vsub.s32 6, %v415
  %v417 = vrot.slane %v50, %v416
  %v418 = vlaneseq
  %v419 = vshrl.u32 %v418, 7
  %v420 = vsub.s32 6, %v419
  %v421 = vrot.slane %v51, %v420
  %v422 = vmul.f32 %v393, %v100
  %v423 = vmul.f32 %v397, %v100
  %v424 = vmul.f32 %v401, %v100
  %v425 = vmul.f32 %v405, %v100
  %v426 = vmul.f32 %v409, %v100
  %v427 = vmul.f32 %v413, %v100
  %v428 = vmul.f32 %v417, %v100
  %v429 = vmul.f32 %v421, %v100
  %v430 = vadd.f32 %v382, %v422
  %v431 = vadd.f32 %v383, %v423
  %v432 = vadd.f32 %v384, %v424
  %v433 = vadd.f32 %v385, %v425
  %v434 = vadd.f32 %v386, %v426
  %v435 = vadd.f32 %v387, %v427
  %v436 = vadd.f32 %v388, %v428
  %v437 = vadd.f32 %v389, %v429
  %v438 = vlaneseq
  %v439 = vshrl.u32 %v438, 7
  %v440 = vsub.s32 7, %v439
  %v441 = vrot.slane %v44, %v440
  %v442 = vlaneseq
  %v443 = vshrl.u32 %v442, 7
  %v444 = vsub.s32 7, %v443
  %v445 = vrot.slane %v45, %v444
  %v446 = vlaneseq
  %v447 = vshrl.u32 %v446, 7
  %v448 = vsub.s32 7, %v447
  %v449 = vrot.slane %v46, %v448
  %v450 = vlaneseq
  %v451 = vshrl.u32 %v450, 7
  %v452 = vsub.s32 7, %v451
  %v453 = vrot.slane %v47, %v452
  %v454 = vlaneseq
  %v455 = vshrl.u32 %v454, 7
  %v456 = vsub.s32 7, %v455
  %v457 = vrot.slane %v48, %v456
  %v458 = vlaneseq
  %v459 = vshrl.u32 %v458, 7
  %v460 = vsub.s32 7, %v459
  %v461 = vrot.slane %v49, %v460
  %v462 = vlaneseq
  %v463 = vshrl.u32 %v462, 7
  %v464 = vsub.s32 7, %v463
  %v465 = vrot.slane %v50, %v464
  %v466 = vlaneseq
  %v467 = vshrl.u32 %v466, 7
  %v468 = vsub.s32 7, %v467
  %v469 = vrot.slane %v51, %v468
  %v470 = vmul.f32 %v441, %v101
  %v471 = vmul.f32 %v445, %v101
  %v472 = vmul.f32 %v449, %v101
  %v473 = vmul.f32 %v453, %v101
  %v474 = vmul.f32 %v457, %v101
  %v475 = vmul.f32 %v461, %v101
  %v476 = vmul.f32 %v465, %v101
  %v477 = vmul.f32 %v469, %v101
  %v478 = vadd.f32 %v430, %v470
  %v479 = vadd.f32 %v431, %v471
  %v480 = vadd.f32 %v432, %v472
  %v481 = vadd.f32 %v433, %v473
  %v482 = vadd.f32 %v434, %v474
  %v483 = vadd.f32 %v435, %v475
  %v484 = vadd.f32 %v436, %v476
  %v485 = vadd.f32 %v437, %v477
  %v486 = vlaneseq
  %v487 = vshrl.u32 %v486, 7
  %v488 = vsub.s32 0, %v487
  %v489 = vrot.slane %v52, %v488
  %v490 = vlaneseq
  %v491 = vshrl.u32 %v490, 7
  %v492 = vsub.s32 0, %v491
  %v493 = vrot.slane %v53, %v492
  %v494 = vlaneseq
  %v495 = vshrl.u32 %v494, 7
  %v496 = vsub.s32 0, %v495
  %v497 = vrot.slane %v54, %v496
  %v498 = vlaneseq
  %v499 = vshrl.u32 %v498, 7
  %v500 = vsub.s32 0, %v499
  %v501 = vrot.slane %v55, %v500
  %v502 = vlaneseq
  %v503 = vshrl.u32 %v502, 7
  %v504 = vsub.s32 0, %v503
  %v505 = vrot.slane %v56, %v504
  %v506 = vlaneseq
  %v507 = vshrl.u32 %v506, 7
  %v508 = vsub.s32 0, %v507
  %v509 = vrot.slane %v57, %v508
  %v510 = vlaneseq
  %v511 = vshrl.u32 %v510, 7
  %v512 = vsub.s32 0, %v511
  %v513 = vrot.slane %v58, %v512
  %v514 = vlaneseq
  %v515 = vshrl.u32 %v514, 7
  %v516 = vsub.s32 0, %v515
  %v517 = vrot.slane %v59, %v516
  %v518 = vmul.f32 %v489, %v102
  %v519 = vmul.f32 %v493, %v102
  %v520 = vmul.f32 %v497, %v102
  %v521 = vmul.f32 %v501, %v102
  %v522 = vmul.f32 %v505, %v102
  %v523 = vmul.f32 %v509, %v102
  %v524 = vmul.f32 %v513, %v102
  %v525 = vmul.f32 %v517, %v102
  %v526 = vlaneseq
  %v527 = vshrl.u32 %v526, 7
  %v528 = vsub.s32 1, %v527
  %v529 = vrot.slane %v52, %v528
  %v530 = vlaneseq
  %v531 = vshrl.u32 %v530, 7
  %v532 = vsub.s32 1, %v531
  %v533 = vrot.slane %v53, %v532
  %v534 = vlaneseq
  %v535 = vshrl.u32 %v534, 7
  %v536 = vsub.s32 1, %v535
  %v537 = vrot.slane %v54, %v536
  %v538 = vlaneseq
  %v539 = vshrl.u32 %v538, 7
  %v540 = vsub.s32 1, %v539
  %v541 = vrot.slane %v55, %v540
  %v542 = vlaneseq
  %v543 = vshrl.u32 %v542, 7
  %v544 = vsub.s32 1, %v543
  %v545 = vrot.slane %v56, %v544
  %v546 = vlaneseq
  %v547 = vshrl.u32 %v546, 7
  %v548 = vsub.s32 1, %v547
  %v549 = vrot.slane %v57, %v548
  %v550 = vlaneseq
  %v551 = vshrl.u32 %v550, 7
  %v552 = vsub.s32 1, %v551
  %v553 = vrot.slane %v58, %v552
  %v554 = vlaneseq
  %v555 = vshrl.u32 %v554, 7
  %v556 = vsub.s32 1, %v555
  %v557 = vrot.slane %v59, %v556
  %v558 = vmul.f32 %v529, %v103
  %v559 = vmul.f32 %v533, %v103
  %v560 = vmul.f32 %v537, %v103
  %v561 = vmul.f32 %v541, %v103
  %v562 = vmul.f32 %v545, %v103
  %v563 = vmul.f32 %v549, %v103
  %v564 = vmul.f32 %v553, %v103
  %v565 = vmul.f32 %v557, %v103
  %v566 = vadd.f32 %v518, %v558
  %v567 = vadd.f32 %v519, %v559
  %v568 = vadd.f32 %v520, %v560
  %v569 = vadd.f32 %v521, %v561
  %v570 = vadd.f32 %v522, %v562
  %v571 = vadd.f32 %v523, %v563
  %v572 = vadd.f32 %v524, %v564
  %v573 = vadd.f32 %v525, %v565
  %v574 = vlaneseq
  %v575 = vshrl.u32 %v574, 7
  %v576 = vsub.s32 2, %v575
  %v577 = vrot.slane %v52, %v576
  %v578 = vlaneseq
  %v579 = vshrl.u32 %v578, 7
  %v580 = vsub.s32 2, %v579
  %v581 = vrot.slane %v53, %v580
  %v582 = vlaneseq
  %v583 = vshrl.u32 %v582, 7
  %v584 = vsub.s32 2, %v583
  %v585 = vrot.slane %v54, %v584
  %v586 = vlaneseq
  %v587 = vshrl.u32 %v586, 7
  %v588 = vsub.s32 2, %v587
  %v589 = vrot.slane %v55, %v588
  %v590 = vlaneseq
  %v591 = vshrl.u32 %v590, 7
  %v592 = vsub.s32 2, %v591
  %v593 = vrot.slane %v56, %v592
  %v594 = vlaneseq
  %v595 = vshrl.u32 %v594, 7
  %v596 = vsub.s32 2, %v595
  %v597 = vrot.slane %v57, %v596
  %v598 = vlaneseq
  %v599 = vshrl.u32 %v598, 7
  %v600 = vsub.s32 2, %v599
  %v601 = vrot.slane %v58, %v600
  %v602 = vlaneseq
  %v603 = vshrl.u32 %v602, 7
  %v604 = vsub.s32 2, %v603
  %v605 = vrot.slane %v59, %v604
  %v606 = vmul.f32 %v577, %v104
  %v607 = vmul.f32 %v581, %v104
  %v608 = vmul.f32 %v585, %v104
  %v609 = vmul.f32 %v589, %v104
  %v610 = vmul.f32 %v593, %v104
  %v611 = vmul.f32 %v597, %v104
  %v612 = vmul.f32 %v601, %v104
  %v613 = vmul.f32 %v605, %v104
  %v614 = vadd.f32 %v566, %v606
  %v615 = vadd.f32 %v567, %v607
  %v616 = vadd.f32 %v568, %v608
  %v617 = vadd.f32 %v569, %v609
  %v618 = vadd.f32 %v570, %v610
  %v619 = vadd.f32 %v571, %v611
  %v620 = vadd.f32 %v572, %v612
  %v621 = vadd.f32 %v573, %v613
  %v622 = vlaneseq
  %v623 = vshrl.u32 %v622, 7
  %v624 = vsub.s32 3, %v623
  %v625 = vrot.slane %v52, %v624
  %v626 = vlaneseq
  %v627 = vshrl.u32 %v626, 7
  %v628 = vsub.s32 3, %v627
  %v629 = vrot.slane %v53, %v628
  %v630 = vlaneseq
  %v631 = vshrl.u32 %v630, 7
  %v632 = vsub.s32 3, %v631
  %v633 = vrot.slane %v54, %v632
  %v634 = vlaneseq
  %v635 = vshrl.u32 %v634, 7
  %v636 = vsub.s32 3, %v635
  %v637 = vrot.slane %v55, %v636
  %v638 = vlaneseq
  %v639 = vshrl.u32 %v638, 7
  %v640 = vsub.s32 3, %v639
  %v641 = vrot.slane %v56, %v640
  %v642 = vlaneseq
  %v643 = vshrl.u32 %v642, 7
  %v644 = vsub.s32 3, %v643
  %v645 = vrot.slane %v57, %v644
  %v646 = vlaneseq
  %v647 = vshrl.u32 %v646, 7
  %v648 = vsub.s32 3, %v647
  %v649 = vrot.slane %v58, %v648
  %v650 = vlaneseq
  %v651 = vshrl.u32 %v650, 7
  %v652 = vsub.s32 3, %v651
  %v653 = vrot.slane %v59, %v652
  %v654 = vmul.f32 %v625, %v105
  %v655 = vmul.f32 %v629, %v105
  %v656 = vmul.f32 %v633, %v105
  %v657 = vmul.f32 %v637, %v105
  %v658 = vmul.f32 %v641, %v105
  %v659 = vmul.f32 %v645, %v105
  %v660 = vmul.f32 %v649, %v105
  %v661 = vmul.f32 %v653, %v105
  %v662 = vadd.f32 %v614, %v654
  %v663 = vadd.f32 %v615, %v655
  %v664 = vadd.f32 %v616, %v656
  %v665 = vadd.f32 %v617, %v657
  %v666 = vadd.f32 %v618, %v658
  %v667 = vadd.f32 %v619, %v659
  %v668 = vadd.f32 %v620, %v660
  %v669 = vadd.f32 %v621, %v661
  %v670 = vlaneseq
  %v671 = vshrl.u32 %v670, 7
  %v672 = vsub.s32 4, %v671
  %v673 = vrot.slane %v52, %v672
  %v674 = vlaneseq
  %v675 = vshrl.u32 %v674, 7
  %v676 = vsub.s32 4, %v675
  %v677 = vrot.slane %v53, %v676
  %v678 = vlaneseq
  %v679 = vshrl.u32 %v678, 7
  %v680 = vsub.s32 4, %v679
  %v681 = vrot.slane %v54, %v680
  %v682 = vlaneseq
  %v683 = vshrl.u32 %v682, 7
  %v684 = vsub.s32 4, %v683
  %v685 = vrot.slane %v55, %v684
  %v686 = vlaneseq
  %v687 = vshrl.u32 %v686, 7
  %v688 = vsub.s32 4, %v687
  %v689 = vrot.slane %v56, %v688
  %v690 = vlaneseq
  %v691 = vshrl.u32 %v690, 7
  %v692 = vsub.s32 4, %v691
  %v693 = vrot.slane %v57, %v692
  %v694 = vlaneseq
  %v695 = vshrl.u32 %v694, 7
  %v696 = vsub.s32 4, %v695
  %v697 = vrot.slane %v58, %v696
  %v698 = vlaneseq
  %v699 = vshrl.u32 %v698, 7
  %v700 = vsub.s32 4, %v699
  %v701 = vrot.slane %v59, %v700
  %v702 = vmul.f32 %v673, %v106
  %v703 = vmul.f32 %v677, %v106
  %v704 = vmul.f32 %v681, %v106
  %v705 = vmul.f32 %v685, %v106
  %v706 = vmul.f32 %v689, %v106
  %v707 = vmul.f32 %v693, %v106
  %v708 = vmul.f32 %v697, %v106
  %v709 = vmul.f32 %v701, %v106
  %v710 = vadd.f32 %v662, %v702
  %v711 = vadd.f32 %v663, %v703
  %v712 = vadd.f32 %v664, %v704
  %v713 = vadd.f32 %v665, %v705
  %v714 = vadd.f32 %v666, %v706
  %v715 = vadd.f32 %v667, %v707
  %v716 = vadd.f32 %v668, %v708
  %v717 = vadd.f32 %v669, %v709
  %v718 = vlaneseq
  %v719 = vshrl.u32 %v718, 7
  %v720 = vsub.s32 5, %v719
  %v721 = vrot.slane %v52, %v720
  %v722 = vlaneseq
  %v723 = vshrl.u32 %v722, 7
  %v724 = vsub.s32 5, %v723
  %v725 = vrot.slane %v53, %v724
  %v726 = vlaneseq
  %v727 = vshrl.u32 %v726, 7
  %v728 = vsub.s32 5, %v727
  %v729 = vrot.slane %v54, %v728
  %v730 = vlaneseq
  %v731 = vshrl.u32 %v730, 7
  %v732 = vsub.s32 5, %v731
  %v733 = vrot.slane %v55, %v732
  %v734 = vlaneseq
  %v735 = vshrl.u32 %v734, 7
  %v736 = vsub.s32 5, %v735
  %v737 = vrot.slane %v56, %v736
  %v738 = vlaneseq
  %v739 = vshrl.u32 %v738, 7
  %v740 = vsub.s32 5, %v739
  %v741 = vrot.slane %v57, %v740
  %v742 = vlaneseq
  %v743 = vshrl.u32 %v742, 7
  %v744 = vsub.s32 5, %v743
  %v745 = vrot.slane %v58, %v744
  %v746 = vlaneseq
  %v747 = vshrl.u32 %v746, 7
  %v748 = vsub.s32 5, %v747
  %v749 = vrot.slane %v59, %v748
  %v750 = vmul.f32 %v721, %v107
  %v751 = vmul.f32 %v725, %v107
  %v752 = vmul.f32 %v729, %v107
  %v753 = vmul.f32 %v733, %v107
  %v754 = vmul.f32 %v737, %v107
  %v755 = vmul.f32 %v741, %v107
  %v756 = vmul.f32 %v745, %v107
  %v757 = vmul.f32 %v749, %v107
  %v758 = vadd.f32 %v710, %v750
  %v759 = vadd.f32 %v711, %v751
  %v760 = vadd.f32 %v712, %v752
  %v761 = vadd.f32 %v713, %v753
  %v762 = vadd.f32 %v714, %v754
  %v763 = vadd.f32 %v715, %v755
  %v764 = vadd.f32 %v716, %v756
  %v765 = vadd.f32 %v717, %v757
  %v766 = vlaneseq
  %v767 = vshrl.u32 %v766, 7
  %v768 = vsub.s32 6, %v767
  %v769 = vrot.slane %v52, %v768
  %v770 = vlaneseq
  %v771 = vshrl.u32 %v770, 7
  %v772 = vsub.s32 6, %v771
  %v773 = vrot.slane %v53, %v772
  %v774 = vlaneseq
  %v775 = vshrl.u32 %v774, 7
  %v776 = vsub.s32 6, %v775
  %v777 = vrot.slane %v54, %v776
  %v778 = vlaneseq
  %v779 = vshrl.u32 %v778, 7
  %v780 = vsub.s32 6, %v779
  %v781 = vrot.slane %v55, %v780
  %v782 = vlaneseq
  %v783 = vshrl.u32 %v782, 7
  %v784 = vsub.s32 6, %v783
  %v785 = vrot.slane %v56, %v784
  %v786 = vlaneseq
  %v787 = vshrl.u32 %v786, 7
  %v788 = vsub.s32 6, %v787
  %v789 = vrot.slane %v57, %v788
  %v790 = vlaneseq
  %v791 = vshrl.u32 %v790, 7
  %v792 = vsub.s32 6, %v791
  %v793 = vrot.slane %v58, %v792
  %v794 = vlaneseq
  %v795 = vshrl.u32 %v794, 7
  %v796 = vsub.s32 6, %v795
  %v797 = vrot.slane %v59, %v796
  %v798 = vmul.f32 %v769, %v108
  %v799 = vmul.f32 %v773, %v108
  %v800 = vmul.f32 %v777, %v108
  %v801 = vmul.f32 %v781, %v108
  %v802 = vmul.f32 %v785, %v108
  %v803 = vmul.f32 %v789, %v108
  %v804 = vmul.f32 %v793, %v108
  %v805 = vmul.f32 %v797, %v108
  %v806 = vadd.f32 %v758, %v798
  %v807 = vadd.f32 %v759, %v799
  %v808 = vadd.f32 %v760, %v800
  %v809 = vadd.f32 %v761, %v801
  %v810 = vadd.f32 %v762, %v802
  %v811 = vadd.f32 %v763, %v803
  %v812 = vadd.f32 %v764, %v804
  %v813 = vadd.f32 %v765, %v805
  %v814 = vlaneseq
  %v815 = vshrl.u32 %v814, 7
  %v816 = vsub.s32 7, %v815
  %v817 = vrot.slane %v52, %v816
  %v818 = vlaneseq
  %v819 = vshrl.u32 %v818, 7
  %v820 = vsub.s32 7, %v819
  %v821 = vrot.slane %v53, %v820
  %v822 = vlaneseq
  %v823 = vshrl.u32 %v822, 7
  %v824 = vsub.s32 7, %v823
  %v825 = vrot.slane %v54, %v824
  %v826 = vlaneseq
  %v827 = vshrl.u32 %v826, 7
  %v828 = vsub.s32 7, %v827
  %v829 = vrot.slane %v55, %v828
  %v830 = vlaneseq
  %v831 = vshrl.u32 %v830, 7
  %v832 = vsub.s32 7, %v831
  %v833 = vrot.slane %v56, %v832
  %v834 = vlaneseq
  %v835 = vshrl.u32 %v834, 7
  %v836 = vsub.s32 7, %v835
  %v837 = vrot.slane %v57, %v836
  %v838 = vlaneseq
  %v839 = vshrl.u32 %v838, 7
  %v840 = vsub.s32 7, %v839
  %v841 = vrot.slane %v58, %v840
  %v842 = vlaneseq
  %v843 = vshrl.u32 %v842, 7
  %v844 = vsub.s32 7, %v843
  %v845 = vrot.slane %v59, %v844
  %v846 = vmul.f32 %v817, %v109
  %v847 = vmul.f32 %v821, %v109
  %v848 = vmul.f32 %v825, %v109
  %v849 = vmul.f32 %v829, %v109
  %v850 = vmul.f32 %v833, %v109
  %v851 = vmul.f32 %v837, %v109
  %v852 = vmul.f32 %v841, %v109
  %v853 = vmul.f32 %v845, %v109
  %v854 = vadd.f32 %v806, %v846
  %v855 = vadd.f32 %v807, %v847
  %v856 = vadd.f32 %v808, %v848
  %v857 = vadd.f32 %v809, %v849
  %v858 = vadd.f32 %v810, %v850
  %v859 = vadd.f32 %v811, %v851
  %v860 = vadd.f32 %v812, %v852
  %v861 = vadd.f32 %v813, %v853
  %v862 = vadd.f32 %v44, %v52
  %v863 = vadd.f32 %v45, %v53
  %v864 = vadd.f32 %v46, %v54
  %v865 = vadd.f32 %v47, %v55
  %v866 = vadd.f32 %v48, %v56
  %v867 = vadd.f32 %v49, %v57
  %v868 = vadd.f32 %v50, %v58
  %v869 = vadd.f32 %v51, %v59
  %v870 = vadd.f32 %v94, %v102
  %v871 = vadd.f32 %v95, %v103
  %v872 = vadd.f32 %v96, %v104
  %v873 = vadd.f32 %v97, %v105
  %v874 = vadd.f32 %v98, %v106
  %v875 = vadd.f32 %v99, %v107
  %v876 = vadd.f32 %v100, %v108
  %v877 = vadd.f32 %v101, %v109
  %v878 = vlaneseq
  %v879 = vshrl.u32 %v878, 7
  %v880 = vsub.s32 0, %v879
  %v881 = vrot.slane %v862, %v880
  %v882 = vlaneseq
  %v883 = vshrl.u32 %v882, 7
  %v884 = vsub.s32 0, %v883
  %v885 = vrot.slane %v863, %v884
  %v886 = vlaneseq
  %v887 = vshrl.u32 %v886, 7
  %v888 = vsub.s32 0, %v887
  %v889 = vrot.slane %v864, %v888
  %v890 = vlaneseq
  %v891 = vshrl.u32 %v890, 7
  %v892 = vsub.s32 0, %v891
  %v893 = vrot.slane %v865, %v892
  %v894 = vlaneseq
  %v895 = vshrl.u32 %v894, 7
  %v896 = vsub.s32 0, %v895
  %v897 = vrot.slane %v866, %v896
  %v898 = vlaneseq
  %v899 = vshrl.u32 %v898, 7
  %v900 = vsub.s32 0, %v899
  %v901 = vrot.slane %v867, %v900
  %v902 = vlaneseq
  %v903 = vshrl.u32 %v902, 7
  %v904 = vsub.s32 0, %v903
  %v905 = vrot.slane %v868, %v904
  %v906 = vlaneseq
  %v907 = vshrl.u32 %v906, 7
  %v908 = vsub.s32 0, %v907
  %v909 = vrot.slane %v869, %v908
  %v910 = vmul.f32 %v881, %v870
  %v911 = vmul.f32 %v885, %v870
  %v912 = vmul.f32 %v889, %v870
  %v913 = vmul.f32 %v893, %v870
  %v914 = vmul.f32 %v897, %v870
  %v915 = vmul.f32 %v901, %v870
  %v916 = vmul.f32 %v905, %v870
  %v917 = vmul.f32 %v909, %v870
  %v918 = vlaneseq
  %v919 = vshrl.u32 %v918, 7
  %v920 = vsub.s32 1, %v919
  %v921 = vrot.slane %v862, %v920
  %v922 = vlaneseq
  %v923 = vshrl.u32 %v922, 7
  %v924 = vsub.s32 1, %v923
  %v925 = vrot.slane %v863, %v924
  %v926 = vlaneseq
  %v927 = vshrl.u32 %v926, 7
  %v928 = vsub.s32 1, %v927
  %v929 = vrot.slane %v864, %v928
  %v930 = vlaneseq
  %v931 = vshrl.u32 %v930, 7
  %v932 = vsub.s32 1, %v931
  %v933 = vrot.slane %v865, %v932
  %v934 = vlaneseq
  %v935 = vshrl.u32 %v934, 7
  %v936 = vsub.s32 1, %v935
  %v937 = vrot.slane %v866, %v936
  %v938 = vlaneseq
  %v939 = vshrl.u32 %v938, 7
  %v940 = vsub.s32 1, %v939
  %v941 = vrot.slane %v867, %v940
  %v942 = vlaneseq
  %v943 = vshrl.u32 %v942, 7
  %v944 = vsub.s32 1, %v943
  %v945 = vrot.slane %v868, %v944
  %v946 = vlaneseq
  %v947 = vshrl.u32 %v946, 7
  %v948 = vsub.s32 1, %v947
  %v949 = vrot.slane %v869, %v948
  %v950 = vmul.f32 %v921, %v871
  %v951 = vmul.f32 %v925, %v871
  %v952 = vmul.f32 %v929, %v871
  %v953 = vmul.f32 %v933, %v871
  %v954 = vmul.f32 %v937, %v871
  %v955 = vmul.f32 %v941, %v871
  %v956 = vmul.f32 %v945, %v871
  %v957 = vmul.f32 %v949, %v871
  %v958 = vadd.f32 %v910, %v950
  %v959 = vadd.f32 %v911, %v951
  %v960 = vadd.f32 %v912, %v952
  %v961 = vadd.f32 %v913, %v953
  %v962 = vadd.f32 %v914, %v954
  %v963 = vadd.f32 %v915, %v955
  %v964 = vadd.f32 %v916, %v956
  %v965 = vadd.f32 %v917, %v957
  %v966 = vlaneseq
  %v967 = vshrl.u32 %v966, 7
  %v968 = vsub.s32 2, %v967
  %v969 = vrot.slane %v862, %v968
  %v970 = vlaneseq
  %v971 = vshrl.u32 %v970, 7
  %v972 = vsub.s32 2, %v971
  %v973 = vrot.slane %v863, %v972
  %v974 = vlaneseq
  %v975 = vshrl.u32 %v974, 7
  %v976 = vsub.s32 2, %v975
  %v977 = vrot.slane %v864, %v976
  %v978 = vlaneseq
  %v979 = vshrl.u32 %v978, 7
  %v980 = vsub.s32 2, %v979
  %v981 = vrot.slane %v865, %v980
  %v982 = vlaneseq
  %v983 = vshrl.u32 %v982, 7
  %v984 = vsub.s32 2, %v983
  %v985 = vrot.slane %v866, %v984
  %v986 = vlaneseq
  %v987 = vshrl.u32 %v986, 7
  %v988 = vsub.s32 2, %v987
  %v989 = vrot.slane %v867, %v988
  %v990 = vlaneseq
  %v991 = vshrl.u32 %v990, 7
  %v992 = vsub.s32 2, %v991
  %v993 = vrot.slane %v868, %v992
  %v994 = vlaneseq
  %v995 = vshrl.u32 %v994, 7
  %v996 = vsub.s32 2, %v995
  %v997 = vrot.slane %v869, %v996
  %v998 = vmul.f32 %v969, %v872
  %v999 = vmul.f32 %v973, %v872
  %v1000 = vmul.f32 %v977, %v872
  %v1001 = vmul.f32 %v981, %v872
  %v1002 = vmul.f32 %v985, %v872
  %v1003 = vmul.f32 %v989, %v872
  %v1004 = vmul.f32 %v993, %v872
  %v1005 = vmul.f32 %v997, %v872
  %v1006 = vadd.f32 %v958, %v998
  %v1007 = vadd.f32 %v959, %v999
  %v1008 = vadd.f32 %v960, %v1000
  %v1009 = vadd.f32 %v961, %v1001
  %v1010 = vadd.f32 %v962, %v1002
  %v1011 = vadd.f32 %v963, %v1003
  %v1012 = vadd.f32 %v964, %v1004
  %v1013 = vadd.f32 %v965, %v1005
  %v1014 = vlaneseq
  %v1015 = vshrl.u32 %v1014, 7
  %v1016 = vsub.s32 3, %v1015
  %v1017 = vrot.slane %v862, %v1016
  %v1018 = vlaneseq
  %v1019 = vshrl.u32 %v1018, 7
  %v1020 = vsub.s32 3, %v1019
  %v1021 = vrot.slane %v863, %v1020
  %v1022 = vlaneseq
  %v1023 = vshrl.u32 %v1022, 7
  %v1024 = vsub.s32 3, %v1023
  %v1025 = vrot.slane %v864, %v1024
  %v1026 = vlaneseq
  %v1027 = vshrl.u32 %v1026, 7
  %v1028 = vsub.s32 3, %v1027
  %v1029 = vrot.slane %v865, %v1028
  %v1030 = vlaneseq
  %v1031 = vshrl.u32 %v1030, 7
  %v1032 = vsub.s32 3, %v1031
  %v1033 = vrot.slane %v866, %v1032
  %v1034 = vlaneseq
  %v1035 = vshrl.u32 %v1034, 7
  %v1036 = vsub.s32 3, %v1035
  %v1037 = vrot.slane %v867, %v1036
  %v1038 = vlaneseq
  %v1039 = vshrl.u32 %v1038, 7
  %v1040 = vsub.s32 3, %v1039
  %v1041 = vrot.slane %v868, %v1040
  %v1042 = vlaneseq
  %v1043 = vshrl.u32 %v1042, 7
  %v1044 = vsub.s32 3, %v1043
  %v1045 = vrot.slane %v869, %v1044
  %v1046 = vmul.f32 %v1017, %v873
  %v1047 = vmul.f32 %v1021, %v873
  %v1048 = vmul.f32 %v1025, %v873
  %v1049 = vmul.f32 %v1029, %v873
  %v1050 = vmul.f32 %v1033, %v873
  %v1051 = vmul.f32 %v1037, %v873
  %v1052 = vmul.f32 %v1041, %v873
  %v1053 = vmul.f32 %v1045, %v873
  %v1054 = vadd.f32 %v1006, %v1046
  %v1055 = vadd.f32 %v1007, %v1047
  %v1056 = vadd.f32 %v1008, %v1048
  %v1057 = vadd.f32 %v1009, %v1049
  %v1058 = vadd.f32 %v1010, %v1050
  %v1059 = vadd.f32 %v1011, %v1051
  %v1060 = vadd.f32 %v1012, %v1052
  %v1061 = vadd.f32 %v1013, %v1053
  %v1062 = vlaneseq
  %v1063 = vshrl.u32 %v1062, 7
  %v1064 = vsub.s32 4, %v1063
  %v1065 = vrot.slane %v862, %v1064
  %v1066 = vlaneseq
  %v1067 = vshrl.u32 %v1066, 7
  %v1068 = vsub.s32 4, %v1067
  %v1069 = vrot.slane %v863, %v1068
  %v1070 = vlaneseq
  %v1071 = vshrl.u32 %v1070, 7
  %v1072 = vsub.s32 4, %v1071
  %v1073 = vrot.slane %v864, %v1072
  %v1074 = vlaneseq
  %v1075 = vshrl.u32 %v1074, 7
  %v1076 = vsub.s32 4, %v1075
  %v1077 = vrot.slane %v865, %v1076
  %v1078 = vlaneseq
  %v1079 = vshrl.u32 %v1078, 7
  %v1080 = vsub.s32 4, %v1079
  %v1081 = vrot.slane %v866, %v1080
  %v1082 = vlaneseq
  %v1083 = vshrl.u32 %v1082, 7
  %v1084 = vsub.s32 4, %v1083
  %v1085 = vrot.slane %v867, %v1084
  %v1086 = vlaneseq
  %v1087 = vshrl.u32 %v1086, 7
  %v1088 = vsub.s32 4, %v1087
  %v1089 = vrot.slane %v868, %v1088
  %v1090 = vlaneseq
  %v1091 = vshrl.u32 %v1090, 7
  %v1092 = vsub.s32 4, %v1091
  %v1093 = vrot.slane %v869, %v1092
  %v1094 = vmul.f32 %v1065, %v874
  %v1095 = vmul.f32 %v1069, %v874
  %v1096 = vmul.f32 %v1073, %v874
  %v1097 = vmul.f32 %v1077, %v874
  %v1098 = vmul.f32 %v1081, %v874
  %v1099 = vmul.f32 %v1085, %v874
  %v1100 = vmul.f32 %v1089, %v874
  %v1101 = vmul.f32 %v1093, %v874
  %v1102 = vadd.f32 %v1054, %v1094
  %v1103 = vadd.f32 %v1055, %v1095
  %v1104 = vadd.f32 %v1056, %v1096
  %v1105 = vadd.f32 %v1057, %v1097
  %v1106 = vadd.f32 %v1058, %v1098
  %v1107 = vadd.f32 %v1059, %v1099
  %v1108 = vadd.f32 %v1060, %v1100
  %v1109 = vadd.f32 %v1061, %v1101
  %v1110 = vlaneseq
  %v1111 = vshrl.u32 %v1110, 7
  %v1112 = vsub.s32 5, %v1111
  %v1113 = vrot.slane %v862, %v1112
  %v1114 = vlaneseq
  %v1115 = vshrl.u32 %v1114, 7
  %v1116 = vsub.s32 5, %v1115
  %v1117 = vrot.slane %v863, %v1116
  %v1118 = vlaneseq
  %v1119 = vshrl.u32 %v1118, 7
  %v1120 = vsub.s32 5, %v1119
  %v1121 = vrot.slane %v864, %v1120
  %v1122 = vlaneseq
  %v1123 = vshrl.u32 %v1122, 7
  %v1124 = vsub.s32 5, %v1123
  %v1125 = vrot.slane %v865, %v1124
  %v1126 = vlaneseq
  %v1127 = vshrl.u32 %v1126, 7
  %v1128 = vsub.s32 5, %v1127
  %v1129 = vrot.slane %v866, %v1128
  %v1130 = vlaneseq
  %v1131 = vshrl.u32 %v1130, 7
  %v1132 = vsub.s32 5, %v1131
  %v1133 = vrot.slane %v867, %v1132
  %v1134 = vlaneseq
  %v1135 = vshrl.u32 %v1134, 7
  %v1136 = vsub.s32 5, %v1135
  %v1137 = vrot.slane %v868, %v1136
  %v1138 = vlaneseq
  %v1139 = vshrl.u32 %v1138, 7
  %v1140 = vsub.s32 5, %v1139
  %v1141 = vrot.slane %v869, %v1140
  %v1142 = vmul.f32 %v1113, %v875
  %v1143 = vmul.f32 %v1117, %v875
  %v1144 = vmul.f32 %v1121, %v875
  %v1145 = vmul.f32 %v1125, %v875
  %v1146 = vmul.f32 %v1129, %v875
  %v1147 = vmul.f32 %v1133, %v875
  %v1148 = vmul.f32 %v1137, %v875
  %v1149 = vmul.f32 %v1141, %v875
  %v1150 = vadd.f32 %v1102, %v1142
  %v1151 = vadd.f32 %v1103, %v1143
  %v1152 = vadd.f32 %v1104, %v1144
  %v1153 = vadd.f32 %v1105, %v1145
  %v1154 = vadd.f32 %v1106, %v1146
  %v1155 = vadd.f32 %v1107, %v1147
  %v1156 = vadd.f32 %v1108, %v1148
  %v1157 = vadd.f32 %v1109, %v1149
  %v1158 = vlaneseq
  %v1159 = vshrl.u32 %v1158, 7
  %v1160 = vsub.s32 6, %v1159
  %v1161 = vrot.slane %v862, %v1160
  %v1162 = vlaneseq
  %v1163 = vshrl.u32 %v1162, 7
  %v1164 = vsub.s32 6, %v1163
  %v1165 = vrot.slane %v863, %v1164
  %v1166 = vlaneseq
  %v1167 = vshrl.u32 %v1166, 7
  %v1168 = vsub.s32 6, %v1167
  %v1169 = vrot.slane %v864, %v1168
  %v1170 = vlaneseq
  %v1171 = vshrl.u32 %v1170, 7
  %v1172 = vsub.s32 6, %v1171
  %v1173 = vrot.slane %v865, %v1172
  %v1174 = vlaneseq
  %v1175 = vshrl.u32 %v1174, 7
  %v1176 = vsub.s32 6, %v1175
  %v1177 = vrot.slane %v866, %v1176
  %v1178 = vlaneseq
  %v1179 = vshrl.u32 %v1178, 7
  %v1180 = vsub.s32 6, %v1179
  %v1181 = vrot.slane %v867, %v1180
  %v1182 = vlaneseq
  %v1183 = vshrl.u32 %v1182, 7
  %v1184 = vsub.s32 6, %v1183
  %v1185 = vrot.slane %v868, %v1184
  %v1186 = vlaneseq
  %v1187 = vshrl.u32 %v1186, 7
  %v1188 = vsub.s32 6, %v1187
  %v1189 = vrot.slane %v869, %v1188
  %v1190 = vmul.f32 %v1161, %v876
  %v1191 = vmul.f32 %v1165, %v876
  %v1192 = vmul.f32 %v1169, %v876
  %v1193 = vmul.f32 %v1173, %v876
  %v1194 = vmul.f32 %v1177, %v876
  %v1195 = vmul.f32 %v1181, %v876
  %v1196 = vmul.f32 %v1185, %v876
  %v1197 = vmul.f32 %v1189, %v876
  %v1198 = vadd.f32 %v1150, %v1190
  %v1199 = vadd.f32 %v1151, %v1191
  %v1200 = vadd.f32 %v1152, %v1192
  %v1201 = vadd.f32 %v1153, %v1193
  %v1202 = vadd.f32 %v1154, %v1194
  %v1203 = vadd.f32 %v1155, %v1195
  %v1204 = vadd.f32 %v1156, %v1196
  %v1205 = vadd.f32 %v1157, %v1197
  %v1206 = vlaneseq
  %v1207 = vshrl.u32 %v1206, 7
  %v1208 = vsub.s32 7, %v1207
  %v1209 = vrot.slane %v862, %v1208
  %v1210 = vlaneseq
  %v1211 = vshrl.u32 %v1210, 7
  %v1212 = vsub.s32 7, %v1211
  %v1213 = vrot.slane %v863, %v1212
  %v1214 = vlaneseq
  %v1215 = vshrl.u32 %v1214, 7
  %v1216 = vsub.s32 7, %v1215
  %v1217 = vrot.slane %v864, %v1216
  %v1218 = vlaneseq
  %v1219 = vshrl.u32 %v1218, 7
  %v1220 = vsub.s32 7, %v1219
  %v1221 = vrot.slane %v865, %v1220
  %v1222 = vlaneseq
  %v1223 = vshrl.u32 %v1222, 7
  %v1224 = vsub.s32 7, %v1223
  %v1225 = vrot.slane %v866, %v1224
  %v1226 = vlaneseq
  %v1227 = vshrl.u32 %v1226, 7
  %v1228 = vsub.s32 7, %v1227
  %v1229 = vrot.slane %v867, %v1228
  %v1230 = vlaneseq
  %v1231 = vshrl.u32 %v1230, 7
  %v1232 = vsub.s32 7, %v1231
  %v1233 = vrot.slane %v868, %v1232
  %v1234 = vlaneseq
  %v1235 = vshrl.u32 %v1234, 7
  %v1236 = vsub.s32 7, %v1235
  %v1237 = vrot.slane %v869, %v1236
  %v1238 = vmul.f32 %v1209, %v877
  %v1239 = vmul.f32 %v1213, %v877
  %v1240 = vmul.f32 %v1217, %v877
  %v1241 = vmul.f32 %v1221, %v877
  %v1242 = vmul.f32 %v1225, %v877
  %v1243 = vmul.f32 %v1229, %v877
  %v1244 = vmul.f32 %v1233, %v877
  %v1245 = vmul.f32 %v1237, %v877
  %v1246 = vadd.f32 %v1198, %v1238
  %v1247 = vadd.f32 %v1199, %v1239
  %v1248 = vadd.f32 %v1200, %v1240
  %v1249 = vadd.f32 %v1201, %v1241
  %v1250 = vadd.f32 %v1202, %v1242
  %v1251 = vadd.f32 %v1203, %v1243
  %v1252 = vadd.f32 %v1204, %v1244
  %v1253 = vadd.f32 %v1205, %v1245
  %v1254 = vsub.f32 %v478, %v854
  %v1255 = vsub.f32 %v479, %v855
  %v1256 = vsub.f32 %v480, %v856
  %v1257 = vsub.f32 %v481, %v857
  %v1258 = vsub.f32 %v482, %v858
  %v1259 = vsub.f32 %v483, %v859
  %v1260 = vsub.f32 %v484, %v860
  %v1261 = vsub.f32 %v485, %v861
  %v1262 = vsub.f32 %v1246, %v478
  %v1263 = vsub.f32 %v1247, %v479
  %v1264 = vsub.f32 %v1248, %v480
  %v1265 = vsub.f32 %v1249, %v481
  %v1266 = vsub.f32 %v1250, %v482
  %v1267 = vsub.f32 %v1251, %v483
  %v1268 = vsub.f32 %v1252, %v484
  %v1269 = vsub.f32 %v1253, %v485
  %v1270 = vsub.f32 %v1262, %v854
  %v1271 = vsub.f32 %v1263, %v855
  %v1272 = vsub.f32 %v1264, %v856
  %v1273 = vsub.f32 %v1265, %v857
  %v1274 = vsub.f32 %v1266, %v858
  %v1275 = vsub.f32 %v1267, %v859
  %v1276 = vsub.f32 %v1268, %v860
  %v1277 = vsub.f32 %v1269, %v861
  %v1278 = vmul.f32 %v1254, 0.083333336
  %v1279 = vmul.f32 %v1255, 0.083333336
  %v1280 = vmul.f32 %v1256, 0.083333336
  %v1281 = vmul.f32 %v1257, 0.083333336
  %v1282 = vmul.f32 %v1258, 0.083333336
  %v1283 = vmul.f32 %v1259, 0.083333336
  %v1284 = vmul.f32 %v1260, 0.083333336
  %v1285 = vmul.f32 %v1261, 0.083333336
  %v1286 = vadd.f32 %v78, %v1278
  %v1287 = vadd.f32 %v79, %v1279
  %v1288 = vadd.f32 %v80, %v1280
  %v1289 = vadd.f32 %v81, %v1281
  %v1290 = vadd.f32 %v82, %v1282
  %v1291 = vadd.f32 %v83, %v1283
  %v1292 = vadd.f32 %v84, %v1284
  %v1293 = vadd.f32 %v85, %v1285
  %v1294 = vmul.f32 %v1270, 0.083333336
  %v1295 = vmul.f32 %v1271, 0.083333336
  %v1296 = vmul.f32 %v1272, 0.083333336
  %v1297 = vmul.f32 %v1273, 0.083333336
  %v1298 = vmul.f32 %v1274, 0.083333336
  %v1299 = vmul.f32 %v1275, 0.083333336
  %v1300 = vmul.f32 %v1276, 0.083333336
  %v1301 = vmul.f32 %v1277, 0.083333336
  %v1302 = vmul.f32 %v113, %v1286
  %v1303 = vmul.f32 %v117, %v1286
  %v1304 = vmul.f32 %v121, %v1286
  %v1305 = vmul.f32 %v125, %v1286
  %v1306 = vmul.f32 %v129, %v1286
  %v1307 = vmul.f32 %v133, %v1286
  %v1308 = vmul.f32 %v137, %v1286
  %v1309 = vmul.f32 %v141, %v1286
  %v1310 = vmul.f32 %v153, %v1287
  %v1311 = vmul.f32 %v157, %v1287
  %v1312 = vmul.f32 %v161, %v1287
  %v1313 = vmul.f32 %v165, %v1287
  %v1314 = vmul.f32 %v169, %v1287
  %v1315 = vmul.f32 %v173, %v1287
  %v1316 = vmul.f32 %v177, %v1287
  %v1317 = vmul.f32 %v181, %v1287
  %v1318 = vadd.f32 %v1302, %v1310
  %v1319 = vadd.f32 %v1303, %v1311
  %v1320 = vadd.f32 %v1304, %v1312
  %v1321 = vadd.f32 %v1305, %v1313
  %v1322 = vadd.f32 %v1306, %v1314
  %v1323 = vadd.f32 %v1307, %v1315
  %v1324 = vadd.f32 %v1308, %v1316
  %v1325 = vadd.f32 %v1309, %v1317
  %v1326 = vmul.f32 %v201, %v1288
  %v1327 = vmul.f32 %v205, %v1288
  %v1328 = vmul.f32 %v209, %v1288
  %v1329 = vmul.f32 %v213, %v1288
  %v1330 = vmul.f32 %v217, %v1288
  %v1331 = vmul.f32 %v221, %v1288
  %v1332 = vmul.f32 %v225, %v1288
  %v1333 = vmul.f32 %v229, %v1288
  %v1334 = vadd.f32 %v1318, %v1326
  %v1335 = vadd.f32 %v1319, %v1327
  %v1336 = vadd.f32 %v1320, %v1328
  %v1337 = vadd.f32 %v1321, %v1329
  %v1338 = vadd.f32 %v1322, %v1330
  %v1339 = vadd.f32 %v1323, %v1331
  %v1340 = vadd.f32 %v1324, %v1332
  %v1341 = vadd.f32 %v1325, %v1333
  %v1342 = vmul.f32 %v249, %v1289
  %v1343 = vmul.f32 %v253, %v1289
  %v1344 = vmul.f32 %v257, %v1289
  %v1345 = vmul.f32 %v261, %v1289
  %v1346 = vmul.f32 %v265, %v1289
  %v1347 = vmul.f32 %v269, %v1289
  %v1348 = vmul.f32 %v273, %v1289
  %v1349 = vmul.f32 %v277, %v1289
  %v1350 = vadd.f32 %v1334, %v1342
  %v1351 = vadd.f32 %v1335, %v1343
  %v1352 = vadd.f32 %v1336, %v1344
  %v1353 = vadd.f32 %v1337, %v1345
  %v1354 = vadd.f32 %v1338, %v1346
  %v1355 = vadd.f32 %v1339, %v1347
  %v1356 = vadd.f32 %v1340, %v1348
  %v1357 = vadd.f32 %v1341, %v1349
  %v1358 = vmul.f32 %v297, %v1290
  %v1359 = vmul.f32 %v301, %v1290
  %v1360 = vmul.f32 %v305, %v1290
  %v1361 = vmul.f32 %v309, %v1290
  %v1362 = vmul.f32 %v313, %v1290
  %v1363 = vmul.f32 %v317, %v1290
  %v1364 = vmul.f32 %v321, %v1290
  %v1365 = vmul.f32 %v325, %v1290
  %v1366 = vadd.f32 %v1350, %v1358
  %v1367 = vadd.f32 %v1351, %v1359
  %v1368 = vadd.f32 %v1352, %v1360
  %v1369 = vadd.f32 %v1353, %v1361
  %v1370 = vadd.f32 %v1354, %v1362
  %v1371 = vadd.f32 %v1355, %v1363
  %v1372 = vadd.f32 %v1356, %v1364
  %v1373 = vadd.f32 %v1357, %v1365
  %v1374 = vmul.f32 %v345, %v1291
  %v1375 = vmul.f32 %v349, %v1291
  %v1376 = vmul.f32 %v353, %v1291
  %v1377 = vmul.f32 %v357, %v1291
  %v1378 = vmul.f32 %v361, %v1291
  %v1379 = vmul.f32 %v365, %v1291
  %v1380 = vmul.f32 %v369, %v1291
  %v1381 = vmul.f32 %v373, %v1291
  %v1382 = vadd.f32 %v1366, %v1374
  %v1383 = vadd.f32 %v1367, %v1375
  %v1384 = vadd.f32 %v1368, %v1376
  %v1385 = vadd.f32 %v1369, %v1377
  %v1386 = vadd.f32 %v1370, %v1378
  %v1387 = vadd.f32 %v1371, %v1379
  %v1388 = vadd.f32 %v1372, %v1380
  %v1389 = vadd.f32 %v1373, %v1381
  %v1390 = vmul.f32 %v393, %v1292
  %v1391 = vmul.f32 %v397, %v1292
  %v1392 = vmul.f32 %v401, %v1292
  %v1393 = vmul.f32 %v405, %v1292
  %v1394 = vmul.f32 %v409, %v1292
  %v1395 = vmul.f32 %v413, %v1292
  %v1396 = vmul.f32 %v417, %v1292
  %v1397 = vmul.f32 %v421, %v1292
  %v1398 = vadd.f32 %v1382, %v1390
  %v1399 = vadd.f32 %v1383, %v1391
  %v1400 = vadd.f32 %v1384, %v1392
  %v1401 = vadd.f32 %v1385, %v1393
  %v1402 = vadd.f32 %v1386, %v1394
  %v1403 = vadd.f32 %v1387, %v1395
  %v1404 = vadd.f32 %v1388, %v1396
  %v1405 = vadd.f32 %v1389, %v1397
  %v1406 = vmul.f32 %v441, %v1293
  %v1407 = vmul.f32 %v445, %v1293
  %v1408 = vmul.f32 %v449, %v1293
  %v1409 = vmul.f32 %v453, %v1293
  %v1410 = vmul.f32 %v457, %v1293
  %v1411 = vmul.f32 %v461, %v1293
  %v1412 = vmul.f32 %v465, %v1293
  %v1413 = vmul.f32 %v469, %v1293
  %v1414 = vadd.f32 %v1398, %v1406
  %v1415 = vadd.f32 %v1399, %v1407
  %v1416 = vadd.f32 %v1400, %v1408
  %v1417 = vadd.f32 %v1401, %v1409
  %v1418 = vadd.f32 %v1402, %v1410
  %v1419 = vadd.f32 %v1403, %v1411
  %v1420 = vadd.f32 %v1404, %v1412
  %v1421 = vadd.f32 %v1405, %v1413
  %v1422 = vmul.f32 %v489, %v1294
  %v1423 = vmul.f32 %v493, %v1294
  %v1424 = vmul.f32 %v497, %v1294
  %v1425 = vmul.f32 %v501, %v1294
  %v1426 = vmul.f32 %v505, %v1294
  %v1427 = vmul.f32 %v509, %v1294
  %v1428 = vmul.f32 %v513, %v1294
  %v1429 = vmul.f32 %v517, %v1294
  %v1430 = vmul.f32 %v529, %v1295
  %v1431 = vmul.f32 %v533, %v1295
  %v1432 = vmul.f32 %v537, %v1295
  %v1433 = vmul.f32 %v541, %v1295
  %v1434 = vmul.f32 %v545, %v1295
  %v1435 = vmul.f32 %v549, %v1295
  %v1436 = vmul.f32 %v553, %v1295
  %v1437 = vmul.f32 %v557, %v1295
  %v1438 = vadd.f32 %v1422, %v1430
  %v1439 = vadd.f32 %v1423, %v1431
  %v1440 = vadd.f32 %v1424, %v1432
  %v1441 = vadd.f32 %v1425, %v1433
  %v1442 = vadd.f32 %v1426, %v1434
  %v1443 = vadd.f32 %v1427, %v1435
  %v1444 = vadd.f32 %v1428, %v1436
  %v1445 = vadd.f32 %v1429, %v1437
  %v1446 = vmul.f32 %v577, %v1296
  %v1447 = vmul.f32 %v581, %v1296
  %v1448 = vmul.f32 %v585, %v1296
  %v1449 = vmul.f32 %v589, %v1296
  %v1450 = vmul.f32 %v593, %v1296
  %v1451 = vmul.f32 %v597, %v1296
  %v1452 = vmul.f32 %v601, %v1296
  %v1453 = vmul.f32 %v605, %v1296
  %v1454 = vadd.f32 %v1438, %v1446
  %v1455 = vadd.f32 %v1439, %v1447
  %v1456 = vadd.f32 %v1440, %v1448
  %v1457 = vadd.f32 %v1441, %v1449
  %v1458 = vadd.f32 %v1442, %v1450
  %v1459 = vadd.f32 %v1443, %v1451
  %v1460 = vadd.f32 %v1444, %v1452
  %v1461 = vadd.f32 %v1445, %v1453
  %v1462 = vmul.f32 %v625, %v1297
  %v1463 = vmul.f32 %v629, %v1297
  %v1464 = vmul.f32 %v633, %v1297
  %v1465 = vmul.f32 %v637, %v1297
  %v1466 = vmul.f32 %v641, %v1297
  %v1467 = vmul.f32 %v645, %v1297
  %v1468 = vmul.f32 %v649, %v1297
  %v1469 = vmul.f32 %v653, %v1297
  %v1470 = vadd.f32 %v1454, %v1462
  %v1471 = vadd.f32 %v1455, %v1463
  %v1472 = vadd.f32 %v1456, %v1464
  %v1473 = vadd.f32 %v1457, %v1465
  %v1474 = vadd.f32 %v1458, %v1466
  %v1475 = vadd.f32 %v1459, %v1467
  %v1476 = vadd.f32 %v1460, %v1468
  %v1477 = vadd.f32 %v1461, %v1469
  %v1478 = vmul.f32 %v673, %v1298
  %v1479 = vmul.f32 %v677, %v1298
  %v1480 = vmul.f32 %v681, %v1298
  %v1481 = vmul.f32 %v685, %v1298
  %v1482 = vmul.f32 %v689, %v1298
  %v1483 = vmul.f32 %v693, %v1298
  %v1484 = vmul.f32 %v697, %v1298
  %v1485 = vmul.f32 %v701, %v1298
  %v1486 = vadd.f32 %v1470, %v1478
  %v1487 = vadd.f32 %v1471, %v1479
  %v1488 = vadd.f32 %v1472, %v1480
  %v1489 = vadd.f32 %v1473, %v1481
  %v1490 = vadd.f32 %v1474, %v1482
  %v1491 = vadd.f32 %v1475, %v1483
  %v1492 = vadd.f32 %v1476, %v1484
  %v1493 = vadd.f32 %v1477, %v1485
  %v1494 = vmul.f32 %v721, %v1299
  %v1495 = vmul.f32 %v725, %v1299
  %v1496 = vmul.f32 %v729, %v1299
  %v1497 = vmul.f32 %v733, %v1299
  %v1498 = vmul.f32 %v737, %v1299
  %v1499 = vmul.f32 %v741, %v1299
  %v1500 = vmul.f32 %v745, %v1299
  %v1501 = vmul.f32 %v749, %v1299
  %v1502 = vadd.f32 %v1486, %v1494
  %v1503 = vadd.f32 %v1487, %v1495
  %v1504 = vadd.f32 %v1488, %v1496
  %v1505 = vadd.f32 %v1489, %v1497
  %v1506 = vadd.f32 %v1490, %v1498
  %v1507 = vadd.f32 %v1491, %v1499
  %v1508 = vadd.f32 %v1492, %v1500
  %v1509 = vadd.f32 %v1493, %v1501
  %v1510 = vmul.f32 %v769, %v1300
  %v1511 = vmul.f32 %v773, %v1300
  %v1512 = vmul.f32 %v777, %v1300
  %v1513 = vmul.f32 %v781, %v1300
  %v1514 = vmul.f32 %v785, %v1300
  %v1515 = vmul.f32 %v789, %v1300
  %v1516 = vmul.f32 %v793, %v1300
  %v1517 = vmul.f32 %v797, %v1300
  %v1518 = vadd.f32 %v1502, %v1510
  %v1519 = vadd.f32 %v1503, %v1511
  %v1520 = vadd.f32 %v1504, %v1512
  %v1521 = vadd.f32 %v1505, %v1513
  %v1522 = vadd.f32 %v1506, %v1514
  %v1523 = vadd.f32 %v1507, %v1515
  %v1524 = vadd.f32 %v1508, %v1516
  %v1525 = vadd.f32 %v1509, %v1517
  %v1526 = vmul.f32 %v817, %v1301
  %v1527 = vmul.f32 %v821, %v1301
  %v1528 = vmul.f32 %v825, %v1301
  %v1529 = vmul.f32 %v829, %v1301
  %v1530 = vmul.f32 %v833, %v1301
  %v1531 = vmul.f32 %v837, %v1301
  %v1532 = vmul.f32 %v841, %v1301
  %v1533 = vmul.f32 %v845, %v1301
  %v1534 = vadd.f32 %v1518, %v1526
  %v1535 = vadd.f32 %v1519, %v1527
  %v1536 = vadd.f32 %v1520, %v1528
  %v1537 = vadd.f32 %v1521, %v1529
  %v1538 = vadd.f32 %v1522, %v1530
  %v1539 = vadd.f32 %v1523, %v1531
  %v1540 = vadd.f32 %v1524, %v1532
  %v1541 = vadd.f32 %v1525, %v1533
  %v1542 = vadd.f32 %v1286, %v1294
  %v1543 = vadd.f32 %v1287, %v1295
  %v1544 = vadd.f32 %v1288, %v1296
  %v1545 = vadd.f32 %v1289, %v1297
  %v1546 = vadd.f32 %v1290, %v1298
  %v1547 = vadd.f32 %v1291, %v1299
  %v1548 = vadd.f32 %v1292, %v1300
  %v1549 = vadd.f32 %v1293, %v1301
  %v1550 = vmul.f32 %v881, %v1542
  %v1551 = vmul.f32 %v885, %v1542
  %v1552 = vmul.f32 %v889, %v1542
  %v1553 = vmul.f32 %v893, %v1542
  %v1554 = vmul.f32 %v897, %v1542
  %v1555 = vmul.f32 %v901, %v1542
  %v1556 = vmul.f32 %v905, %v1542
  %v1557 = vmul.f32 %v909, %v1542
  %v1558 = vmul.f32 %v921, %v1543
  %v1559 = vmul.f32 %v925, %v1543
  %v1560 = vmul.f32 %v929, %v1543
  %v1561 = vmul.f32 %v933, %v1543
  %v1562 = vmul.f32 %v937, %v1543
  %v1563 = vmul.f32 %v941, %v1543
  %v1564 = vmul.f32 %v945, %v1543
  %v1565 = vmul.f32 %v949, %v1543
  %v1566 = vadd.f32 %v1550, %v1558
  %v1567 = vadd.f32 %v1551, %v1559
  %v1568 = vadd.f32 %v1552, %v1560
  %v1569 = vadd.f32 %v1553, %v1561
  %v1570 = vadd.f32 %v1554, %v1562
  %v1571 = vadd.f32 %v1555, %v1563
  %v1572 = vadd.f32 %v1556, %v1564
  %v1573 = vadd.f32 %v1557, %v1565
  %v1574 = vmul.f32 %v969, %v1544
  %v1575 = vmul.f32 %v973, %v1544
  %v1576 = vmul.f32 %v977, %v1544
  %v1577 = vmul.f32 %v981, %v1544
  %v1578 = vmul.f32 %v985, %v1544
  %v1579 = vmul.f32 %v989, %v1544
  %v1580 = vmul.f32 %v993, %v1544
  %v1581 = vmul.f32 %v997, %v1544
  %v1582 = vadd.f32 %v1566, %v1574
  %v1583 = vadd.f32 %v1567, %v1575
  %v1584 = vadd.f32 %v1568, %v1576
  %v1585 = vadd.f32 %v1569, %v1577
  %v1586 = vadd.f32 %v1570, %v1578
  %v1587 = vadd.f32 %v1571, %v1579
  %v1588 = vadd.f32 %v1572, %v1580
  %v1589 = vadd.f32 %v1573, %v1581
  %v1590 = vmul.f32 %v1017, %v1545
  %v1591 = vmul.f32 %v1021, %v1545
  %v1592 = vmul.f32 %v1025, %v1545
  %v1593 = vmul.f32 %v1029, %v1545
  %v1594 = vmul.f32 %v1033, %v1545
  %v1595 = vmul.f32 %v1037, %v1545
  %v1596 = vmul.f32 %v1041, %v1545
  %v1597 = vmul.f32 %v1045, %v1545
  %v1598 = vadd.f32 %v1582, %v1590
  %v1599 = vadd.f32 %v1583, %v1591
  %v1600 = vadd.f32 %v1584, %v1592
  %v1601 = vadd.f32 %v1585, %v1593
  %v1602 = vadd.f32 %v1586, %v1594
  %v1603 = vadd.f32 %v1587, %v1595
  %v1604 = vadd.f32 %v1588, %v1596
  %v1605 = vadd.f32 %v1589, %v1597
  %v1606 = vmul.f32 %v1065, %v1546
  %v1607 = vmul.f32 %v1069, %v1546
  %v1608 = vmul.f32 %v1073, %v1546
  %v1609 = vmul.f32 %v1077, %v1546
  %v1610 = vmul.f32 %v1081, %v1546
  %v1611 = vmul.f32 %v1085, %v1546
  %v1612 = vmul.f32 %v1089, %v1546
  %v1613 = vmul.f32 %v1093, %v1546
  %v1614 = vadd.f32 %v1598, %v1606
  %v1615 = vadd.f32 %v1599, %v1607
  %v1616 = vadd.f32 %v1600, %v1608
  %v1617 = vadd.f32 %v1601, %v1609
  %v1618 = vadd.f32 %v1602, %v1610
  %v1619 = vadd.f32 %v1603, %v1611
  %v1620 = vadd.f32 %v1604, %v1612
  %v1621 = vadd.f32 %v1605, %v1613
  %v1622 = vmul.f32 %v1113, %v1547
  %v1623 = vmul.f32 %v1117, %v1547
  %v1624 = vmul.f32 %v1121, %v1547
  %v1625 = vmul.f32 %v1125, %v1547
  %v1626 = vmul.f32 %v1129, %v1547
  %v1627 = vmul.f32 %v1133, %v1547
  %v1628 = vmul.f32 %v1137, %v1547
  %v1629 = vmul.f32 %v1141, %v1547
  %v1630 = vadd.f32 %v1614, %v1622
  %v1631 = vadd.f32 %v1615, %v1623
  %v1632 = vadd.f32 %v1616, %v1624
  %v1633 = vadd.f32 %v1617, %v1625
  %v1634 = vadd.f32 %v1618, %v1626
  %v1635 = vadd.f32 %v1619, %v1627
  %v1636 = vadd.f32 %v1620, %v1628
  %v1637 = vadd.f32 %v1621, %v1629
  %v1638 = vmul.f32 %v1161, %v1548
  %v1639 = vmul.f32 %v1165, %v1548
  %v1640 = vmul.f32 %v1169, %v1548
  %v1641 = vmul.f32 %v1173, %v1548
  %v1642 = vmul.f32 %v1177, %v1548
  %v1643 = vmul.f32 %v1181, %v1548
  %v1644 = vmul.f32 %v1185, %v1548
  %v1645 = vmul.f32 %v1189, %v1548
  %v1646 = vadd.f32 %v1630, %v1638
  %v1647 = vadd.f32 %v1631, %v1639
  %v1648 = vadd.f32 %v1632, %v1640
  %v1649 = vadd.f32 %v1633, %v1641
  %v1650 = vadd.f32 %v1634, %v1642
  %v1651 = vadd.f32 %v1635, %v1643
  %v1652 = vadd.f32 %v1636, %v1644
  %v1653 = vadd.f32 %v1637, %v1645
  %v1654 = vmul.f32 %v1209, %v1549
  %v1655 = vmul.f32 %v1213, %v1549
  %v1656 = vmul.f32 %v1217, %v1549
  %v1657 = vmul.f32 %v1221, %v1549
  %v1658 = vmul.f32 %v1225, %v1549
  %v1659 = vmul.f32 %v1229, %v1549
  %v1660 = vmul.f32 %v1233, %v1549
  %v1661 = vmul.f32 %v1237, %v1549
  %v1662 = vadd.f32 %v1646, %v1654
  %v1663 = vadd.f32 %v1647, %v1655
  %v1664 = vadd.f32 %v1648, %v1656
  %v1665 = vadd.f32 %v1649, %v1657
  %v1666 = vadd.f32 %v1650, %v1658
  %v1667 = vadd.f32 %v1651, %v1659
  %v1668 = vadd.f32 %v1652, %v1660
  %v1669 = vadd.f32 %v1653, %v1661
  %v1670 = vsub.f32 %v1414, %v1534
  %v1671 = vsub.f32 %v1415, %v1535
  %v1672 = vsub.f32 %v1416, %v1536
  %v1673 = vsub.f32 %v1417, %v1537
  %v1674 = vsub.f32 %v1418, %v1538
  %v1675 = vsub.f32 %v1419, %v1539
  %v1676 = vsub.f32 %v1420, %v1540
  %v1677 = vsub.f32 %v1421, %v1541
  %v1678 = vsub.f32 %v1662, %v1414
  %v1679 = vsub.f32 %v1663, %v1415
  %v1680 = vsub.f32 %v1664, %v1416
  %v1681 = vsub.f32 %v1665, %v1417
  %v1682 = vsub.f32 %v1666, %v1418
  %v1683 = vsub.f32 %v1667, %v1419
  %v1684 = vsub.f32 %v1668, %v1420
  %v1685 = vsub.f32 %v1669, %v1421
  %v1686 = vsub.f32 %v1678, %v1534
  %v1687 = vsub.f32 %v1679, %v1535
  %v1688 = vsub.f32 %v1680, %v1536
  %v1689 = vsub.f32 %v1681, %v1537
  %v1690 = vsub.f32 %v1682, %v1538
  %v1691 = vsub.f32 %v1683, %v1539
  %v1692 = vsub.f32 %v1684, %v1540
  %v1693 = vsub.f32 %v1685, %v1541
  %v1694 = vmul.f32 %v1670, 0.09090909
  %v1695 = vmul.f32 %v1671, 0.09090909
  %v1696 = vmul.f32 %v1672, 0.09090909
  %v1697 = vmul.f32 %v1673, 0.09090909
  %v1698 = vmul.f32 %v1674, 0.09090909
  %v1699 = vmul.f32 %v1675, 0.09090909
  %v1700 = vmul.f32 %v1676, 0.09090909
  %v1701 = vmul.f32 %v1677, 0.09090909
  %v1702 = vadd.f32 %v78, %v1694
  %v1703 = vadd.f32 %v79, %v1695
  %v1704 = vadd.f32 %v80, %v1696
  %v1705 = vadd.f32 %v81, %v1697
  %v1706 = vadd.f32 %v82, %v1698
  %v1707 = vadd.f32 %v83, %v1699
  %v1708 = vadd.f32 %v84, %v1700
  %v1709 = vadd.f32 %v85, %v1701
  %v1710 = vmul.f32 %v1686, 0.09090909
  %v1711 = vmul.f32 %v1687, 0.09090909
  %v1712 = vmul.f32 %v1688, 0.09090909
  %v1713 = vmul.f32 %v1689, 0.09090909
  %v1714 = vmul.f32 %v1690, 0.09090909
  %v1715 = vmul.f32 %v1691, 0.09090909
  %v1716 = vmul.f32 %v1692, 0.09090909
  %v1717 = vmul.f32 %v1693, 0.09090909
  %v1718 = vmul.f32 %v113, %v1702
  %v1719 = vmul.f32 %v117, %v1702
  %v1720 = vmul.f32 %v121, %v1702
  %v1721 = vmul.f32 %v125, %v1702
  %v1722 = vmul.f32 %v129, %v1702
  %v1723 = vmul.f32 %v133, %v1702
  %v1724 = vmul.f32 %v137, %v1702
  %v1725 = vmul.f32 %v141, %v1702
  %v1726 = vmul.f32 %v153, %v1703
  %v1727 = vmul.f32 %v157, %v1703
  %v1728 = vmul.f32 %v161, %v1703
  %v1729 = vmul.f32 %v165, %v1703
  %v1730 = vmul.f32 %v169, %v1703
  %v1731 = vmul.f32 %v173, %v1703
  %v1732 = vmul.f32 %v177, %v1703
  %v1733 = vmul.f32 %v181, %v1703
  %v1734 = vadd.f32 %v1718, %v1726
  %v1735 = vadd.f32 %v1719, %v1727
  %v1736 = vadd.f32 %v1720, %v1728
  %v1737 = vadd.f32 %v1721, %v1729
  %v1738 = vadd.f32 %v1722, %v1730
  %v1739 = vadd.f32 %v1723, %v1731
  %v1740 = vadd.f32 %v1724, %v1732
  %v1741 = vadd.f32 %v1725, %v1733
  %v1742 = vmul.f32 %v201, %v1704
  %v1743 = vmul.f32 %v205, %v1704
  %v1744 = vmul.f32 %v209, %v1704
  %v1745 = vmul.f32 %v213, %v1704
  %v1746 = vmul.f32 %v217, %v1704
  %v1747 = vmul.f32 %v221, %v1704
  %v1748 = vmul.f32 %v225, %v1704
  %v1749 = vmul.f32 %v229, %v1704
  %v1750 = vadd.f32 %v1734, %v1742
  %v1751 = vadd.f32 %v1735, %v1743
  %v1752 = vadd.f32 %v1736, %v1744
  %v1753 = vadd.f32 %v1737, %v1745
  %v1754 = vadd.f32 %v1738, %v1746
  %v1755 = vadd.f32 %v1739, %v1747
  %v1756 = vadd.f32 %v1740, %v1748
  %v1757 = vadd.f32 %v1741, %v1749
  %v1758 = vmul.f32 %v249, %v1705
  %v1759 = vmul.f32 %v253, %v1705
  %v1760 = vmul.f32 %v257, %v1705
  %v1761 = vmul.f32 %v261, %v1705
  %v1762 = vmul.f32 %v265, %v1705
  %v1763 = vmul.f32 %v269, %v1705
  %v1764 = vmul.f32 %v273, %v1705
  %v1765 = vmul.f32 %v277, %v1705
  %v1766 = vadd.f32 %v1750, %v1758
  %v1767 = vadd.f32 %v1751, %v1759
  %v1768 = vadd.f32 %v1752, %v1760
  %v1769 = vadd.f32 %v1753, %v1761
  %v1770 = vadd.f32 %v1754, %v1762
  %v1771 = vadd.f32 %v1755, %v1763
  %v1772 = vadd.f32 %v1756, %v1764
  %v1773 = vadd.f32 %v1757, %v1765
  %v1774 = vmul.f32 %v297, %v1706
  %v1775 = vmul.f32 %v301, %v1706
  %v1776 = vmul.f32 %v305, %v1706
  %v1777 = vmul.f32 %v309, %v1706
  %v1778 = vmul.f32 %v313, %v1706
  %v1779 = vmul.f32 %v317, %v1706
  %v1780 = vmul.f32 %v321, %v1706
  %v1781 = vmul.f32 %v325, %v1706
  %v1782 = vadd.f32 %v1766, %v1774
  %v1783 = vadd.f32 %v1767, %v1775
  %v1784 = vadd.f32 %v1768, %v1776
  %v1785 = vadd.f32 %v1769, %v1777
  %v1786 = vadd.f32 %v1770, %v1778
  %v1787 = vadd.f32 %v1771, %v1779
  %v1788 = vadd.f32 %v1772, %v1780
  %v1789 = vadd.f32 %v1773, %v1781
  %v1790 = vmul.f32 %v345, %v1707
  %v1791 = vmul.f32 %v349, %v1707
  %v1792 = vmul.f32 %v353, %v1707
  %v1793 = vmul.f32 %v357, %v1707
  %v1794 = vmul.f32 %v361, %v1707
  %v1795 = vmul.f32 %v365, %v1707
  %v1796 = vmul.f32 %v369, %v1707
  %v1797 = vmul.f32 %v373, %v1707
  %v1798 = vadd.f32 %v1782, %v1790
  %v1799 = vadd.f32 %v1783, %v1791
  %v1800 = vadd.f32 %v1784, %v1792
  %v1801 = vadd.f32 %v1785, %v1793
  %v1802 = vadd.f32 %v1786, %v1794
  %v1803 = vadd.f32 %v1787, %v1795
  %v1804 = vadd.f32 %v1788, %v1796
  %v1805 = vadd.f32 %v1789, %v1797
  %v1806 = vmul.f32 %v393, %v1708
  %v1807 = vmul.f32 %v397, %v1708
  %v1808 = vmul.f32 %v401, %v1708
  %v1809 = vmul.f32 %v405, %v1708
  %v1810 = vmul.f32 %v409, %v1708
  %v1811 = vmul.f32 %v413, %v1708
  %v1812 = vmul.f32 %v417, %v1708
  %v1813 = vmul.f32 %v421, %v1708
  %v1814 = vadd.f32 %v1798, %v1806
  %v1815 = vadd.f32 %v1799, %v1807
  %v1816 = vadd.f32 %v1800, %v1808
  %v1817 = vadd.f32 %v1801, %v1809
  %v1818 = vadd.f32 %v1802, %v1810
  %v1819 = vadd.f32 %v1803, %v1811
  %v1820 = vadd.f32 %v1804, %v1812
  %v1821 = vadd.f32 %v1805, %v1813
  %v1822 = vmul.f32 %v441, %v1709
  %v1823 = vmul.f32 %v445, %v1709
  %v1824 = vmul.f32 %v449, %v1709
  %v1825 = vmul.f32 %v453, %v1709
  %v1826 = vmul.f32 %v457, %v1709
  %v1827 = vmul.f32 %v461, %v1709
  %v1828 = vmul.f32 %v465, %v1709
  %v1829 = vmul.f32 %v469, %v1709
  %v1830 = vadd.f32 %v1814, %v1822
  %v1831 = vadd.f32 %v1815, %v1823
  %v1832 = vadd.f32 %v1816, %v1824
  %v1833 = vadd.f32 %v1817, %v1825
  %v1834 = vadd.f32 %v1818, %v1826
  %v1835 = vadd.f32 %v1819, %v1827
  %v1836 = vadd.f32 %v1820, %v1828
  %v1837 = vadd.f32 %v1821, %v1829
  %v1838 = vmul.f32 %v489, %v1710
  %v1839 = vmul.f32 %v493, %v1710
  %v1840 = vmul.f32 %v497, %v1710
  %v1841 = vmul.f32 %v501, %v1710
  %v1842 = vmul.f32 %v505, %v1710
  %v1843 = vmul.f32 %v509, %v1710
  %v1844 = vmul.f32 %v513, %v1710
  %v1845 = vmul.f32 %v517, %v1710
  %v1846 = vmul.f32 %v529, %v1711
  %v1847 = vmul.f32 %v533, %v1711
  %v1848 = vmul.f32 %v537, %v1711
  %v1849 = vmul.f32 %v541, %v1711
  %v1850 = vmul.f32 %v545, %v1711
  %v1851 = vmul.f32 %v549, %v1711
  %v1852 = vmul.f32 %v553, %v1711
  %v1853 = vmul.f32 %v557, %v1711
  %v1854 = vadd.f32 %v1838, %v1846
  %v1855 = vadd.f32 %v1839, %v1847
  %v1856 = vadd.f32 %v1840, %v1848
  %v1857 = vadd.f32 %v1841, %v1849
  %v1858 = vadd.f32 %v1842, %v1850
  %v1859 = vadd.f32 %v1843, %v1851
  %v1860 = vadd.f32 %v1844, %v1852
  %v1861 = vadd.f32 %v1845, %v1853
  %v1862 = vmul.f32 %v577, %v1712
  %v1863 = vmul.f32 %v581, %v1712
  %v1864 = vmul.f32 %v585, %v1712
  %v1865 = vmul.f32 %v589, %v1712
  %v1866 = vmul.f32 %v593, %v1712
  %v1867 = vmul.f32 %v597, %v1712
  %v1868 = vmul.f32 %v601, %v1712
  %v1869 = vmul.f32 %v605, %v1712
  %v1870 = vadd.f32 %v1854, %v1862
  %v1871 = vadd.f32 %v1855, %v1863
  %v1872 = vadd.f32 %v1856, %v1864
  %v1873 = vadd.f32 %v1857, %v1865
  %v1874 = vadd.f32 %v1858, %v1866
  %v1875 = vadd.f32 %v1859, %v1867
  %v1876 = vadd.f32 %v1860, %v1868
  %v1877 = vadd.f32 %v1861, %v1869
  %v1878 = vmul.f32 %v625, %v1713
  %v1879 = vmul.f32 %v629, %v1713
  %v1880 = vmul.f32 %v633, %v1713
  %v1881 = vmul.f32 %v637, %v1713
  %v1882 = vmul.f32 %v641, %v1713
  %v1883 = vmul.f32 %v645, %v1713
  %v1884 = vmul.f32 %v649, %v1713
  %v1885 = vmul.f32 %v653, %v1713
  %v1886 = vadd.f32 %v1870, %v1878
  %v1887 = vadd.f32 %v1871, %v1879
  %v1888 = vadd.f32 %v1872, %v1880
  %v1889 = vadd.f32 %v1873, %v1881
  %v1890 = vadd.f32 %v1874, %v1882
  %v1891 = vadd.f32 %v1875, %v1883
  %v1892 = vadd.f32 %v1876, %v1884
  %v1893 = vadd.f32 %v1877, %v1885
  %v1894 = vmul.f32 %v673, %v1714
  %v1895 = vmul.f32 %v677, %v1714
  %v1896 = vmul.f32 %v681, %v1714
  %v1897 = vmul.f32 %v685, %v1714
  %v1898 = vmul.f32 %v689, %v1714
  %v1899 = vmul.f32 %v693, %v1714
  %v1900 = vmul.f32 %v697, %v1714
  %v1901 = vmul.f32 %v701, %v1714
  %v1902 = vadd.f32 %v1886, %v1894
  %v1903 = vadd.f32 %v1887, %v1895
  %v1904 = vadd.f32 %v1888, %v1896
  %v1905 = vadd.f32 %v1889, %v1897
  %v1906 = vadd.f32 %v1890, %v1898
  %v1907 = vadd.f32 %v1891, %v1899
  %v1908 = vadd.f32 %v1892, %v1900
  %v1909 = vadd.f32 %v1893, %v1901
  %v1910 = vmul.f32 %v721, %v1715
  %v1911 = vmul.f32 %v725, %v1715
  %v1912 = vmul.f32 %v729, %v1715
  %v1913 = vmul.f32 %v733, %v1715
  %v1914 = vmul.f32 %v737, %v1715
  %v1915 = vmul.f32 %v741, %v1715
  %v1916 = vmul.f32 %v745, %v1715
  %v1917 = vmul.f32 %v749, %v1715
  %v1918 = vadd.f32 %v1902, %v1910
  %v1919 = vadd.f32 %v1903, %v1911
  %v1920 = vadd.f32 %v1904, %v1912
  %v1921 = vadd.f32 %v1905, %v1913
  %v1922 = vadd.f32 %v1906, %v1914
  %v1923 = vadd.f32 %v1907, %v1915
  %v1924 = vadd.f32 %v1908, %v1916
  %v1925 = vadd.f32 %v1909, %v1917
  %v1926 = vmul.f32 %v769, %v1716
  %v1927 = vmul.f32 %v773, %v1716
  %v1928 = vmul.f32 %v777, %v1716
  %v1929 = vmul.f32 %v781, %v1716
  %v1930 = vmul.f32 %v785, %v1716
  %v1931 = vmul.f32 %v789, %v1716
  %v1932 = vmul.f32 %v793, %v1716
  %v1933 = vmul.f32 %v797, %v1716
  %v1934 = vadd.f32 %v1918, %v1926
  %v1935 = vadd.f32 %v1919, %v1927
  %v1936 = vadd.f32 %v1920, %v1928
  %v1937 = vadd.f32 %v1921, %v1929
  %v1938 = vadd.f32 %v1922, %v1930
  %v1939 = vadd.f32 %v1923, %v1931
  %v1940 = vadd.f32 %v1924, %v1932
  %v1941 = vadd.f32 %v1925, %v1933
  %v1942 = vmul.f32 %v817, %v1717
  %v1943 = vmul.f32 %v821, %v1717
  %v1944 = vmul.f32 %v825, %v1717
  %v1945 = vmul.f32 %v829, %v1717
  %v1946 = vmul.f32 %v833, %v1717
  %v1947 = vmul.f32 %v837, %v1717
  %v1948 = vmul.f32 %v841, %v1717
  %v1949 = vmul.f32 %v845, %v1717
  %v1950 = vadd.f32 %v1934, %v1942
  %v1951 = vadd.f32 %v1935, %v1943
  %v1952 = vadd.f32 %v1936, %v1944
  %v1953 = vadd.f32 %v1937, %v1945
  %v1954 = vadd.f32 %v1938, %v1946
  %v1955 = vadd.f32 %v1939, %v1947
  %v1956 = vadd.f32 %v1940, %v1948
  %v1957 = vadd.f32 %v1941, %v1949
  %v1958 = vadd.f32 %v1702, %v1710
  %v1959 = vadd.f32 %v1703, %v1711
  %v1960 = vadd.f32 %v1704, %v1712
  %v1961 = vadd.f32 %v1705, %v1713
  %v1962 = vadd.f32 %v1706, %v1714
  %v1963 = vadd.f32 %v1707, %v1715
  %v1964 = vadd.f32 %v1708, %v1716
  %v1965 = vadd.f32 %v1709, %v1717
  %v1966 = vmul.f32 %v881, %v1958
  %v1967 = vmul.f32 %v885, %v1958
  %v1968 = vmul.f32 %v889, %v1958
  %v1969 = vmul.f32 %v893, %v1958
  %v1970 = vmul.f32 %v897, %v1958
  %v1971 = vmul.f32 %v901, %v1958
  %v1972 = vmul.f32 %v905, %v1958
  %v1973 = vmul.f32 %v909, %v1958
  %v1974 = vmul.f32 %v921, %v1959
  %v1975 = vmul.f32 %v925, %v1959
  %v1976 = vmul.f32 %v929, %v1959
  %v1977 = vmul.f32 %v933, %v1959
  %v1978 = vmul.f32 %v937, %v1959
  %v1979 = vmul.f32 %v941, %v1959
  %v1980 = vmul.f32 %v945, %v1959
  %v1981 = vmul.f32 %v949, %v1959
  %v1982 = vadd.f32 %v1966, %v1974
  %v1983 = vadd.f32 %v1967, %v1975
  %v1984 = vadd.f32 %v1968, %v1976
  %v1985 = vadd.f32 %v1969, %v1977
  %v1986 = vadd.f32 %v1970, %v1978
  %v1987 = vadd.f32 %v1971, %v1979
  %v1988 = vadd.f32 %v1972, %v1980
  %v1989 = vadd.f32 %v1973, %v1981
  %v1990 = vmul.f32 %v969, %v1960
  %v1991 = vmul.f32 %v973, %v1960
  %v1992 = vmul.f32 %v977, %v1960
  %v1993 = vmul.f32 %v981, %v1960
  %v1994 = vmul.f32 %v985, %v1960
  %v1995 = vmul.f32 %v989, %v1960
  %v1996 = vmul.f32 %v993, %v1960
  %v1997 = vmul.f32 %v997, %v1960
  %v1998 = vadd.f32 %v1982, %v1990
  %v1999 = vadd.f32 %v1983, %v1991
  %v2000 = vadd.f32 %v1984, %v1992
  %v2001 = vadd.f32 %v1985, %v1993
  %v2002 = vadd.f32 %v1986, %v1994
  %v2003 = vadd.f32 %v1987, %v1995
  %v2004 = vadd.f32 %v1988, %v1996
  %v2005 = vadd.f32 %v1989, %v1997
  %v2006 = vmul.f32 %v1017, %v1961
  %v2007 = vmul.f32 %v1021, %v1961
  %v2008 = vmul.f32 %v1025, %v1961
  %v2009 = vmul.f32 %v1029, %v1961
  %v2010 = vmul.f32 %v1033, %v1961
  %v2011 = vmul.f32 %v1037, %v1961
  %v2012 = vmul.f32 %v1041, %v1961
  %v2013 = vmul.f32 %v1045, %v1961
  %v2014 = vadd.f32 %v1998, %v2006
  %v2015 = vadd.f32 %v1999, %v2007
  %v2016 = vadd.f32 %v2000, %v2008
  %v2017 = vadd.f32 %v2001, %v2009
  %v2018 = vadd.f32 %v2002, %v2010
  %v2019 = vadd.f32 %v2003, %v2011
  %v2020 = vadd.f32 %v2004, %v2012
  %v2021 = vadd.f32 %v2005, %v2013
  %v2022 = vmul.f32 %v1065, %v1962
  %v2023 = vmul.f32 %v1069, %v1962
  %v2024 = vmul.f32 %v1073, %v1962
  %v2025 = vmul.f32 %v1077, %v1962
  %v2026 = vmul.f32 %v1081, %v1962
  %v2027 = vmul.f32 %v1085, %v1962
  %v2028 = vmul.f32 %v1089, %v1962
  %v2029 = vmul.f32 %v1093, %v1962
  %v2030 = vadd.f32 %v2014, %v2022
  %v2031 = vadd.f32 %v2015, %v2023
  %v2032 = vadd.f32 %v2016, %v2024
  %v2033 = vadd.f32 %v2017, %v2025
  %v2034 = vadd.f32 %v2018, %v2026
  %v2035 = vadd.f32 %v2019, %v2027
  %v2036 = vadd.f32 %v2020, %v2028
  %v2037 = vadd.f32 %v2021, %v2029
  %v2038 = vmul.f32 %v1113, %v1963
  %v2039 = vmul.f32 %v1117, %v1963
  %v2040 = vmul.f32 %v1121, %v1963
  %v2041 = vmul.f32 %v1125, %v1963
  %v2042 = vmul.f32 %v1129, %v1963
  %v2043 = vmul.f32 %v1133, %v1963
  %v2044 = vmul.f32 %v1137, %v1963
  %v2045 = vmul.f32 %v1141, %v1963
  %v2046 = vadd.f32 %v2030, %v2038
  %v2047 = vadd.f32 %v2031, %v2039
  %v2048 = vadd.f32 %v2032, %v2040
  %v2049 = vadd.f32 %v2033, %v2041
  %v2050 = vadd.f32 %v2034, %v2042
  %v2051 = vadd.f32 %v2035, %v2043
  %v2052 = vadd.f32 %v2036, %v2044
  %v2053 = vadd.f32 %v2037, %v2045
  %v2054 = vmul.f32 %v1161, %v1964
  %v2055 = vmul.f32 %v1165, %v1964
  %v2056 = vmul.f32 %v1169, %v1964
  %v2057 = vmul.f32 %v1173, %v1964
  %v2058 = vmul.f32 %v1177, %v1964
  %v2059 = vmul.f32 %v1181, %v1964
  %v2060 = vmul.f32 %v1185, %v1964
  %v2061 = vmul.f32 %v1189, %v1964
  %v2062 = vadd.f32 %v2046, %v2054
  %v2063 = vadd.f32 %v2047, %v2055
  %v2064 = vadd.f32 %v2048, %v2056
  %v2065 = vadd.f32 %v2049, %v2057
  %v2066 = vadd.f32 %v2050, %v2058
  %v2067 = vadd.f32 %v2051, %v2059
  %v2068 = vadd.f32 %v2052, %v2060
  %v2069 = vadd.f32 %v2053, %v2061
  %v2070 = vmul.f32 %v1209, %v1965
  %v2071 = vmul.f32 %v1213, %v1965
  %v2072 = vmul.f32 %v1217, %v1965
  %v2073 = vmul.f32 %v1221, %v1965
  %v2074 = vmul.f32 %v1225, %v1965
  %v2075 = vmul.f32 %v1229, %v1965
  %v2076 = vmul.f32 %v1233, %v1965
  %v2077 = vmul.f32 %v1237, %v1965
  %v2078 = vadd.f32 %v2062, %v2070
  %v2079 = vadd.f32 %v2063, %v2071
  %v2080 = vadd.f32 %v2064, %v2072
  %v2081 = vadd.f32 %v2065, %v2073
  %v2082 = vadd.f32 %v2066, %v2074
  %v2083 = vadd.f32 %v2067, %v2075
  %v2084 = vadd.f32 %v2068, %v2076
  %v2085 = vadd.f32 %v2069, %v2077
  %v2086 = vsub.f32 %v1830, %v1950
  %v2087 = vsub.f32 %v1831, %v1951
  %v2088 = vsub.f32 %v1832, %v1952
  %v2089 = vsub.f32 %v1833, %v1953
  %v2090 = vsub.f32 %v1834, %v1954
  %v2091 = vsub.f32 %v1835, %v1955
  %v2092 = vsub.f32 %v1836, %v1956
  %v2093 = vsub.f32 %v1837, %v1957
  %v2094 = vsub.f32 %v2078, %v1830
  %v2095 = vsub.f32 %v2079, %v1831
  %v2096 = vsub.f32 %v2080, %v1832
  %v2097 = vsub.f32 %v2081, %v1833
  %v2098 = vsub.f32 %v2082, %v1834
  %v2099 = vsub.f32 %v2083, %v1835
  %v2100 = vsub.f32 %v2084, %v1836
  %v2101 = vsub.f32 %v2085, %v1837
  %v2102 = vsub.f32 %v2094, %v1950
  %v2103 = vsub.f32 %v2095, %v1951
  %v2104 = vsub.f32 %v2096, %v1952
  %v2105 = vsub.f32 %v2097, %v1953
  %v2106 = vsub.f32 %v2098, %v1954
  %v2107 = vsub.f32 %v2099, %v1955
  %v2108 = vsub.f32 %v2100, %v1956
  %v2109 = vsub.f32 %v2101, %v1957
  %v2110 = vmul.f32 %v2086, 0.1
  %v2111 = vmul.f32 %v2087, 0.1
  %v2112 = vmul.f32 %v2088, 0.1
  %v2113 = vmul.f32 %v2089, 0.1
  %v2114 = vmul.f32 %v2090, 0.1
  %v2115 = vmul.f32 %v2091, 0.1
  %v2116 = vmul.f32 %v2092, 0.1
  %v2117 = vmul.f32 %v2093, 0.1
  %v2118 = vadd.f32 %v78, %v2110
  %v2119 = vadd.f32 %v79, %v2111
  %v2120 = vadd.f32 %v80, %v2112
  %v2121 = vadd.f32 %v81, %v2113
  %v2122 = vadd.f32 %v82, %v2114
  %v2123 = vadd.f32 %v83, %v2115
  %v2124 = vadd.f32 %v84, %v2116
  %v2125 = vadd.f32 %v85, %v2117
  %v2126 = vmul.f32 %v2102, 0.1
  %v2127 = vmul.f32 %v2103, 0.1
  %v2128 = vmul.f32 %v2104, 0.1
  %v2129 = vmul.f32 %v2105, 0.1
  %v2130 = vmul.f32 %v2106, 0.1
  %v2131 = vmul.f32 %v2107, 0.1
  %v2132 = vmul.f32 %v2108, 0.1
  %v2133 = vmul.f32 %v2109, 0.1
  %v2134 = vmul.f32 %v113, %v2118
  %v2135 = vmul.f32 %v117, %v2118
  %v2136 = vmul.f32 %v121, %v2118
  %v2137 = vmul.f32 %v125, %v2118
  %v2138 = vmul.f32 %v129, %v2118
  %v2139 = vmul.f32 %v133, %v2118
  %v2140 = vmul.f32 %v137, %v2118
  %v2141 = vmul.f32 %v141, %v2118
  %v2142 = vmul.f32 %v153, %v2119
  %v2143 = vmul.f32 %v157, %v2119
  %v2144 = vmul.f32 %v161, %v2119
  %v2145 = vmul.f32 %v165, %v2119
  %v2146 = vmul.f32 %v169, %v2119
  %v2147 = vmul.f32 %v173, %v2119
  %v2148 = vmul.f32 %v177, %v2119
  %v2149 = vmul.f32 %v181, %v2119
  %v2150 = vadd.f32 %v2134, %v2142
  %v2151 = vadd.f32 %v2135, %v2143
  %v2152 = vadd.f32 %v2136, %v2144
  %v2153 = vadd.f32 %v2137, %v2145
  %v2154 = vadd.f32 %v2138, %v2146
  %v2155 = vadd.f32 %v2139, %v2147
  %v2156 = vadd.f32 %v2140, %v2148
  %v2157 = vadd.f32 %v2141, %v2149
  %v2158 = vmul.f32 %v201, %v2120
  %v2159 = vmul.f32 %v205, %v2120
  %v2160 = vmul.f32 %v209, %v2120
  %v2161 = vmul.f32 %v213, %v2120
  %v2162 = vmul.f32 %v217, %v2120
  %v2163 = vmul.f32 %v221, %v2120
  %v2164 = vmul.f32 %v225, %v2120
  %v2165 = vmul.f32 %v229, %v2120
  %v2166 = vadd.f32 %v2150, %v2158
  %v2167 = vadd.f32 %v2151, %v2159
  %v2168 = vadd.f32 %v2152, %v2160
  %v2169 = vadd.f32 %v2153, %v2161
  %v2170 = vadd.f32 %v2154, %v2162
  %v2171 = vadd.f32 %v2155, %v2163
  %v2172 = vadd.f32 %v2156, %v2164
  %v2173 = vadd.f32 %v2157, %v2165
  %v2174 = vmul.f32 %v249, %v2121
  %v2175 = vmul.f32 %v253, %v2121
  %v2176 = vmul.f32 %v257, %v2121
  %v2177 = vmul.f32 %v261, %v2121
  %v2178 = vmul.f32 %v265, %v2121
  %v2179 = vmul.f32 %v269, %v2121
  %v2180 = vmul.f32 %v273, %v2121
  %v2181 = vmul.f32 %v277, %v2121
  %v2182 = vadd.f32 %v2166, %v2174
  %v2183 = vadd.f32 %v2167, %v2175
  %v2184 = vadd.f32 %v2168, %v2176
  %v2185 = vadd.f32 %v2169, %v2177
  %v2186 = vadd.f32 %v2170, %v2178
  %v2187 = vadd.f32 %v2171, %v2179
  %v2188 = vadd.f32 %v2172, %v2180
  %v2189 = vadd.f32 %v2173, %v2181
  %v2190 = vmul.f32 %v297, %v2122
  %v2191 = vmul.f32 %v301, %v2122
  %v2192 = vmul.f32 %v305, %v2122
  %v2193 = vmul.f32 %v309, %v2122
  %v2194 = vmul.f32 %v313, %v2122
  %v2195 = vmul.f32 %v317, %v2122
  %v2196 = vmul.f32 %v321, %v2122
  %v2197 = vmul.f32 %v325, %v2122
  %v2198 = vadd.f32 %v2182, %v2190
  %v2199 = vadd.f32 %v2183, %v2191
  %v2200 = vadd.f32 %v2184, %v2192
  %v2201 = vadd.f32 %v2185, %v2193
  %v2202 = vadd.f32 %v2186, %v2194
  %v2203 = vadd.f32 %v2187, %v2195
  %v2204 = vadd.f32 %v2188, %v2196
  %v2205 = vadd.f32 %v2189, %v2197
  %v2206 = vmul.f32 %v345, %v2123
  %v2207 = vmul.f32 %v349, %v2123
  %v2208 = vmul.f32 %v353, %v2123
  %v2209 = vmul.f32 %v357, %v2123
  %v2210 = vmul.f32 %v361, %v2123
  %v2211 = vmul.f32 %v365, %v2123
  %v2212 = vmul.f32 %v369, %v2123
  %v2213 = vmul.f32 %v373, %v2123
  %v2214 = vadd.f32 %v2198, %v2206
  %v2215 = vadd.f32 %v2199, %v2207
  %v2216 = vadd.f32 %v2200, %v2208
  %v2217 = vadd.f32 %v2201, %v2209
  %v2218 = vadd.f32 %v2202, %v2210
  %v2219 = vadd.f32 %v2203, %v2211
  %v2220 = vadd.f32 %v2204, %v2212
  %v2221 = vadd.f32 %v2205, %v2213
  %v2222 = vmul.f32 %v393, %v2124
  %v2223 = vmul.f32 %v397, %v2124
  %v2224 = vmul.f32 %v401, %v2124
  %v2225 = vmul.f32 %v405, %v2124
  %v2226 = vmul.f32 %v409, %v2124
  %v2227 = vmul.f32 %v413, %v2124
  %v2228 = vmul.f32 %v417, %v2124
  %v2229 = vmul.f32 %v421, %v2124
  %v2230 = vadd.f32 %v2214, %v2222
  %v2231 = vadd.f32 %v2215, %v2223
  %v2232 = vadd.f32 %v2216, %v2224
  %v2233 = vadd.f32 %v2217, %v2225
  %v2234 = vadd.f32 %v2218, %v2226
  %v2235 = vadd.f32 %v2219, %v2227
  %v2236 = vadd.f32 %v2220, %v2228
  %v2237 = vadd.f32 %v2221, %v2229
  %v2238 = vmul.f32 %v441, %v2125
  %v2239 = vmul.f32 %v445, %v2125
  %v2240 = vmul.f32 %v449, %v2125
  %v2241 = vmul.f32 %v453, %v2125
  %v2242 = vmul.f32 %v457, %v2125
  %v2243 = vmul.f32 %v461, %v2125
  %v2244 = vmul.f32 %v465, %v2125
  %v2245 = vmul.f32 %v469, %v2125
  %v2246 = vadd.f32 %v2230, %v2238
  %v2247 = vadd.f32 %v2231, %v2239
  %v2248 = vadd.f32 %v2232, %v2240
  %v2249 = vadd.f32 %v2233, %v2241
  %v2250 = vadd.f32 %v2234, %v2242
  %v2251 = vadd.f32 %v2235, %v2243
  %v2252 = vadd.f32 %v2236, %v2244
  %v2253 = vadd.f32 %v2237, %v2245
  %v2254 = vmul.f32 %v489, %v2126
  %v2255 = vmul.f32 %v493, %v2126
  %v2256 = vmul.f32 %v497, %v2126
  %v2257 = vmul.f32 %v501, %v2126
  %v2258 = vmul.f32 %v505, %v2126
  %v2259 = vmul.f32 %v509, %v2126
  %v2260 = vmul.f32 %v513, %v2126
  %v2261 = vmul.f32 %v517, %v2126
  %v2262 = vmul.f32 %v529, %v2127
  %v2263 = vmul.f32 %v533, %v2127
  %v2264 = vmul.f32 %v537, %v2127
  %v2265 = vmul.f32 %v541, %v2127
  %v2266 = vmul.f32 %v545, %v2127
  %v2267 = vmul.f32 %v549, %v2127
  %v2268 = vmul.f32 %v553, %v2127
  %v2269 = vmul.f32 %v557, %v2127
  %v2270 = vadd.f32 %v2254, %v2262
  %v2271 = vadd.f32 %v2255, %v2263
  %v2272 = vadd.f32 %v2256, %v2264
  %v2273 = vadd.f32 %v2257, %v2265
  %v2274 = vadd.f32 %v2258, %v2266
  %v2275 = vadd.f32 %v2259, %v2267
  %v2276 = vadd.f32 %v2260, %v2268
  %v2277 = vadd.f32 %v2261, %v2269
  %v2278 = vmul.f32 %v577, %v2128
  %v2279 = vmul.f32 %v581, %v2128
  %v2280 = vmul.f32 %v585, %v2128
  %v2281 = vmul.f32 %v589, %v2128
  %v2282 = vmul.f32 %v593, %v2128
  %v2283 = vmul.f32 %v597, %v2128
  %v2284 = vmul.f32 %v601, %v2128
  %v2285 = vmul.f32 %v605, %v2128
  %v2286 = vadd.f32 %v2270, %v2278
  %v2287 = vadd.f32 %v2271, %v2279
  %v2288 = vadd.f32 %v2272, %v2280
  %v2289 = vadd.f32 %v2273, %v2281
  %v2290 = vadd.f32 %v2274, %v2282
  %v2291 = vadd.f32 %v2275, %v2283
  %v2292 = vadd.f32 %v2276, %v2284
  %v2293 = vadd.f32 %v2277, %v2285
  %v2294 = vmul.f32 %v625, %v2129
  %v2295 = vmul.f32 %v629, %v2129
  %v2296 = vmul.f32 %v633, %v2129
  %v2297 = vmul.f32 %v637, %v2129
  %v2298 = vmul.f32 %v641, %v2129
  %v2299 = vmul.f32 %v645, %v2129
  %v2300 = vmul.f32 %v649, %v2129
  %v2301 = vmul.f32 %v653, %v2129
  %v2302 = vadd.f32 %v2286, %v2294
  %v2303 = vadd.f32 %v2287, %v2295
  %v2304 = vadd.f32 %v2288, %v2296
  %v2305 = vadd.f32 %v2289, %v2297
  %v2306 = vadd.f32 %v2290, %v2298
  %v2307 = vadd.f32 %v2291, %v2299
  %v2308 = vadd.f32 %v2292, %v2300
  %v2309 = vadd.f32 %v2293, %v2301
  %v2310 = vmul.f32 %v673, %v2130
  %v2311 = vmul.f32 %v677, %v2130
  %v2312 = vmul.f32 %v681, %v2130
  %v2313 = vmul.f32 %v685, %v2130
  %v2314 = vmul.f32 %v689, %v2130
  %v2315 = vmul.f32 %v693, %v2130
  %v2316 = vmul.f32 %v697, %v2130
  %v2317 = vmul.f32 %v701, %v2130
  %v2318 = vadd.f32 %v2302, %v2310
  %v2319 = vadd.f32 %v2303, %v2311
  %v2320 = vadd.f32 %v2304, %v2312
  %v2321 = vadd.f32 %v2305, %v2313
  %v2322 = vadd.f32 %v2306, %v2314
  %v2323 = vadd.f32 %v2307, %v2315
  %v2324 = vadd.f32 %v2308, %v2316
  %v2325 = vadd.f32 %v2309, %v2317
  %v2326 = vmul.f32 %v721, %v2131
  %v2327 = vmul.f32 %v725, %v2131
  %v2328 = vmul.f32 %v729, %v2131
  %v2329 = vmul.f32 %v733, %v2131
  %v2330 = vmul.f32 %v737, %v2131
  %v2331 = vmul.f32 %v741, %v2131
  %v2332 = vmul.f32 %v745, %v2131
  %v2333 = vmul.f32 %v749, %v2131
  %v2334 = vadd.f32 %v2318, %v2326
  %v2335 = vadd.f32 %v2319, %v2327
  %v2336 = vadd.f32 %v2320, %v2328
  %v2337 = vadd.f32 %v2321, %v2329
  %v2338 = vadd.f32 %v2322, %v2330
  %v2339 = vadd.f32 %v2323, %v2331
  %v2340 = vadd.f32 %v2324, %v2332
  %v2341 = vadd.f32 %v2325, %v2333
  %v2342 = vmul.f32 %v769, %v2132
  %v2343 = vmul.f32 %v773, %v2132
  %v2344 = vmul.f32 %v777, %v2132
  %v2345 = vmul.f32 %v781, %v2132
  %v2346 = vmul.f32 %v785, %v2132
  %v2347 = vmul.f32 %v789, %v2132
  %v2348 = vmul.f32 %v793, %v2132
  %v2349 = vmul.f32 %v797, %v2132
  %v2350 = vadd.f32 %v2334, %v2342
  %v2351 = vadd.f32 %v2335, %v2343
  %v2352 = vadd.f32 %v2336, %v2344
  %v2353 = vadd.f32 %v2337, %v2345
  %v2354 = vadd.f32 %v2338, %v2346
  %v2355 = vadd.f32 %v2339, %v2347
  %v2356 = vadd.f32 %v2340, %v2348
  %v2357 = vadd.f32 %v2341, %v2349
  %v2358 = vmul.f32 %v817, %v2133
  %v2359 = vmul.f32 %v821, %v2133
  %v2360 = vmul.f32 %v825, %v2133
  %v2361 = vmul.f32 %v829, %v2133
  %v2362 = vmul.f32 %v833, %v2133
  %v2363 = vmul.f32 %v837, %v2133
  %v2364 = vmul.f32 %v841, %v2133
  %v2365 = vmul.f32 %v845, %v2133
  %v2366 = vadd.f32 %v2350, %v2358
  %v2367 = vadd.f32 %v2351, %v2359
  %v2368 = vadd.f32 %v2352, %v2360
  %v2369 = vadd.f32 %v2353, %v2361
  %v2370 = vadd.f32 %v2354, %v2362
  %v2371 = vadd.f32 %v2355, %v2363
  %v2372 = vadd.f32 %v2356, %v2364
  %v2373 = vadd.f32 %v2357, %v2365
  %v2374 = vadd.f32 %v2118, %v2126
  %v2375 = vadd.f32 %v2119, %v2127
  %v2376 = vadd.f32 %v2120, %v2128
  %v2377 = vadd.f32 %v2121, %v2129
  %v2378 = vadd.f32 %v2122, %v2130
  %v2379 = vadd.f32 %v2123, %v2131
  %v2380 = vadd.f32 %v2124, %v2132
  %v2381 = vadd.f32 %v2125, %v2133
  %v2382 = vmul.f32 %v881, %v2374
  %v2383 = vmul.f32 %v885, %v2374
  %v2384 = vmul.f32 %v889, %v2374
  %v2385 = vmul.f32 %v893, %v2374
  %v2386 = vmul.f32 %v897, %v2374
  %v2387 = vmul.f32 %v901, %v2374
  %v2388 = vmul.f32 %v905, %v2374
  %v2389 = vmul.f32 %v909, %v2374
  %v2390 = vmul.f32 %v921, %v2375
  %v2391 = vmul.f32 %v925, %v2375
  %v2392 = vmul.f32 %v929, %v2375
  %v2393 = vmul.f32 %v933, %v2375
  %v2394 = vmul.f32 %v937, %v2375
  %v2395 = vmul.f32 %v941, %v2375
  %v2396 = vmul.f32 %v945, %v2375
  %v2397 = vmul.f32 %v949, %v2375
  %v2398 = vadd.f32 %v2382, %v2390
  %v2399 = vadd.f32 %v2383, %v2391
  %v2400 = vadd.f32 %v2384, %v2392
  %v2401 = vadd.f32 %v2385, %v2393
  %v2402 = vadd.f32 %v2386, %v2394
  %v2403 = vadd.f32 %v2387, %v2395
  %v2404 = vadd.f32 %v2388, %v2396
  %v2405 = vadd.f32 %v2389, %v2397
  %v2406 = vmul.f32 %v969, %v2376
  %v2407 = vmul.f32 %v973, %v2376
  %v2408 = vmul.f32 %v977, %v2376
  %v2409 = vmul.f32 %v981, %v2376
  %v2410 = vmul.f32 %v985, %v2376
  %v2411 = vmul.f32 %v989, %v2376
  %v2412 = vmul.f32 %v993, %v2376
  %v2413 = vmul.f32 %v997, %v2376
  %v2414 = vadd.f32 %v2398, %v2406
  %v2415 = vadd.f32 %v2399, %v2407
  %v2416 = vadd.f32 %v2400, %v2408
  %v2417 = vadd.f32 %v2401, %v2409
  %v2418 = vadd.f32 %v2402, %v2410
  %v2419 = vadd.f32 %v2403, %v2411
  %v2420 = vadd.f32 %v2404, %v2412
  %v2421 = vadd.f32 %v2405, %v2413
  %v2422 = vmul.f32 %v1017, %v2377
  %v2423 = vmul.f32 %v1021, %v2377
  %v2424 = vmul.f32 %v1025, %v2377
  %v2425 = vmul.f32 %v1029, %v2377
  %v2426 = vmul.f32 %v1033, %v2377
  %v2427 = vmul.f32 %v1037, %v2377
  %v2428 = vmul.f32 %v1041, %v2377
  %v2429 = vmul.f32 %v1045, %v2377
  %v2430 = vadd.f32 %v2414, %v2422
  %v2431 = vadd.f32 %v2415, %v2423
  %v2432 = vadd.f32 %v2416, %v2424
  %v2433 = vadd.f32 %v2417, %v2425
  %v2434 = vadd.f32 %v2418, %v2426
  %v2435 = vadd.f32 %v2419, %v2427
  %v2436 = vadd.f32 %v2420, %v2428
  %v2437 = vadd.f32 %v2421, %v2429
  %v2438 = vmul.f32 %v1065, %v2378
  %v2439 = vmul.f32 %v1069, %v2378
  %v2440 = vmul.f32 %v1073, %v2378
  %v2441 = vmul.f32 %v1077, %v2378
  %v2442 = vmul.f32 %v1081, %v2378
  %v2443 = vmul.f32 %v1085, %v2378
  %v2444 = vmul.f32 %v1089, %v2378
  %v2445 = vmul.f32 %v1093, %v2378
  %v2446 = vadd.f32 %v2430, %v2438
  %v2447 = vadd.f32 %v2431, %v2439
  %v2448 = vadd.f32 %v2432, %v2440
  %v2449 = vadd.f32 %v2433, %v2441
  %v2450 = vadd.f32 %v2434, %v2442
  %v2451 = vadd.f32 %v2435, %v2443
  %v2452 = vadd.f32 %v2436, %v2444
  %v2453 = vadd.f32 %v2437, %v2445
  %v2454 = vmul.f32 %v1113, %v2379
  %v2455 = vmul.f32 %v1117, %v2379
  %v2456 = vmul.f32 %v1121, %v2379
  %v2457 = vmul.f32 %v1125, %v2379
  %v2458 = vmul.f32 %v1129, %v2379
  %v2459 = vmul.f32 %v1133, %v2379
  %v2460 = vmul.f32 %v1137, %v2379
  %v2461 = vmul.f32 %v1141, %v2379
  %v2462 = vadd.f32 %v2446, %v2454
  %v2463 = vadd.f32 %v2447, %v2455
  %v2464 = vadd.f32 %v2448, %v2456
  %v2465 = vadd.f32 %v2449, %v2457
  %v2466 = vadd.f32 %v2450, %v2458
  %v2467 = vadd.f32 %v2451, %v2459
  %v2468 = vadd.f32 %v2452, %v2460
  %v2469 = vadd.f32 %v2453, %v2461
  %v2470 = vmul.f32 %v1161, %v2380
  %v2471 = vmul.f32 %v1165, %v2380
  %v2472 = vmul.f32 %v1169, %v2380
  %v2473 = vmul.f32 %v1173, %v2380
  %v2474 = vmul.f32 %v1177, %v2380
  %v2475 = vmul.f32 %v1181, %v2380
  %v2476 = vmul.f32 %v1185, %v2380
  %v2477 = vmul.f32 %v1189, %v2380
  %v2478 = vadd.f32 %v2462, %v2470
  %v2479 = vadd.f32 %v2463, %v2471
  %v2480 = vadd.f32 %v2464, %v2472
  %v2481 = vadd.f32 %v2465, %v2473
  %v2482 = vadd.f32 %v2466, %v2474
  %v2483 = vadd.f32 %v2467, %v2475
  %v2484 = vadd.f32 %v2468, %v2476
  %v2485 = vadd.f32 %v2469, %v2477
  %v2486 = vmul.f32 %v1209, %v2381
  %v2487 = vmul.f32 %v1213, %v2381
  %v2488 = vmul.f32 %v1217, %v2381
  %v2489 = vmul.f32 %v1221, %v2381
  %v2490 = vmul.f32 %v1225, %v2381
  %v2491 = vmul.f32 %v1229, %v2381
  %v2492 = vmul.f32 %v1233, %v2381
  %v2493 = vmul.f32 %v1237, %v2381
  %v2494 = vadd.f32 %v2478, %v2486
  %v2495 = vadd.f32 %v2479, %v2487
  %v2496 = vadd.f32 %v2480, %v2488
  %v2497 = vadd.f32 %v2481, %v2489
  %v2498 = vadd.f32 %v2482, %v2490
  %v2499 = vadd.f32 %v2483, %v2491
  %v2500 = vadd.f32 %v2484, %v2492
  %v2501 = vadd.f32 %v2485, %v2493
  %v2502 = vsub.f32 %v2246, %v2366
  %v2503 = vsub.f32 %v2247, %v2367
  %v2504 = vsub.f32 %v2248, %v2368
  %v2505 = vsub.f32 %v2249, %v2369
  %v2506 = vsub.f32 %v2250, %v2370
  %v2507 = vsub.f32 %v2251, %v2371
  %v2508 = vsub.f32 %v2252, %v2372
  %v2509 = vsub.f32 %v2253, %v2373
  %v2510 = vsub.f32 %v2494, %v2246
  %v2511 = vsub.f32 %v2495, %v2247
  %v2512 = vsub.f32 %v2496, %v2248
  %v2513 = vsub.f32 %v2497, %v2249
  %v2514 = vsub.f32 %v2498, %v2250
  %v2515 = vsub.f32 %v2499, %v2251
  %v2516 = vsub.f32 %v2500, %v2252
  %v2517 = vsub.f32 %v2501, %v2253
  %v2518 = vsub.f32 %v2510, %v2366
  %v2519 = vsub.f32 %v2511, %v2367
  %v2520 = vsub.f32 %v2512, %v2368
  %v2521 = vsub.f32 %v2513, %v2369
  %v2522 = vsub.f32 %v2514, %v2370
  %v2523 = vsub.f32 %v2515, %v2371
  %v2524 = vsub.f32 %v2516, %v2372
  %v2525 = vsub.f32 %v2517, %v2373
  %v2526 = vmul.f32 %v2502, 0.11111111
  %v2527 = vmul.f32 %v2503, 0.11111111
  %v2528 = vmul.f32 %v2504, 0.11111111
  %v2529 = vmul.f32 %v2505, 0.11111111
  %v2530 = vmul.f32 %v2506, 0.11111111
  %v2531 = vmul.f32 %v2507, 0.11111111
  %v2532 = vmul.f32 %v2508, 0.11111111
  %v2533 = vmul.f32 %v2509, 0.11111111
  %v2534 = vadd.f32 %v78, %v2526
  %v2535 = vadd.f32 %v79, %v2527
  %v2536 = vadd.f32 %v80, %v2528
  %v2537 = vadd.f32 %v81, %v2529
  %v2538 = vadd.f32 %v82, %v2530
  %v2539 = vadd.f32 %v83, %v2531
  %v2540 = vadd.f32 %v84, %v2532
  %v2541 = vadd.f32 %v85, %v2533
  %v2542 = vmul.f32 %v2518, 0.11111111
  %v2543 = vmul.f32 %v2519, 0.11111111
  %v2544 = vmul.f32 %v2520, 0.11111111
  %v2545 = vmul.f32 %v2521, 0.11111111
  %v2546 = vmul.f32 %v2522, 0.11111111
  %v2547 = vmul.f32 %v2523, 0.11111111
  %v2548 = vmul.f32 %v2524, 0.11111111
  %v2549 = vmul.f32 %v2525, 0.11111111
  %v2550 = vmul.f32 %v113, %v2534
  %v2551 = vmul.f32 %v117, %v2534
  %v2552 = vmul.f32 %v121, %v2534
  %v2553 = vmul.f32 %v125, %v2534
  %v2554 = vmul.f32 %v129, %v2534
  %v2555 = vmul.f32 %v133, %v2534
  %v2556 = vmul.f32 %v137, %v2534
  %v2557 = vmul.f32 %v141, %v2534
  %v2558 = vmul.f32 %v153, %v2535
  %v2559 = vmul.f32 %v157, %v2535
  %v2560 = vmul.f32 %v161, %v2535
  %v2561 = vmul.f32 %v165, %v2535
  %v2562 = vmul.f32 %v169, %v2535
  %v2563 = vmul.f32 %v173, %v2535
  %v2564 = vmul.f32 %v177, %v2535
  %v2565 = vmul.f32 %v181, %v2535
  %v2566 = vadd.f32 %v2550, %v2558
  %v2567 = vadd.f32 %v2551, %v2559
  %v2568 = vadd.f32 %v2552, %v2560
  %v2569 = vadd.f32 %v2553, %v2561
  %v2570 = vadd.f32 %v2554, %v2562
  %v2571 = vadd.f32 %v2555, %v2563
  %v2572 = vadd.f32 %v2556, %v2564
  %v2573 = vadd.f32 %v2557, %v2565
  %v2574 = vmul.f32 %v201, %v2536
  %v2575 = vmul.f32 %v205, %v2536
  %v2576 = vmul.f32 %v209, %v2536
  %v2577 = vmul.f32 %v213, %v2536
  %v2578 = vmul.f32 %v217, %v2536
  %v2579 = vmul.f32 %v221, %v2536
  %v2580 = vmul.f32 %v225, %v2536
  %v2581 = vmul.f32 %v229, %v2536
  %v2582 = vadd.f32 %v2566, %v2574
  %v2583 = vadd.f32 %v2567, %v2575
  %v2584 = vadd.f32 %v2568, %v2576
  %v2585 = vadd.f32 %v2569, %v2577
  %v2586 = vadd.f32 %v2570, %v2578
  %v2587 = vadd.f32 %v2571, %v2579
  %v2588 = vadd.f32 %v2572, %v2580
  %v2589 = vadd.f32 %v2573, %v2581
  %v2590 = vmul.f32 %v249, %v2537
  %v2591 = vmul.f32 %v253, %v2537
  %v2592 = vmul.f32 %v257, %v2537
  %v2593 = vmul.f32 %v261, %v2537
  %v2594 = vmul.f32 %v265, %v2537
  %v2595 = vmul.f32 %v269, %v2537
  %v2596 = vmul.f32 %v273, %v2537
  %v2597 = vmul.f32 %v277, %v2537
  %v2598 = vadd.f32 %v2582, %v2590
  %v2599 = vadd.f32 %v2583, %v2591
  %v2600 = vadd.f32 %v2584, %v2592
  %v2601 = vadd.f32 %v2585, %v2593
  %v2602 = vadd.f32 %v2586, %v2594
  %v2603 = vadd.f32 %v2587, %v2595
  %v2604 = vadd.f32 %v2588, %v2596
  %v2605 = vadd.f32 %v2589, %v2597
  %v2606 = vmul.f32 %v297, %v2538
  %v2607 = vmul.f32 %v301, %v2538
  %v2608 = vmul.f32 %v305, %v2538
  %v2609 = vmul.f32 %v309, %v2538
  %v2610 = vmul.f32 %v313, %v2538
  %v2611 = vmul.f32 %v317, %v2538
  %v2612 = vmul.f32 %v321, %v2538
  %v2613 = vmul.f32 %v325, %v2538
  %v2614 = vadd.f32 %v2598, %v2606
  %v2615 = vadd.f32 %v2599, %v2607
  %v2616 = vadd.f32 %v2600, %v2608
  %v2617 = vadd.f32 %v2601, %v2609
  %v2618 = vadd.f32 %v2602, %v2610
  %v2619 = vadd.f32 %v2603, %v2611
  %v2620 = vadd.f32 %v2604, %v2612
  %v2621 = vadd.f32 %v2605, %v2613
  %v2622 = vmul.f32 %v345, %v2539
  %v2623 = vmul.f32 %v349, %v2539
  %v2624 = vmul.f32 %v353, %v2539
  %v2625 = vmul.f32 %v357, %v2539
  %v2626 = vmul.f32 %v361, %v2539
  %v2627 = vmul.f32 %v365, %v2539
  %v2628 = vmul.f32 %v369, %v2539
  %v2629 = vmul.f32 %v373, %v2539
  %v2630 = vadd.f32 %v2614, %v2622
  %v2631 = vadd.f32 %v2615, %v2623
  %v2632 = vadd.f32 %v2616, %v2624
  %v2633 = vadd.f32 %v2617, %v2625
  %v2634 = vadd.f32 %v2618, %v2626
  %v2635 = vadd.f32 %v2619, %v2627
  %v2636 = vadd.f32 %v2620, %v2628
  %v2637 = vadd.f32 %v2621, %v2629
  %v2638 = vmul.f32 %v393, %v2540
  %v2639 = vmul.f32 %v397, %v2540
  %v2640 = vmul.f32 %v401, %v2540
  %v2641 = vmul.f32 %v405, %v2540
  %v2642 = vmul.f32 %v409, %v2540
  %v2643 = vmul.f32 %v413, %v2540
  %v2644 = vmul.f32 %v417, %v2540
  %v2645 = vmul.f32 %v421, %v2540
  %v2646 = vadd.f32 %v2630, %v2638
  %v2647 = vadd.f32 %v2631, %v2639
  %v2648 = vadd.f32 %v2632, %v2640
  %v2649 = vadd.f32 %v2633, %v2641
  %v2650 = vadd.f32 %v2634, %v2642
  %v2651 = vadd.f32 %v2635, %v2643
  %v2652 = vadd.f32 %v2636, %v2644
  %v2653 = vadd.f32 %v2637, %v2645
  %v2654 = vmul.f32 %v441, %v2541
  %v2655 = vmul.f32 %v445, %v2541
  %v2656 = vmul.f32 %v449, %v2541
  %v2657 = vmul.f32 %v453, %v2541
  %v2658 = vmul.f32 %v457, %v2541
  %v2659 = vmul.f32 %v461, %v2541
  %v2660 = vmul.f32 %v465, %v2541
  %v2661 = vmul.f32 %v469, %v2541
  %v2662 = vadd.f32 %v2646, %v2654
  %v2663 = vadd.f32 %v2647, %v2655
  %v2664 = vadd.f32 %v2648, %v2656
  %v2665 = vadd.f32 %v2649, %v2657
  %v2666 = vadd.f32 %v2650, %v2658
  %v2667 = vadd.f32 %v2651, %v2659
  %v2668 = vadd.f32 %v2652, %v2660
  %v2669 = vadd.f32 %v2653, %v2661
  %v2670 = vmul.f32 %v489, %v2542
  %v2671 = vmul.f32 %v493, %v2542
  %v2672 = vmul.f32 %v497, %v2542
  %v2673 = vmul.f32 %v501, %v2542
  %v2674 = vmul.f32 %v505, %v2542
  %v2675 = vmul.f32 %v509, %v2542
  %v2676 = vmul.f32 %v513, %v2542
  %v2677 = vmul.f32 %v517, %v2542
  %v2678 = vmul.f32 %v529, %v2543
  %v2679 = vmul.f32 %v533, %v2543
  %v2680 = vmul.f32 %v537, %v2543
  %v2681 = vmul.f32 %v541, %v2543
  %v2682 = vmul.f32 %v545, %v2543
  %v2683 = vmul.f32 %v549, %v2543
  %v2684 = vmul.f32 %v553, %v2543
  %v2685 = vmul.f32 %v557, %v2543
  %v2686 = vadd.f32 %v2670, %v2678
  %v2687 = vadd.f32 %v2671, %v2679
  %v2688 = vadd.f32 %v2672, %v2680
  %v2689 = vadd.f32 %v2673, %v2681
  %v2690 = vadd.f32 %v2674, %v2682
  %v2691 = vadd.f32 %v2675, %v2683
  %v2692 = vadd.f32 %v2676, %v2684
  %v2693 = vadd.f32 %v2677, %v2685
  %v2694 = vmul.f32 %v577, %v2544
  %v2695 = vmul.f32 %v581, %v2544
  %v2696 = vmul.f32 %v585, %v2544
  %v2697 = vmul.f32 %v589, %v2544
  %v2698 = vmul.f32 %v593, %v2544
  %v2699 = vmul.f32 %v597, %v2544
  %v2700 = vmul.f32 %v601, %v2544
  %v2701 = vmul.f32 %v605, %v2544
  %v2702 = vadd.f32 %v2686, %v2694
  %v2703 = vadd.f32 %v2687, %v2695
  %v2704 = vadd.f32 %v2688, %v2696
  %v2705 = vadd.f32 %v2689, %v2697
  %v2706 = vadd.f32 %v2690, %v2698
  %v2707 = vadd.f32 %v2691, %v2699
  %v2708 = vadd.f32 %v2692, %v2700
  %v2709 = vadd.f32 %v2693, %v2701
  %v2710 = vmul.f32 %v625, %v2545
  %v2711 = vmul.f32 %v629, %v2545
  %v2712 = vmul.f32 %v633, %v2545
  %v2713 = vmul.f32 %v637, %v2545
  %v2714 = vmul.f32 %v641, %v2545
  %v2715 = vmul.f32 %v645, %v2545
  %v2716 = vmul.f32 %v649, %v2545
  %v2717 = vmul.f32 %v653, %v2545
  %v2718 = vadd.f32 %v2702, %v2710
  %v2719 = vadd.f32 %v2703, %v2711
  %v2720 = vadd.f32 %v2704, %v2712
  %v2721 = vadd.f32 %v2705, %v2713
  %v2722 = vadd.f32 %v2706, %v2714
  %v2723 = vadd.f32 %v2707, %v2715
  %v2724 = vadd.f32 %v2708, %v2716
  %v2725 = vadd.f32 %v2709, %v2717
  %v2726 = vmul.f32 %v673, %v2546
  %v2727 = vmul.f32 %v677, %v2546
  %v2728 = vmul.f32 %v681, %v2546
  %v2729 = vmul.f32 %v685, %v2546
  %v2730 = vmul.f32 %v689, %v2546
  %v2731 = vmul.f32 %v693, %v2546
  %v2732 = vmul.f32 %v697, %v2546
  %v2733 = vmul.f32 %v701, %v2546
  %v2734 = vadd.f32 %v2718, %v2726
  %v2735 = vadd.f32 %v2719, %v2727
  %v2736 = vadd.f32 %v2720, %v2728
  %v2737 = vadd.f32 %v2721, %v2729
  %v2738 = vadd.f32 %v2722, %v2730
  %v2739 = vadd.f32 %v2723, %v2731
  %v2740 = vadd.f32 %v2724, %v2732
  %v2741 = vadd.f32 %v2725, %v2733
  %v2742 = vmul.f32 %v721, %v2547
  %v2743 = vmul.f32 %v725, %v2547
  %v2744 = vmul.f32 %v729, %v2547
  %v2745 = vmul.f32 %v733, %v2547
  %v2746 = vmul.f32 %v737, %v2547
  %v2747 = vmul.f32 %v741, %v2547
  %v2748 = vmul.f32 %v745, %v2547
  %v2749 = vmul.f32 %v749, %v2547
  %v2750 = vadd.f32 %v2734, %v2742
  %v2751 = vadd.f32 %v2735, %v2743
  %v2752 = vadd.f32 %v2736, %v2744
  %v2753 = vadd.f32 %v2737, %v2745
  %v2754 = vadd.f32 %v2738, %v2746
  %v2755 = vadd.f32 %v2739, %v2747
  %v2756 = vadd.f32 %v2740, %v2748
  %v2757 = vadd.f32 %v2741, %v2749
  %v2758 = vmul.f32 %v769, %v2548
  %v2759 = vmul.f32 %v773, %v2548
  %v2760 = vmul.f32 %v777, %v2548
  %v2761 = vmul.f32 %v781, %v2548
  %v2762 = vmul.f32 %v785, %v2548
  %v2763 = vmul.f32 %v789, %v2548
  %v2764 = vmul.f32 %v793, %v2548
  %v2765 = vmul.f32 %v797, %v2548
  %v2766 = vadd.f32 %v2750, %v2758
  %v2767 = vadd.f32 %v2751, %v2759
  %v2768 = vadd.f32 %v2752, %v2760
  %v2769 = vadd.f32 %v2753, %v2761
  %v2770 = vadd.f32 %v2754, %v2762
  %v2771 = vadd.f32 %v2755, %v2763
  %v2772 = vadd.f32 %v2756, %v2764
  %v2773 = vadd.f32 %v2757, %v2765
  %v2774 = vmul.f32 %v817, %v2549
  %v2775 = vmul.f32 %v821, %v2549
  %v2776 = vmul.f32 %v825, %v2549
  %v2777 = vmul.f32 %v829, %v2549
  %v2778 = vmul.f32 %v833, %v2549
  %v2779 = vmul.f32 %v837, %v2549
  %v2780 = vmul.f32 %v841, %v2549
  %v2781 = vmul.f32 %v845, %v2549
  %v2782 = vadd.f32 %v2766, %v2774
  %v2783 = vadd.f32 %v2767, %v2775
  %v2784 = vadd.f32 %v2768, %v2776
  %v2785 = vadd.f32 %v2769, %v2777
  %v2786 = vadd.f32 %v2770, %v2778
  %v2787 = vadd.f32 %v2771, %v2779
  %v2788 = vadd.f32 %v2772, %v2780
  %v2789 = vadd.f32 %v2773, %v2781
  %v2790 = vadd.f32 %v2534, %v2542
  %v2791 = vadd.f32 %v2535, %v2543
  %v2792 = vadd.f32 %v2536, %v2544
  %v2793 = vadd.f32 %v2537, %v2545
  %v2794 = vadd.f32 %v2538, %v2546
  %v2795 = vadd.f32 %v2539, %v2547
  %v2796 = vadd.f32 %v2540, %v2548
  %v2797 = vadd.f32 %v2541, %v2549
  %v2798 = vmul.f32 %v881, %v2790
  %v2799 = vmul.f32 %v885, %v2790
  %v2800 = vmul.f32 %v889, %v2790
  %v2801 = vmul.f32 %v893, %v2790
  %v2802 = vmul.f32 %v897, %v2790
  %v2803 = vmul.f32 %v901, %v2790
  %v2804 = vmul.f32 %v905, %v2790
  %v2805 = vmul.f32 %v909, %v2790
  %v2806 = vmul.f32 %v921, %v2791
  %v2807 = vmul.f32 %v925, %v2791
  %v2808 = vmul.f32 %v929, %v2791
  %v2809 = vmul.f32 %v933, %v2791
  %v2810 = vmul.f32 %v937, %v2791
  %v2811 = vmul.f32 %v941, %v2791
  %v2812 = vmul.f32 %v945, %v2791
  %v2813 = vmul.f32 %v949, %v2791
  %v2814 = vadd.f32 %v2798, %v2806
  %v2815 = vadd.f32 %v2799, %v2807
  %v2816 = vadd.f32 %v2800, %v2808
  %v2817 = vadd.f32 %v2801, %v2809
  %v2818 = vadd.f32 %v2802, %v2810
  %v2819 = vadd.f32 %v2803, %v2811
  %v2820 = vadd.f32 %v2804, %v2812
  %v2821 = vadd.f32 %v2805, %v2813
  %v2822 = vmul.f32 %v969, %v2792
  %v2823 = vmul.f32 %v973, %v2792
  %v2824 = vmul.f32 %v977, %v2792
  %v2825 = vmul.f32 %v981, %v2792
  %v2826 = vmul.f32 %v985, %v2792
  %v2827 = vmul.f32 %v989, %v2792
  %v2828 = vmul.f32 %v993, %v2792
  %v2829 = vmul.f32 %v997, %v2792
  %v2830 = vadd.f32 %v2814, %v2822
  %v2831 = vadd.f32 %v2815, %v2823
  %v2832 = vadd.f32 %v2816, %v2824
  %v2833 = vadd.f32 %v2817, %v2825
  %v2834 = vadd.f32 %v2818, %v2826
  %v2835 = vadd.f32 %v2819, %v2827
  %v2836 = vadd.f32 %v2820, %v2828
  %v2837 = vadd.f32 %v2821, %v2829
  %v2838 = vmul.f32 %v1017, %v2793
  %v2839 = vmul.f32 %v1021, %v2793
  %v2840 = vmul.f32 %v1025, %v2793
  %v2841 = vmul.f32 %v1029, %v2793
  %v2842 = vmul.f32 %v1033, %v2793
  %v2843 = vmul.f32 %v1037, %v2793
  %v2844 = vmul.f32 %v1041, %v2793
  %v2845 = vmul.f32 %v1045, %v2793
  %v2846 = vadd.f32 %v2830, %v2838
  %v2847 = vadd.f32 %v2831, %v2839
  %v2848 = vadd.f32 %v2832, %v2840
  %v2849 = vadd.f32 %v2833, %v2841
  %v2850 = vadd.f32 %v2834, %v2842
  %v2851 = vadd.f32 %v2835, %v2843
  %v2852 = vadd.f32 %v2836, %v2844
  %v2853 = vadd.f32 %v2837, %v2845
  %v2854 = vmul.f32 %v1065, %v2794
  %v2855 = vmul.f32 %v1069, %v2794
  %v2856 = vmul.f32 %v1073, %v2794
  %v2857 = vmul.f32 %v1077, %v2794
  %v2858 = vmul.f32 %v1081, %v2794
  %v2859 = vmul.f32 %v1085, %v2794
  %v2860 = vmul.f32 %v1089, %v2794
  %v2861 = vmul.f32 %v1093, %v2794
  %v2862 = vadd.f32 %v2846, %v2854
  %v2863 = vadd.f32 %v2847, %v2855
  %v2864 = vadd.f32 %v2848, %v2856
  %v2865 = vadd.f32 %v2849, %v2857
  %v2866 = vadd.f32 %v2850, %v2858
  %v2867 = vadd.f32 %v2851, %v2859
  %v2868 = vadd.f32 %v2852, %v2860
  %v2869 = vadd.f32 %v2853, %v2861
  %v2870 = vmul.f32 %v1113, %v2795
  %v2871 = vmul.f32 %v1117, %v2795
  %v2872 = vmul.f32 %v1121, %v2795
  %v2873 = vmul.f32 %v1125, %v2795
  %v2874 = vmul.f32 %v1129, %v2795
  %v2875 = vmul.f32 %v1133, %v2795
  %v2876 = vmul.f32 %v1137, %v2795
  %v2877 = vmul.f32 %v1141, %v2795
  %v2878 = vadd.f32 %v2862, %v2870
  %v2879 = vadd.f32 %v2863, %v2871
  %v2880 = vadd.f32 %v2864, %v2872
  %v2881 = vadd.f32 %v2865, %v2873
  %v2882 = vadd.f32 %v2866, %v2874
  %v2883 = vadd.f32 %v2867, %v2875
  %v2884 = vadd.f32 %v2868, %v2876
  %v2885 = vadd.f32 %v2869, %v2877
  %v2886 = vmul.f32 %v1161, %v2796
  %v2887 = vmul.f32 %v1165, %v2796
  %v2888 = vmul.f32 %v1169, %v2796
  %v2889 = vmul.f32 %v1173, %v2796
  %v2890 = vmul.f32 %v1177, %v2796
  %v2891 = vmul.f32 %v1181, %v2796
  %v2892 = vmul.f32 %v1185, %v2796
  %v2893 = vmul.f32 %v1189, %v2796
  %v2894 = vadd.f32 %v2878, %v2886
  %v2895 = vadd.f32 %v2879, %v2887
  %v2896 = vadd.f32 %v2880, %v2888
  %v2897 = vadd.f32 %v2881, %v2889
  %v2898 = vadd.f32 %v2882, %v2890
  %v2899 = vadd.f32 %v2883, %v2891
  %v2900 = vadd.f32 %v2884, %v2892
  %v2901 = vadd.f32 %v2885, %v2893
  %v2902 = vmul.f32 %v1209, %v2797
  %v2903 = vmul.f32 %v1213, %v2797
  %v2904 = vmul.f32 %v1217, %v2797
  %v2905 = vmul.f32 %v1221, %v2797
  %v2906 = vmul.f32 %v1225, %v2797
  %v2907 = vmul.f32 %v1229, %v2797
  %v2908 = vmul.f32 %v1233, %v2797
  %v2909 = vmul.f32 %v1237, %v2797
  %v2910 = vadd.f32 %v2894, %v2902
  %v2911 = vadd.f32 %v2895, %v2903
  %v2912 = vadd.f32 %v2896, %v2904
  %v2913 = vadd.f32 %v2897, %v2905
  %v2914 = vadd.f32 %v2898, %v2906
  %v2915 = vadd.f32 %v2899, %v2907
  %v2916 = vadd.f32 %v2900, %v2908
  %v2917 = vadd.f32 %v2901, %v2909
  %v2918 = vsub.f32 %v2662, %v2782
  %v2919 = vsub.f32 %v2663, %v2783
  %v2920 = vsub.f32 %v2664, %v2784
  %v2921 = vsub.f32 %v2665, %v2785
  %v2922 = vsub.f32 %v2666, %v2786
  %v2923 = vsub.f32 %v2667, %v2787
  %v2924 = vsub.f32 %v2668, %v2788
  %v2925 = vsub.f32 %v2669, %v2789
  %v2926 = vsub.f32 %v2910, %v2662
  %v2927 = vsub.f32 %v2911, %v2663
  %v2928 = vsub.f32 %v2912, %v2664
  %v2929 = vsub.f32 %v2913, %v2665
  %v2930 = vsub.f32 %v2914, %v2666
  %v2931 = vsub.f32 %v2915, %v2667
  %v2932 = vsub.f32 %v2916, %v2668
  %v2933 = vsub.f32 %v2917, %v2669
  %v2934 = vsub.f32 %v2926, %v2782
  %v2935 = vsub.f32 %v2927, %v2783
  %v2936 = vsub.f32 %v2928, %v2784
  %v2937 = vsub.f32 %v2929, %v2785
  %v2938 = vsub.f32 %v2930, %v2786
  %v2939 = vsub.f32 %v2931, %v2787
  %v2940 = vsub.f32 %v2932, %v2788
  %v2941 = vsub.f32 %v2933, %v2789
  %v2942 = vmul.f32 %v2918, 0.125
  %v2943 = vmul.f32 %v2919, 0.125
  %v2944 = vmul.f32 %v2920, 0.125
  %v2945 = vmul.f32 %v2921, 0.125
  %v2946 = vmul.f32 %v2922, 0.125
  %v2947 = vmul.f32 %v2923, 0.125
  %v2948 = vmul.f32 %v2924, 0.125
  %v2949 = vmul.f32 %v2925, 0.125
  %v2950 = vadd.f32 %v78, %v2942
  %v2951 = vadd.f32 %v79, %v2943
  %v2952 = vadd.f32 %v80, %v2944
  %v2953 = vadd.f32 %v81, %v2945
  %v2954 = vadd.f32 %v82, %v2946
  %v2955 = vadd.f32 %v83, %v2947
  %v2956 = vadd.f32 %v84, %v2948
  %v2957 = vadd.f32 %v85, %v2949
  %v2958 = vmul.f32 %v2934, 0.125
  %v2959 = vmul.f32 %v2935, 0.125
  %v2960 = vmul.f32 %v2936, 0.125
  %v2961 = vmul.f32 %v2937, 0.125
  %v2962 = vmul.f32 %v2938, 0.125
  %v2963 = vmul.f32 %v2939, 0.125
  %v2964 = vmul.f32 %v2940, 0.125
  %v2965 = vmul.f32 %v2941, 0.125
  %v2966 = vmul.f32 %v113, %v2950
  %v2967 = vmul.f32 %v117, %v2950
  %v2968 = vmul.f32 %v121, %v2950
  %v2969 = vmul.f32 %v125, %v2950
  %v2970 = vmul.f32 %v129, %v2950
  %v2971 = vmul.f32 %v133, %v2950
  %v2972 = vmul.f32 %v137, %v2950
  %v2973 = vmul.f32 %v141, %v2950
  %v2974 = vmul.f32 %v153, %v2951
  %v2975 = vmul.f32 %v157, %v2951
  %v2976 = vmul.f32 %v161, %v2951
  %v2977 = vmul.f32 %v165, %v2951
  %v2978 = vmul.f32 %v169, %v2951
  %v2979 = vmul.f32 %v173, %v2951
  %v2980 = vmul.f32 %v177, %v2951
  %v2981 = vmul.f32 %v181, %v2951
  %v2982 = vadd.f32 %v2966, %v2974
  %v2983 = vadd.f32 %v2967, %v2975
  %v2984 = vadd.f32 %v2968, %v2976
  %v2985 = vadd.f32 %v2969, %v2977
  %v2986 = vadd.f32 %v2970, %v2978
  %v2987 = vadd.f32 %v2971, %v2979
  %v2988 = vadd.f32 %v2972, %v2980
  %v2989 = vadd.f32 %v2973, %v2981
  %v2990 = vmul.f32 %v201, %v2952
  %v2991 = vmul.f32 %v205, %v2952
  %v2992 = vmul.f32 %v209, %v2952
  %v2993 = vmul.f32 %v213, %v2952
  %v2994 = vmul.f32 %v217, %v2952
  %v2995 = vmul.f32 %v221, %v2952
  %v2996 = vmul.f32 %v225, %v2952
  %v2997 = vmul.f32 %v229, %v2952
  %v2998 = vadd.f32 %v2982, %v2990
  %v2999 = vadd.f32 %v2983, %v2991
  %v3000 = vadd.f32 %v2984, %v2992
  %v3001 = vadd.f32 %v2985, %v2993
  %v3002 = vadd.f32 %v2986, %v2994
  %v3003 = vadd.f32 %v2987, %v2995
  %v3004 = vadd.f32 %v2988, %v2996
  %v3005 = vadd.f32 %v2989, %v2997
  %v3006 = vmul.f32 %v249, %v2953
  %v3007 = vmul.f32 %v253, %v2953
  %v3008 = vmul.f32 %v257, %v2953
  %v3009 = vmul.f32 %v261, %v2953
  %v3010 = vmul.f32 %v265, %v2953
  %v3011 = vmul.f32 %v269, %v2953
  %v3012 = vmul.f32 %v273, %v2953
  %v3013 = vmul.f32 %v277, %v2953
  %v3014 = vadd.f32 %v2998, %v3006
  %v3015 = vadd.f32 %v2999, %v3007
  %v3016 = vadd.f32 %v3000, %v3008
  %v3017 = vadd.f32 %v3001, %v3009
  %v3018 = vadd.f32 %v3002, %v3010
  %v3019 = vadd.f32 %v3003, %v3011
  %v3020 = vadd.f32 %v3004, %v3012
  %v3021 = vadd.f32 %v3005, %v3013
  %v3022 = vmul.f32 %v297, %v2954
  %v3023 = vmul.f32 %v301, %v2954
  %v3024 = vmul.f32 %v305, %v2954
  %v3025 = vmul.f32 %v309, %v2954
  %v3026 = vmul.f32 %v313, %v2954
  %v3027 = vmul.f32 %v317, %v2954
  %v3028 = vmul.f32 %v321, %v2954
  %v3029 = vmul.f32 %v325, %v2954
  %v3030 = vadd.f32 %v3014, %v3022
  %v3031 = vadd.f32 %v3015, %v3023
  %v3032 = vadd.f32 %v3016, %v3024
  %v3033 = vadd.f32 %v3017, %v3025
  %v3034 = vadd.f32 %v3018, %v3026
  %v3035 = vadd.f32 %v3019, %v3027
  %v3036 = vadd.f32 %v3020, %v3028
  %v3037 = vadd.f32 %v3021, %v3029
  %v3038 = vmul.f32 %v345, %v2955
  %v3039 = vmul.f32 %v349, %v2955
  %v3040 = vmul.f32 %v353, %v2955
  %v3041 = vmul.f32 %v357, %v2955
  %v3042 = vmul.f32 %v361, %v2955
  %v3043 = vmul.f32 %v365, %v2955
  %v3044 = vmul.f32 %v369, %v2955
  %v3045 = vmul.f32 %v373, %v2955
  %v3046 = vadd.f32 %v3030, %v3038
  %v3047 = vadd.f32 %v3031, %v3039
  %v3048 = vadd.f32 %v3032, %v3040
  %v3049 = vadd.f32 %v3033, %v3041
  %v3050 = vadd.f32 %v3034, %v3042
  %v3051 = vadd.f32 %v3035, %v3043
  %v3052 = vadd.f32 %v3036, %v3044
  %v3053 = vadd.f32 %v3037, %v3045
  %v3054 = vmul.f32 %v393, %v2956
  %v3055 = vmul.f32 %v397, %v2956
  %v3056 = vmul.f32 %v401, %v2956
  %v3057 = vmul.f32 %v405, %v2956
  %v3058 = vmul.f32 %v409, %v2956
  %v3059 = vmul.f32 %v413, %v2956
  %v3060 = vmul.f32 %v417, %v2956
  %v3061 = vmul.f32 %v421, %v2956
  %v3062 = vadd.f32 %v3046, %v3054
  %v3063 = vadd.f32 %v3047, %v3055
  %v3064 = vadd.f32 %v3048, %v3056
  %v3065 = vadd.f32 %v3049, %v3057
  %v3066 = vadd.f32 %v3050, %v3058
  %v3067 = vadd.f32 %v3051, %v3059
  %v3068 = vadd.f32 %v3052, %v3060
  %v3069 = vadd.f32 %v3053, %v3061
  %v3070 = vmul.f32 %v441, %v2957
  %v3071 = vmul.f32 %v445, %v2957
  %v3072 = vmul.f32 %v449, %v2957
  %v3073 = vmul.f32 %v453, %v2957
  %v3074 = vmul.f32 %v457, %v2957
  %v3075 = vmul.f32 %v461, %v2957
  %v3076 = vmul.f32 %v465, %v2957
  %v3077 = vmul.f32 %v469, %v2957
  %v3078 = vadd.f32 %v3062, %v3070
  %v3079 = vadd.f32 %v3063, %v3071
  %v3080 = vadd.f32 %v3064, %v3072
  %v3081 = vadd.f32 %v3065, %v3073
  %v3082 = vadd.f32 %v3066, %v3074
  %v3083 = vadd.f32 %v3067, %v3075
  %v3084 = vadd.f32 %v3068, %v3076
  %v3085 = vadd.f32 %v3069, %v3077
  %v3086 = vmul.f32 %v489, %v2958
  %v3087 = vmul.f32 %v493, %v2958
  %v3088 = vmul.f32 %v497, %v2958
  %v3089 = vmul.f32 %v501, %v2958
  %v3090 = vmul.f32 %v505, %v2958
  %v3091 = vmul.f32 %v509, %v2958
  %v3092 = vmul.f32 %v513, %v2958
  %v3093 = vmul.f32 %v517, %v2958
  %v3094 = vmul.f32 %v529, %v2959
  %v3095 = vmul.f32 %v533, %v2959
  %v3096 = vmul.f32 %v537, %v2959
  %v3097 = vmul.f32 %v541, %v2959
  %v3098 = vmul.f32 %v545, %v2959
  %v3099 = vmul.f32 %v549, %v2959
  %v3100 = vmul.f32 %v553, %v2959
  %v3101 = vmul.f32 %v557, %v2959
  %v3102 = vadd.f32 %v3086, %v3094
  %v3103 = vadd.f32 %v3087, %v3095
  %v3104 = vadd.f32 %v3088, %v3096
  %v3105 = vadd.f32 %v3089, %v3097
  %v3106 = vadd.f32 %v3090, %v3098
  %v3107 = vadd.f32 %v3091, %v3099
  %v3108 = vadd.f32 %v3092, %v3100
  %v3109 = vadd.f32 %v3093, %v3101
  %v3110 = vmul.f32 %v577, %v2960
  %v3111 = vmul.f32 %v581, %v2960
  %v3112 = vmul.f32 %v585, %v2960
  %v3113 = vmul.f32 %v589, %v2960
  %v3114 = vmul.f32 %v593, %v2960
  %v3115 = vmul.f32 %v597, %v2960
  %v3116 = vmul.f32 %v601, %v2960
  %v3117 = vmul.f32 %v605, %v2960
  %v3118 = vadd.f32 %v3102, %v3110
  %v3119 = vadd.f32 %v3103, %v3111
  %v3120 = vadd.f32 %v3104, %v3112
  %v3121 = vadd.f32 %v3105, %v3113
  %v3122 = vadd.f32 %v3106, %v3114
  %v3123 = vadd.f32 %v3107, %v3115
  %v3124 = vadd.f32 %v3108, %v3116
  %v3125 = vadd.f32 %v3109, %v3117
  %v3126 = vmul.f32 %v625, %v2961
  %v3127 = vmul.f32 %v629, %v2961
  %v3128 = vmul.f32 %v633, %v2961
  %v3129 = vmul.f32 %v637, %v2961
  %v3130 = vmul.f32 %v641, %v2961
  %v3131 = vmul.f32 %v645, %v2961
  %v3132 = vmul.f32 %v649, %v2961
  %v3133 = vmul.f32 %v653, %v2961
  %v3134 = vadd.f32 %v3118, %v3126
  %v3135 = vadd.f32 %v3119, %v3127
  %v3136 = vadd.f32 %v3120, %v3128
  %v3137 = vadd.f32 %v3121, %v3129
  %v3138 = vadd.f32 %v3122, %v3130
  %v3139 = vadd.f32 %v3123, %v3131
  %v3140 = vadd.f32 %v3124, %v3132
  %v3141 = vadd.f32 %v3125, %v3133
  %v3142 = vmul.f32 %v673, %v2962
  %v3143 = vmul.f32 %v677, %v2962
  %v3144 = vmul.f32 %v681, %v2962
  %v3145 = vmul.f32 %v685, %v2962
  %v3146 = vmul.f32 %v689, %v2962
  %v3147 = vmul.f32 %v693, %v2962
  %v3148 = vmul.f32 %v697, %v2962
  %v3149 = vmul.f32 %v701, %v2962
  %v3150 = vadd.f32 %v3134, %v3142
  %v3151 = vadd.f32 %v3135, %v3143
  %v3152 = vadd.f32 %v3136, %v3144
  %v3153 = vadd.f32 %v3137, %v3145
  %v3154 = vadd.f32 %v3138, %v3146
  %v3155 = vadd.f32 %v3139, %v3147
  %v3156 = vadd.f32 %v3140, %v3148
  %v3157 = vadd.f32 %v3141, %v3149
  %v3158 = vmul.f32 %v721, %v2963
  %v3159 = vmul.f32 %v725, %v2963
  %v3160 = vmul.f32 %v729, %v2963
  %v3161 = vmul.f32 %v733, %v2963
  %v3162 = vmul.f32 %v737, %v2963
  %v3163 = vmul.f32 %v741, %v2963
  %v3164 = vmul.f32 %v745, %v2963
  %v3165 = vmul.f32 %v749, %v2963
  %v3166 = vadd.f32 %v3150, %v3158
  %v3167 = vadd.f32 %v3151, %v3159
  %v3168 = vadd.f32 %v3152, %v3160
  %v3169 = vadd.f32 %v3153, %v3161
  %v3170 = vadd.f32 %v3154, %v3162
  %v3171 = vadd.f32 %v3155, %v3163
  %v3172 = vadd.f32 %v3156, %v3164
  %v3173 = vadd.f32 %v3157, %v3165
  %v3174 = vmul.f32 %v769, %v2964
  %v3175 = vmul.f32 %v773, %v2964
  %v3176 = vmul.f32 %v777, %v2964
  %v3177 = vmul.f32 %v781, %v2964
  %v3178 = vmul.f32 %v785, %v2964
  %v3179 = vmul.f32 %v789, %v2964
  %v3180 = vmul.f32 %v793, %v2964
  %v3181 = vmul.f32 %v797, %v2964
  %v3182 = vadd.f32 %v3166, %v3174
  %v3183 = vadd.f32 %v3167, %v3175
  %v3184 = vadd.f32 %v3168, %v3176
  %v3185 = vadd.f32 %v3169, %v3177
  %v3186 = vadd.f32 %v3170, %v3178
  %v3187 = vadd.f32 %v3171, %v3179
  %v3188 = vadd.f32 %v3172, %v3180
  %v3189 = vadd.f32 %v3173, %v3181
  %v3190 = vmul.f32 %v817, %v2965
  %v3191 = vmul.f32 %v821, %v2965
  %v3192 = vmul.f32 %v825, %v2965
  %v3193 = vmul.f32 %v829, %v2965
  %v3194 = vmul.f32 %v833, %v2965
  %v3195 = vmul.f32 %v837, %v2965
  %v3196 = vmul.f32 %v841, %v2965
  %v3197 = vmul.f32 %v845, %v2965
  %v3198 = vadd.f32 %v3182, %v3190
  %v3199 = vadd.f32 %v3183, %v3191
  %v3200 = vadd.f32 %v3184, %v3192
  %v3201 = vadd.f32 %v3185, %v3193
  %v3202 = vadd.f32 %v3186, %v3194
  %v3203 = vadd.f32 %v3187, %v3195
  %v3204 = vadd.f32 %v3188, %v3196
  %v3205 = vadd.f32 %v3189, %v3197
  %v3206 = vadd.f32 %v2950, %v2958
  %v3207 = vadd.f32 %v2951, %v2959
  %v3208 = vadd.f32 %v2952, %v2960
  %v3209 = vadd.f32 %v2953, %v2961
  %v3210 = vadd.f32 %v2954, %v2962
  %v3211 = vadd.f32 %v2955, %v2963
  %v3212 = vadd.f32 %v2956, %v2964
  %v3213 = vadd.f32 %v2957, %v2965
  %v3214 = vmul.f32 %v881, %v3206
  %v3215 = vmul.f32 %v885, %v3206
  %v3216 = vmul.f32 %v889, %v3206
  %v3217 = vmul.f32 %v893, %v3206
  %v3218 = vmul.f32 %v897, %v3206
  %v3219 = vmul.f32 %v901, %v3206
  %v3220 = vmul.f32 %v905, %v3206
  %v3221 = vmul.f32 %v909, %v3206
  %v3222 = vmul.f32 %v921, %v3207
  %v3223 = vmul.f32 %v925, %v3207
  %v3224 = vmul.f32 %v929, %v3207
  %v3225 = vmul.f32 %v933, %v3207
  %v3226 = vmul.f32 %v937, %v3207
  %v3227 = vmul.f32 %v941, %v3207
  %v3228 = vmul.f32 %v945, %v3207
  %v3229 = vmul.f32 %v949, %v3207
  %v3230 = vadd.f32 %v3214, %v3222
  %v3231 = vadd.f32 %v3215, %v3223
  %v3232 = vadd.f32 %v3216, %v3224
  %v3233 = vadd.f32 %v3217, %v3225
  %v3234 = vadd.f32 %v3218, %v3226
  %v3235 = vadd.f32 %v3219, %v3227
  %v3236 = vadd.f32 %v3220, %v3228
  %v3237 = vadd.f32 %v3221, %v3229
  %v3238 = vmul.f32 %v969, %v3208
  %v3239 = vmul.f32 %v973, %v3208
  %v3240 = vmul.f32 %v977, %v3208
  %v3241 = vmul.f32 %v981, %v3208
  %v3242 = vmul.f32 %v985, %v3208
  %v3243 = vmul.f32 %v989, %v3208
  %v3244 = vmul.f32 %v993, %v3208
  %v3245 = vmul.f32 %v997, %v3208
  %v3246 = vadd.f32 %v3230, %v3238
  %v3247 = vadd.f32 %v3231, %v3239
  %v3248 = vadd.f32 %v3232, %v3240
  %v3249 = vadd.f32 %v3233, %v3241
  %v3250 = vadd.f32 %v3234, %v3242
  %v3251 = vadd.f32 %v3235, %v3243
  %v3252 = vadd.f32 %v3236, %v3244
  %v3253 = vadd.f32 %v3237, %v3245
  %v3254 = vmul.f32 %v1017, %v3209
  %v3255 = vmul.f32 %v1021, %v3209
  %v3256 = vmul.f32 %v1025, %v3209
  %v3257 = vmul.f32 %v1029, %v3209
  %v3258 = vmul.f32 %v1033, %v3209
  %v3259 = vmul.f32 %v1037, %v3209
  %v3260 = vmul.f32 %v1041, %v3209
  %v3261 = vmul.f32 %v1045, %v3209
  %v3262 = vadd.f32 %v3246, %v3254
  %v3263 = vadd.f32 %v3247, %v3255
  %v3264 = vadd.f32 %v3248, %v3256
  %v3265 = vadd.f32 %v3249, %v3257
  %v3266 = vadd.f32 %v3250, %v3258
  %v3267 = vadd.f32 %v3251, %v3259
  %v3268 = vadd.f32 %v3252, %v3260
  %v3269 = vadd.f32 %v3253, %v3261
  %v3270 = vmul.f32 %v1065, %v3210
  %v3271 = vmul.f32 %v1069, %v3210
  %v3272 = vmul.f32 %v1073, %v3210
  %v3273 = vmul.f32 %v1077, %v3210
  %v3274 = vmul.f32 %v1081, %v3210
  %v3275 = vmul.f32 %v1085, %v3210
  %v3276 = vmul.f32 %v1089, %v3210
  %v3277 = vmul.f32 %v1093, %v3210
  %v3278 = vadd.f32 %v3262, %v3270
  %v3279 = vadd.f32 %v3263, %v3271
  %v3280 = vadd.f32 %v3264, %v3272
  %v3281 = vadd.f32 %v3265, %v3273
  %v3282 = vadd.f32 %v3266, %v3274
  %v3283 = vadd.f32 %v3267, %v3275
  %v3284 = vadd.f32 %v3268, %v3276
  %v3285 = vadd.f32 %v3269, %v3277
  %v3286 = vmul.f32 %v1113, %v3211
  %v3287 = vmul.f32 %v1117, %v3211
  %v3288 = vmul.f32 %v1121, %v3211
  %v3289 = vmul.f32 %v1125, %v3211
  %v3290 = vmul.f32 %v1129, %v3211
  %v3291 = vmul.f32 %v1133, %v3211
  %v3292 = vmul.f32 %v1137, %v3211
  %v3293 = vmul.f32 %v1141, %v3211
  %v3294 = vadd.f32 %v3278, %v3286
  %v3295 = vadd.f32 %v3279, %v3287
  %v3296 = vadd.f32 %v3280, %v3288
  %v3297 = vadd.f32 %v3281, %v3289
  %v3298 = vadd.f32 %v3282, %v3290
  %v3299 = vadd.f32 %v3283, %v3291
  %v3300 = vadd.f32 %v3284, %v3292
  %v3301 = vadd.f32 %v3285, %v3293
  %v3302 = vmul.f32 %v1161, %v3212
  %v3303 = vmul.f32 %v1165, %v3212
  %v3304 = vmul.f32 %v1169, %v3212
  %v3305 = vmul.f32 %v1173, %v3212
  %v3306 = vmul.f32 %v1177, %v3212
  %v3307 = vmul.f32 %v1181, %v3212
  %v3308 = vmul.f32 %v1185, %v3212
  %v3309 = vmul.f32 %v1189, %v3212
  %v3310 = vadd.f32 %v3294, %v3302
  %v3311 = vadd.f32 %v3295, %v3303
  %v3312 = vadd.f32 %v3296, %v3304
  %v3313 = vadd.f32 %v3297, %v3305
  %v3314 = vadd.f32 %v3298, %v3306
  %v3315 = vadd.f32 %v3299, %v3307
  %v3316 = vadd.f32 %v3300, %v3308
  %v3317 = vadd.f32 %v3301, %v3309
  %v3318 = vmul.f32 %v1209, %v3213
  %v3319 = vmul.f32 %v1213, %v3213
  %v3320 = vmul.f32 %v1217, %v3213
  %v3321 = vmul.f32 %v1221, %v3213
  %v3322 = vmul.f32 %v1225, %v3213
  %v3323 = vmul.f32 %v1229, %v3213
  %v3324 = vmul.f32 %v1233, %v3213
  %v3325 = vmul.f32 %v1237, %v3213
  %v3326 = vadd.f32 %v3310, %v3318
  %v3327 = vadd.f32 %v3311, %v3319
  %v3328 = vadd.f32 %v3312, %v3320
  %v3329 = vadd.f32 %v3313, %v3321
  %v3330 = vadd.f32 %v3314, %v3322
  %v3331 = vadd.f32 %v3315, %v3323
  %v3332 = vadd.f32 %v3316, %v3324
  %v3333 = vadd.f32 %v3317, %v3325
  %v3334 = vsub.f32 %v3078, %v3198
  %v3335 = vsub.f32 %v3079, %v3199
  %v3336 = vsub.f32 %v3080, %v3200
  %v3337 = vsub.f32 %v3081, %v3201
  %v3338 = vsub.f32 %v3082, %v3202
  %v3339 = vsub.f32 %v3083, %v3203
  %v3340 = vsub.f32 %v3084, %v3204
  %v3341 = vsub.f32 %v3085, %v3205
  %v3342 = vsub.f32 %v3326, %v3078
  %v3343 = vsub.f32 %v3327, %v3079
  %v3344 = vsub.f32 %v3328, %v3080
  %v3345 = vsub.f32 %v3329, %v3081
  %v3346 = vsub.f32 %v3330, %v3082
  %v3347 = vsub.f32 %v3331, %v3083
  %v3348 = vsub.f32 %v3332, %v3084
  %v3349 = vsub.f32 %v3333, %v3085
  %v3350 = vsub.f32 %v3342, %v3198
  %v3351 = vsub.f32 %v3343, %v3199
  %v3352 = vsub.f32 %v3344, %v3200
  %v3353 = vsub.f32 %v3345, %v3201
  %v3354 = vsub.f32 %v3346, %v3202
  %v3355 = vsub.f32 %v3347, %v3203
  %v3356 = vsub.f32 %v3348, %v3204
  %v3357 = vsub.f32 %v3349, %v3205
  %v3358 = vmul.f32 %v3334, 0.14285715
  %v3359 = vmul.f32 %v3335, 0.14285715
  %v3360 = vmul.f32 %v3336, 0.14285715
  %v3361 = vmul.f32 %v3337, 0.14285715
  %v3362 = vmul.f32 %v3338, 0.14285715
  %v3363 = vmul.f32 %v3339, 0.14285715
  %v3364 = vmul.f32 %v3340, 0.14285715
  %v3365 = vmul.f32 %v3341, 0.14285715
  %v3366 = vadd.f32 %v78, %v3358
  %v3367 = vadd.f32 %v79, %v3359
  %v3368 = vadd.f32 %v80, %v3360
  %v3369 = vadd.f32 %v81, %v3361
  %v3370 = vadd.f32 %v82, %v3362
  %v3371 = vadd.f32 %v83, %v3363
  %v3372 = vadd.f32 %v84, %v3364
  %v3373 = vadd.f32 %v85, %v3365
  %v3374 = vmul.f32 %v3350, 0.14285715
  %v3375 = vmul.f32 %v3351, 0.14285715
  %v3376 = vmul.f32 %v3352, 0.14285715
  %v3377 = vmul.f32 %v3353, 0.14285715
  %v3378 = vmul.f32 %v3354, 0.14285715
  %v3379 = vmul.f32 %v3355, 0.14285715
  %v3380 = vmul.f32 %v3356, 0.14285715
  %v3381 = vmul.f32 %v3357, 0.14285715
  %v3382 = vmul.f32 %v113, %v3366
  %v3383 = vmul.f32 %v117, %v3366
  %v3384 = vmul.f32 %v121, %v3366
  %v3385 = vmul.f32 %v125, %v3366
  %v3386 = vmul.f32 %v129, %v3366
  %v3387 = vmul.f32 %v133, %v3366
  %v3388 = vmul.f32 %v137, %v3366
  %v3389 = vmul.f32 %v141, %v3366
  %v3390 = vmul.f32 %v153, %v3367
  %v3391 = vmul.f32 %v157, %v3367
  %v3392 = vmul.f32 %v161, %v3367
  %v3393 = vmul.f32 %v165, %v3367
  %v3394 = vmul.f32 %v169, %v3367
  %v3395 = vmul.f32 %v173, %v3367
  %v3396 = vmul.f32 %v177, %v3367
  %v3397 = vmul.f32 %v181, %v3367
  %v3398 = vadd.f32 %v3382, %v3390
  %v3399 = vadd.f32 %v3383, %v3391
  %v3400 = vadd.f32 %v3384, %v3392
  %v3401 = vadd.f32 %v3385, %v3393
  %v3402 = vadd.f32 %v3386, %v3394
  %v3403 = vadd.f32 %v3387, %v3395
  %v3404 = vadd.f32 %v3388, %v3396
  %v3405 = vadd.f32 %v3389, %v3397
  %v3406 = vmul.f32 %v201, %v3368
  %v3407 = vmul.f32 %v205, %v3368
  %v3408 = vmul.f32 %v209, %v3368
  %v3409 = vmul.f32 %v213, %v3368
  %v3410 = vmul.f32 %v217, %v3368
  %v3411 = vmul.f32 %v221, %v3368
  %v3412 = vmul.f32 %v225, %v3368
  %v3413 = vmul.f32 %v229, %v3368
  %v3414 = vadd.f32 %v3398, %v3406
  %v3415 = vadd.f32 %v3399, %v3407
  %v3416 = vadd.f32 %v3400, %v3408
  %v3417 = vadd.f32 %v3401, %v3409
  %v3418 = vadd.f32 %v3402, %v3410
  %v3419 = vadd.f32 %v3403, %v3411
  %v3420 = vadd.f32 %v3404, %v3412
  %v3421 = vadd.f32 %v3405, %v3413
  %v3422 = vmul.f32 %v249, %v3369
  %v3423 = vmul.f32 %v253, %v3369
  %v3424 = vmul.f32 %v257, %v3369
  %v3425 = vmul.f32 %v261, %v3369
  %v3426 = vmul.f32 %v265, %v3369
  %v3427 = vmul.f32 %v269, %v3369
  %v3428 = vmul.f32 %v273, %v3369
  %v3429 = vmul.f32 %v277, %v3369
  %v3430 = vadd.f32 %v3414, %v3422
  %v3431 = vadd.f32 %v3415, %v3423
  %v3432 = vadd.f32 %v3416, %v3424
  %v3433 = vadd.f32 %v3417, %v3425
  %v3434 = vadd.f32 %v3418, %v3426
  %v3435 = vadd.f32 %v3419, %v3427
  %v3436 = vadd.f32 %v3420, %v3428
  %v3437 = vadd.f32 %v3421, %v3429
  %v3438 = vmul.f32 %v297, %v3370
  %v3439 = vmul.f32 %v301, %v3370
  %v3440 = vmul.f32 %v305, %v3370
  %v3441 = vmul.f32 %v309, %v3370
  %v3442 = vmul.f32 %v313, %v3370
  %v3443 = vmul.f32 %v317, %v3370
  %v3444 = vmul.f32 %v321, %v3370
  %v3445 = vmul.f32 %v325, %v3370
  %v3446 = vadd.f32 %v3430, %v3438
  %v3447 = vadd.f32 %v3431, %v3439
  %v3448 = vadd.f32 %v3432, %v3440
  %v3449 = vadd.f32 %v3433, %v3441
  %v3450 = vadd.f32 %v3434, %v3442
  %v3451 = vadd.f32 %v3435, %v3443
  %v3452 = vadd.f32 %v3436, %v3444
  %v3453 = vadd.f32 %v3437, %v3445
  %v3454 = vmul.f32 %v345, %v3371
  %v3455 = vmul.f32 %v349, %v3371
  %v3456 = vmul.f32 %v353, %v3371
  %v3457 = vmul.f32 %v357, %v3371
  %v3458 = vmul.f32 %v361, %v3371
  %v3459 = vmul.f32 %v365, %v3371
  %v3460 = vmul.f32 %v369, %v3371
  %v3461 = vmul.f32 %v373, %v3371
  %v3462 = vadd.f32 %v3446, %v3454
  %v3463 = vadd.f32 %v3447, %v3455
  %v3464 = vadd.f32 %v3448, %v3456
  %v3465 = vadd.f32 %v3449, %v3457
  %v3466 = vadd.f32 %v3450, %v3458
  %v3467 = vadd.f32 %v3451, %v3459
  %v3468 = vadd.f32 %v3452, %v3460
  %v3469 = vadd.f32 %v3453, %v3461
  %v3470 = vmul.f32 %v393, %v3372
  %v3471 = vmul.f32 %v397, %v3372
  %v3472 = vmul.f32 %v401, %v3372
  %v3473 = vmul.f32 %v405, %v3372
  %v3474 = vmul.f32 %v409, %v3372
  %v3475 = vmul.f32 %v413, %v3372
  %v3476 = vmul.f32 %v417, %v3372
  %v3477 = vmul.f32 %v421, %v3372
  %v3478 = vadd.f32 %v3462, %v3470
  %v3479 = vadd.f32 %v3463, %v3471
  %v3480 = vadd.f32 %v3464, %v3472
  %v3481 = vadd.f32 %v3465, %v3473
  %v3482 = vadd.f32 %v3466, %v3474
  %v3483 = vadd.f32 %v3467, %v3475
  %v3484 = vadd.f32 %v3468, %v3476
  %v3485 = vadd.f32 %v3469, %v3477
  %v3486 = vmul.f32 %v441, %v3373
  %v3487 = vmul.f32 %v445, %v3373
  %v3488 = vmul.f32 %v449, %v3373
  %v3489 = vmul.f32 %v453, %v3373
  %v3490 = vmul.f32 %v457, %v3373
  %v3491 = vmul.f32 %v461, %v3373
  %v3492 = vmul.f32 %v465, %v3373
  %v3493 = vmul.f32 %v469, %v3373
  %v3494 = vadd.f32 %v3478, %v3486
  %v3495 = vadd.f32 %v3479, %v3487
  %v3496 = vadd.f32 %v3480, %v3488
  %v3497 = vadd.f32 %v3481, %v3489
  %v3498 = vadd.f32 %v3482, %v3490
  %v3499 = vadd.f32 %v3483, %v3491
  %v3500 = vadd.f32 %v3484, %v3492
  %v3501 = vadd.f32 %v3485, %v3493
  %v3502 = vmul.f32 %v489, %v3374
  %v3503 = vmul.f32 %v493, %v3374
  %v3504 = vmul.f32 %v497, %v3374
  %v3505 = vmul.f32 %v501, %v3374
  %v3506 = vmul.f32 %v505, %v3374
  %v3507 = vmul.f32 %v509, %v3374
  %v3508 = vmul.f32 %v513, %v3374
  %v3509 = vmul.f32 %v517, %v3374
  %v3510 = vmul.f32 %v529, %v3375
  %v3511 = vmul.f32 %v533, %v3375
  %v3512 = vmul.f32 %v537, %v3375
  %v3513 = vmul.f32 %v541, %v3375
  %v3514 = vmul.f32 %v545, %v3375
  %v3515 = vmul.f32 %v549, %v3375
  %v3516 = vmul.f32 %v553, %v3375
  %v3517 = vmul.f32 %v557, %v3375
  %v3518 = vadd.f32 %v3502, %v3510
  %v3519 = vadd.f32 %v3503, %v3511
  %v3520 = vadd.f32 %v3504, %v3512
  %v3521 = vadd.f32 %v3505, %v3513
  %v3522 = vadd.f32 %v3506, %v3514
  %v3523 = vadd.f32 %v3507, %v3515
  %v3524 = vadd.f32 %v3508, %v3516
  %v3525 = vadd.f32 %v3509, %v3517
  %v3526 = vmul.f32 %v577, %v3376
  %v3527 = vmul.f32 %v581, %v3376
  %v3528 = vmul.f32 %v585, %v3376
  %v3529 = vmul.f32 %v589, %v3376
  %v3530 = vmul.f32 %v593, %v3376
  %v3531 = vmul.f32 %v597, %v3376
  %v3532 = vmul.f32 %v601, %v3376
  %v3533 = vmul.f32 %v605, %v3376
  %v3534 = vadd.f32 %v3518, %v3526
  %v3535 = vadd.f32 %v3519, %v3527
  %v3536 = vadd.f32 %v3520, %v3528
  %v3537 = vadd.f32 %v3521, %v3529
  %v3538 = vadd.f32 %v3522, %v3530
  %v3539 = vadd.f32 %v3523, %v3531
  %v3540 = vadd.f32 %v3524, %v3532
  %v3541 = vadd.f32 %v3525, %v3533
  %v3542 = vmul.f32 %v625, %v3377
  %v3543 = vmul.f32 %v629, %v3377
  %v3544 = vmul.f32 %v633, %v3377
  %v3545 = vmul.f32 %v637, %v3377
  %v3546 = vmul.f32 %v641, %v3377
  %v3547 = vmul.f32 %v645, %v3377
  %v3548 = vmul.f32 %v649, %v3377
  %v3549 = vmul.f32 %v653, %v3377
  %v3550 = vadd.f32 %v3534, %v3542
  %v3551 = vadd.f32 %v3535, %v3543
  %v3552 = vadd.f32 %v3536, %v3544
  %v3553 = vadd.f32 %v3537, %v3545
  %v3554 = vadd.f32 %v3538, %v3546
  %v3555 = vadd.f32 %v3539, %v3547
  %v3556 = vadd.f32 %v3540, %v3548
  %v3557 = vadd.f32 %v3541, %v3549
  %v3558 = vmul.f32 %v673, %v3378
  %v3559 = vmul.f32 %v677, %v3378
  %v3560 = vmul.f32 %v681, %v3378
  %v3561 = vmul.f32 %v685, %v3378
  %v3562 = vmul.f32 %v689, %v3378
  %v3563 = vmul.f32 %v693, %v3378
  %v3564 = vmul.f32 %v697, %v3378
  %v3565 = vmul.f32 %v701, %v3378
  %v3566 = vadd.f32 %v3550, %v3558
  %v3567 = vadd.f32 %v3551, %v3559
  %v3568 = vadd.f32 %v3552, %v3560
  %v3569 = vadd.f32 %v3553, %v3561
  %v3570 = vadd.f32 %v3554, %v3562
  %v3571 = vadd.f32 %v3555, %v3563
  %v3572 = vadd.f32 %v3556, %v3564
  %v3573 = vadd.f32 %v3557, %v3565
  %v3574 = vmul.f32 %v721, %v3379
  %v3575 = vmul.f32 %v725, %v3379
  %v3576 = vmul.f32 %v729, %v3379
  %v3577 = vmul.f32 %v733, %v3379
  %v3578 = vmul.f32 %v737, %v3379
  %v3579 = vmul.f32 %v741, %v3379
  %v3580 = vmul.f32 %v745, %v3379
  %v3581 = vmul.f32 %v749, %v3379
  %v3582 = vadd.f32 %v3566, %v3574
  %v3583 = vadd.f32 %v3567, %v3575
  %v3584 = vadd.f32 %v3568, %v3576
  %v3585 = vadd.f32 %v3569, %v3577
  %v3586 = vadd.f32 %v3570, %v3578
  %v3587 = vadd.f32 %v3571, %v3579
  %v3588 = vadd.f32 %v3572, %v3580
  %v3589 = vadd.f32 %v3573, %v3581
  %v3590 = vmul.f32 %v769, %v3380
  %v3591 = vmul.f32 %v773, %v3380
  %v3592 = vmul.f32 %v777, %v3380
  %v3593 = vmul.f32 %v781, %v3380
  %v3594 = vmul.f32 %v785, %v3380
  %v3595 = vmul.f32 %v789, %v3380
  %v3596 = vmul.f32 %v793, %v3380
  %v3597 = vmul.f32 %v797, %v3380
  %v3598 = vadd.f32 %v3582, %v3590
  %v3599 = vadd.f32 %v3583, %v3591
  %v3600 = vadd.f32 %v3584, %v3592
  %v3601 = vadd.f32 %v3585, %v3593
  %v3602 = vadd.f32 %v3586, %v3594
  %v3603 = vadd.f32 %v3587, %v3595
  %v3604 = vadd.f32 %v3588, %v3596
  %v3605 = vadd.f32 %v3589, %v3597
  %v3606 = vmul.f32 %v817, %v3381
  %v3607 = vmul.f32 %v821, %v3381
  %v3608 = vmul.f32 %v825, %v3381
  %v3609 = vmul.f32 %v829, %v3381
  %v3610 = vmul.f32 %v833, %v3381
  %v3611 = vmul.f32 %v837, %v3381
  %v3612 = vmul.f32 %v841, %v3381
  %v3613 = vmul.f32 %v845, %v3381
  %v3614 = vadd.f32 %v3598, %v3606
  %v3615 = vadd.f32 %v3599, %v3607
  %v3616 = vadd.f32 %v3600, %v3608
  %v3617 = vadd.f32 %v3601, %v3609
  %v3618 = vadd.f32 %v3602, %v3610
  %v3619 = vadd.f32 %v3603, %v3611
  %v3620 = vadd.f32 %v3604, %v3612
  %v3621 = vadd.f32 %v3605, %v3613
  %v3622 = vadd.f32 %v3366, %v3374
  %v3623 = vadd.f32 %v3367, %v3375
  %v3624 = vadd.f32 %v3368, %v3376
  %v3625 = vadd.f32 %v3369, %v3377
  %v3626 = vadd.f32 %v3370, %v3378
  %v3627 = vadd.f32 %v3371, %v3379
  %v3628 = vadd.f32 %v3372, %v3380
  %v3629 = vadd.f32 %v3373, %v3381
  %v3630 = vmul.f32 %v881, %v3622
  %v3631 = vmul.f32 %v885, %v3622
  %v3632 = vmul.f32 %v889, %v3622
  %v3633 = vmul.f32 %v893, %v3622
  %v3634 = vmul.f32 %v897, %v3622
  %v3635 = vmul.f32 %v901, %v3622
  %v3636 = vmul.f32 %v905, %v3622
  %v3637 = vmul.f32 %v909, %v3622
  %v3638 = vmul.f32 %v921, %v3623
  %v3639 = vmul.f32 %v925, %v3623
  %v3640 = vmul.f32 %v929, %v3623
  %v3641 = vmul.f32 %v933, %v3623
  %v3642 = vmul.f32 %v937, %v3623
  %v3643 = vmul.f32 %v941, %v3623
  %v3644 = vmul.f32 %v945, %v3623
  %v3645 = vmul.f32 %v949, %v3623
  %v3646 = vadd.f32 %v3630, %v3638
  %v3647 = vadd.f32 %v3631, %v3639
  %v3648 = vadd.f32 %v3632, %v3640
  %v3649 = vadd.f32 %v3633, %v3641
  %v3650 = vadd.f32 %v3634, %v3642
  %v3651 = vadd.f32 %v3635, %v3643
  %v3652 = vadd.f32 %v3636, %v3644
  %v3653 = vadd.f32 %v3637, %v3645
  %v3654 = vmul.f32 %v969, %v3624
  %v3655 = vmul.f32 %v973, %v3624
  %v3656 = vmul.f32 %v977, %v3624
  %v3657 = vmul.f32 %v981, %v3624
  %v3658 = vmul.f32 %v985, %v3624
  %v3659 = vmul.f32 %v989, %v3624
  %v3660 = vmul.f32 %v993, %v3624
  %v3661 = vmul.f32 %v997, %v3624
  %v3662 = vadd.f32 %v3646, %v3654
  %v3663 = vadd.f32 %v3647, %v3655
  %v3664 = vadd.f32 %v3648, %v3656
  %v3665 = vadd.f32 %v3649, %v3657
  %v3666 = vadd.f32 %v3650, %v3658
  %v3667 = vadd.f32 %v3651, %v3659
  %v3668 = vadd.f32 %v3652, %v3660
  %v3669 = vadd.f32 %v3653, %v3661
  %v3670 = vmul.f32 %v1017, %v3625
  %v3671 = vmul.f32 %v1021, %v3625
  %v3672 = vmul.f32 %v1025, %v3625
  %v3673 = vmul.f32 %v1029, %v3625
  %v3674 = vmul.f32 %v1033, %v3625
  %v3675 = vmul.f32 %v1037, %v3625
  %v3676 = vmul.f32 %v1041, %v3625
  %v3677 = vmul.f32 %v1045, %v3625
  %v3678 = vadd.f32 %v3662, %v3670
  %v3679 = vadd.f32 %v3663, %v3671
  %v3680 = vadd.f32 %v3664, %v3672
  %v3681 = vadd.f32 %v3665, %v3673
  %v3682 = vadd.f32 %v3666, %v3674
  %v3683 = vadd.f32 %v3667, %v3675
  %v3684 = vadd.f32 %v3668, %v3676
  %v3685 = vadd.f32 %v3669, %v3677
  %v3686 = vmul.f32 %v1065, %v3626
  %v3687 = vmul.f32 %v1069, %v3626
  %v3688 = vmul.f32 %v1073, %v3626
  %v3689 = vmul.f32 %v1077, %v3626
  %v3690 = vmul.f32 %v1081, %v3626
  %v3691 = vmul.f32 %v1085, %v3626
  %v3692 = vmul.f32 %v1089, %v3626
  %v3693 = vmul.f32 %v1093, %v3626
  %v3694 = vadd.f32 %v3678, %v3686
  %v3695 = vadd.f32 %v3679, %v3687
  %v3696 = vadd.f32 %v3680, %v3688
  %v3697 = vadd.f32 %v3681, %v3689
  %v3698 = vadd.f32 %v3682, %v3690
  %v3699 = vadd.f32 %v3683, %v3691
  %v3700 = vadd.f32 %v3684, %v3692
  %v3701 = vadd.f32 %v3685, %v3693
  %v3702 = vmul.f32 %v1113, %v3627
  %v3703 = vmul.f32 %v1117, %v3627
  %v3704 = vmul.f32 %v1121, %v3627
  %v3705 = vmul.f32 %v1125, %v3627
  %v3706 = vmul.f32 %v1129, %v3627
  %v3707 = vmul.f32 %v1133, %v3627
  %v3708 = vmul.f32 %v1137, %v3627
  %v3709 = vmul.f32 %v1141, %v3627
  %v3710 = vadd.f32 %v3694, %v3702
  %v3711 = vadd.f32 %v3695, %v3703
  %v3712 = vadd.f32 %v3696, %v3704
  %v3713 = vadd.f32 %v3697, %v3705
  %v3714 = vadd.f32 %v3698, %v3706
  %v3715 = vadd.f32 %v3699, %v3707
  %v3716 = vadd.f32 %v3700, %v3708
  %v3717 = vadd.f32 %v3701, %v3709
  %v3718 = vmul.f32 %v1161, %v3628
  %v3719 = vmul.f32 %v1165, %v3628
  %v3720 = vmul.f32 %v1169, %v3628
  %v3721 = vmul.f32 %v1173, %v3628
  %v3722 = vmul.f32 %v1177, %v3628
  %v3723 = vmul.f32 %v1181, %v3628
  %v3724 = vmul.f32 %v1185, %v3628
  %v3725 = vmul.f32 %v1189, %v3628
  %v3726 = vadd.f32 %v3710, %v3718
  %v3727 = vadd.f32 %v3711, %v3719
  %v3728 = vadd.f32 %v3712, %v3720
  %v3729 = vadd.f32 %v3713, %v3721
  %v3730 = vadd.f32 %v3714, %v3722
  %v3731 = vadd.f32 %v3715, %v3723
  %v3732 = vadd.f32 %v3716, %v3724
  %v3733 = vadd.f32 %v3717, %v3725
  %v3734 = vmul.f32 %v1209, %v3629
  %v3735 = vmul.f32 %v1213, %v3629
  %v3736 = vmul.f32 %v1217, %v3629
  %v3737 = vmul.f32 %v1221, %v3629
  %v3738 = vmul.f32 %v1225, %v3629
  %v3739 = vmul.f32 %v1229, %v3629
  %v3740 = vmul.f32 %v1233, %v3629
  %v3741 = vmul.f32 %v1237, %v3629
  %v3742 = vadd.f32 %v3726, %v3734
  %v3743 = vadd.f32 %v3727, %v3735
  %v3744 = vadd.f32 %v3728, %v3736
  %v3745 = vadd.f32 %v3729, %v3737
  %v3746 = vadd.f32 %v3730, %v3738
  %v3747 = vadd.f32 %v3731, %v3739
  %v3748 = vadd.f32 %v3732, %v3740
  %v3749 = vadd.f32 %v3733, %v3741
  %v3750 = vsub.f32 %v3494, %v3614
  %v3751 = vsub.f32 %v3495, %v3615
  %v3752 = vsub.f32 %v3496, %v3616
  %v3753 = vsub.f32 %v3497, %v3617
  %v3754 = vsub.f32 %v3498, %v3618
  %v3755 = vsub.f32 %v3499, %v3619
  %v3756 = vsub.f32 %v3500, %v3620
  %v3757 = vsub.f32 %v3501, %v3621
  %v3758 = vsub.f32 %v3742, %v3494
  %v3759 = vsub.f32 %v3743, %v3495
  %v3760 = vsub.f32 %v3744, %v3496
  %v3761 = vsub.f32 %v3745, %v3497
  %v3762 = vsub.f32 %v3746, %v3498
  %v3763 = vsub.f32 %v3747, %v3499
  %v3764 = vsub.f32 %v3748, %v3500
  %v3765 = vsub.f32 %v3749, %v3501
  %v3766 = vsub.f32 %v3758, %v3614
  %v3767 = vsub.f32 %v3759, %v3615
  %v3768 = vsub.f32 %v3760, %v3616
  %v3769 = vsub.f32 %v3761, %v3617
  %v3770 = vsub.f32 %v3762, %v3618
  %v3771 = vsub.f32 %v3763, %v3619
  %v3772 = vsub.f32 %v3764, %v3620
  %v3773 = vsub.f32 %v3765, %v3621
  %v3774 = vmul.f32 %v3750, 0.16666667
  %v3775 = vmul.f32 %v3751, 0.16666667
  %v3776 = vmul.f32 %v3752, 0.16666667
  %v3777 = vmul.f32 %v3753, 0.16666667
  %v3778 = vmul.f32 %v3754, 0.16666667
  %v3779 = vmul.f32 %v3755, 0.16666667
  %v3780 = vmul.f32 %v3756, 0.16666667
  %v3781 = vmul.f32 %v3757, 0.16666667
  %v3782 = vadd.f32 %v78, %v3774
  %v3783 = vadd.f32 %v79, %v3775
  %v3784 = vadd.f32 %v80, %v3776
  %v3785 = vadd.f32 %v81, %v3777
  %v3786 = vadd.f32 %v82, %v3778
  %v3787 = vadd.f32 %v83, %v3779
  %v3788 = vadd.f32 %v84, %v3780
  %v3789 = vadd.f32 %v85, %v3781
  %v3790 = vmul.f32 %v3766, 0.16666667
  %v3791 = vmul.f32 %v3767, 0.16666667
  %v3792 = vmul.f32 %v3768, 0.16666667
  %v3793 = vmul.f32 %v3769, 0.16666667
  %v3794 = vmul.f32 %v3770, 0.16666667
  %v3795 = vmul.f32 %v3771, 0.16666667
  %v3796 = vmul.f32 %v3772, 0.16666667
  %v3797 = vmul.f32 %v3773, 0.16666667
  %v3798 = vmul.f32 %v113, %v3782
  %v3799 = vmul.f32 %v117, %v3782
  %v3800 = vmul.f32 %v121, %v3782
  %v3801 = vmul.f32 %v125, %v3782
  %v3802 = vmul.f32 %v129, %v3782
  %v3803 = vmul.f32 %v133, %v3782
  %v3804 = vmul.f32 %v137, %v3782
  %v3805 = vmul.f32 %v141, %v3782
  %v3806 = vmul.f32 %v153, %v3783
  %v3807 = vmul.f32 %v157, %v3783
  %v3808 = vmul.f32 %v161, %v3783
  %v3809 = vmul.f32 %v165, %v3783
  %v3810 = vmul.f32 %v169, %v3783
  %v3811 = vmul.f32 %v173, %v3783
  %v3812 = vmul.f32 %v177, %v3783
  %v3813 = vmul.f32 %v181, %v3783
  %v3814 = vadd.f32 %v3798, %v3806
  %v3815 = vadd.f32 %v3799, %v3807
  %v3816 = vadd.f32 %v3800, %v3808
  %v3817 = vadd.f32 %v3801, %v3809
  %v3818 = vadd.f32 %v3802, %v3810
  %v3819 = vadd.f32 %v3803, %v3811
  %v3820 = vadd.f32 %v3804, %v3812
  %v3821 = vadd.f32 %v3805, %v3813
  %v3822 = vmul.f32 %v201, %v3784
  %v3823 = vmul.f32 %v205, %v3784
  %v3824 = vmul.f32 %v209, %v3784
  %v3825 = vmul.f32 %v213, %v3784
  %v3826 = vmul.f32 %v217, %v3784
  %v3827 = vmul.f32 %v221, %v3784
  %v3828 = vmul.f32 %v225, %v3784
  %v3829 = vmul.f32 %v229, %v3784
  %v3830 = vadd.f32 %v3814, %v3822
  %v3831 = vadd.f32 %v3815, %v3823
  %v3832 = vadd.f32 %v3816, %v3824
  %v3833 = vadd.f32 %v3817, %v3825
  %v3834 = vadd.f32 %v3818, %v3826
  %v3835 = vadd.f32 %v3819, %v3827
  %v3836 = vadd.f32 %v3820, %v3828
  %v3837 = vadd.f32 %v3821, %v3829
  %v3838 = vmul.f32 %v249, %v3785
  %v3839 = vmul.f32 %v253, %v3785
  %v3840 = vmul.f32 %v257, %v3785
  %v3841 = vmul.f32 %v261, %v3785
  %v3842 = vmul.f32 %v265, %v3785
  %v3843 = vmul.f32 %v269, %v3785
  %v3844 = vmul.f32 %v273, %v3785
  %v3845 = vmul.f32 %v277, %v3785
  %v3846 = vadd.f32 %v3830, %v3838
  %v3847 = vadd.f32 %v3831, %v3839
  %v3848 = vadd.f32 %v3832, %v3840
  %v3849 = vadd.f32 %v3833, %v3841
  %v3850 = vadd.f32 %v3834, %v3842
  %v3851 = vadd.f32 %v3835, %v3843
  %v3852 = vadd.f32 %v3836, %v3844
  %v3853 = vadd.f32 %v3837, %v3845
  %v3854 = vmul.f32 %v297, %v3786
  %v3855 = vmul.f32 %v301, %v3786
  %v3856 = vmul.f32 %v305, %v3786
  %v3857 = vmul.f32 %v309, %v3786
  %v3858 = vmul.f32 %v313, %v3786
  %v3859 = vmul.f32 %v317, %v3786
  %v3860 = vmul.f32 %v321, %v3786
  %v3861 = vmul.f32 %v325, %v3786
  %v3862 = vadd.f32 %v3846, %v3854
  %v3863 = vadd.f32 %v3847, %v3855
  %v3864 = vadd.f32 %v3848, %v3856
  %v3865 = vadd.f32 %v3849, %v3857
  %v3866 = vadd.f32 %v3850, %v3858
  %v3867 = vadd.f32 %v3851, %v3859
  %v3868 = vadd.f32 %v3852, %v3860
  %v3869 = vadd.f32 %v3853, %v3861
  %v3870 = vmul.f32 %v345, %v3787
  %v3871 = vmul.f32 %v349, %v3787
  %v3872 = vmul.f32 %v353, %v3787
  %v3873 = vmul.f32 %v357, %v3787
  %v3874 = vmul.f32 %v361, %v3787
  %v3875 = vmul.f32 %v365, %v3787
  %v3876 = vmul.f32 %v369, %v3787
  %v3877 = vmul.f32 %v373, %v3787
  %v3878 = vadd.f32 %v3862, %v3870
  %v3879 = vadd.f32 %v3863, %v3871
  %v3880 = vadd.f32 %v3864, %v3872
  %v3881 = vadd.f32 %v3865, %v3873
  %v3882 = vadd.f32 %v3866, %v3874
  %v3883 = vadd.f32 %v3867, %v3875
  %v3884 = vadd.f32 %v3868, %v3876
  %v3885 = vadd.f32 %v3869, %v3877
  %v3886 = vmul.f32 %v393, %v3788
  %v3887 = vmul.f32 %v397, %v3788
  %v3888 = vmul.f32 %v401, %v3788
  %v3889 = vmul.f32 %v405, %v3788
  %v3890 = vmul.f32 %v409, %v3788
  %v3891 = vmul.f32 %v413, %v3788
  %v3892 = vmul.f32 %v417, %v3788
  %v3893 = vmul.f32 %v421, %v3788
  %v3894 = vadd.f32 %v3878, %v3886
  %v3895 = vadd.f32 %v3879, %v3887
  %v3896 = vadd.f32 %v3880, %v3888
  %v3897 = vadd.f32 %v3881, %v3889
  %v3898 = vadd.f32 %v3882, %v3890
  %v3899 = vadd.f32 %v3883, %v3891
  %v3900 = vadd.f32 %v3884, %v3892
  %v3901 = vadd.f32 %v3885, %v3893
  %v3902 = vmul.f32 %v441, %v3789
  %v3903 = vmul.f32 %v445, %v3789
  %v3904 = vmul.f32 %v449, %v3789
  %v3905 = vmul.f32 %v453, %v3789
  %v3906 = vmul.f32 %v457, %v3789
  %v3907 = vmul.f32 %v461, %v3789
  %v3908 = vmul.f32 %v465, %v3789
  %v3909 = vmul.f32 %v469, %v3789
  %v3910 = vadd.f32 %v3894, %v3902
  %v3911 = vadd.f32 %v3895, %v3903
  %v3912 = vadd.f32 %v3896, %v3904
  %v3913 = vadd.f32 %v3897, %v3905
  %v3914 = vadd.f32 %v3898, %v3906
  %v3915 = vadd.f32 %v3899, %v3907
  %v3916 = vadd.f32 %v3900, %v3908
  %v3917 = vadd.f32 %v3901, %v3909
  %v3918 = vmul.f32 %v489, %v3790
  %v3919 = vmul.f32 %v493, %v3790
  %v3920 = vmul.f32 %v497, %v3790
  %v3921 = vmul.f32 %v501, %v3790
  %v3922 = vmul.f32 %v505, %v3790
  %v3923 = vmul.f32 %v509, %v3790
  %v3924 = vmul.f32 %v513, %v3790
  %v3925 = vmul.f32 %v517, %v3790
  %v3926 = vmul.f32 %v529, %v3791
  %v3927 = vmul.f32 %v533, %v3791
  %v3928 = vmul.f32 %v537, %v3791
  %v3929 = vmul.f32 %v541, %v3791
  %v3930 = vmul.f32 %v545, %v3791
  %v3931 = vmul.f32 %v549, %v3791
  %v3932 = vmul.f32 %v553, %v3791
  %v3933 = vmul.f32 %v557, %v3791
  %v3934 = vadd.f32 %v3918, %v3926
  %v3935 = vadd.f32 %v3919, %v3927
  %v3936 = vadd.f32 %v3920, %v3928
  %v3937 = vadd.f32 %v3921, %v3929
  %v3938 = vadd.f32 %v3922, %v3930
  %v3939 = vadd.f32 %v3923, %v3931
  %v3940 = vadd.f32 %v3924, %v3932
  %v3941 = vadd.f32 %v3925, %v3933
  %v3942 = vmul.f32 %v577, %v3792
  %v3943 = vmul.f32 %v581, %v3792
  %v3944 = vmul.f32 %v585, %v3792
  %v3945 = vmul.f32 %v589, %v3792
  %v3946 = vmul.f32 %v593, %v3792
  %v3947 = vmul.f32 %v597, %v3792
  %v3948 = vmul.f32 %v601, %v3792
  %v3949 = vmul.f32 %v605, %v3792
  %v3950 = vadd.f32 %v3934, %v3942
  %v3951 = vadd.f32 %v3935, %v3943
  %v3952 = vadd.f32 %v3936, %v3944
  %v3953 = vadd.f32 %v3937, %v3945
  %v3954 = vadd.f32 %v3938, %v3946
  %v3955 = vadd.f32 %v3939, %v3947
  %v3956 = vadd.f32 %v3940, %v3948
  %v3957 = vadd.f32 %v3941, %v3949
  %v3958 = vmul.f32 %v625, %v3793
  %v3959 = vmul.f32 %v629, %v3793
  %v3960 = vmul.f32 %v633, %v3793
  %v3961 = vmul.f32 %v637, %v3793
  %v3962 = vmul.f32 %v641, %v3793
  %v3963 = vmul.f32 %v645, %v3793
  %v3964 = vmul.f32 %v649, %v3793
  %v3965 = vmul.f32 %v653, %v3793
  %v3966 = vadd.f32 %v3950, %v3958
  %v3967 = vadd.f32 %v3951, %v3959
  %v3968 = vadd.f32 %v3952, %v3960
  %v3969 = vadd.f32 %v3953, %v3961
  %v3970 = vadd.f32 %v3954, %v3962
  %v3971 = vadd.f32 %v3955, %v3963
  %v3972 = vadd.f32 %v3956, %v3964
  %v3973 = vadd.f32 %v3957, %v3965
  %v3974 = vmul.f32 %v673, %v3794
  %v3975 = vmul.f32 %v677, %v3794
  %v3976 = vmul.f32 %v681, %v3794
  %v3977 = vmul.f32 %v685, %v3794
  %v3978 = vmul.f32 %v689, %v3794
  %v3979 = vmul.f32 %v693, %v3794
  %v3980 = vmul.f32 %v697, %v3794
  %v3981 = vmul.f32 %v701, %v3794
  %v3982 = vadd.f32 %v3966, %v3974
  %v3983 = vadd.f32 %v3967, %v3975
  %v3984 = vadd.f32 %v3968, %v3976
  %v3985 = vadd.f32 %v3969, %v3977
  %v3986 = vadd.f32 %v3970, %v3978
  %v3987 = vadd.f32 %v3971, %v3979
  %v3988 = vadd.f32 %v3972, %v3980
  %v3989 = vadd.f32 %v3973, %v3981
  %v3990 = vmul.f32 %v721, %v3795
  %v3991 = vmul.f32 %v725, %v3795
  %v3992 = vmul.f32 %v729, %v3795
  %v3993 = vmul.f32 %v733, %v3795
  %v3994 = vmul.f32 %v737, %v3795
  %v3995 = vmul.f32 %v741, %v3795
  %v3996 = vmul.f32 %v745, %v3795
  %v3997 = vmul.f32 %v749, %v3795
  %v3998 = vadd.f32 %v3982, %v3990
  %v3999 = vadd.f32 %v3983, %v3991
  %v4000 = vadd.f32 %v3984, %v3992
  %v4001 = vadd.f32 %v3985, %v3993
  %v4002 = vadd.f32 %v3986, %v3994
  %v4003 = vadd.f32 %v3987, %v3995
  %v4004 = vadd.f32 %v3988, %v3996
  %v4005 = vadd.f32 %v3989, %v3997
  %v4006 = vmul.f32 %v769, %v3796
  %v4007 = vmul.f32 %v773, %v3796
  %v4008 = vmul.f32 %v777, %v3796
  %v4009 = vmul.f32 %v781, %v3796
  %v4010 = vmul.f32 %v785, %v3796
  %v4011 = vmul.f32 %v789, %v3796
  %v4012 = vmul.f32 %v793, %v3796
  %v4013 = vmul.f32 %v797, %v3796
  %v4014 = vadd.f32 %v3998, %v4006
  %v4015 = vadd.f32 %v3999, %v4007
  %v4016 = vadd.f32 %v4000, %v4008
  %v4017 = vadd.f32 %v4001, %v4009
  %v4018 = vadd.f32 %v4002, %v4010
  %v4019 = vadd.f32 %v4003, %v4011
  %v4020 = vadd.f32 %v4004, %v4012
  %v4021 = vadd.f32 %v4005, %v4013
  %v4022 = vmul.f32 %v817, %v3797
  %v4023 = vmul.f32 %v821, %v3797
  %v4024 = vmul.f32 %v825, %v3797
  %v4025 = vmul.f32 %v829, %v3797
  %v4026 = vmul.f32 %v833, %v3797
  %v4027 = vmul.f32 %v837, %v3797
  %v4028 = vmul.f32 %v841, %v3797
  %v4029 = vmul.f32 %v845, %v3797
  %v4030 = vadd.f32 %v4014, %v4022
  %v4031 = vadd.f32 %v4015, %v4023
  %v4032 = vadd.f32 %v4016, %v4024
  %v4033 = vadd.f32 %v4017, %v4025
  %v4034 = vadd.f32 %v4018, %v4026
  %v4035 = vadd.f32 %v4019, %v4027
  %v4036 = vadd.f32 %v4020, %v4028
  %v4037 = vadd.f32 %v4021, %v4029
  %v4038 = vadd.f32 %v3782, %v3790
  %v4039 = vadd.f32 %v3783, %v3791
  %v4040 = vadd.f32 %v3784, %v3792
  %v4041 = vadd.f32 %v3785, %v3793
  %v4042 = vadd.f32 %v3786, %v3794
  %v4043 = vadd.f32 %v3787, %v3795
  %v4044 = vadd.f32 %v3788, %v3796
  %v4045 = vadd.f32 %v3789, %v3797
  %v4046 = vmul.f32 %v881, %v4038
  %v4047 = vmul.f32 %v885, %v4038
  %v4048 = vmul.f32 %v889, %v4038
  %v4049 = vmul.f32 %v893, %v4038
  %v4050 = vmul.f32 %v897, %v4038
  %v4051 = vmul.f32 %v901, %v4038
  %v4052 = vmul.f32 %v905, %v4038
  %v4053 = vmul.f32 %v909, %v4038
  %v4054 = vmul.f32 %v921, %v4039
  %v4055 = vmul.f32 %v925, %v4039
  %v4056 = vmul.f32 %v929, %v4039
  %v4057 = vmul.f32 %v933, %v4039
  %v4058 = vmul.f32 %v937, %v4039
  %v4059 = vmul.f32 %v941, %v4039
  %v4060 = vmul.f32 %v945, %v4039
  %v4061 = vmul.f32 %v949, %v4039
  %v4062 = vadd.f32 %v4046, %v4054
  %v4063 = vadd.f32 %v4047, %v4055
  %v4064 = vadd.f32 %v4048, %v4056
  %v4065 = vadd.f32 %v4049, %v4057
  %v4066 = vadd.f32 %v4050, %v4058
  %v4067 = vadd.f32 %v4051, %v4059
  %v4068 = vadd.f32 %v4052, %v4060
  %v4069 = vadd.f32 %v4053, %v4061
  %v4070 = vmul.f32 %v969, %v4040
  %v4071 = vmul.f32 %v973, %v4040
  %v4072 = vmul.f32 %v977, %v4040
  %v4073 = vmul.f32 %v981, %v4040
  %v4074 = vmul.f32 %v985, %v4040
  %v4075 = vmul.f32 %v989, %v4040
  %v4076 = vmul.f32 %v993, %v4040
  %v4077 = vmul.f32 %v997, %v4040
  %v4078 = vadd.f32 %v4062, %v4070
  %v4079 = vadd.f32 %v4063, %v4071
  %v4080 = vadd.f32 %v4064, %v4072
  %v4081 = vadd.f32 %v4065, %v4073
  %v4082 = vadd.f32 %v4066, %v4074
  %v4083 = vadd.f32 %v4067, %v4075
  %v4084 = vadd.f32 %v4068, %v4076
  %v4085 = vadd.f32 %v4069, %v4077
  %v4086 = vmul.f32 %v1017, %v4041
  %v4087 = vmul.f32 %v1021, %v4041
  %v4088 = vmul.f32 %v1025, %v4041
  %v4089 = vmul.f32 %v1029, %v4041
  %v4090 = vmul.f32 %v1033, %v4041
  %v4091 = vmul.f32 %v1037, %v4041
  %v4092 = vmul.f32 %v1041, %v4041
  %v4093 = vmul.f32 %v1045, %v4041
  %v4094 = vadd.f32 %v4078, %v4086
  %v4095 = vadd.f32 %v4079, %v4087
  %v4096 = vadd.f32 %v4080, %v4088
  %v4097 = vadd.f32 %v4081, %v4089
  %v4098 = vadd.f32 %v4082, %v4090
  %v4099 = vadd.f32 %v4083, %v4091
  %v4100 = vadd.f32 %v4084, %v4092
  %v4101 = vadd.f32 %v4085, %v4093
  %v4102 = vmul.f32 %v1065, %v4042
  %v4103 = vmul.f32 %v1069, %v4042
  %v4104 = vmul.f32 %v1073, %v4042
  %v4105 = vmul.f32 %v1077, %v4042
  %v4106 = vmul.f32 %v1081, %v4042
  %v4107 = vmul.f32 %v1085, %v4042
  %v4108 = vmul.f32 %v1089, %v4042
  %v4109 = vmul.f32 %v1093, %v4042
  %v4110 = vadd.f32 %v4094, %v4102
  %v4111 = vadd.f32 %v4095, %v4103
  %v4112 = vadd.f32 %v4096, %v4104
  %v4113 = vadd.f32 %v4097, %v4105
  %v4114 = vadd.f32 %v4098, %v4106
  %v4115 = vadd.f32 %v4099, %v4107
  %v4116 = vadd.f32 %v4100, %v4108
  %v4117 = vadd.f32 %v4101, %v4109
  %v4118 = vmul.f32 %v1113, %v4043
  %v4119 = vmul.f32 %v1117, %v4043
  %v4120 = vmul.f32 %v1121, %v4043
  %v4121 = vmul.f32 %v1125, %v4043
  %v4122 = vmul.f32 %v1129, %v4043
  %v4123 = vmul.f32 %v1133, %v4043
  %v4124 = vmul.f32 %v1137, %v4043
  %v4125 = vmul.f32 %v1141, %v4043
  %v4126 = vadd.f32 %v4110, %v4118
  %v4127 = vadd.f32 %v4111, %v4119
  %v4128 = vadd.f32 %v4112, %v4120
  %v4129 = vadd.f32 %v4113, %v4121
  %v4130 = vadd.f32 %v4114, %v4122
  %v4131 = vadd.f32 %v4115, %v4123
  %v4132 = vadd.f32 %v4116, %v4124
  %v4133 = vadd.f32 %v4117, %v4125
  %v4134 = vmul.f32 %v1161, %v4044
  %v4135 = vmul.f32 %v1165, %v4044
  %v4136 = vmul.f32 %v1169, %v4044
  %v4137 = vmul.f32 %v1173, %v4044
  %v4138 = vmul.f32 %v1177, %v4044
  %v4139 = vmul.f32 %v1181, %v4044
  %v4140 = vmul.f32 %v1185, %v4044
  %v4141 = vmul.f32 %v1189, %v4044
  %v4142 = vadd.f32 %v4126, %v4134
  %v4143 = vadd.f32 %v4127, %v4135
  %v4144 = vadd.f32 %v4128, %v4136
  %v4145 = vadd.f32 %v4129, %v4137
  %v4146 = vadd.f32 %v4130, %v4138
  %v4147 = vadd.f32 %v4131, %v4139
  %v4148 = vadd.f32 %v4132, %v4140
  %v4149 = vadd.f32 %v4133, %v4141
  %v4150 = vmul.f32 %v1209, %v4045
  %v4151 = vmul.f32 %v1213, %v4045
  %v4152 = vmul.f32 %v1217, %v4045
  %v4153 = vmul.f32 %v1221, %v4045
  %v4154 = vmul.f32 %v1225, %v4045
  %v4155 = vmul.f32 %v1229, %v4045
  %v4156 = vmul.f32 %v1233, %v4045
  %v4157 = vmul.f32 %v1237, %v4045
  %v4158 = vadd.f32 %v4142, %v4150
  %v4159 = vadd.f32 %v4143, %v4151
  %v4160 = vadd.f32 %v4144, %v4152
  %v4161 = vadd.f32 %v4145, %v4153
  %v4162 = vadd.f32 %v4146, %v4154
  %v4163 = vadd.f32 %v4147, %v4155
  %v4164 = vadd.f32 %v4148, %v4156
  %v4165 = vadd.f32 %v4149, %v4157
  %v4166 = vsub.f32 %v3910, %v4030
  %v4167 = vsub.f32 %v3911, %v4031
  %v4168 = vsub.f32 %v3912, %v4032
  %v4169 = vsub.f32 %v3913, %v4033
  %v4170 = vsub.f32 %v3914, %v4034
  %v4171 = vsub.f32 %v3915, %v4035
  %v4172 = vsub.f32 %v3916, %v4036
  %v4173 = vsub.f32 %v3917, %v4037
  %v4174 = vsub.f32 %v4158, %v3910
  %v4175 = vsub.f32 %v4159, %v3911
  %v4176 = vsub.f32 %v4160, %v3912
  %v4177 = vsub.f32 %v4161, %v3913
  %v4178 = vsub.f32 %v4162, %v3914
  %v4179 = vsub.f32 %v4163, %v3915
  %v4180 = vsub.f32 %v4164, %v3916
  %v4181 = vsub.f32 %v4165, %v3917
  %v4182 = vsub.f32 %v4174, %v4030
  %v4183 = vsub.f32 %v4175, %v4031
  %v4184 = vsub.f32 %v4176, %v4032
  %v4185 = vsub.f32 %v4177, %v4033
  %v4186 = vsub.f32 %v4178, %v4034
  %v4187 = vsub.f32 %v4179, %v4035
  %v4188 = vsub.f32 %v4180, %v4036
  %v4189 = vsub.f32 %v4181, %v4037
  %v4190 = vmul.f32 %v4166, 0.2
  %v4191 = vmul.f32 %v4167, 0.2
  %v4192 = vmul.f32 %v4168, 0.2
  %v4193 = vmul.f32 %v4169, 0.2
  %v4194 = vmul.f32 %v4170, 0.2
  %v4195 = vmul.f32 %v4171, 0.2
  %v4196 = vmul.f32 %v4172, 0.2
  %v4197 = vmul.f32 %v4173, 0.2
  %v4198 = vadd.f32 %v78, %v4190
  %v4199 = vadd.f32 %v79, %v4191
  %v4200 = vadd.f32 %v80, %v4192
  %v4201 = vadd.f32 %v81, %v4193
  %v4202 = vadd.f32 %v82, %v4194
  %v4203 = vadd.f32 %v83, %v4195
  %v4204 = vadd.f32 %v84, %v4196
  %v4205 = vadd.f32 %v85, %v4197
  %v4206 = vmul.f32 %v4182, 0.2
  %v4207 = vmul.f32 %v4183, 0.2
  %v4208 = vmul.f32 %v4184, 0.2
  %v4209 = vmul.f32 %v4185, 0.2
  %v4210 = vmul.f32 %v4186, 0.2
  %v4211 = vmul.f32 %v4187, 0.2
  %v4212 = vmul.f32 %v4188, 0.2
  %v4213 = vmul.f32 %v4189, 0.2
  %v4214 = vmul.f32 %v113, %v4198
  %v4215 = vmul.f32 %v117, %v4198
  %v4216 = vmul.f32 %v121, %v4198
  %v4217 = vmul.f32 %v125, %v4198
  %v4218 = vmul.f32 %v129, %v4198
  %v4219 = vmul.f32 %v133, %v4198
  %v4220 = vmul.f32 %v137, %v4198
  %v4221 = vmul.f32 %v141, %v4198
  %v4222 = vmul.f32 %v153, %v4199
  %v4223 = vmul.f32 %v157, %v4199
  %v4224 = vmul.f32 %v161, %v4199
  %v4225 = vmul.f32 %v165, %v4199
  %v4226 = vmul.f32 %v169, %v4199
  %v4227 = vmul.f32 %v173, %v4199
  %v4228 = vmul.f32 %v177, %v4199
  %v4229 = vmul.f32 %v181, %v4199
  %v4230 = vadd.f32 %v4214, %v4222
  %v4231 = vadd.f32 %v4215, %v4223
  %v4232 = vadd.f32 %v4216, %v4224
  %v4233 = vadd.f32 %v4217, %v4225
  %v4234 = vadd.f32 %v4218, %v4226
  %v4235 = vadd.f32 %v4219, %v4227
  %v4236 = vadd.f32 %v4220, %v4228
  %v4237 = vadd.f32 %v4221, %v4229
  %v4238 = vmul.f32 %v201, %v4200
  %v4239 = vmul.f32 %v205, %v4200
  %v4240 = vmul.f32 %v209, %v4200
  %v4241 = vmul.f32 %v213, %v4200
  %v4242 = vmul.f32 %v217, %v4200
  %v4243 = vmul.f32 %v221, %v4200
  %v4244 = vmul.f32 %v225, %v4200
  %v4245 = vmul.f32 %v229, %v4200
  %v4246 = vadd.f32 %v4230, %v4238
  %v4247 = vadd.f32 %v4231, %v4239
  %v4248 = vadd.f32 %v4232, %v4240
  %v4249 = vadd.f32 %v4233, %v4241
  %v4250 = vadd.f32 %v4234, %v4242
  %v4251 = vadd.f32 %v4235, %v4243
  %v4252 = vadd.f32 %v4236, %v4244
  %v4253 = vadd.f32 %v4237, %v4245
  %v4254 = vmul.f32 %v249, %v4201
  %v4255 = vmul.f32 %v253, %v4201
  %v4256 = vmul.f32 %v257, %v4201
  %v4257 = vmul.f32 %v261, %v4201
  %v4258 = vmul.f32 %v265, %v4201
  %v4259 = vmul.f32 %v269, %v4201
  %v4260 = vmul.f32 %v273, %v4201
  %v4261 = vmul.f32 %v277, %v4201
  %v4262 = vadd.f32 %v4246, %v4254
  %v4263 = vadd.f32 %v4247, %v4255
  %v4264 = vadd.f32 %v4248, %v4256
  %v4265 = vadd.f32 %v4249, %v4257
  %v4266 = vadd.f32 %v4250, %v4258
  %v4267 = vadd.f32 %v4251, %v4259
  %v4268 = vadd.f32 %v4252, %v4260
  %v4269 = vadd.f32 %v4253, %v4261
  %v4270 = vmul.f32 %v297, %v4202
  %v4271 = vmul.f32 %v301, %v4202
  %v4272 = vmul.f32 %v305, %v4202
  %v4273 = vmul.f32 %v309, %v4202
  %v4274 = vmul.f32 %v313, %v4202
  %v4275 = vmul.f32 %v317, %v4202
  %v4276 = vmul.f32 %v321, %v4202
  %v4277 = vmul.f32 %v325, %v4202
  %v4278 = vadd.f32 %v4262, %v4270
  %v4279 = vadd.f32 %v4263, %v4271
  %v4280 = vadd.f32 %v4264, %v4272
  %v4281 = vadd.f32 %v4265, %v4273
  %v4282 = vadd.f32 %v4266, %v4274
  %v4283 = vadd.f32 %v4267, %v4275
  %v4284 = vadd.f32 %v4268, %v4276
  %v4285 = vadd.f32 %v4269, %v4277
  %v4286 = vmul.f32 %v345, %v4203
  %v4287 = vmul.f32 %v349, %v4203
  %v4288 = vmul.f32 %v353, %v4203
  %v4289 = vmul.f32 %v357, %v4203
  %v4290 = vmul.f32 %v361, %v4203
  %v4291 = vmul.f32 %v365, %v4203
  %v4292 = vmul.f32 %v369, %v4203
  %v4293 = vmul.f32 %v373, %v4203
  %v4294 = vadd.f32 %v4278, %v4286
  %v4295 = vadd.f32 %v4279, %v4287
  %v4296 = vadd.f32 %v4280, %v4288
  %v4297 = vadd.f32 %v4281, %v4289
  %v4298 = vadd.f32 %v4282, %v4290
  %v4299 = vadd.f32 %v4283, %v4291
  %v4300 = vadd.f32 %v4284, %v4292
  %v4301 = vadd.f32 %v4285, %v4293
  %v4302 = vmul.f32 %v393, %v4204
  %v4303 = vmul.f32 %v397, %v4204
  %v4304 = vmul.f32 %v401, %v4204
  %v4305 = vmul.f32 %v405, %v4204
  %v4306 = vmul.f32 %v409, %v4204
  %v4307 = vmul.f32 %v413, %v4204
  %v4308 = vmul.f32 %v417, %v4204
  %v4309 = vmul.f32 %v421, %v4204
  %v4310 = vadd.f32 %v4294, %v4302
  %v4311 = vadd.f32 %v4295, %v4303
  %v4312 = vadd.f32 %v4296, %v4304
  %v4313 = vadd.f32 %v4297, %v4305
  %v4314 = vadd.f32 %v4298, %v4306
  %v4315 = vadd.f32 %v4299, %v4307
  %v4316 = vadd.f32 %v4300, %v4308
  %v4317 = vadd.f32 %v4301, %v4309
  %v4318 = vmul.f32 %v441, %v4205
  %v4319 = vmul.f32 %v445, %v4205
  %v4320 = vmul.f32 %v449, %v4205
  %v4321 = vmul.f32 %v453, %v4205
  %v4322 = vmul.f32 %v457, %v4205
  %v4323 = vmul.f32 %v461, %v4205
  %v4324 = vmul.f32 %v465, %v4205
  %v4325 = vmul.f32 %v469, %v4205
  %v4326 = vadd.f32 %v4310, %v4318
  %v4327 = vadd.f32 %v4311, %v4319
  %v4328 = vadd.f32 %v4312, %v4320
  %v4329 = vadd.f32 %v4313, %v4321
  %v4330 = vadd.f32 %v4314, %v4322
  %v4331 = vadd.f32 %v4315, %v4323
  %v4332 = vadd.f32 %v4316, %v4324
  %v4333 = vadd.f32 %v4317, %v4325
  %v4334 = vmul.f32 %v489, %v4206
  %v4335 = vmul.f32 %v493, %v4206
  %v4336 = vmul.f32 %v497, %v4206
  %v4337 = vmul.f32 %v501, %v4206
  %v4338 = vmul.f32 %v505, %v4206
  %v4339 = vmul.f32 %v509, %v4206
  %v4340 = vmul.f32 %v513, %v4206
  %v4341 = vmul.f32 %v517, %v4206
  %v4342 = vmul.f32 %v529, %v4207
  %v4343 = vmul.f32 %v533, %v4207
  %v4344 = vmul.f32 %v537, %v4207
  %v4345 = vmul.f32 %v541, %v4207
  %v4346 = vmul.f32 %v545, %v4207
  %v4347 = vmul.f32 %v549, %v4207
  %v4348 = vmul.f32 %v553, %v4207
  %v4349 = vmul.f32 %v557, %v4207
  %v4350 = vadd.f32 %v4334, %v4342
  %v4351 = vadd.f32 %v4335, %v4343
  %v4352 = vadd.f32 %v4336, %v4344
  %v4353 = vadd.f32 %v4337, %v4345
  %v4354 = vadd.f32 %v4338, %v4346
  %v4355 = vadd.f32 %v4339, %v4347
  %v4356 = vadd.f32 %v4340, %v4348
  %v4357 = vadd.f32 %v4341, %v4349
  %v4358 = vmul.f32 %v577, %v4208
  %v4359 = vmul.f32 %v581, %v4208
  %v4360 = vmul.f32 %v585, %v4208
  %v4361 = vmul.f32 %v589, %v4208
  %v4362 = vmul.f32 %v593, %v4208
  %v4363 = vmul.f32 %v597, %v4208
  %v4364 = vmul.f32 %v601, %v4208
  %v4365 = vmul.f32 %v605, %v4208
  %v4366 = vadd.f32 %v4350, %v4358
  %v4367 = vadd.f32 %v4351, %v4359
  %v4368 = vadd.f32 %v4352, %v4360
  %v4369 = vadd.f32 %v4353, %v4361
  %v4370 = vadd.f32 %v4354, %v4362
  %v4371 = vadd.f32 %v4355, %v4363
  %v4372 = vadd.f32 %v4356, %v4364
  %v4373 = vadd.f32 %v4357, %v4365
  %v4374 = vmul.f32 %v625, %v4209
  %v4375 = vmul.f32 %v629, %v4209
  %v4376 = vmul.f32 %v633, %v4209
  %v4377 = vmul.f32 %v637, %v4209
  %v4378 = vmul.f32 %v641, %v4209
  %v4379 = vmul.f32 %v645, %v4209
  %v4380 = vmul.f32 %v649, %v4209
  %v4381 = vmul.f32 %v653, %v4209
  %v4382 = vadd.f32 %v4366, %v4374
  %v4383 = vadd.f32 %v4367, %v4375
  %v4384 = vadd.f32 %v4368, %v4376
  %v4385 = vadd.f32 %v4369, %v4377
  %v4386 = vadd.f32 %v4370, %v4378
  %v4387 = vadd.f32 %v4371, %v4379
  %v4388 = vadd.f32 %v4372, %v4380
  %v4389 = vadd.f32 %v4373, %v4381
  %v4390 = vmul.f32 %v673, %v4210
  %v4391 = vmul.f32 %v677, %v4210
  %v4392 = vmul.f32 %v681, %v4210
  %v4393 = vmul.f32 %v685, %v4210
  %v4394 = vmul.f32 %v689, %v4210
  %v4395 = vmul.f32 %v693, %v4210
  %v4396 = vmul.f32 %v697, %v4210
  %v4397 = vmul.f32 %v701, %v4210
  %v4398 = vadd.f32 %v4382, %v4390
  %v4399 = vadd.f32 %v4383, %v4391
  %v4400 = vadd.f32 %v4384, %v4392
  %v4401 = vadd.f32 %v4385, %v4393
  %v4402 = vadd.f32 %v4386, %v4394
  %v4403 = vadd.f32 %v4387, %v4395
  %v4404 = vadd.f32 %v4388, %v4396
  %v4405 = vadd.f32 %v4389, %v4397
  %v4406 = vmul.f32 %v721, %v4211
  %v4407 = vmul.f32 %v725, %v4211
  %v4408 = vmul.f32 %v729, %v4211
  %v4409 = vmul.f32 %v733, %v4211
  %v4410 = vmul.f32 %v737, %v4211
  %v4411 = vmul.f32 %v741, %v4211
  %v4412 = vmul.f32 %v745, %v4211
  %v4413 = vmul.f32 %v749, %v4211
  %v4414 = vadd.f32 %v4398, %v4406
  %v4415 = vadd.f32 %v4399, %v4407
  %v4416 = vadd.f32 %v4400, %v4408
  %v4417 = vadd.f32 %v4401, %v4409
  %v4418 = vadd.f32 %v4402, %v4410
  %v4419 = vadd.f32 %v4403, %v4411
  %v4420 = vadd.f32 %v4404, %v4412
  %v4421 = vadd.f32 %v4405, %v4413
  %v4422 = vmul.f32 %v769, %v4212
  %v4423 = vmul.f32 %v773, %v4212
  %v4424 = vmul.f32 %v777, %v4212
  %v4425 = vmul.f32 %v781, %v4212
  %v4426 = vmul.f32 %v785, %v4212
  %v4427 = vmul.f32 %v789, %v4212
  %v4428 = vmul.f32 %v793, %v4212
  %v4429 = vmul.f32 %v797, %v4212
  %v4430 = vadd.f32 %v4414, %v4422
  %v4431 = vadd.f32 %v4415, %v4423
  %v4432 = vadd.f32 %v4416, %v4424
  %v4433 = vadd.f32 %v4417, %v4425
  %v4434 = vadd.f32 %v4418, %v4426
  %v4435 = vadd.f32 %v4419, %v4427
  %v4436 = vadd.f32 %v4420, %v4428
  %v4437 = vadd.f32 %v4421, %v4429
  %v4438 = vmul.f32 %v817, %v4213
  %v4439 = vmul.f32 %v821, %v4213
  %v4440 = vmul.f32 %v825, %v4213
  %v4441 = vmul.f32 %v829, %v4213
  %v4442 = vmul.f32 %v833, %v4213
  %v4443 = vmul.f32 %v837, %v4213
  %v4444 = vmul.f32 %v841, %v4213
  %v4445 = vmul.f32 %v845, %v4213
  %v4446 = vadd.f32 %v4430, %v4438
  %v4447 = vadd.f32 %v4431, %v4439
  %v4448 = vadd.f32 %v4432, %v4440
  %v4449 = vadd.f32 %v4433, %v4441
  %v4450 = vadd.f32 %v4434, %v4442
  %v4451 = vadd.f32 %v4435, %v4443
  %v4452 = vadd.f32 %v4436, %v4444
  %v4453 = vadd.f32 %v4437, %v4445
  %v4454 = vadd.f32 %v4198, %v4206
  %v4455 = vadd.f32 %v4199, %v4207
  %v4456 = vadd.f32 %v4200, %v4208
  %v4457 = vadd.f32 %v4201, %v4209
  %v4458 = vadd.f32 %v4202, %v4210
  %v4459 = vadd.f32 %v4203, %v4211
  %v4460 = vadd.f32 %v4204, %v4212
  %v4461 = vadd.f32 %v4205, %v4213
  %v4462 = vmul.f32 %v881, %v4454
  %v4463 = vmul.f32 %v885, %v4454
  %v4464 = vmul.f32 %v889, %v4454
  %v4465 = vmul.f32 %v893, %v4454
  %v4466 = vmul.f32 %v897, %v4454
  %v4467 = vmul.f32 %v901, %v4454
  %v4468 = vmul.f32 %v905, %v4454
  %v4469 = vmul.f32 %v909, %v4454
  %v4470 = vmul.f32 %v921, %v4455
  %v4471 = vmul.f32 %v925, %v4455
  %v4472 = vmul.f32 %v929, %v4455
  %v4473 = vmul.f32 %v933, %v4455
  %v4474 = vmul.f32 %v937, %v4455
  %v4475 = vmul.f32 %v941, %v4455
  %v4476 = vmul.f32 %v945, %v4455
  %v4477 = vmul.f32 %v949, %v4455
  %v4478 = vadd.f32 %v4462, %v4470
  %v4479 = vadd.f32 %v4463, %v4471
  %v4480 = vadd.f32 %v4464, %v4472
  %v4481 = vadd.f32 %v4465, %v4473
  %v4482 = vadd.f32 %v4466, %v4474
  %v4483 = vadd.f32 %v4467, %v4475
  %v4484 = vadd.f32 %v4468, %v4476
  %v4485 = vadd.f32 %v4469, %v4477
  %v4486 = vmul.f32 %v969, %v4456
  %v4487 = vmul.f32 %v973, %v4456
  %v4488 = vmul.f32 %v977, %v4456
  %v4489 = vmul.f32 %v981, %v4456
  %v4490 = vmul.f32 %v985, %v4456
  %v4491 = vmul.f32 %v989, %v4456
  %v4492 = vmul.f32 %v993, %v4456
  %v4493 = vmul.f32 %v997, %v4456
  %v4494 = vadd.f32 %v4478, %v4486
  %v4495 = vadd.f32 %v4479, %v4487
  %v4496 = vadd.f32 %v4480, %v4488
  %v4497 = vadd.f32 %v4481, %v4489
  %v4498 = vadd.f32 %v4482, %v4490
  %v4499 = vadd.f32 %v4483, %v4491
  %v4500 = vadd.f32 %v4484, %v4492
  %v4501 = vadd.f32 %v4485, %v4493
  %v4502 = vmul.f32 %v1017, %v4457
  %v4503 = vmul.f32 %v1021, %v4457
  %v4504 = vmul.f32 %v1025, %v4457
  %v4505 = vmul.f32 %v1029, %v4457
  %v4506 = vmul.f32 %v1033, %v4457
  %v4507 = vmul.f32 %v1037, %v4457
  %v4508 = vmul.f32 %v1041, %v4457
  %v4509 = vmul.f32 %v1045, %v4457
  %v4510 = vadd.f32 %v4494, %v4502
  %v4511 = vadd.f32 %v4495, %v4503
  %v4512 = vadd.f32 %v4496, %v4504
  %v4513 = vadd.f32 %v4497, %v4505
  %v4514 = vadd.f32 %v4498, %v4506
  %v4515 = vadd.f32 %v4499, %v4507
  %v4516 = vadd.f32 %v4500, %v4508
  %v4517 = vadd.f32 %v4501, %v4509
  %v4518 = vmul.f32 %v1065, %v4458
  %v4519 = vmul.f32 %v1069, %v4458
  %v4520 = vmul.f32 %v1073, %v4458
  %v4521 = vmul.f32 %v1077, %v4458
  %v4522 = vmul.f32 %v1081, %v4458
  %v4523 = vmul.f32 %v1085, %v4458
  %v4524 = vmul.f32 %v1089, %v4458
  %v4525 = vmul.f32 %v1093, %v4458
  %v4526 = vadd.f32 %v4510, %v4518
  %v4527 = vadd.f32 %v4511, %v4519
  %v4528 = vadd.f32 %v4512, %v4520
  %v4529 = vadd.f32 %v4513, %v4521
  %v4530 = vadd.f32 %v4514, %v4522
  %v4531 = vadd.f32 %v4515, %v4523
  %v4532 = vadd.f32 %v4516, %v4524
  %v4533 = vadd.f32 %v4517, %v4525
  %v4534 = vmul.f32 %v1113, %v4459
  %v4535 = vmul.f32 %v1117, %v4459
  %v4536 = vmul.f32 %v1121, %v4459
  %v4537 = vmul.f32 %v1125, %v4459
  %v4538 = vmul.f32 %v1129, %v4459
  %v4539 = vmul.f32 %v1133, %v4459
  %v4540 = vmul.f32 %v1137, %v4459
  %v4541 = vmul.f32 %v1141, %v4459
  %v4542 = vadd.f32 %v4526, %v4534
  %v4543 = vadd.f32 %v4527, %v4535
  %v4544 = vadd.f32 %v4528, %v4536
  %v4545 = vadd.f32 %v4529, %v4537
  %v4546 = vadd.f32 %v4530, %v4538
  %v4547 = vadd.f32 %v4531, %v4539
  %v4548 = vadd.f32 %v4532, %v4540
  %v4549 = vadd.f32 %v4533, %v4541
  %v4550 = vmul.f32 %v1161, %v4460
  %v4551 = vmul.f32 %v1165, %v4460
  %v4552 = vmul.f32 %v1169, %v4460
  %v4553 = vmul.f32 %v1173, %v4460
  %v4554 = vmul.f32 %v1177, %v4460
  %v4555 = vmul.f32 %v1181, %v4460
  %v4556 = vmul.f32 %v1185, %v4460
  %v4557 = vmul.f32 %v1189, %v4460
  %v4558 = vadd.f32 %v4542, %v4550
  %v4559 = vadd.f32 %v4543, %v4551
  %v4560 = vadd.f32 %v4544, %v4552
  %v4561 = vadd.f32 %v4545, %v4553
  %v4562 = vadd.f32 %v4546, %v4554
  %v4563 = vadd.f32 %v4547, %v4555
  %v4564 = vadd.f32 %v4548, %v4556
  %v4565 = vadd.f32 %v4549, %v4557
  %v4566 = vmul.f32 %v1209, %v4461
  %v4567 = vmul.f32 %v1213, %v4461
  %v4568 = vmul.f32 %v1217, %v4461
  %v4569 = vmul.f32 %v1221, %v4461
  %v4570 = vmul.f32 %v1225, %v4461
  %v4571 = vmul.f32 %v1229, %v4461
  %v4572 = vmul.f32 %v1233, %v4461
  %v4573 = vmul.f32 %v1237, %v4461
  %v4574 = vadd.f32 %v4558, %v4566
  %v4575 = vadd.f32 %v4559, %v4567
  %v4576 = vadd.f32 %v4560, %v4568
  %v4577 = vadd.f32 %v4561, %v4569
  %v4578 = vadd.f32 %v4562, %v4570
  %v4579 = vadd.f32 %v4563, %v4571
  %v4580 = vadd.f32 %v4564, %v4572
  %v4581 = vadd.f32 %v4565, %v4573
  %v4582 = vsub.f32 %v4326, %v4446
  %v4583 = vsub.f32 %v4327, %v4447
  %v4584 = vsub.f32 %v4328, %v4448
  %v4585 = vsub.f32 %v4329, %v4449
  %v4586 = vsub.f32 %v4330, %v4450
  %v4587 = vsub.f32 %v4331, %v4451
  %v4588 = vsub.f32 %v4332, %v4452
  %v4589 = vsub.f32 %v4333, %v4453
  %v4590 = vsub.f32 %v4574, %v4326
  %v4591 = vsub.f32 %v4575, %v4327
  %v4592 = vsub.f32 %v4576, %v4328
  %v4593 = vsub.f32 %v4577, %v4329
  %v4594 = vsub.f32 %v4578, %v4330
  %v4595 = vsub.f32 %v4579, %v4331
  %v4596 = vsub.f32 %v4580, %v4332
  %v4597 = vsub.f32 %v4581, %v4333
  %v4598 = vsub.f32 %v4590, %v4446
  %v4599 = vsub.f32 %v4591, %v4447
  %v4600 = vsub.f32 %v4592, %v4448
  %v4601 = vsub.f32 %v4593, %v4449
  %v4602 = vsub.f32 %v4594, %v4450
  %v4603 = vsub.f32 %v4595, %v4451
  %v4604 = vsub.f32 %v4596, %v4452
  %v4605 = vsub.f32 %v4597, %v4453
  %v4606 = vmul.f32 %v4582, 0.25
  %v4607 = vmul.f32 %v4583, 0.25
  %v4608 = vmul.f32 %v4584, 0.25
  %v4609 = vmul.f32 %v4585, 0.25
  %v4610 = vmul.f32 %v4586, 0.25
  %v4611 = vmul.f32 %v4587, 0.25
  %v4612 = vmul.f32 %v4588, 0.25
  %v4613 = vmul.f32 %v4589, 0.25
  %v4614 = vadd.f32 %v78, %v4606
  %v4615 = vadd.f32 %v79, %v4607
  %v4616 = vadd.f32 %v80, %v4608
  %v4617 = vadd.f32 %v81, %v4609
  %v4618 = vadd.f32 %v82, %v4610
  %v4619 = vadd.f32 %v83, %v4611
  %v4620 = vadd.f32 %v84, %v4612
  %v4621 = vadd.f32 %v85, %v4613
  %v4622 = vmul.f32 %v4598, 0.25
  %v4623 = vmul.f32 %v4599, 0.25
  %v4624 = vmul.f32 %v4600, 0.25
  %v4625 = vmul.f32 %v4601, 0.25
  %v4626 = vmul.f32 %v4602, 0.25
  %v4627 = vmul.f32 %v4603, 0.25
  %v4628 = vmul.f32 %v4604, 0.25
  %v4629 = vmul.f32 %v4605, 0.25
  %v4630 = vmul.f32 %v113, %v4614
  %v4631 = vmul.f32 %v117, %v4614
  %v4632 = vmul.f32 %v121, %v4614
  %v4633 = vmul.f32 %v125, %v4614
  %v4634 = vmul.f32 %v129, %v4614
  %v4635 = vmul.f32 %v133, %v4614
  %v4636 = vmul.f32 %v137, %v4614
  %v4637 = vmul.f32 %v141, %v4614
  %v4638 = vmul.f32 %v153, %v4615
  %v4639 = vmul.f32 %v157, %v4615
  %v4640 = vmul.f32 %v161, %v4615
  %v4641 = vmul.f32 %v165, %v4615
  %v4642 = vmul.f32 %v169, %v4615
  %v4643 = vmul.f32 %v173, %v4615
  %v4644 = vmul.f32 %v177, %v4615
  %v4645 = vmul.f32 %v181, %v4615
  %v4646 = vadd.f32 %v4630, %v4638
  %v4647 = vadd.f32 %v4631, %v4639
  %v4648 = vadd.f32 %v4632, %v4640
  %v4649 = vadd.f32 %v4633, %v4641
  %v4650 = vadd.f32 %v4634, %v4642
  %v4651 = vadd.f32 %v4635, %v4643
  %v4652 = vadd.f32 %v4636, %v4644
  %v4653 = vadd.f32 %v4637, %v4645
  %v4654 = vmul.f32 %v201, %v4616
  %v4655 = vmul.f32 %v205, %v4616
  %v4656 = vmul.f32 %v209, %v4616
  %v4657 = vmul.f32 %v213, %v4616
  %v4658 = vmul.f32 %v217, %v4616
  %v4659 = vmul.f32 %v221, %v4616
  %v4660 = vmul.f32 %v225, %v4616
  %v4661 = vmul.f32 %v229, %v4616
  %v4662 = vadd.f32 %v4646, %v4654
  %v4663 = vadd.f32 %v4647, %v4655
  %v4664 = vadd.f32 %v4648, %v4656
  %v4665 = vadd.f32 %v4649, %v4657
  %v4666 = vadd.f32 %v4650, %v4658
  %v4667 = vadd.f32 %v4651, %v4659
  %v4668 = vadd.f32 %v4652, %v4660
  %v4669 = vadd.f32 %v4653, %v4661
  %v4670 = vmul.f32 %v249, %v4617
  %v4671 = vmul.f32 %v253, %v4617
  %v4672 = vmul.f32 %v257, %v4617
  %v4673 = vmul.f32 %v261, %v4617
  %v4674 = vmul.f32 %v265, %v4617
  %v4675 = vmul.f32 %v269, %v4617
  %v4676 = vmul.f32 %v273, %v4617
  %v4677 = vmul.f32 %v277, %v4617
  %v4678 = vadd.f32 %v4662, %v4670
  %v4679 = vadd.f32 %v4663, %v4671
  %v4680 = vadd.f32 %v4664, %v4672
  %v4681 = vadd.f32 %v4665, %v4673
  %v4682 = vadd.f32 %v4666, %v4674
  %v4683 = vadd.f32 %v4667, %v4675
  %v4684 = vadd.f32 %v4668, %v4676
  %v4685 = vadd.f32 %v4669, %v4677
  %v4686 = vmul.f32 %v297, %v4618
  %v4687 = vmul.f32 %v301, %v4618
  %v4688 = vmul.f32 %v305, %v4618
  %v4689 = vmul.f32 %v309, %v4618
  %v4690 = vmul.f32 %v313, %v4618
  %v4691 = vmul.f32 %v317, %v4618
  %v4692 = vmul.f32 %v321, %v4618
  %v4693 = vmul.f32 %v325, %v4618
  %v4694 = vadd.f32 %v4678, %v4686
  %v4695 = vadd.f32 %v4679, %v4687
  %v4696 = vadd.f32 %v4680, %v4688
  %v4697 = vadd.f32 %v4681, %v4689
  %v4698 = vadd.f32 %v4682, %v4690
  %v4699 = vadd.f32 %v4683, %v4691
  %v4700 = vadd.f32 %v4684, %v4692
  %v4701 = vadd.f32 %v4685, %v4693
  %v4702 = vmul.f32 %v345, %v4619
  %v4703 = vmul.f32 %v349, %v4619
  %v4704 = vmul.f32 %v353, %v4619
  %v4705 = vmul.f32 %v357, %v4619
  %v4706 = vmul.f32 %v361, %v4619
  %v4707 = vmul.f32 %v365, %v4619
  %v4708 = vmul.f32 %v369, %v4619
  %v4709 = vmul.f32 %v373, %v4619
  %v4710 = vadd.f32 %v4694, %v4702
  %v4711 = vadd.f32 %v4695, %v4703
  %v4712 = vadd.f32 %v4696, %v4704
  %v4713 = vadd.f32 %v4697, %v4705
  %v4714 = vadd.f32 %v4698, %v4706
  %v4715 = vadd.f32 %v4699, %v4707
  %v4716 = vadd.f32 %v4700, %v4708
  %v4717 = vadd.f32 %v4701, %v4709
  %v4718 = vmul.f32 %v393, %v4620
  %v4719 = vmul.f32 %v397, %v4620
  %v4720 = vmul.f32 %v401, %v4620
  %v4721 = vmul.f32 %v405, %v4620
  %v4722 = vmul.f32 %v409, %v4620
  %v4723 = vmul.f32 %v413, %v4620
  %v4724 = vmul.f32 %v417, %v4620
  %v4725 = vmul.f32 %v421, %v4620
  %v4726 = vadd.f32 %v4710, %v4718
  %v4727 = vadd.f32 %v4711, %v4719
  %v4728 = vadd.f32 %v4712, %v4720
  %v4729 = vadd.f32 %v4713, %v4721
  %v4730 = vadd.f32 %v4714, %v4722
  %v4731 = vadd.f32 %v4715, %v4723
  %v4732 = vadd.f32 %v4716, %v4724
  %v4733 = vadd.f32 %v4717, %v4725
  %v4734 = vmul.f32 %v441, %v4621
  %v4735 = vmul.f32 %v445, %v4621
  %v4736 = vmul.f32 %v449, %v4621
  %v4737 = vmul.f32 %v453, %v4621
  %v4738 = vmul.f32 %v457, %v4621
  %v4739 = vmul.f32 %v461, %v4621
  %v4740 = vmul.f32 %v465, %v4621
  %v4741 = vmul.f32 %v469, %v4621
  %v4742 = vadd.f32 %v4726, %v4734
  %v4743 = vadd.f32 %v4727, %v4735
  %v4744 = vadd.f32 %v4728, %v4736
  %v4745 = vadd.f32 %v4729, %v4737
  %v4746 = vadd.f32 %v4730, %v4738
  %v4747 = vadd.f32 %v4731, %v4739
  %v4748 = vadd.f32 %v4732, %v4740
  %v4749 = vadd.f32 %v4733, %v4741
  %v4750 = vmul.f32 %v489, %v4622
  %v4751 = vmul.f32 %v493, %v4622
  %v4752 = vmul.f32 %v497, %v4622
  %v4753 = vmul.f32 %v501, %v4622
  %v4754 = vmul.f32 %v505, %v4622
  %v4755 = vmul.f32 %v509, %v4622
  %v4756 = vmul.f32 %v513, %v4622
  %v4757 = vmul.f32 %v517, %v4622
  %v4758 = vmul.f32 %v529, %v4623
  %v4759 = vmul.f32 %v533, %v4623
  %v4760 = vmul.f32 %v537, %v4623
  %v4761 = vmul.f32 %v541, %v4623
  %v4762 = vmul.f32 %v545, %v4623
  %v4763 = vmul.f32 %v549, %v4623
  %v4764 = vmul.f32 %v553, %v4623
  %v4765 = vmul.f32 %v557, %v4623
  %v4766 = vadd.f32 %v4750, %v4758
  %v4767 = vadd.f32 %v4751, %v4759
  %v4768 = vadd.f32 %v4752, %v4760
  %v4769 = vadd.f32 %v4753, %v4761
  %v4770 = vadd.f32 %v4754, %v4762
  %v4771 = vadd.f32 %v4755, %v4763
  %v4772 = vadd.f32 %v4756, %v4764
  %v4773 = vadd.f32 %v4757, %v4765
  %v4774 = vmul.f32 %v577, %v4624
  %v4775 = vmul.f32 %v581, %v4624
  %v4776 = vmul.f32 %v585, %v4624
  %v4777 = vmul.f32 %v589, %v4624
  %v4778 = vmul.f32 %v593, %v4624
  %v4779 = vmul.f32 %v597, %v4624
  %v4780 = vmul.f32 %v601, %v4624
  %v4781 = vmul.f32 %v605, %v4624
  %v4782 = vadd.f32 %v4766, %v4774
  %v4783 = vadd.f32 %v4767, %v4775
  %v4784 = vadd.f32 %v4768, %v4776
  %v4785 = vadd.f32 %v4769, %v4777
  %v4786 = vadd.f32 %v4770, %v4778
  %v4787 = vadd.f32 %v4771, %v4779
  %v4788 = vadd.f32 %v4772, %v4780
  %v4789 = vadd.f32 %v4773, %v4781
  %v4790 = vmul.f32 %v625, %v4625
  %v4791 = vmul.f32 %v629, %v4625
  %v4792 = vmul.f32 %v633, %v4625
  %v4793 = vmul.f32 %v637, %v4625
  %v4794 = vmul.f32 %v641, %v4625
  %v4795 = vmul.f32 %v645, %v4625
  %v4796 = vmul.f32 %v649, %v4625
  %v4797 = vmul.f32 %v653, %v4625
  %v4798 = vadd.f32 %v4782, %v4790
  %v4799 = vadd.f32 %v4783, %v4791
  %v4800 = vadd.f32 %v4784, %v4792
  %v4801 = vadd.f32 %v4785, %v4793
  %v4802 = vadd.f32 %v4786, %v4794
  %v4803 = vadd.f32 %v4787, %v4795
  %v4804 = vadd.f32 %v4788, %v4796
  %v4805 = vadd.f32 %v4789, %v4797
  %v4806 = vmul.f32 %v673, %v4626
  %v4807 = vmul.f32 %v677, %v4626
  %v4808 = vmul.f32 %v681, %v4626
  %v4809 = vmul.f32 %v685, %v4626
  %v4810 = vmul.f32 %v689, %v4626
  %v4811 = vmul.f32 %v693, %v4626
  %v4812 = vmul.f32 %v697, %v4626
  %v4813 = vmul.f32 %v701, %v4626
  %v4814 = vadd.f32 %v4798, %v4806
  %v4815 = vadd.f32 %v4799, %v4807
  %v4816 = vadd.f32 %v4800, %v4808
  %v4817 = vadd.f32 %v4801, %v4809
  %v4818 = vadd.f32 %v4802, %v4810
  %v4819 = vadd.f32 %v4803, %v4811
  %v4820 = vadd.f32 %v4804, %v4812
  %v4821 = vadd.f32 %v4805, %v4813
  %v4822 = vmul.f32 %v721, %v4627
  %v4823 = vmul.f32 %v725, %v4627
  %v4824 = vmul.f32 %v729, %v4627
  %v4825 = vmul.f32 %v733, %v4627
  %v4826 = vmul.f32 %v737, %v4627
  %v4827 = vmul.f32 %v741, %v4627
  %v4828 = vmul.f32 %v745, %v4627
  %v4829 = vmul.f32 %v749, %v4627
  %v4830 = vadd.f32 %v4814, %v4822
  %v4831 = vadd.f32 %v4815, %v4823
  %v4832 = vadd.f32 %v4816, %v4824
  %v4833 = vadd.f32 %v4817, %v4825
  %v4834 = vadd.f32 %v4818, %v4826
  %v4835 = vadd.f32 %v4819, %v4827
  %v4836 = vadd.f32 %v4820, %v4828
  %v4837 = vadd.f32 %v4821, %v4829
  %v4838 = vmul.f32 %v769, %v4628
  %v4839 = vmul.f32 %v773, %v4628
  %v4840 = vmul.f32 %v777, %v4628
  %v4841 = vmul.f32 %v781, %v4628
  %v4842 = vmul.f32 %v785, %v4628
  %v4843 = vmul.f32 %v789, %v4628
  %v4844 = vmul.f32 %v793, %v4628
  %v4845 = vmul.f32 %v797, %v4628
  %v4846 = vadd.f32 %v4830, %v4838
  %v4847 = vadd.f32 %v4831, %v4839
  %v4848 = vadd.f32 %v4832, %v4840
  %v4849 = vadd.f32 %v4833, %v4841
  %v4850 = vadd.f32 %v4834, %v4842
  %v4851 = vadd.f32 %v4835, %v4843
  %v4852 = vadd.f32 %v4836, %v4844
  %v4853 = vadd.f32 %v4837, %v4845
  %v4854 = vmul.f32 %v817, %v4629
  %v4855 = vmul.f32 %v821, %v4629
  %v4856 = vmul.f32 %v825, %v4629
  %v4857 = vmul.f32 %v829, %v4629
  %v4858 = vmul.f32 %v833, %v4629
  %v4859 = vmul.f32 %v837, %v4629
  %v4860 = vmul.f32 %v841, %v4629
  %v4861 = vmul.f32 %v845, %v4629
  %v4862 = vadd.f32 %v4846, %v4854
  %v4863 = vadd.f32 %v4847, %v4855
  %v4864 = vadd.f32 %v4848, %v4856
  %v4865 = vadd.f32 %v4849, %v4857
  %v4866 = vadd.f32 %v4850, %v4858
  %v4867 = vadd.f32 %v4851, %v4859
  %v4868 = vadd.f32 %v4852, %v4860
  %v4869 = vadd.f32 %v4853, %v4861
  %v4870 = vadd.f32 %v4614, %v4622
  %v4871 = vadd.f32 %v4615, %v4623
  %v4872 = vadd.f32 %v4616, %v4624
  %v4873 = vadd.f32 %v4617, %v4625
  %v4874 = vadd.f32 %v4618, %v4626
  %v4875 = vadd.f32 %v4619, %v4627
  %v4876 = vadd.f32 %v4620, %v4628
  %v4877 = vadd.f32 %v4621, %v4629
  %v4878 = vmul.f32 %v881, %v4870
  %v4879 = vmul.f32 %v885, %v4870
  %v4880 = vmul.f32 %v889, %v4870
  %v4881 = vmul.f32 %v893, %v4870
  %v4882 = vmul.f32 %v897, %v4870
  %v4883 = vmul.f32 %v901, %v4870
  %v4884 = vmul.f32 %v905, %v4870
  %v4885 = vmul.f32 %v909, %v4870
  %v4886 = vmul.f32 %v921, %v4871
  %v4887 = vmul.f32 %v925, %v4871
  %v4888 = vmul.f32 %v929, %v4871
  %v4889 = vmul.f32 %v933, %v4871
  %v4890 = vmul.f32 %v937, %v4871
  %v4891 = vmul.f32 %v941, %v4871
  %v4892 = vmul.f32 %v945, %v4871
  %v4893 = vmul.f32 %v949, %v4871
  %v4894 = vadd.f32 %v4878, %v4886
  %v4895 = vadd.f32 %v4879, %v4887
  %v4896 = vadd.f32 %v4880, %v4888
  %v4897 = vadd.f32 %v4881, %v4889
  %v4898 = vadd.f32 %v4882, %v4890
  %v4899 = vadd.f32 %v4883, %v4891
  %v4900 = vadd.f32 %v4884, %v4892
  %v4901 = vadd.f32 %v4885, %v4893
  %v4902 = vmul.f32 %v969, %v4872
  %v4903 = vmul.f32 %v973, %v4872
  %v4904 = vmul.f32 %v977, %v4872
  %v4905 = vmul.f32 %v981, %v4872
  %v4906 = vmul.f32 %v985, %v4872
  %v4907 = vmul.f32 %v989, %v4872
  %v4908 = vmul.f32 %v993, %v4872
  %v4909 = vmul.f32 %v997, %v4872
  %v4910 = vadd.f32 %v4894, %v4902
  %v4911 = vadd.f32 %v4895, %v4903
  %v4912 = vadd.f32 %v4896, %v4904
  %v4913 = vadd.f32 %v4897, %v4905
  %v4914 = vadd.f32 %v4898, %v4906
  %v4915 = vadd.f32 %v4899, %v4907
  %v4916 = vadd.f32 %v4900, %v4908
  %v4917 = vadd.f32 %v4901, %v4909
  %v4918 = vmul.f32 %v1017, %v4873
  %v4919 = vmul.f32 %v1021, %v4873
  %v4920 = vmul.f32 %v1025, %v4873
  %v4921 = vmul.f32 %v1029, %v4873
  %v4922 = vmul.f32 %v1033, %v4873
  %v4923 = vmul.f32 %v1037, %v4873
  %v4924 = vmul.f32 %v1041, %v4873
  %v4925 = vmul.f32 %v1045, %v4873
  %v4926 = vadd.f32 %v4910, %v4918
  %v4927 = vadd.f32 %v4911, %v4919
  %v4928 = vadd.f32 %v4912, %v4920
  %v4929 = vadd.f32 %v4913, %v4921
  %v4930 = vadd.f32 %v4914, %v4922
  %v4931 = vadd.f32 %v4915, %v4923
  %v4932 = vadd.f32 %v4916, %v4924
  %v4933 = vadd.f32 %v4917, %v4925
  %v4934 = vmul.f32 %v1065, %v4874
  %v4935 = vmul.f32 %v1069, %v4874
  %v4936 = vmul.f32 %v1073, %v4874
  %v4937 = vmul.f32 %v1077, %v4874
  %v4938 = vmul.f32 %v1081, %v4874
  %v4939 = vmul.f32 %v1085, %v4874
  %v4940 = vmul.f32 %v1089, %v4874
  %v4941 = vmul.f32 %v1093, %v4874
  %v4942 = vadd.f32 %v4926, %v4934
  %v4943 = vadd.f32 %v4927, %v4935
  %v4944 = vadd.f32 %v4928, %v4936
  %v4945 = vadd.f32 %v4929, %v4937
  %v4946 = vadd.f32 %v4930, %v4938
  %v4947 = vadd.f32 %v4931, %v4939
  %v4948 = vadd.f32 %v4932, %v4940
  %v4949 = vadd.f32 %v4933, %v4941
  %v4950 = vmul.f32 %v1113, %v4875
  %v4951 = vmul.f32 %v1117, %v4875
  %v4952 = vmul.f32 %v1121, %v4875
  %v4953 = vmul.f32 %v1125, %v4875
  %v4954 = vmul.f32 %v1129, %v4875
  %v4955 = vmul.f32 %v1133, %v4875
  %v4956 = vmul.f32 %v1137, %v4875
  %v4957 = vmul.f32 %v1141, %v4875
  %v4958 = vadd.f32 %v4942, %v4950
  %v4959 = vadd.f32 %v4943, %v4951
  %v4960 = vadd.f32 %v4944, %v4952
  %v4961 = vadd.f32 %v4945, %v4953
  %v4962 = vadd.f32 %v4946, %v4954
  %v4963 = vadd.f32 %v4947, %v4955
  %v4964 = vadd.f32 %v4948, %v4956
  %v4965 = vadd.f32 %v4949, %v4957
  %v4966 = vmul.f32 %v1161, %v4876
  %v4967 = vmul.f32 %v1165, %v4876
  %v4968 = vmul.f32 %v1169, %v4876
  %v4969 = vmul.f32 %v1173, %v4876
  %v4970 = vmul.f32 %v1177, %v4876
  %v4971 = vmul.f32 %v1181, %v4876
  %v4972 = vmul.f32 %v1185, %v4876
  %v4973 = vmul.f32 %v1189, %v4876
  %v4974 = vadd.f32 %v4958, %v4966
  %v4975 = vadd.f32 %v4959, %v4967
  %v4976 = vadd.f32 %v4960, %v4968
  %v4977 = vadd.f32 %v4961, %v4969
  %v4978 = vadd.f32 %v4962, %v4970
  %v4979 = vadd.f32 %v4963, %v4971
  %v4980 = vadd.f32 %v4964, %v4972
  %v4981 = vadd.f32 %v4965, %v4973
  %v4982 = vmul.f32 %v1209, %v4877
  %v4983 = vmul.f32 %v1213, %v4877
  %v4984 = vmul.f32 %v1217, %v4877
  %v4985 = vmul.f32 %v1221, %v4877
  %v4986 = vmul.f32 %v1225, %v4877
  %v4987 = vmul.f32 %v1229, %v4877
  %v4988 = vmul.f32 %v1233, %v4877
  %v4989 = vmul.f32 %v1237, %v4877
  %v4990 = vadd.f32 %v4974, %v4982
  %v4991 = vadd.f32 %v4975, %v4983
  %v4992 = vadd.f32 %v4976, %v4984
  %v4993 = vadd.f32 %v4977, %v4985
  %v4994 = vadd.f32 %v4978, %v4986
  %v4995 = vadd.f32 %v4979, %v4987
  %v4996 = vadd.f32 %v4980, %v4988
  %v4997 = vadd.f32 %v4981, %v4989
  %v4998 = vsub.f32 %v4742, %v4862
  %v4999 = vsub.f32 %v4743, %v4863
  %v5000 = vsub.f32 %v4744, %v4864
  %v5001 = vsub.f32 %v4745, %v4865
  %v5002 = vsub.f32 %v4746, %v4866
  %v5003 = vsub.f32 %v4747, %v4867
  %v5004 = vsub.f32 %v4748, %v4868
  %v5005 = vsub.f32 %v4749, %v4869
  %v5006 = vsub.f32 %v4990, %v4742
  %v5007 = vsub.f32 %v4991, %v4743
  %v5008 = vsub.f32 %v4992, %v4744
  %v5009 = vsub.f32 %v4993, %v4745
  %v5010 = vsub.f32 %v4994, %v4746
  %v5011 = vsub.f32 %v4995, %v4747
  %v5012 = vsub.f32 %v4996, %v4748
  %v5013 = vsub.f32 %v4997, %v4749
  %v5014 = vsub.f32 %v5006, %v4862
  %v5015 = vsub.f32 %v5007, %v4863
  %v5016 = vsub.f32 %v5008, %v4864
  %v5017 = vsub.f32 %v5009, %v4865
  %v5018 = vsub.f32 %v5010, %v4866
  %v5019 = vsub.f32 %v5011, %v4867
  %v5020 = vsub.f32 %v5012, %v4868
  %v5021 = vsub.f32 %v5013, %v4869
  %v5022 = vmul.f32 %v4998, 0.33333334
  %v5023 = vmul.f32 %v4999, 0.33333334
  %v5024 = vmul.f32 %v5000, 0.33333334
  %v5025 = vmul.f32 %v5001, 0.33333334
  %v5026 = vmul.f32 %v5002, 0.33333334
  %v5027 = vmul.f32 %v5003, 0.33333334
  %v5028 = vmul.f32 %v5004, 0.33333334
  %v5029 = vmul.f32 %v5005, 0.33333334
  %v5030 = vadd.f32 %v78, %v5022
  %v5031 = vadd.f32 %v79, %v5023
  %v5032 = vadd.f32 %v80, %v5024
  %v5033 = vadd.f32 %v81, %v5025
  %v5034 = vadd.f32 %v82, %v5026
  %v5035 = vadd.f32 %v83, %v5027
  %v5036 = vadd.f32 %v84, %v5028
  %v5037 = vadd.f32 %v85, %v5029
  %v5038 = vmul.f32 %v5014, 0.33333334
  %v5039 = vmul.f32 %v5015, 0.33333334
  %v5040 = vmul.f32 %v5016, 0.33333334
  %v5041 = vmul.f32 %v5017, 0.33333334
  %v5042 = vmul.f32 %v5018, 0.33333334
  %v5043 = vmul.f32 %v5019, 0.33333334
  %v5044 = vmul.f32 %v5020, 0.33333334
  %v5045 = vmul.f32 %v5021, 0.33333334
  %v5046 = vmul.f32 %v113, %v5030
  %v5047 = vmul.f32 %v117, %v5030
  %v5048 = vmul.f32 %v121, %v5030
  %v5049 = vmul.f32 %v125, %v5030
  %v5050 = vmul.f32 %v129, %v5030
  %v5051 = vmul.f32 %v133, %v5030
  %v5052 = vmul.f32 %v137, %v5030
  %v5053 = vmul.f32 %v141, %v5030
  %v5054 = vmul.f32 %v153, %v5031
  %v5055 = vmul.f32 %v157, %v5031
  %v5056 = vmul.f32 %v161, %v5031
  %v5057 = vmul.f32 %v165, %v5031
  %v5058 = vmul.f32 %v169, %v5031
  %v5059 = vmul.f32 %v173, %v5031
  %v5060 = vmul.f32 %v177, %v5031
  %v5061 = vmul.f32 %v181, %v5031
  %v5062 = vadd.f32 %v5046, %v5054
  %v5063 = vadd.f32 %v5047, %v5055
  %v5064 = vadd.f32 %v5048, %v5056
  %v5065 = vadd.f32 %v5049, %v5057
  %v5066 = vadd.f32 %v5050, %v5058
  %v5067 = vadd.f32 %v5051, %v5059
  %v5068 = vadd.f32 %v5052, %v5060
  %v5069 = vadd.f32 %v5053, %v5061
  %v5070 = vmul.f32 %v201, %v5032
  %v5071 = vmul.f32 %v205, %v5032
  %v5072 = vmul.f32 %v209, %v5032
  %v5073 = vmul.f32 %v213, %v5032
  %v5074 = vmul.f32 %v217, %v5032
  %v5075 = vmul.f32 %v221, %v5032
  %v5076 = vmul.f32 %v225, %v5032
  %v5077 = vmul.f32 %v229, %v5032
  %v5078 = vadd.f32 %v5062, %v5070
  %v5079 = vadd.f32 %v5063, %v5071
  %v5080 = vadd.f32 %v5064, %v5072
  %v5081 = vadd.f32 %v5065, %v5073
  %v5082 = vadd.f32 %v5066, %v5074
  %v5083 = vadd.f32 %v5067, %v5075
  %v5084 = vadd.f32 %v5068, %v5076
  %v5085 = vadd.f32 %v5069, %v5077
  %v5086 = vmul.f32 %v249, %v5033
  %v5087 = vmul.f32 %v253, %v5033
  %v5088 = vmul.f32 %v257, %v5033
  %v5089 = vmul.f32 %v261, %v5033
  %v5090 = vmul.f32 %v265, %v5033
  %v5091 = vmul.f32 %v269, %v5033
  %v5092 = vmul.f32 %v273, %v5033
  %v5093 = vmul.f32 %v277, %v5033
  %v5094 = vadd.f32 %v5078, %v5086
  %v5095 = vadd.f32 %v5079, %v5087
  %v5096 = vadd.f32 %v5080, %v5088
  %v5097 = vadd.f32 %v5081, %v5089
  %v5098 = vadd.f32 %v5082, %v5090
  %v5099 = vadd.f32 %v5083, %v5091
  %v5100 = vadd.f32 %v5084, %v5092
  %v5101 = vadd.f32 %v5085, %v5093
  %v5102 = vmul.f32 %v297, %v5034
  %v5103 = vmul.f32 %v301, %v5034
  %v5104 = vmul.f32 %v305, %v5034
  %v5105 = vmul.f32 %v309, %v5034
  %v5106 = vmul.f32 %v313, %v5034
  %v5107 = vmul.f32 %v317, %v5034
  %v5108 = vmul.f32 %v321, %v5034
  %v5109 = vmul.f32 %v325, %v5034
  %v5110 = vadd.f32 %v5094, %v5102
  %v5111 = vadd.f32 %v5095, %v5103
  %v5112 = vadd.f32 %v5096, %v5104
  %v5113 = vadd.f32 %v5097, %v5105
  %v5114 = vadd.f32 %v5098, %v5106
  %v5115 = vadd.f32 %v5099, %v5107
  %v5116 = vadd.f32 %v5100, %v5108
  %v5117 = vadd.f32 %v5101, %v5109
  %v5118 = vmul.f32 %v345, %v5035
  %v5119 = vmul.f32 %v349, %v5035
  %v5120 = vmul.f32 %v353, %v5035
  %v5121 = vmul.f32 %v357, %v5035
  %v5122 = vmul.f32 %v361, %v5035
  %v5123 = vmul.f32 %v365, %v5035
  %v5124 = vmul.f32 %v369, %v5035
  %v5125 = vmul.f32 %v373, %v5035
  %v5126 = vadd.f32 %v5110, %v5118
  %v5127 = vadd.f32 %v5111, %v5119
  %v5128 = vadd.f32 %v5112, %v5120
  %v5129 = vadd.f32 %v5113, %v5121
  %v5130 = vadd.f32 %v5114, %v5122
  %v5131 = vadd.f32 %v5115, %v5123
  %v5132 = vadd.f32 %v5116, %v5124
  %v5133 = vadd.f32 %v5117, %v5125
  %v5134 = vmul.f32 %v393, %v5036
  %v5135 = vmul.f32 %v397, %v5036
  %v5136 = vmul.f32 %v401, %v5036
  %v5137 = vmul.f32 %v405, %v5036
  %v5138 = vmul.f32 %v409, %v5036
  %v5139 = vmul.f32 %v413, %v5036
  %v5140 = vmul.f32 %v417, %v5036
  %v5141 = vmul.f32 %v421, %v5036
  %v5142 = vadd.f32 %v5126, %v5134
  %v5143 = vadd.f32 %v5127, %v5135
  %v5144 = vadd.f32 %v5128, %v5136
  %v5145 = vadd.f32 %v5129, %v5137
  %v5146 = vadd.f32 %v5130, %v5138
  %v5147 = vadd.f32 %v5131, %v5139
  %v5148 = vadd.f32 %v5132, %v5140
  %v5149 = vadd.f32 %v5133, %v5141
  %v5150 = vmul.f32 %v441, %v5037
  %v5151 = vmul.f32 %v445, %v5037
  %v5152 = vmul.f32 %v449, %v5037
  %v5153 = vmul.f32 %v453, %v5037
  %v5154 = vmul.f32 %v457, %v5037
  %v5155 = vmul.f32 %v461, %v5037
  %v5156 = vmul.f32 %v465, %v5037
  %v5157 = vmul.f32 %v469, %v5037
  %v5158 = vadd.f32 %v5142, %v5150
  %v5159 = vadd.f32 %v5143, %v5151
  %v5160 = vadd.f32 %v5144, %v5152
  %v5161 = vadd.f32 %v5145, %v5153
  %v5162 = vadd.f32 %v5146, %v5154
  %v5163 = vadd.f32 %v5147, %v5155
  %v5164 = vadd.f32 %v5148, %v5156
  %v5165 = vadd.f32 %v5149, %v5157
  %v5166 = vmul.f32 %v489, %v5038
  %v5167 = vmul.f32 %v493, %v5038
  %v5168 = vmul.f32 %v497, %v5038
  %v5169 = vmul.f32 %v501, %v5038
  %v5170 = vmul.f32 %v505, %v5038
  %v5171 = vmul.f32 %v509, %v5038
  %v5172 = vmul.f32 %v513, %v5038
  %v5173 = vmul.f32 %v517, %v5038
  %v5174 = vmul.f32 %v529, %v5039
  %v5175 = vmul.f32 %v533, %v5039
  %v5176 = vmul.f32 %v537, %v5039
  %v5177 = vmul.f32 %v541, %v5039
  %v5178 = vmul.f32 %v545, %v5039
  %v5179 = vmul.f32 %v549, %v5039
  %v5180 = vmul.f32 %v553, %v5039
  %v5181 = vmul.f32 %v557, %v5039
  %v5182 = vadd.f32 %v5166, %v5174
  %v5183 = vadd.f32 %v5167, %v5175
  %v5184 = vadd.f32 %v5168, %v5176
  %v5185 = vadd.f32 %v5169, %v5177
  %v5186 = vadd.f32 %v5170, %v5178
  %v5187 = vadd.f32 %v5171, %v5179
  %v5188 = vadd.f32 %v5172, %v5180
  %v5189 = vadd.f32 %v5173, %v5181
  %v5190 = vmul.f32 %v577, %v5040
  %v5191 = vmul.f32 %v581, %v5040
  %v5192 = vmul.f32 %v585, %v5040
  %v5193 = vmul.f32 %v589, %v5040
  %v5194 = vmul.f32 %v593, %v5040
  %v5195 = vmul.f32 %v597, %v5040
  %v5196 = vmul.f32 %v601, %v5040
  %v5197 = vmul.f32 %v605, %v5040
  %v5198 = vadd.f32 %v5182, %v5190
  %v5199 = vadd.f32 %v5183, %v5191
  %v5200 = vadd.f32 %v5184, %v5192
  %v5201 = vadd.f32 %v5185, %v5193
  %v5202 = vadd.f32 %v5186, %v5194
  %v5203 = vadd.f32 %v5187, %v5195
  %v5204 = vadd.f32 %v5188, %v5196
  %v5205 = vadd.f32 %v5189, %v5197
  %v5206 = vmul.f32 %v625, %v5041
  %v5207 = vmul.f32 %v629, %v5041
  %v5208 = vmul.f32 %v633, %v5041
  %v5209 = vmul.f32 %v637, %v5041
  %v5210 = vmul.f32 %v641, %v5041
  %v5211 = vmul.f32 %v645, %v5041
  %v5212 = vmul.f32 %v649, %v5041
  %v5213 = vmul.f32 %v653, %v5041
  %v5214 = vadd.f32 %v5198, %v5206
  %v5215 = vadd.f32 %v5199, %v5207
  %v5216 = vadd.f32 %v5200, %v5208
  %v5217 = vadd.f32 %v5201, %v5209
  %v5218 = vadd.f32 %v5202, %v5210
  %v5219 = vadd.f32 %v5203, %v5211
  %v5220 = vadd.f32 %v5204, %v5212
  %v5221 = vadd.f32 %v5205, %v5213
  %v5222 = vmul.f32 %v673, %v5042
  %v5223 = vmul.f32 %v677, %v5042
  %v5224 = vmul.f32 %v681, %v5042
  %v5225 = vmul.f32 %v685, %v5042
  %v5226 = vmul.f32 %v689, %v5042
  %v5227 = vmul.f32 %v693, %v5042
  %v5228 = vmul.f32 %v697, %v5042
  %v5229 = vmul.f32 %v701, %v5042
  %v5230 = vadd.f32 %v5214, %v5222
  %v5231 = vadd.f32 %v5215, %v5223
  %v5232 = vadd.f32 %v5216, %v5224
  %v5233 = vadd.f32 %v5217, %v5225
  %v5234 = vadd.f32 %v5218, %v5226
  %v5235 = vadd.f32 %v5219, %v5227
  %v5236 = vadd.f32 %v5220, %v5228
  %v5237 = vadd.f32 %v5221, %v5229
  %v5238 = vmul.f32 %v721, %v5043
  %v5239 = vmul.f32 %v725, %v5043
  %v5240 = vmul.f32 %v729, %v5043
  %v5241 = vmul.f32 %v733, %v5043
  %v5242 = vmul.f32 %v737, %v5043
  %v5243 = vmul.f32 %v741, %v5043
  %v5244 = vmul.f32 %v745, %v5043
  %v5245 = vmul.f32 %v749, %v5043
  %v5246 = vadd.f32 %v5230, %v5238
  %v5247 = vadd.f32 %v5231, %v5239
  %v5248 = vadd.f32 %v5232, %v5240
  %v5249 = vadd.f32 %v5233, %v5241
  %v5250 = vadd.f32 %v5234, %v5242
  %v5251 = vadd.f32 %v5235, %v5243
  %v5252 = vadd.f32 %v5236, %v5244
  %v5253 = vadd.f32 %v5237, %v5245
  %v5254 = vmul.f32 %v769, %v5044
  %v5255 = vmul.f32 %v773, %v5044
  %v5256 = vmul.f32 %v777, %v5044
  %v5257 = vmul.f32 %v781, %v5044
  %v5258 = vmul.f32 %v785, %v5044
  %v5259 = vmul.f32 %v789, %v5044
  %v5260 = vmul.f32 %v793, %v5044
  %v5261 = vmul.f32 %v797, %v5044
  %v5262 = vadd.f32 %v5246, %v5254
  %v5263 = vadd.f32 %v5247, %v5255
  %v5264 = vadd.f32 %v5248, %v5256
  %v5265 = vadd.f32 %v5249, %v5257
  %v5266 = vadd.f32 %v5250, %v5258
  %v5267 = vadd.f32 %v5251, %v5259
  %v5268 = vadd.f32 %v5252, %v5260
  %v5269 = vadd.f32 %v5253, %v5261
  %v5270 = vmul.f32 %v817, %v5045
  %v5271 = vmul.f32 %v821, %v5045
  %v5272 = vmul.f32 %v825, %v5045
  %v5273 = vmul.f32 %v829, %v5045
  %v5274 = vmul.f32 %v833, %v5045
  %v5275 = vmul.f32 %v837, %v5045
  %v5276 = vmul.f32 %v841, %v5045
  %v5277 = vmul.f32 %v845, %v5045
  %v5278 = vadd.f32 %v5262, %v5270
  %v5279 = vadd.f32 %v5263, %v5271
  %v5280 = vadd.f32 %v5264, %v5272
  %v5281 = vadd.f32 %v5265, %v5273
  %v5282 = vadd.f32 %v5266, %v5274
  %v5283 = vadd.f32 %v5267, %v5275
  %v5284 = vadd.f32 %v5268, %v5276
  %v5285 = vadd.f32 %v5269, %v5277
  %v5286 = vadd.f32 %v5030, %v5038
  %v5287 = vadd.f32 %v5031, %v5039
  %v5288 = vadd.f32 %v5032, %v5040
  %v5289 = vadd.f32 %v5033, %v5041
  %v5290 = vadd.f32 %v5034, %v5042
  %v5291 = vadd.f32 %v5035, %v5043
  %v5292 = vadd.f32 %v5036, %v5044
  %v5293 = vadd.f32 %v5037, %v5045
  %v5294 = vmul.f32 %v881, %v5286
  %v5295 = vmul.f32 %v885, %v5286
  %v5296 = vmul.f32 %v889, %v5286
  %v5297 = vmul.f32 %v893, %v5286
  %v5298 = vmul.f32 %v897, %v5286
  %v5299 = vmul.f32 %v901, %v5286
  %v5300 = vmul.f32 %v905, %v5286
  %v5301 = vmul.f32 %v909, %v5286
  %v5302 = vmul.f32 %v921, %v5287
  %v5303 = vmul.f32 %v925, %v5287
  %v5304 = vmul.f32 %v929, %v5287
  %v5305 = vmul.f32 %v933, %v5287
  %v5306 = vmul.f32 %v937, %v5287
  %v5307 = vmul.f32 %v941, %v5287
  %v5308 = vmul.f32 %v945, %v5287
  %v5309 = vmul.f32 %v949, %v5287
  %v5310 = vadd.f32 %v5294, %v5302
  %v5311 = vadd.f32 %v5295, %v5303
  %v5312 = vadd.f32 %v5296, %v5304
  %v5313 = vadd.f32 %v5297, %v5305
  %v5314 = vadd.f32 %v5298, %v5306
  %v5315 = vadd.f32 %v5299, %v5307
  %v5316 = vadd.f32 %v5300, %v5308
  %v5317 = vadd.f32 %v5301, %v5309
  %v5318 = vmul.f32 %v969, %v5288
  %v5319 = vmul.f32 %v973, %v5288
  %v5320 = vmul.f32 %v977, %v5288
  %v5321 = vmul.f32 %v981, %v5288
  %v5322 = vmul.f32 %v985, %v5288
  %v5323 = vmul.f32 %v989, %v5288
  %v5324 = vmul.f32 %v993, %v5288
  %v5325 = vmul.f32 %v997, %v5288
  %v5326 = vadd.f32 %v5310, %v5318
  %v5327 = vadd.f32 %v5311, %v5319
  %v5328 = vadd.f32 %v5312, %v5320
  %v5329 = vadd.f32 %v5313, %v5321
  %v5330 = vadd.f32 %v5314, %v5322
  %v5331 = vadd.f32 %v5315, %v5323
  %v5332 = vadd.f32 %v5316, %v5324
  %v5333 = vadd.f32 %v5317, %v5325
  %v5334 = vmul.f32 %v1017, %v5289
  %v5335 = vmul.f32 %v1021, %v5289
  %v5336 = vmul.f32 %v1025, %v5289
  %v5337 = vmul.f32 %v1029, %v5289
  %v5338 = vmul.f32 %v1033, %v5289
  %v5339 = vmul.f32 %v1037, %v5289
  %v5340 = vmul.f32 %v1041, %v5289
  %v5341 = vmul.f32 %v1045, %v5289
  %v5342 = vadd.f32 %v5326, %v5334
  %v5343 = vadd.f32 %v5327, %v5335
  %v5344 = vadd.f32 %v5328, %v5336
  %v5345 = vadd.f32 %v5329, %v5337
  %v5346 = vadd.f32 %v5330, %v5338
  %v5347 = vadd.f32 %v5331, %v5339
  %v5348 = vadd.f32 %v5332, %v5340
  %v5349 = vadd.f32 %v5333, %v5341
  %v5350 = vmul.f32 %v1065, %v5290
  %v5351 = vmul.f32 %v1069, %v5290
  %v5352 = vmul.f32 %v1073, %v5290
  %v5353 = vmul.f32 %v1077, %v5290
  %v5354 = vmul.f32 %v1081, %v5290
  %v5355 = vmul.f32 %v1085, %v5290
  %v5356 = vmul.f32 %v1089, %v5290
  %v5357 = vmul.f32 %v1093, %v5290
  %v5358 = vadd.f32 %v5342, %v5350
  %v5359 = vadd.f32 %v5343, %v5351
  %v5360 = vadd.f32 %v5344, %v5352
  %v5361 = vadd.f32 %v5345, %v5353
  %v5362 = vadd.f32 %v5346, %v5354
  %v5363 = vadd.f32 %v5347, %v5355
  %v5364 = vadd.f32 %v5348, %v5356
  %v5365 = vadd.f32 %v5349, %v5357
  %v5366 = vmul.f32 %v1113, %v5291
  %v5367 = vmul.f32 %v1117, %v5291
  %v5368 = vmul.f32 %v1121, %v5291
  %v5369 = vmul.f32 %v1125, %v5291
  %v5370 = vmul.f32 %v1129, %v5291
  %v5371 = vmul.f32 %v1133, %v5291
  %v5372 = vmul.f32 %v1137, %v5291
  %v5373 = vmul.f32 %v1141, %v5291
  %v5374 = vadd.f32 %v5358, %v5366
  %v5375 = vadd.f32 %v5359, %v5367
  %v5376 = vadd.f32 %v5360, %v5368
  %v5377 = vadd.f32 %v5361, %v5369
  %v5378 = vadd.f32 %v5362, %v5370
  %v5379 = vadd.f32 %v5363, %v5371
  %v5380 = vadd.f32 %v5364, %v5372
  %v5381 = vadd.f32 %v5365, %v5373
  %v5382 = vmul.f32 %v1161, %v5292
  %v5383 = vmul.f32 %v1165, %v5292
  %v5384 = vmul.f32 %v1169, %v5292
  %v5385 = vmul.f32 %v1173, %v5292
  %v5386 = vmul.f32 %v1177, %v5292
  %v5387 = vmul.f32 %v1181, %v5292
  %v5388 = vmul.f32 %v1185, %v5292
  %v5389 = vmul.f32 %v1189, %v5292
  %v5390 = vadd.f32 %v5374, %v5382
  %v5391 = vadd.f32 %v5375, %v5383
  %v5392 = vadd.f32 %v5376, %v5384
  %v5393 = vadd.f32 %v5377, %v5385
  %v5394 = vadd.f32 %v5378, %v5386
  %v5395 = vadd.f32 %v5379, %v5387
  %v5396 = vadd.f32 %v5380, %v5388
  %v5397 = vadd.f32 %v5381, %v5389
  %v5398 = vmul.f32 %v1209, %v5293
  %v5399 = vmul.f32 %v1213, %v5293
  %v5400 = vmul.f32 %v1217, %v5293
  %v5401 = vmul.f32 %v1221, %v5293
  %v5402 = vmul.f32 %v1225, %v5293
  %v5403 = vmul.f32 %v1229, %v5293
  %v5404 = vmul.f32 %v1233, %v5293
  %v5405 = vmul.f32 %v1237, %v5293
  %v5406 = vadd.f32 %v5390, %v5398
  %v5407 = vadd.f32 %v5391, %v5399
  %v5408 = vadd.f32 %v5392, %v5400
  %v5409 = vadd.f32 %v5393, %v5401
  %v5410 = vadd.f32 %v5394, %v5402
  %v5411 = vadd.f32 %v5395, %v5403
  %v5412 = vadd.f32 %v5396, %v5404
  %v5413 = vadd.f32 %v5397, %v5405
  %v5414 = vsub.f32 %v5158, %v5278
  %v5415 = vsub.f32 %v5159, %v5279
  %v5416 = vsub.f32 %v5160, %v5280
  %v5417 = vsub.f32 %v5161, %v5281
  %v5418 = vsub.f32 %v5162, %v5282
  %v5419 = vsub.f32 %v5163, %v5283
  %v5420 = vsub.f32 %v5164, %v5284
  %v5421 = vsub.f32 %v5165, %v5285
  %v5422 = vsub.f32 %v5406, %v5158
  %v5423 = vsub.f32 %v5407, %v5159
  %v5424 = vsub.f32 %v5408, %v5160
  %v5425 = vsub.f32 %v5409, %v5161
  %v5426 = vsub.f32 %v5410, %v5162
  %v5427 = vsub.f32 %v5411, %v5163
  %v5428 = vsub.f32 %v5412, %v5164
  %v5429 = vsub.f32 %v5413, %v5165
  %v5430 = vsub.f32 %v5422, %v5278
  %v5431 = vsub.f32 %v5423, %v5279
  %v5432 = vsub.f32 %v5424, %v5280
  %v5433 = vsub.f32 %v5425, %v5281
  %v5434 = vsub.f32 %v5426, %v5282
  %v5435 = vsub.f32 %v5427, %v5283
  %v5436 = vsub.f32 %v5428, %v5284
  %v5437 = vsub.f32 %v5429, %v5285
  %v5438 = vmul.f32 %v5414, 0.5
  %v5439 = vmul.f32 %v5415, 0.5
  %v5440 = vmul.f32 %v5416, 0.5
  %v5441 = vmul.f32 %v5417, 0.5
  %v5442 = vmul.f32 %v5418, 0.5
  %v5443 = vmul.f32 %v5419, 0.5
  %v5444 = vmul.f32 %v5420, 0.5
  %v5445 = vmul.f32 %v5421, 0.5
  %v5446 = vadd.f32 %v78, %v5438
  %v5447 = vadd.f32 %v79, %v5439
  %v5448 = vadd.f32 %v80, %v5440
  %v5449 = vadd.f32 %v81, %v5441
  %v5450 = vadd.f32 %v82, %v5442
  %v5451 = vadd.f32 %v83, %v5443
  %v5452 = vadd.f32 %v84, %v5444
  %v5453 = vadd.f32 %v85, %v5445
  %v5454 = vmul.f32 %v5430, 0.5
  %v5455 = vmul.f32 %v5431, 0.5
  %v5456 = vmul.f32 %v5432, 0.5
  %v5457 = vmul.f32 %v5433, 0.5
  %v5458 = vmul.f32 %v5434, 0.5
  %v5459 = vmul.f32 %v5435, 0.5
  %v5460 = vmul.f32 %v5436, 0.5
  %v5461 = vmul.f32 %v5437, 0.5
  %v5462 = vmul.f32 %v113, %v5446
  %v5463 = vmul.f32 %v117, %v5446
  %v5464 = vmul.f32 %v121, %v5446
  %v5465 = vmul.f32 %v125, %v5446
  %v5466 = vmul.f32 %v129, %v5446
  %v5467 = vmul.f32 %v133, %v5446
  %v5468 = vmul.f32 %v137, %v5446
  %v5469 = vmul.f32 %v141, %v5446
  %v5470 = vmul.f32 %v153, %v5447
  %v5471 = vmul.f32 %v157, %v5447
  %v5472 = vmul.f32 %v161, %v5447
  %v5473 = vmul.f32 %v165, %v5447
  %v5474 = vmul.f32 %v169, %v5447
  %v5475 = vmul.f32 %v173, %v5447
  %v5476 = vmul.f32 %v177, %v5447
  %v5477 = vmul.f32 %v181, %v5447
  %v5478 = vadd.f32 %v5462, %v5470
  %v5479 = vadd.f32 %v5463, %v5471
  %v5480 = vadd.f32 %v5464, %v5472
  %v5481 = vadd.f32 %v5465, %v5473
  %v5482 = vadd.f32 %v5466, %v5474
  %v5483 = vadd.f32 %v5467, %v5475
  %v5484 = vadd.f32 %v5468, %v5476
  %v5485 = vadd.f32 %v5469, %v5477
  %v5486 = vmul.f32 %v201, %v5448
  %v5487 = vmul.f32 %v205, %v5448
  %v5488 = vmul.f32 %v209, %v5448
  %v5489 = vmul.f32 %v213, %v5448
  %v5490 = vmul.f32 %v217, %v5448
  %v5491 = vmul.f32 %v221, %v5448
  %v5492 = vmul.f32 %v225, %v5448
  %v5493 = vmul.f32 %v229, %v5448
  %v5494 = vadd.f32 %v5478, %v5486
  %v5495 = vadd.f32 %v5479, %v5487
  %v5496 = vadd.f32 %v5480, %v5488
  %v5497 = vadd.f32 %v5481, %v5489
  %v5498 = vadd.f32 %v5482, %v5490
  %v5499 = vadd.f32 %v5483, %v5491
  %v5500 = vadd.f32 %v5484, %v5492
  %v5501 = vadd.f32 %v5485, %v5493
  %v5502 = vmul.f32 %v249, %v5449
  %v5503 = vmul.f32 %v253, %v5449
  %v5504 = vmul.f32 %v257, %v5449
  %v5505 = vmul.f32 %v261, %v5449
  %v5506 = vmul.f32 %v265, %v5449
  %v5507 = vmul.f32 %v269, %v5449
  %v5508 = vmul.f32 %v273, %v5449
  %v5509 = vmul.f32 %v277, %v5449
  %v5510 = vadd.f32 %v5494, %v5502
  %v5511 = vadd.f32 %v5495, %v5503
  %v5512 = vadd.f32 %v5496, %v5504
  %v5513 = vadd.f32 %v5497, %v5505
  %v5514 = vadd.f32 %v5498, %v5506
  %v5515 = vadd.f32 %v5499, %v5507
  %v5516 = vadd.f32 %v5500, %v5508
  %v5517 = vadd.f32 %v5501, %v5509
  %v5518 = vmul.f32 %v297, %v5450
  %v5519 = vmul.f32 %v301, %v5450
  %v5520 = vmul.f32 %v305, %v5450
  %v5521 = vmul.f32 %v309, %v5450
  %v5522 = vmul.f32 %v313, %v5450
  %v5523 = vmul.f32 %v317, %v5450
  %v5524 = vmul.f32 %v321, %v5450
  %v5525 = vmul.f32 %v325, %v5450
  %v5526 = vadd.f32 %v5510, %v5518
  %v5527 = vadd.f32 %v5511, %v5519
  %v5528 = vadd.f32 %v5512, %v5520
  %v5529 = vadd.f32 %v5513, %v5521
  %v5530 = vadd.f32 %v5514, %v5522
  %v5531 = vadd.f32 %v5515, %v5523
  %v5532 = vadd.f32 %v5516, %v5524
  %v5533 = vadd.f32 %v5517, %v5525
  %v5534 = vmul.f32 %v345, %v5451
  %v5535 = vmul.f32 %v349, %v5451
  %v5536 = vmul.f32 %v353, %v5451
  %v5537 = vmul.f32 %v357, %v5451
  %v5538 = vmul.f32 %v361, %v5451
  %v5539 = vmul.f32 %v365, %v5451
  %v5540 = vmul.f32 %v369, %v5451
  %v5541 = vmul.f32 %v373, %v5451
  %v5542 = vadd.f32 %v5526, %v5534
  %v5543 = vadd.f32 %v5527, %v5535
  %v5544 = vadd.f32 %v5528, %v5536
  %v5545 = vadd.f32 %v5529, %v5537
  %v5546 = vadd.f32 %v5530, %v5538
  %v5547 = vadd.f32 %v5531, %v5539
  %v5548 = vadd.f32 %v5532, %v5540
  %v5549 = vadd.f32 %v5533, %v5541
  %v5550 = vmul.f32 %v393, %v5452
  %v5551 = vmul.f32 %v397, %v5452
  %v5552 = vmul.f32 %v401, %v5452
  %v5553 = vmul.f32 %v405, %v5452
  %v5554 = vmul.f32 %v409, %v5452
  %v5555 = vmul.f32 %v413, %v5452
  %v5556 = vmul.f32 %v417, %v5452
  %v5557 = vmul.f32 %v421, %v5452
  %v5558 = vadd.f32 %v5542, %v5550
  %v5559 = vadd.f32 %v5543, %v5551
  %v5560 = vadd.f32 %v5544, %v5552
  %v5561 = vadd.f32 %v5545, %v5553
  %v5562 = vadd.f32 %v5546, %v5554
  %v5563 = vadd.f32 %v5547, %v5555
  %v5564 = vadd.f32 %v5548, %v5556
  %v5565 = vadd.f32 %v5549, %v5557
  %v5566 = vmul.f32 %v441, %v5453
  %v5567 = vmul.f32 %v445, %v5453
  %v5568 = vmul.f32 %v449, %v5453
  %v5569 = vmul.f32 %v453, %v5453
  %v5570 = vmul.f32 %v457, %v5453
  %v5571 = vmul.f32 %v461, %v5453
  %v5572 = vmul.f32 %v465, %v5453
  %v5573 = vmul.f32 %v469, %v5453
  %v5574 = vadd.f32 %v5558, %v5566
  %v5575 = vadd.f32 %v5559, %v5567
  %v5576 = vadd.f32 %v5560, %v5568
  %v5577 = vadd.f32 %v5561, %v5569
  %v5578 = vadd.f32 %v5562, %v5570
  %v5579 = vadd.f32 %v5563, %v5571
  %v5580 = vadd.f32 %v5564, %v5572
  %v5581 = vadd.f32 %v5565, %v5573
  %v5582 = vmul.f32 %v489, %v5454
  %v5583 = vmul.f32 %v493, %v5454
  %v5584 = vmul.f32 %v497, %v5454
  %v5585 = vmul.f32 %v501, %v5454
  %v5586 = vmul.f32 %v505, %v5454
  %v5587 = vmul.f32 %v509, %v5454
  %v5588 = vmul.f32 %v513, %v5454
  %v5589 = vmul.f32 %v517, %v5454
  %v5590 = vmul.f32 %v529, %v5455
  %v5591 = vmul.f32 %v533, %v5455
  %v5592 = vmul.f32 %v537, %v5455
  %v5593 = vmul.f32 %v541, %v5455
  %v5594 = vmul.f32 %v545, %v5455
  %v5595 = vmul.f32 %v549, %v5455
  %v5596 = vmul.f32 %v553, %v5455
  %v5597 = vmul.f32 %v557, %v5455
  %v5598 = vadd.f32 %v5582, %v5590
  %v5599 = vadd.f32 %v5583, %v5591
  %v5600 = vadd.f32 %v5584, %v5592
  %v5601 = vadd.f32 %v5585, %v5593
  %v5602 = vadd.f32 %v5586, %v5594
  %v5603 = vadd.f32 %v5587, %v5595
  %v5604 = vadd.f32 %v5588, %v5596
  %v5605 = vadd.f32 %v5589, %v5597
  %v5606 = vmul.f32 %v577, %v5456
  %v5607 = vmul.f32 %v581, %v5456
  %v5608 = vmul.f32 %v585, %v5456
  %v5609 = vmul.f32 %v589, %v5456
  %v5610 = vmul.f32 %v593, %v5456
  %v5611 = vmul.f32 %v597, %v5456
  %v5612 = vmul.f32 %v601, %v5456
  %v5613 = vmul.f32 %v605, %v5456
  %v5614 = vadd.f32 %v5598, %v5606
  %v5615 = vadd.f32 %v5599, %v5607
  %v5616 = vadd.f32 %v5600, %v5608
  %v5617 = vadd.f32 %v5601, %v5609
  %v5618 = vadd.f32 %v5602, %v5610
  %v5619 = vadd.f32 %v5603, %v5611
  %v5620 = vadd.f32 %v5604, %v5612
  %v5621 = vadd.f32 %v5605, %v5613
  %v5622 = vmul.f32 %v625, %v5457
  %v5623 = vmul.f32 %v629, %v5457
  %v5624 = vmul.f32 %v633, %v5457
  %v5625 = vmul.f32 %v637, %v5457
  %v5626 = vmul.f32 %v641, %v5457
  %v5627 = vmul.f32 %v645, %v5457
  %v5628 = vmul.f32 %v649, %v5457
  %v5629 = vmul.f32 %v653, %v5457
  %v5630 = vadd.f32 %v5614, %v5622
  %v5631 = vadd.f32 %v5615, %v5623
  %v5632 = vadd.f32 %v5616, %v5624
  %v5633 = vadd.f32 %v5617, %v5625
  %v5634 = vadd.f32 %v5618, %v5626
  %v5635 = vadd.f32 %v5619, %v5627
  %v5636 = vadd.f32 %v5620, %v5628
  %v5637 = vadd.f32 %v5621, %v5629
  %v5638 = vmul.f32 %v673, %v5458
  %v5639 = vmul.f32 %v677, %v5458
  %v5640 = vmul.f32 %v681, %v5458
  %v5641 = vmul.f32 %v685, %v5458
  %v5642 = vmul.f32 %v689, %v5458
  %v5643 = vmul.f32 %v693, %v5458
  %v5644 = vmul.f32 %v697, %v5458
  %v5645 = vmul.f32 %v701, %v5458
  %v5646 = vadd.f32 %v5630, %v5638
  %v5647 = vadd.f32 %v5631, %v5639
  %v5648 = vadd.f32 %v5632, %v5640
  %v5649 = vadd.f32 %v5633, %v5641
  %v5650 = vadd.f32 %v5634, %v5642
  %v5651 = vadd.f32 %v5635, %v5643
  %v5652 = vadd.f32 %v5636, %v5644
  %v5653 = vadd.f32 %v5637, %v5645
  %v5654 = vmul.f32 %v721, %v5459
  %v5655 = vmul.f32 %v725, %v5459
  %v5656 = vmul.f32 %v729, %v5459
  %v5657 = vmul.f32 %v733, %v5459
  %v5658 = vmul.f32 %v737, %v5459
  %v5659 = vmul.f32 %v741, %v5459
  %v5660 = vmul.f32 %v745, %v5459
  %v5661 = vmul.f32 %v749, %v5459
  %v5662 = vadd.f32 %v5646, %v5654
  %v5663 = vadd.f32 %v5647, %v5655
  %v5664 = vadd.f32 %v5648, %v5656
  %v5665 = vadd.f32 %v5649, %v5657
  %v5666 = vadd.f32 %v5650, %v5658
  %v5667 = vadd.f32 %v5651, %v5659
  %v5668 = vadd.f32 %v5652, %v5660
  %v5669 = vadd.f32 %v5653, %v5661
  %v5670 = vmul.f32 %v769, %v5460
  %v5671 = vmul.f32 %v773, %v5460
  %v5672 = vmul.f32 %v777, %v5460
  %v5673 = vmul.f32 %v781, %v5460
  %v5674 = vmul.f32 %v785, %v5460
  %v5675 = vmul.f32 %v789, %v5460
  %v5676 = vmul.f32 %v793, %v5460
  %v5677 = vmul.f32 %v797, %v5460
  %v5678 = vadd.f32 %v5662, %v5670
  %v5679 = vadd.f32 %v5663, %v5671
  %v5680 = vadd.f32 %v5664, %v5672
  %v5681 = vadd.f32 %v5665, %v5673
  %v5682 = vadd.f32 %v5666, %v5674
  %v5683 = vadd.f32 %v5667, %v5675
  %v5684 = vadd.f32 %v5668, %v5676
  %v5685 = vadd.f32 %v5669, %v5677
  %v5686 = vmul.f32 %v817, %v5461
  %v5687 = vmul.f32 %v821, %v5461
  %v5688 = vmul.f32 %v825, %v5461
  %v5689 = vmul.f32 %v829, %v5461
  %v5690 = vmul.f32 %v833, %v5461
  %v5691 = vmul.f32 %v837, %v5461
  %v5692 = vmul.f32 %v841, %v5461
  %v5693 = vmul.f32 %v845, %v5461
  %v5694 = vadd.f32 %v5678, %v5686
  %v5695 = vadd.f32 %v5679, %v5687
  %v5696 = vadd.f32 %v5680, %v5688
  %v5697 = vadd.f32 %v5681, %v5689
  %v5698 = vadd.f32 %v5682, %v5690
  %v5699 = vadd.f32 %v5683, %v5691
  %v5700 = vadd.f32 %v5684, %v5692
  %v5701 = vadd.f32 %v5685, %v5693
  %v5702 = vadd.f32 %v5446, %v5454
  %v5703 = vadd.f32 %v5447, %v5455
  %v5704 = vadd.f32 %v5448, %v5456
  %v5705 = vadd.f32 %v5449, %v5457
  %v5706 = vadd.f32 %v5450, %v5458
  %v5707 = vadd.f32 %v5451, %v5459
  %v5708 = vadd.f32 %v5452, %v5460
  %v5709 = vadd.f32 %v5453, %v5461
  %v5710 = vmul.f32 %v881, %v5702
  %v5711 = vmul.f32 %v885, %v5702
  %v5712 = vmul.f32 %v889, %v5702
  %v5713 = vmul.f32 %v893, %v5702
  %v5714 = vmul.f32 %v897, %v5702
  %v5715 = vmul.f32 %v901, %v5702
  %v5716 = vmul.f32 %v905, %v5702
  %v5717 = vmul.f32 %v909, %v5702
  %v5718 = vmul.f32 %v921, %v5703
  %v5719 = vmul.f32 %v925, %v5703
  %v5720 = vmul.f32 %v929, %v5703
  %v5721 = vmul.f32 %v933, %v5703
  %v5722 = vmul.f32 %v937, %v5703
  %v5723 = vmul.f32 %v941, %v5703
  %v5724 = vmul.f32 %v945, %v5703
  %v5725 = vmul.f32 %v949, %v5703
  %v5726 = vadd.f32 %v5710, %v5718
  %v5727 = vadd.f32 %v5711, %v5719
  %v5728 = vadd.f32 %v5712, %v5720
  %v5729 = vadd.f32 %v5713, %v5721
  %v5730 = vadd.f32 %v5714, %v5722
  %v5731 = vadd.f32 %v5715, %v5723
  %v5732 = vadd.f32 %v5716, %v5724
  %v5733 = vadd.f32 %v5717, %v5725
  %v5734 = vmul.f32 %v969, %v5704
  %v5735 = vmul.f32 %v973, %v5704
  %v5736 = vmul.f32 %v977, %v5704
  %v5737 = vmul.f32 %v981, %v5704
  %v5738 = vmul.f32 %v985, %v5704
  %v5739 = vmul.f32 %v989, %v5704
  %v5740 = vmul.f32 %v993, %v5704
  %v5741 = vmul.f32 %v997, %v5704
  %v5742 = vadd.f32 %v5726, %v5734
  %v5743 = vadd.f32 %v5727, %v5735
  %v5744 = vadd.f32 %v5728, %v5736
  %v5745 = vadd.f32 %v5729, %v5737
  %v5746 = vadd.f32 %v5730, %v5738
  %v5747 = vadd.f32 %v5731, %v5739
  %v5748 = vadd.f32 %v5732, %v5740
  %v5749 = vadd.f32 %v5733, %v5741
  %v5750 = vmul.f32 %v1017, %v5705
  %v5751 = vmul.f32 %v1021, %v5705
  %v5752 = vmul.f32 %v1025, %v5705
  %v5753 = vmul.f32 %v1029, %v5705
  %v5754 = vmul.f32 %v1033, %v5705
  %v5755 = vmul.f32 %v1037, %v5705
  %v5756 = vmul.f32 %v1041, %v5705
  %v5757 = vmul.f32 %v1045, %v5705
  %v5758 = vadd.f32 %v5742, %v5750
  %v5759 = vadd.f32 %v5743, %v5751
  %v5760 = vadd.f32 %v5744, %v5752
  %v5761 = vadd.f32 %v5745, %v5753
  %v5762 = vadd.f32 %v5746, %v5754
  %v5763 = vadd.f32 %v5747, %v5755
  %v5764 = vadd.f32 %v5748, %v5756
  %v5765 = vadd.f32 %v5749, %v5757
  %v5766 = vmul.f32 %v1065, %v5706
  %v5767 = vmul.f32 %v1069, %v5706
  %v5768 = vmul.f32 %v1073, %v5706
  %v5769 = vmul.f32 %v1077, %v5706
  %v5770 = vmul.f32 %v1081, %v5706
  %v5771 = vmul.f32 %v1085, %v5706
  %v5772 = vmul.f32 %v1089, %v5706
  %v5773 = vmul.f32 %v1093, %v5706
  %v5774 = vadd.f32 %v5758, %v5766
  %v5775 = vadd.f32 %v5759, %v5767
  %v5776 = vadd.f32 %v5760, %v5768
  %v5777 = vadd.f32 %v5761, %v5769
  %v5778 = vadd.f32 %v5762, %v5770
  %v5779 = vadd.f32 %v5763, %v5771
  %v5780 = vadd.f32 %v5764, %v5772
  %v5781 = vadd.f32 %v5765, %v5773
  %v5782 = vmul.f32 %v1113, %v5707
  %v5783 = vmul.f32 %v1117, %v5707
  %v5784 = vmul.f32 %v1121, %v5707
  %v5785 = vmul.f32 %v1125, %v5707
  %v5786 = vmul.f32 %v1129, %v5707
  %v5787 = vmul.f32 %v1133, %v5707
  %v5788 = vmul.f32 %v1137, %v5707
  %v5789 = vmul.f32 %v1141, %v5707
  %v5790 = vadd.f32 %v5774, %v5782
  %v5791 = vadd.f32 %v5775, %v5783
  %v5792 = vadd.f32 %v5776, %v5784
  %v5793 = vadd.f32 %v5777, %v5785
  %v5794 = vadd.f32 %v5778, %v5786
  %v5795 = vadd.f32 %v5779, %v5787
  %v5796 = vadd.f32 %v5780, %v5788
  %v5797 = vadd.f32 %v5781, %v5789
  %v5798 = vmul.f32 %v1161, %v5708
  %v5799 = vmul.f32 %v1165, %v5708
  %v5800 = vmul.f32 %v1169, %v5708
  %v5801 = vmul.f32 %v1173, %v5708
  %v5802 = vmul.f32 %v1177, %v5708
  %v5803 = vmul.f32 %v1181, %v5708
  %v5804 = vmul.f32 %v1185, %v5708
  %v5805 = vmul.f32 %v1189, %v5708
  %v5806 = vadd.f32 %v5790, %v5798
  %v5807 = vadd.f32 %v5791, %v5799
  %v5808 = vadd.f32 %v5792, %v5800
  %v5809 = vadd.f32 %v5793, %v5801
  %v5810 = vadd.f32 %v5794, %v5802
  %v5811 = vadd.f32 %v5795, %v5803
  %v5812 = vadd.f32 %v5796, %v5804
  %v5813 = vadd.f32 %v5797, %v5805
  %v5814 = vmul.f32 %v1209, %v5709
  %v5815 = vmul.f32 %v1213, %v5709
  %v5816 = vmul.f32 %v1217, %v5709
  %v5817 = vmul.f32 %v1221, %v5709
  %v5818 = vmul.f32 %v1225, %v5709
  %v5819 = vmul.f32 %v1229, %v5709
  %v5820 = vmul.f32 %v1233, %v5709
  %v5821 = vmul.f32 %v1237, %v5709
  %v5822 = vadd.f32 %v5806, %v5814
  %v5823 = vadd.f32 %v5807, %v5815
  %v5824 = vadd.f32 %v5808, %v5816
  %v5825 = vadd.f32 %v5809, %v5817
  %v5826 = vadd.f32 %v5810, %v5818
  %v5827 = vadd.f32 %v5811, %v5819
  %v5828 = vadd.f32 %v5812, %v5820
  %v5829 = vadd.f32 %v5813, %v5821
  %v5830 = vsub.f32 %v5574, %v5694
  %v5831 = vsub.f32 %v5575, %v5695
  %v5832 = vsub.f32 %v5576, %v5696
  %v5833 = vsub.f32 %v5577, %v5697
  %v5834 = vsub.f32 %v5578, %v5698
  %v5835 = vsub.f32 %v5579, %v5699
  %v5836 = vsub.f32 %v5580, %v5700
  %v5837 = vsub.f32 %v5581, %v5701
  %v5838 = vsub.f32 %v5822, %v5574
  %v5839 = vsub.f32 %v5823, %v5575
  %v5840 = vsub.f32 %v5824, %v5576
  %v5841 = vsub.f32 %v5825, %v5577
  %v5842 = vsub.f32 %v5826, %v5578
  %v5843 = vsub.f32 %v5827, %v5579
  %v5844 = vsub.f32 %v5828, %v5580
  %v5845 = vsub.f32 %v5829, %v5581
  %v5846 = vsub.f32 %v5838, %v5694
  %v5847 = vsub.f32 %v5839, %v5695
  %v5848 = vsub.f32 %v5840, %v5696
  %v5849 = vsub.f32 %v5841, %v5697
  %v5850 = vsub.f32 %v5842, %v5698
  %v5851 = vsub.f32 %v5843, %v5699
  %v5852 = vsub.f32 %v5844, %v5700
  %v5853 = vsub.f32 %v5845, %v5701
  %v5854 = vadd.f32 %v78, %v5830
  %v5855 = vadd.f32 %v79, %v5831
  %v5856 = vadd.f32 %v80, %v5832
  %v5857 = vadd.f32 %v81, %v5833
  %v5858 = vadd.f32 %v82, %v5834
  %v5859 = vadd.f32 %v83, %v5835
  %v5860 = vadd.f32 %v84, %v5836
  %v5861 = vadd.f32 %v85, %v5837
  %5862 = vst [vmem:[%s5] sm:$0xff] %v5854
  %5863 = vst [vmem:[%s5 + $0x8] sm:$0xff] %v5855
  %5864 = vst [vmem:[%s5 + $0x10] sm:$0xff] %v5856
  %5865 = vst [vmem:[%s5 + $0x18] sm:$0xff] %v5857
  %5866 = vst [vmem:[%s5 + $0x20] sm:$0xff] %v5858
  %5867 = vst [vmem:[%s5 + $0x28] sm:$0xff] %v5859
  %5868 = vst [vmem:[%s5 + $0x30] sm:$0xff] %v5860
  %5869 = vst [vmem:[%s5 + $0x38] sm:$0xff] %v5861
  %5870 = vst [vmem:[%s6] sm:$0xff] %v5846
  %5871 = vst [vmem:[%s6 + $0x8] sm:$0xff] %v5847
  %5872 = vst [vmem:[%s6 + $0x10] sm:$0xff] %v5848
  %5873 = vst [vmem:[%s6 + $0x18] sm:$0xff] %v5849
  %5874 = vst [vmem:[%s6 + $0x20] sm:$0xff] %v5850
  %5875 = vst [vmem:[%s6 + $0x28] sm:$0xff] %v5851
  %5876 = vst [vmem:[%s6 + $0x30] sm:$0xff] %v5852
  %5877 = vst [vmem:[%s6 + $0x38] sm:$0xff] %v5853
  %s5878 = sld [smem:[#allocation3]]
  // While loop
  $region18: #{base_projection_forward.3} parent=0 // loop_pre_header
    _
  $region19: #{base_projection_forward.3} parent=0 // loop_header
    %s5880 = sphi 0, %s5882
    %p5881 = scmp.ge.s32.totalorder %s5880, %s5878
  $region20: #{base_projection_forward.3} parent=0 // loop_header_branch
    %5884 = sbr.rel (%p5881) target = $region24
  $region21: #{base_projection_forward.3} parent=0 // loop_body
    %v5885 = vld [vmem:[%s5] sm:$0xff]
    %v5886 = vld [vmem:[%s5 + $0x8] sm:$0xff]
    %v5887 = vld [vmem:[%s5 + $0x10] sm:$0xff]
    %v5888 = vld [vmem:[%s5 + $0x18] sm:$0xff]
    %v5889 = vld [vmem:[%s5 + $0x20] sm:$0xff]
    %v5890 = vld [vmem:[%s5 + $0x28] sm:$0xff]
    %v5891 = vld [vmem:[%s5 + $0x30] sm:$0xff]
    %v5892 = vld [vmem:[%s5 + $0x38] sm:$0xff]
    %v5893 = vld [vmem:[%s6] sm:$0xff]
    %v5894 = vld [vmem:[%s6 + $0x8] sm:$0xff]
    %v5895 = vld [vmem:[%s6 + $0x10] sm:$0xff]
    %v5896 = vld [vmem:[%s6 + $0x18] sm:$0xff]
    %v5897 = vld [vmem:[%s6 + $0x20] sm:$0xff]
    %v5898 = vld [vmem:[%s6 + $0x28] sm:$0xff]
    %v5899 = vld [vmem:[%s6 + $0x30] sm:$0xff]
    %v5900 = vld [vmem:[%s6 + $0x38] sm:$0xff]
    %v5901 = vlaneseq
    %v5902 = vshrl.u32 %v5901, 7
    %v5903 = vsub.s32 0, %v5902
    %v5904 = vrot.slane %v5885, %v5903
    %v5905 = vlaneseq
    %v5906 = vshrl.u32 %v5905, 7
    %v5907 = vsub.s32 0, %v5906
    %v5908 = vrot.slane %v5886, %v5907
    %v5909 = vlaneseq
    %v5910 = vshrl.u32 %v5909, 7
    %v5911 = vsub.s32 0, %v5910
    %v5912 = vrot.slane %v5887, %v5911
    %v5913 = vlaneseq
    %v5914 = vshrl.u32 %v5913, 7
    %v5915 = vsub.s32 0, %v5914
    %v5916 = vrot.slane %v5888, %v5915
    %v5917 = vlaneseq
    %v5918 = vshrl.u32 %v5917, 7
    %v5919 = vsub.s32 0, %v5918
    %v5920 = vrot.slane %v5889, %v5919
    %v5921 = vlaneseq
    %v5922 = vshrl.u32 %v5921, 7
    %v5923 = vsub.s32 0, %v5922
    %v5924 = vrot.slane %v5890, %v5923
    %v5925 = vlaneseq
    %v5926 = vshrl.u32 %v5925, 7
    %v5927 = vsub.s32 0, %v5926
    %v5928 = vrot.slane %v5891, %v5927
    %v5929 = vlaneseq
    %v5930 = vshrl.u32 %v5929, 7
    %v5931 = vsub.s32 0, %v5930
    %v5932 = vrot.slane %v5892, %v5931
    %v5933 = vmul.f32 %v5904, %v5885
    %v5934 = vmul.f32 %v5908, %v5885
    %v5935 = vmul.f32 %v5912, %v5885
    %v5936 = vmul.f32 %v5916, %v5885
    %v5937 = vmul.f32 %v5920, %v5885
    %v5938 = vmul.f32 %v5924, %v5885
    %v5939 = vmul.f32 %v5928, %v5885
    %v5940 = vmul.f32 %v5932, %v5885
    %v5941 = vlaneseq
    %v5942 = vshrl.u32 %v5941, 7
    %v5943 = vsub.s32 1, %v5942
    %v5944 = vrot.slane %v5885, %v5943
    %v5945 = vlaneseq
    %v5946 = vshrl.u32 %v5945, 7
    %v5947 = vsub.s32 1, %v5946
    %v5948 = vrot.slane %v5886, %v5947
    %v5949 = vlaneseq
    %v5950 = vshrl.u32 %v5949, 7
    %v5951 = vsub.s32 1, %v5950
    %v5952 = vrot.slane %v5887, %v5951
    %v5953 = vlaneseq
    %v5954 = vshrl.u32 %v5953, 7
    %v5955 = vsub.s32 1, %v5954
    %v5956 = vrot.slane %v5888, %v5955
    %v5957 = vlaneseq
    %v5958 = vshrl.u32 %v5957, 7
    %v5959 = vsub.s32 1, %v5958
    %v5960 = vrot.slane %v5889, %v5959
    %v5961 = vlaneseq
    %v5962 = vshrl.u32 %v5961, 7
    %v5963 = vsub.s32 1, %v5962
    %v5964 = vrot.slane %v5890, %v5963
    %v5965 = vlaneseq
    %v5966 = vshrl.u32 %v5965, 7
    %v5967 = vsub.s32 1, %v5966
    %v5968 = vrot.slane %v5891, %v5967
    %v5969 = vlaneseq
    %v5970 = vshrl.u32 %v5969, 7
    %v5971 = vsub.s32 1, %v5970
    %v5972 = vrot.slane %v5892, %v5971
    %v5973 = vmul.f32 %v5944, %v5886
    %v5974 = vmul.f32 %v5948, %v5886
    %v5975 = vmul.f32 %v5952, %v5886
    %v5976 = vmul.f32 %v5956, %v5886
    %v5977 = vmul.f32 %v5960, %v5886
    %v5978 = vmul.f32 %v5964, %v5886
    %v5979 = vmul.f32 %v5968, %v5886
    %v5980 = vmul.f32 %v5972, %v5886
    %v5981 = vadd.f32 %v5933, %v5973
    %v5982 = vadd.f32 %v5934, %v5974
    %v5983 = vadd.f32 %v5935, %v5975
    %v5984 = vadd.f32 %v5936, %v5976
    %v5985 = vadd.f32 %v5937, %v5977
    %v5986 = vadd.f32 %v5938, %v5978
    %v5987 = vadd.f32 %v5939, %v5979
    %v5988 = vadd.f32 %v5940, %v5980
    %v5989 = vlaneseq
    %v5990 = vshrl.u32 %v5989, 7
    %v5991 = vsub.s32 2, %v5990
    %v5992 = vrot.slane %v5885, %v5991
    %v5993 = vlaneseq
    %v5994 = vshrl.u32 %v5993, 7
    %v5995 = vsub.s32 2, %v5994
    %v5996 = vrot.slane %v5886, %v5995
    %v5997 = vlaneseq
    %v5998 = vshrl.u32 %v5997, 7
    %v5999 = vsub.s32 2, %v5998
    %v6000 = vrot.slane %v5887, %v5999
    %v6001 = vlaneseq
    %v6002 = vshrl.u32 %v6001, 7
    %v6003 = vsub.s32 2, %v6002
    %v6004 = vrot.slane %v5888, %v6003
    %v6005 = vlaneseq
    %v6006 = vshrl.u32 %v6005, 7
    %v6007 = vsub.s32 2, %v6006
    %v6008 = vrot.slane %v5889, %v6007
    %v6009 = vlaneseq
    %v6010 = vshrl.u32 %v6009, 7
    %v6011 = vsub.s32 2, %v6010
    %v6012 = vrot.slane %v5890, %v6011
    %v6013 = vlaneseq
    %v6014 = vshrl.u32 %v6013, 7
    %v6015 = vsub.s32 2, %v6014
    %v6016 = vrot.slane %v5891, %v6015
    %v6017 = vlaneseq
    %v6018 = vshrl.u32 %v6017, 7
    %v6019 = vsub.s32 2, %v6018
    %v6020 = vrot.slane %v5892, %v6019
    %v6021 = vmul.f32 %v5992, %v5887
    %v6022 = vmul.f32 %v5996, %v5887
    %v6023 = vmul.f32 %v6000, %v5887
    %v6024 = vmul.f32 %v6004, %v5887
    %v6025 = vmul.f32 %v6008, %v5887
    %v6026 = vmul.f32 %v6012, %v5887
    %v6027 = vmul.f32 %v6016, %v5887
    %v6028 = vmul.f32 %v6020, %v5887
    %v6029 = vadd.f32 %v5981, %v6021
    %v6030 = vadd.f32 %v5982, %v6022
    %v6031 = vadd.f32 %v5983, %v6023
    %v6032 = vadd.f32 %v5984, %v6024
    %v6033 = vadd.f32 %v5985, %v6025
    %v6034 = vadd.f32 %v5986, %v6026
    %v6035 = vadd.f32 %v5987, %v6027
    %v6036 = vadd.f32 %v5988, %v6028
    %v6037 = vlaneseq
    %v6038 = vshrl.u32 %v6037, 7
    %v6039 = vsub.s32 3, %v6038
    %v6040 = vrot.slane %v5885, %v6039
    %v6041 = vlaneseq
    %v6042 = vshrl.u32 %v6041, 7
    %v6043 = vsub.s32 3, %v6042
    %v6044 = vrot.slane %v5886, %v6043
    %v6045 = vlaneseq
    %v6046 = vshrl.u32 %v6045, 7
    %v6047 = vsub.s32 3, %v6046
    %v6048 = vrot.slane %v5887, %v6047
    %v6049 = vlaneseq
    %v6050 = vshrl.u32 %v6049, 7
    %v6051 = vsub.s32 3, %v6050
    %v6052 = vrot.slane %v5888, %v6051
    %v6053 = vlaneseq
    %v6054 = vshrl.u32 %v6053, 7
    %v6055 = vsub.s32 3, %v6054
    %v6056 = vrot.slane %v5889, %v6055
    %v6057 = vlaneseq
    %v6058 = vshrl.u32 %v6057, 7
    %v6059 = vsub.s32 3, %v6058
    %v6060 = vrot.slane %v5890, %v6059
    %v6061 = vlaneseq
    %v6062 = vshrl.u32 %v6061, 7
    %v6063 = vsub.s32 3, %v6062
    %v6064 = vrot.slane %v5891, %v6063
    %v6065 = vlaneseq
    %v6066 = vshrl.u32 %v6065, 7
    %v6067 = vsub.s32 3, %v6066
    %v6068 = vrot.slane %v5892, %v6067
    %v6069 = vmul.f32 %v6040, %v5888
    %v6070 = vmul.f32 %v6044, %v5888
    %v6071 = vmul.f32 %v6048, %v5888
    %v6072 = vmul.f32 %v6052, %v5888
    %v6073 = vmul.f32 %v6056, %v5888
    %v6074 = vmul.f32 %v6060, %v5888
    %v6075 = vmul.f32 %v6064, %v5888
    %v6076 = vmul.f32 %v6068, %v5888
    %v6077 = vadd.f32 %v6029, %v6069
    %v6078 = vadd.f32 %v6030, %v6070
    %v6079 = vadd.f32 %v6031, %v6071
    %v6080 = vadd.f32 %v6032, %v6072
    %v6081 = vadd.f32 %v6033, %v6073
    %v6082 = vadd.f32 %v6034, %v6074
    %v6083 = vadd.f32 %v6035, %v6075
    %v6084 = vadd.f32 %v6036, %v6076
    %v6085 = vlaneseq
    %v6086 = vshrl.u32 %v6085, 7
    %v6087 = vsub.s32 4, %v6086
    %v6088 = vrot.slane %v5885, %v6087
    %v6089 = vlaneseq
    %v6090 = vshrl.u32 %v6089, 7
    %v6091 = vsub.s32 4, %v6090
    %v6092 = vrot.slane %v5886, %v6091
    %v6093 = vlaneseq
    %v6094 = vshrl.u32 %v6093, 7
    %v6095 = vsub.s32 4, %v6094
    %v6096 = vrot.slane %v5887, %v6095
    %v6097 = vlaneseq
    %v6098 = vshrl.u32 %v6097, 7
    %v6099 = vsub.s32 4, %v6098
    %v6100 = vrot.slane %v5888, %v6099
    %v6101 = vlaneseq
    %v6102 = vshrl.u32 %v6101, 7
    %v6103 = vsub.s32 4, %v6102
    %v6104 = vrot.slane %v5889, %v6103
    %v6105 = vlaneseq
    %v6106 = vshrl.u32 %v6105, 7
    %v6107 = vsub.s32 4, %v6106
    %v6108 = vrot.slane %v5890, %v6107
    %v6109 = vlaneseq
    %v6110 = vshrl.u32 %v6109, 7
    %v6111 = vsub.s32 4, %v6110
    %v6112 = vrot.slane %v5891, %v6111
    %v6113 = vlaneseq
    %v6114 = vshrl.u32 %v6113, 7
    %v6115 = vsub.s32 4, %v6114
    %v6116 = vrot.slane %v5892, %v6115
    %v6117 = vmul.f32 %v6088, %v5889
    %v6118 = vmul.f32 %v6092, %v5889
    %v6119 = vmul.f32 %v6096, %v5889
    %v6120 = vmul.f32 %v6100, %v5889
    %v6121 = vmul.f32 %v6104, %v5889
    %v6122 = vmul.f32 %v6108, %v5889
    %v6123 = vmul.f32 %v6112, %v5889
    %v6124 = vmul.f32 %v6116, %v5889
    %v6125 = vadd.f32 %v6077, %v6117
    %v6126 = vadd.f32 %v6078, %v6118
    %v6127 = vadd.f32 %v6079, %v6119
    %v6128 = vadd.f32 %v6080, %v6120
    %v6129 = vadd.f32 %v6081, %v6121
    %v6130 = vadd.f32 %v6082, %v6122
    %v6131 = vadd.f32 %v6083, %v6123
    %v6132 = vadd.f32 %v6084, %v6124
    %v6133 = vlaneseq
    %v6134 = vshrl.u32 %v6133, 7
    %v6135 = vsub.s32 5, %v6134
    %v6136 = vrot.slane %v5885, %v6135
    %v6137 = vlaneseq
    %v6138 = vshrl.u32 %v6137, 7
    %v6139 = vsub.s32 5, %v6138
    %v6140 = vrot.slane %v5886, %v6139
    %v6141 = vlaneseq
    %v6142 = vshrl.u32 %v6141, 7
    %v6143 = vsub.s32 5, %v6142
    %v6144 = vrot.slane %v5887, %v6143
    %v6145 = vlaneseq
    %v6146 = vshrl.u32 %v6145, 7
    %v6147 = vsub.s32 5, %v6146
    %v6148 = vrot.slane %v5888, %v6147
    %v6149 = vlaneseq
    %v6150 = vshrl.u32 %v6149, 7
    %v6151 = vsub.s32 5, %v6150
    %v6152 = vrot.slane %v5889, %v6151
    %v6153 = vlaneseq
    %v6154 = vshrl.u32 %v6153, 7
    %v6155 = vsub.s32 5, %v6154
    %v6156 = vrot.slane %v5890, %v6155
    %v6157 = vlaneseq
    %v6158 = vshrl.u32 %v6157, 7
    %v6159 = vsub.s32 5, %v6158
    %v6160 = vrot.slane %v5891, %v6159
    %v6161 = vlaneseq
    %v6162 = vshrl.u32 %v6161, 7
    %v6163 = vsub.s32 5, %v6162
    %v6164 = vrot.slane %v5892, %v6163
    %v6165 = vmul.f32 %v6136, %v5890
    %v6166 = vmul.f32 %v6140, %v5890
    %v6167 = vmul.f32 %v6144, %v5890
    %v6168 = vmul.f32 %v6148, %v5890
    %v6169 = vmul.f32 %v6152, %v5890
    %v6170 = vmul.f32 %v6156, %v5890
    %v6171 = vmul.f32 %v6160, %v5890
    %v6172 = vmul.f32 %v6164, %v5890
    %v6173 = vadd.f32 %v6125, %v6165
    %v6174 = vadd.f32 %v6126, %v6166
    %v6175 = vadd.f32 %v6127, %v6167
    %v6176 = vadd.f32 %v6128, %v6168
    %v6177 = vadd.f32 %v6129, %v6169
    %v6178 = vadd.f32 %v6130, %v6170
    %v6179 = vadd.f32 %v6131, %v6171
    %v6180 = vadd.f32 %v6132, %v6172
    %v6181 = vlaneseq
    %v6182 = vshrl.u32 %v6181, 7
    %v6183 = vsub.s32 6, %v6182
    %v6184 = vrot.slane %v5885, %v6183
    %v6185 = vlaneseq
    %v6186 = vshrl.u32 %v6185, 7
    %v6187 = vsub.s32 6, %v6186
    %v6188 = vrot.slane %v5886, %v6187
    %v6189 = vlaneseq
    %v6190 = vshrl.u32 %v6189, 7
    %v6191 = vsub.s32 6, %v6190
    %v6192 = vrot.slane %v5887, %v6191
    %v6193 = vlaneseq
    %v6194 = vshrl.u32 %v6193, 7
    %v6195 = vsub.s32 6, %v6194
    %v6196 = vrot.slane %v5888, %v6195
    %v6197 = vlaneseq
    %v6198 = vshrl.u32 %v6197, 7
    %v6199 = vsub.s32 6, %v6198
    %v6200 = vrot.slane %v5889, %v6199
    %v6201 = vlaneseq
    %v6202 = vshrl.u32 %v6201, 7
    %v6203 = vsub.s32 6, %v6202
    %v6204 = vrot.slane %v5890, %v6203
    %v6205 = vlaneseq
    %v6206 = vshrl.u32 %v6205, 7
    %v6207 = vsub.s32 6, %v6206
    %v6208 = vrot.slane %v5891, %v6207
    %v6209 = vlaneseq
    %v6210 = vshrl.u32 %v6209, 7
    %v6211 = vsub.s32 6, %v6210
    %v6212 = vrot.slane %v5892, %v6211
    %v6213 = vmul.f32 %v6184, %v5891
    %v6214 = vmul.f32 %v6188, %v5891
    %v6215 = vmul.f32 %v6192, %v5891
    %v6216 = vmul.f32 %v6196, %v5891
    %v6217 = vmul.f32 %v6200, %v5891
    %v6218 = vmul.f32 %v6204, %v5891
    %v6219 = vmul.f32 %v6208, %v5891
    %v6220 = vmul.f32 %v6212, %v5891
    %v6221 = vadd.f32 %v6173, %v6213
    %v6222 = vadd.f32 %v6174, %v6214
    %v6223 = vadd.f32 %v6175, %v6215
    %v6224 = vadd.f32 %v6176, %v6216
    %v6225 = vadd.f32 %v6177, %v6217
    %v6226 = vadd.f32 %v6178, %v6218
    %v6227 = vadd.f32 %v6179, %v6219
    %v6228 = vadd.f32 %v6180, %v6220
    %v6229 = vlaneseq
    %v6230 = vshrl.u32 %v6229, 7
    %v6231 = vsub.s32 7, %v6230
    %v6232 = vrot.slane %v5885, %v6231
    %v6233 = vlaneseq
    %v6234 = vshrl.u32 %v6233, 7
    %v6235 = vsub.s32 7, %v6234
    %v6236 = vrot.slane %v5886, %v6235
    %v6237 = vlaneseq
    %v6238 = vshrl.u32 %v6237, 7
    %v6239 = vsub.s32 7, %v6238
    %v6240 = vrot.slane %v5887, %v6239
    %v6241 = vlaneseq
    %v6242 = vshrl.u32 %v6241, 7
    %v6243 = vsub.s32 7, %v6242
    %v6244 = vrot.slane %v5888, %v6243
    %v6245 = vlaneseq
    %v6246 = vshrl.u32 %v6245, 7
    %v6247 = vsub.s32 7, %v6246
    %v6248 = vrot.slane %v5889, %v6247
    %v6249 = vlaneseq
    %v6250 = vshrl.u32 %v6249, 7
    %v6251 = vsub.s32 7, %v6250
    %v6252 = vrot.slane %v5890, %v6251
    %v6253 = vlaneseq
    %v6254 = vshrl.u32 %v6253, 7
    %v6255 = vsub.s32 7, %v6254
    %v6256 = vrot.slane %v5891, %v6255
    %v6257 = vlaneseq
    %v6258 = vshrl.u32 %v6257, 7
    %v6259 = vsub.s32 7, %v6258
    %v6260 = vrot.slane %v5892, %v6259
    %v6261 = vmul.f32 %v6232, %v5892
    %v6262 = vmul.f32 %v6236, %v5892
    %v6263 = vmul.f32 %v6240, %v5892
    %v6264 = vmul.f32 %v6244, %v5892
    %v6265 = vmul.f32 %v6248, %v5892
    %v6266 = vmul.f32 %v6252, %v5892
    %v6267 = vmul.f32 %v6256, %v5892
    %v6268 = vmul.f32 %v6260, %v5892
    %v6269 = vadd.f32 %v6221, %v6261
    %v6270 = vadd.f32 %v6222, %v6262
    %v6271 = vadd.f32 %v6223, %v6263
    %v6272 = vadd.f32 %v6224, %v6264
    %v6273 = vadd.f32 %v6225, %v6265
    %v6274 = vadd.f32 %v6226, %v6266
    %v6275 = vadd.f32 %v6227, %v6267
    %v6276 = vadd.f32 %v6228, %v6268
    %v6277 = vlaneseq
    %v6278 = vshrl.u32 %v6277, 7
    %v6279 = vsub.s32 0, %v6278
    %v6280 = vrot.slane %v5893, %v6279
    %v6281 = vlaneseq
    %v6282 = vshrl.u32 %v6281, 7
    %v6283 = vsub.s32 0, %v6282
    %v6284 = vrot.slane %v5894, %v6283
    %v6285 = vlaneseq
    %v6286 = vshrl.u32 %v6285, 7
    %v6287 = vsub.s32 0, %v6286
    %v6288 = vrot.slane %v5895, %v6287
    %v6289 = vlaneseq
    %v6290 = vshrl.u32 %v6289, 7
    %v6291 = vsub.s32 0, %v6290
    %v6292 = vrot.slane %v5896, %v6291
    %v6293 = vlaneseq
    %v6294 = vshrl.u32 %v6293, 7
    %v6295 = vsub.s32 0, %v6294
    %v6296 = vrot.slane %v5897, %v6295
    %v6297 = vlaneseq
    %v6298 = vshrl.u32 %v6297, 7
    %v6299 = vsub.s32 0, %v6298
    %v6300 = vrot.slane %v5898, %v6299
    %v6301 = vlaneseq
    %v6302 = vshrl.u32 %v6301, 7
    %v6303 = vsub.s32 0, %v6302
    %v6304 = vrot.slane %v5899, %v6303
    %v6305 = vlaneseq
    %v6306 = vshrl.u32 %v6305, 7
    %v6307 = vsub.s32 0, %v6306
    %v6308 = vrot.slane %v5900, %v6307
    %v6309 = vmul.f32 %v6280, %v5893
    %v6310 = vmul.f32 %v6284, %v5893
    %v6311 = vmul.f32 %v6288, %v5893
    %v6312 = vmul.f32 %v6292, %v5893
    %v6313 = vmul.f32 %v6296, %v5893
    %v6314 = vmul.f32 %v6300, %v5893
    %v6315 = vmul.f32 %v6304, %v5893
    %v6316 = vmul.f32 %v6308, %v5893
    %v6317 = vlaneseq
    %v6318 = vshrl.u32 %v6317, 7
    %v6319 = vsub.s32 1, %v6318
    %v6320 = vrot.slane %v5893, %v6319
    %v6321 = vlaneseq
    %v6322 = vshrl.u32 %v6321, 7
    %v6323 = vsub.s32 1, %v6322
    %v6324 = vrot.slane %v5894, %v6323
    %v6325 = vlaneseq
    %v6326 = vshrl.u32 %v6325, 7
    %v6327 = vsub.s32 1, %v6326
    %v6328 = vrot.slane %v5895, %v6327
    %v6329 = vlaneseq
    %v6330 = vshrl.u32 %v6329, 7
    %v6331 = vsub.s32 1, %v6330
    %v6332 = vrot.slane %v5896, %v6331
    %v6333 = vlaneseq
    %v6334 = vshrl.u32 %v6333, 7
    %v6335 = vsub.s32 1, %v6334
    %v6336 = vrot.slane %v5897, %v6335
    %v6337 = vlaneseq
    %v6338 = vshrl.u32 %v6337, 7
    %v6339 = vsub.s32 1, %v6338
    %v6340 = vrot.slane %v5898, %v6339
    %v6341 = vlaneseq
    %v6342 = vshrl.u32 %v6341, 7
    %v6343 = vsub.s32 1, %v6342
    %v6344 = vrot.slane %v5899, %v6343
    %v6345 = vlaneseq
    %v6346 = vshrl.u32 %v6345, 7
    %v6347 = vsub.s32 1, %v6346
    %v6348 = vrot.slane %v5900, %v6347
    %v6349 = vmul.f32 %v6320, %v5894
    %v6350 = vmul.f32 %v6324, %v5894
    %v6351 = vmul.f32 %v6328, %v5894
    %v6352 = vmul.f32 %v6332, %v5894
    %v6353 = vmul.f32 %v6336, %v5894
    %v6354 = vmul.f32 %v6340, %v5894
    %v6355 = vmul.f32 %v6344, %v5894
    %v6356 = vmul.f32 %v6348, %v5894
    %v6357 = vadd.f32 %v6309, %v6349
    %v6358 = vadd.f32 %v6310, %v6350
    %v6359 = vadd.f32 %v6311, %v6351
    %v6360 = vadd.f32 %v6312, %v6352
    %v6361 = vadd.f32 %v6313, %v6353
    %v6362 = vadd.f32 %v6314, %v6354
    %v6363 = vadd.f32 %v6315, %v6355
    %v6364 = vadd.f32 %v6316, %v6356
    %v6365 = vlaneseq
    %v6366 = vshrl.u32 %v6365, 7
    %v6367 = vsub.s32 2, %v6366
    %v6368 = vrot.slane %v5893, %v6367
    %v6369 = vlaneseq
    %v6370 = vshrl.u32 %v6369, 7
    %v6371 = vsub.s32 2, %v6370
    %v6372 = vrot.slane %v5894, %v6371
    %v6373 = vlaneseq
    %v6374 = vshrl.u32 %v6373, 7
    %v6375 = vsub.s32 2, %v6374
    %v6376 = vrot.slane %v5895, %v6375
    %v6377 = vlaneseq
    %v6378 = vshrl.u32 %v6377, 7
    %v6379 = vsub.s32 2, %v6378
    %v6380 = vrot.slane %v5896, %v6379
    %v6381 = vlaneseq
    %v6382 = vshrl.u32 %v6381, 7
    %v6383 = vsub.s32 2, %v6382
    %v6384 = vrot.slane %v5897, %v6383
    %v6385 = vlaneseq
    %v6386 = vshrl.u32 %v6385, 7
    %v6387 = vsub.s32 2, %v6386
    %v6388 = vrot.slane %v5898, %v6387
    %v6389 = vlaneseq
    %v6390 = vshrl.u32 %v6389, 7
    %v6391 = vsub.s32 2, %v6390
    %v6392 = vrot.slane %v5899, %v6391
    %v6393 = vlaneseq
    %v6394 = vshrl.u32 %v6393, 7
    %v6395 = vsub.s32 2, %v6394
    %v6396 = vrot.slane %v5900, %v6395
    %v6397 = vmul.f32 %v6368, %v5895
    %v6398 = vmul.f32 %v6372, %v5895
    %v6399 = vmul.f32 %v6376, %v5895
    %v6400 = vmul.f32 %v6380, %v5895
    %v6401 = vmul.f32 %v6384, %v5895
    %v6402 = vmul.f32 %v6388, %v5895
    %v6403 = vmul.f32 %v6392, %v5895
    %v6404 = vmul.f32 %v6396, %v5895
    %v6405 = vadd.f32 %v6357, %v6397
    %v6406 = vadd.f32 %v6358, %v6398
    %v6407 = vadd.f32 %v6359, %v6399
    %v6408 = vadd.f32 %v6360, %v6400
    %v6409 = vadd.f32 %v6361, %v6401
    %v6410 = vadd.f32 %v6362, %v6402
    %v6411 = vadd.f32 %v6363, %v6403
    %v6412 = vadd.f32 %v6364, %v6404
    %v6413 = vlaneseq
    %v6414 = vshrl.u32 %v6413, 7
    %v6415 = vsub.s32 3, %v6414
    %v6416 = vrot.slane %v5893, %v6415
    %v6417 = vlaneseq
    %v6418 = vshrl.u32 %v6417, 7
    %v6419 = vsub.s32 3, %v6418
    %v6420 = vrot.slane %v5894, %v6419
    %v6421 = vlaneseq
    %v6422 = vshrl.u32 %v6421, 7
    %v6423 = vsub.s32 3, %v6422
    %v6424 = vrot.slane %v5895, %v6423
    %v6425 = vlaneseq
    %v6426 = vshrl.u32 %v6425, 7
    %v6427 = vsub.s32 3, %v6426
    %v6428 = vrot.slane %v5896, %v6427
    %v6429 = vlaneseq
    %v6430 = vshrl.u32 %v6429, 7
    %v6431 = vsub.s32 3, %v6430
    %v6432 = vrot.slane %v5897, %v6431
    %v6433 = vlaneseq
    %v6434 = vshrl.u32 %v6433, 7
    %v6435 = vsub.s32 3, %v6434
    %v6436 = vrot.slane %v5898, %v6435
    %v6437 = vlaneseq
    %v6438 = vshrl.u32 %v6437, 7
    %v6439 = vsub.s32 3, %v6438
    %v6440 = vrot.slane %v5899, %v6439
    %v6441 = vlaneseq
    %v6442 = vshrl.u32 %v6441, 7
    %v6443 = vsub.s32 3, %v6442
    %v6444 = vrot.slane %v5900, %v6443
    %v6445 = vmul.f32 %v6416, %v5896
    %v6446 = vmul.f32 %v6420, %v5896
    %v6447 = vmul.f32 %v6424, %v5896
    %v6448 = vmul.f32 %v6428, %v5896
    %v6449 = vmul.f32 %v6432, %v5896
    %v6450 = vmul.f32 %v6436, %v5896
    %v6451 = vmul.f32 %v6440, %v5896
    %v6452 = vmul.f32 %v6444, %v5896
    %v6453 = vadd.f32 %v6405, %v6445
    %v6454 = vadd.f32 %v6406, %v6446
    %v6455 = vadd.f32 %v6407, %v6447
    %v6456 = vadd.f32 %v6408, %v6448
    %v6457 = vadd.f32 %v6409, %v6449
    %v6458 = vadd.f32 %v6410, %v6450
    %v6459 = vadd.f32 %v6411, %v6451
    %v6460 = vadd.f32 %v6412, %v6452
    %v6461 = vlaneseq
    %v6462 = vshrl.u32 %v6461, 7
    %v6463 = vsub.s32 4, %v6462
    %v6464 = vrot.slane %v5893, %v6463
    %v6465 = vlaneseq
    %v6466 = vshrl.u32 %v6465, 7
    %v6467 = vsub.s32 4, %v6466
    %v6468 = vrot.slane %v5894, %v6467
    %v6469 = vlaneseq
    %v6470 = vshrl.u32 %v6469, 7
    %v6471 = vsub.s32 4, %v6470
    %v6472 = vrot.slane %v5895, %v6471
    %v6473 = vlaneseq
    %v6474 = vshrl.u32 %v6473, 7
    %v6475 = vsub.s32 4, %v6474
    %v6476 = vrot.slane %v5896, %v6475
    %v6477 = vlaneseq
    %v6478 = vshrl.u32 %v6477, 7
    %v6479 = vsub.s32 4, %v6478
    %v6480 = vrot.slane %v5897, %v6479
    %v6481 = vlaneseq
    %v6482 = vshrl.u32 %v6481, 7
    %v6483 = vsub.s32 4, %v6482
    %v6484 = vrot.slane %v5898, %v6483
    %v6485 = vlaneseq
    %v6486 = vshrl.u32 %v6485, 7
    %v6487 = vsub.s32 4, %v6486
    %v6488 = vrot.slane %v5899, %v6487
    %v6489 = vlaneseq
    %v6490 = vshrl.u32 %v6489, 7
    %v6491 = vsub.s32 4, %v6490
    %v6492 = vrot.slane %v5900, %v6491
    %v6493 = vmul.f32 %v6464, %v5897
    %v6494 = vmul.f32 %v6468, %v5897
    %v6495 = vmul.f32 %v6472, %v5897
    %v6496 = vmul.f32 %v6476, %v5897
    %v6497 = vmul.f32 %v6480, %v5897
    %v6498 = vmul.f32 %v6484, %v5897
    %v6499 = vmul.f32 %v6488, %v5897
    %v6500 = vmul.f32 %v6492, %v5897
    %v6501 = vadd.f32 %v6453, %v6493
    %v6502 = vadd.f32 %v6454, %v6494
    %v6503 = vadd.f32 %v6455, %v6495
    %v6504 = vadd.f32 %v6456, %v6496
    %v6505 = vadd.f32 %v6457, %v6497
    %v6506 = vadd.f32 %v6458, %v6498
    %v6507 = vadd.f32 %v6459, %v6499
    %v6508 = vadd.f32 %v6460, %v6500
    %v6509 = vlaneseq
    %v6510 = vshrl.u32 %v6509, 7
    %v6511 = vsub.s32 5, %v6510
    %v6512 = vrot.slane %v5893, %v6511
    %v6513 = vlaneseq
    %v6514 = vshrl.u32 %v6513, 7
    %v6515 = vsub.s32 5, %v6514
    %v6516 = vrot.slane %v5894, %v6515
    %v6517 = vlaneseq
    %v6518 = vshrl.u32 %v6517, 7
    %v6519 = vsub.s32 5, %v6518
    %v6520 = vrot.slane %v5895, %v6519
    %v6521 = vlaneseq
    %v6522 = vshrl.u32 %v6521, 7
    %v6523 = vsub.s32 5, %v6522
    %v6524 = vrot.slane %v5896, %v6523
    %v6525 = vlaneseq
    %v6526 = vshrl.u32 %v6525, 7
    %v6527 = vsub.s32 5, %v6526
    %v6528 = vrot.slane %v5897, %v6527
    %v6529 = vlaneseq
    %v6530 = vshrl.u32 %v6529, 7
    %v6531 = vsub.s32 5, %v6530
    %v6532 = vrot.slane %v5898, %v6531
    %v6533 = vlaneseq
    %v6534 = vshrl.u32 %v6533, 7
    %v6535 = vsub.s32 5, %v6534
    %v6536 = vrot.slane %v5899, %v6535
    %v6537 = vlaneseq
    %v6538 = vshrl.u32 %v6537, 7
    %v6539 = vsub.s32 5, %v6538
    %v6540 = vrot.slane %v5900, %v6539
    %v6541 = vmul.f32 %v6512, %v5898
    %v6542 = vmul.f32 %v6516, %v5898
    %v6543 = vmul.f32 %v6520, %v5898
    %v6544 = vmul.f32 %v6524, %v5898
    %v6545 = vmul.f32 %v6528, %v5898
    %v6546 = vmul.f32 %v6532, %v5898
    %v6547 = vmul.f32 %v6536, %v5898
    %v6548 = vmul.f32 %v6540, %v5898
    %v6549 = vadd.f32 %v6501, %v6541
    %v6550 = vadd.f32 %v6502, %v6542
    %v6551 = vadd.f32 %v6503, %v6543
    %v6552 = vadd.f32 %v6504, %v6544
    %v6553 = vadd.f32 %v6505, %v6545
    %v6554 = vadd.f32 %v6506, %v6546
    %v6555 = vadd.f32 %v6507, %v6547
    %v6556 = vadd.f32 %v6508, %v6548
    %v6557 = vlaneseq
    %v6558 = vshrl.u32 %v6557, 7
    %v6559 = vsub.s32 6, %v6558
    %v6560 = vrot.slane %v5893, %v6559
    %v6561 = vlaneseq
    %v6562 = vshrl.u32 %v6561, 7
    %v6563 = vsub.s32 6, %v6562
    %v6564 = vrot.slane %v5894, %v6563
    %v6565 = vlaneseq
    %v6566 = vshrl.u32 %v6565, 7
    %v6567 = vsub.s32 6, %v6566
    %v6568 = vrot.slane %v5895, %v6567
    %v6569 = vlaneseq
    %v6570 = vshrl.u32 %v6569, 7
    %v6571 = vsub.s32 6, %v6570
    %v6572 = vrot.slane %v5896, %v6571
    %v6573 = vlaneseq
    %v6574 = vshrl.u32 %v6573, 7
    %v6575 = vsub.s32 6, %v6574
    %v6576 = vrot.slane %v5897, %v6575
    %v6577 = vlaneseq
    %v6578 = vshrl.u32 %v6577, 7
    %v6579 = vsub.s32 6, %v6578
    %v6580 = vrot.slane %v5898, %v6579
    %v6581 = vlaneseq
    %v6582 = vshrl.u32 %v6581, 7
    %v6583 = vsub.s32 6, %v6582
    %v6584 = vrot.slane %v5899, %v6583
    %v6585 = vlaneseq
    %v6586 = vshrl.u32 %v6585, 7
    %v6587 = vsub.s32 6, %v6586
    %v6588 = vrot.slane %v5900, %v6587
    %v6589 = vmul.f32 %v6560, %v5899
    %v6590 = vmul.f32 %v6564, %v5899
    %v6591 = vmul.f32 %v6568, %v5899
    %v6592 = vmul.f32 %v6572, %v5899
    %v6593 = vmul.f32 %v6576, %v5899
    %v6594 = vmul.f32 %v6580, %v5899
    %v6595 = vmul.f32 %v6584, %v5899
    %v6596 = vmul.f32 %v6588, %v5899
    %v6597 = vadd.f32 %v6549, %v6589
    %v6598 = vadd.f32 %v6550, %v6590
    %v6599 = vadd.f32 %v6551, %v6591
    %v6600 = vadd.f32 %v6552, %v6592
    %v6601 = vadd.f32 %v6553, %v6593
    %v6602 = vadd.f32 %v6554, %v6594
    %v6603 = vadd.f32 %v6555, %v6595
    %v6604 = vadd.f32 %v6556, %v6596
    %v6605 = vlaneseq
    %v6606 = vshrl.u32 %v6605, 7
    %v6607 = vsub.s32 7, %v6606
    %v6608 = vrot.slane %v5893, %v6607
    %v6609 = vlaneseq
    %v6610 = vshrl.u32 %v6609, 7
    %v6611 = vsub.s32 7, %v6610
    %v6612 = vrot.slane %v5894, %v6611
    %v6613 = vlaneseq
    %v6614 = vshrl.u32 %v6613, 7
    %v6615 = vsub.s32 7, %v6614
    %v6616 = vrot.slane %v5895, %v6615
    %v6617 = vlaneseq
    %v6618 = vshrl.u32 %v6617, 7
    %v6619 = vsub.s32 7, %v6618
    %v6620 = vrot.slane %v5896, %v6619
    %v6621 = vlaneseq
    %v6622 = vshrl.u32 %v6621, 7
    %v6623 = vsub.s32 7, %v6622
    %v6624 = vrot.slane %v5897, %v6623
    %v6625 = vlaneseq
    %v6626 = vshrl.u32 %v6625, 7
    %v6627 = vsub.s32 7, %v6626
    %v6628 = vrot.slane %v5898, %v6627
    %v6629 = vlaneseq
    %v6630 = vshrl.u32 %v6629, 7
    %v6631 = vsub.s32 7, %v6630
    %v6632 = vrot.slane %v5899, %v6631
    %v6633 = vlaneseq
    %v6634 = vshrl.u32 %v6633, 7
    %v6635 = vsub.s32 7, %v6634
    %v6636 = vrot.slane %v5900, %v6635
    %v6637 = vmul.f32 %v6608, %v5900
    %v6638 = vmul.f32 %v6612, %v5900
    %v6639 = vmul.f32 %v6616, %v5900
    %v6640 = vmul.f32 %v6620, %v5900
    %v6641 = vmul.f32 %v6624, %v5900
    %v6642 = vmul.f32 %v6628, %v5900
    %v6643 = vmul.f32 %v6632, %v5900
    %v6644 = vmul.f32 %v6636, %v5900
    %v6645 = vadd.f32 %v6597, %v6637
    %v6646 = vadd.f32 %v6598, %v6638
    %v6647 = vadd.f32 %v6599, %v6639
    %v6648 = vadd.f32 %v6600, %v6640
    %v6649 = vadd.f32 %v6601, %v6641
    %v6650 = vadd.f32 %v6602, %v6642
    %v6651 = vadd.f32 %v6603, %v6643
    %v6652 = vadd.f32 %v6604, %v6644
    %v6653 = vadd.f32 %v5885, %v5893
    %v6654 = vadd.f32 %v5886, %v5894
    %v6655 = vadd.f32 %v5887, %v5895
    %v6656 = vadd.f32 %v5888, %v5896
    %v6657 = vadd.f32 %v5889, %v5897
    %v6658 = vadd.f32 %v5890, %v5898
    %v6659 = vadd.f32 %v5891, %v5899
    %v6660 = vadd.f32 %v5892, %v5900
    %v6661 = vlaneseq
    %v6662 = vshrl.u32 %v6661, 7
    %v6663 = vsub.s32 0, %v6662
    %v6664 = vrot.slane %v6653, %v6663
    %v6665 = vlaneseq
    %v6666 = vshrl.u32 %v6665, 7
    %v6667 = vsub.s32 0, %v6666
    %v6668 = vrot.slane %v6654, %v6667
    %v6669 = vlaneseq
    %v6670 = vshrl.u32 %v6669, 7
    %v6671 = vsub.s32 0, %v6670
    %v6672 = vrot.slane %v6655, %v6671
    %v6673 = vlaneseq
    %v6674 = vshrl.u32 %v6673, 7
    %v6675 = vsub.s32 0, %v6674
    %v6676 = vrot.slane %v6656, %v6675
    %v6677 = vlaneseq
    %v6678 = vshrl.u32 %v6677, 7
    %v6679 = vsub.s32 0, %v6678
    %v6680 = vrot.slane %v6657, %v6679
    %v6681 = vlaneseq
    %v6682 = vshrl.u32 %v6681, 7
    %v6683 = vsub.s32 0, %v6682
    %v6684 = vrot.slane %v6658, %v6683
    %v6685 = vlaneseq
    %v6686 = vshrl.u32 %v6685, 7
    %v6687 = vsub.s32 0, %v6686
    %v6688 = vrot.slane %v6659, %v6687
    %v6689 = vlaneseq
    %v6690 = vshrl.u32 %v6689, 7
    %v6691 = vsub.s32 0, %v6690
    %v6692 = vrot.slane %v6660, %v6691
    %v6693 = vmul.f32 %v6664, %v6653
    %v6694 = vmul.f32 %v6668, %v6653
    %v6695 = vmul.f32 %v6672, %v6653
    %v6696 = vmul.f32 %v6676, %v6653
    %v6697 = vmul.f32 %v6680, %v6653
    %v6698 = vmul.f32 %v6684, %v6653
    %v6699 = vmul.f32 %v6688, %v6653
    %v6700 = vmul.f32 %v6692, %v6653
    %v6701 = vlaneseq
    %v6702 = vshrl.u32 %v6701, 7
    %v6703 = vsub.s32 1, %v6702
    %v6704 = vrot.slane %v6653, %v6703
    %v6705 = vlaneseq
    %v6706 = vshrl.u32 %v6705, 7
    %v6707 = vsub.s32 1, %v6706
    %v6708 = vrot.slane %v6654, %v6707
    %v6709 = vlaneseq
    %v6710 = vshrl.u32 %v6709, 7
    %v6711 = vsub.s32 1, %v6710
    %v6712 = vrot.slane %v6655, %v6711
    %v6713 = vlaneseq
    %v6714 = vshrl.u32 %v6713, 7
    %v6715 = vsub.s32 1, %v6714
    %v6716 = vrot.slane %v6656, %v6715
    %v6717 = vlaneseq
    %v6718 = vshrl.u32 %v6717, 7
    %v6719 = vsub.s32 1, %v6718
    %v6720 = vrot.slane %v6657, %v6719
    %v6721 = vlaneseq
    %v6722 = vshrl.u32 %v6721, 7
    %v6723 = vsub.s32 1, %v6722
    %v6724 = vrot.slane %v6658, %v6723
    %v6725 = vlaneseq
    %v6726 = vshrl.u32 %v6725, 7
    %v6727 = vsub.s32 1, %v6726
    %v6728 = vrot.slane %v6659, %v6727
    %v6729 = vlaneseq
    %v6730 = vshrl.u32 %v6729, 7
    %v6731 = vsub.s32 1, %v6730
    %v6732 = vrot.slane %v6660, %v6731
    %v6733 = vmul.f32 %v6704, %v6654
    %v6734 = vmul.f32 %v6708, %v6654
    %v6735 = vmul.f32 %v6712, %v6654
    %v6736 = vmul.f32 %v6716, %v6654
    %v6737 = vmul.f32 %v6720, %v6654
    %v6738 = vmul.f32 %v6724, %v6654
    %v6739 = vmul.f32 %v6728, %v6654
    %v6740 = vmul.f32 %v6732, %v6654
    %v6741 = vadd.f32 %v6693, %v6733
    %v6742 = vadd.f32 %v6694, %v6734
    %v6743 = vadd.f32 %v6695, %v6735
    %v6744 = vadd.f32 %v6696, %v6736
    %v6745 = vadd.f32 %v6697, %v6737
    %v6746 = vadd.f32 %v6698, %v6738
    %v6747 = vadd.f32 %v6699, %v6739
    %v6748 = vadd.f32 %v6700, %v6740
    %v6749 = vlaneseq
    %v6750 = vshrl.u32 %v6749, 7
    %v6751 = vsub.s32 2, %v6750
    %v6752 = vrot.slane %v6653, %v6751
    %v6753 = vlaneseq
    %v6754 = vshrl.u32 %v6753, 7
    %v6755 = vsub.s32 2, %v6754
    %v6756 = vrot.slane %v6654, %v6755
    %v6757 = vlaneseq
    %v6758 = vshrl.u32 %v6757, 7
    %v6759 = vsub.s32 2, %v6758
    %v6760 = vrot.slane %v6655, %v6759
    %v6761 = vlaneseq
    %v6762 = vshrl.u32 %v6761, 7
    %v6763 = vsub.s32 2, %v6762
    %v6764 = vrot.slane %v6656, %v6763
    %v6765 = vlaneseq
    %v6766 = vshrl.u32 %v6765, 7
    %v6767 = vsub.s32 2, %v6766
    %v6768 = vrot.slane %v6657, %v6767
    %v6769 = vlaneseq
    %v6770 = vshrl.u32 %v6769, 7
    %v6771 = vsub.s32 2, %v6770
    %v6772 = vrot.slane %v6658, %v6771
    %v6773 = vlaneseq
    %v6774 = vshrl.u32 %v6773, 7
    %v6775 = vsub.s32 2, %v6774
    %v6776 = vrot.slane %v6659, %v6775
    %v6777 = vlaneseq
    %v6778 = vshrl.u32 %v6777, 7
    %v6779 = vsub.s32 2, %v6778
    %v6780 = vrot.slane %v6660, %v6779
    %v6781 = vmul.f32 %v6752, %v6655
    %v6782 = vmul.f32 %v6756, %v6655
    %v6783 = vmul.f32 %v6760, %v6655
    %v6784 = vmul.f32 %v6764, %v6655
    %v6785 = vmul.f32 %v6768, %v6655
    %v6786 = vmul.f32 %v6772, %v6655
    %v6787 = vmul.f32 %v6776, %v6655
    %v6788 = vmul.f32 %v6780, %v6655
    %v6789 = vadd.f32 %v6741, %v6781
    %v6790 = vadd.f32 %v6742, %v6782
    %v6791 = vadd.f32 %v6743, %v6783
    %v6792 = vadd.f32 %v6744, %v6784
    %v6793 = vadd.f32 %v6745, %v6785
    %v6794 = vadd.f32 %v6746, %v6786
    %v6795 = vadd.f32 %v6747, %v6787
    %v6796 = vadd.f32 %v6748, %v6788
    %v6797 = vlaneseq
    %v6798 = vshrl.u32 %v6797, 7
    %v6799 = vsub.s32 3, %v6798
    %v6800 = vrot.slane %v6653, %v6799
    %v6801 = vlaneseq
    %v6802 = vshrl.u32 %v6801, 7
    %v6803 = vsub.s32 3, %v6802
    %v6804 = vrot.slane %v6654, %v6803
    %v6805 = vlaneseq
    %v6806 = vshrl.u32 %v6805, 7
    %v6807 = vsub.s32 3, %v6806
    %v6808 = vrot.slane %v6655, %v6807
    %v6809 = vlaneseq
    %v6810 = vshrl.u32 %v6809, 7
    %v6811 = vsub.s32 3, %v6810
    %v6812 = vrot.slane %v6656, %v6811
    %v6813 = vlaneseq
    %v6814 = vshrl.u32 %v6813, 7
    %v6815 = vsub.s32 3, %v6814
    %v6816 = vrot.slane %v6657, %v6815
    %v6817 = vlaneseq
    %v6818 = vshrl.u32 %v6817, 7
    %v6819 = vsub.s32 3, %v6818
    %v6820 = vrot.slane %v6658, %v6819
    %v6821 = vlaneseq
    %v6822 = vshrl.u32 %v6821, 7
    %v6823 = vsub.s32 3, %v6822
    %v6824 = vrot.slane %v6659, %v6823
    %v6825 = vlaneseq
    %v6826 = vshrl.u32 %v6825, 7
    %v6827 = vsub.s32 3, %v6826
    %v6828 = vrot.slane %v6660, %v6827
    %v6829 = vmul.f32 %v6800, %v6656
    %v6830 = vmul.f32 %v6804, %v6656
    %v6831 = vmul.f32 %v6808, %v6656
    %v6832 = vmul.f32 %v6812, %v6656
    %v6833 = vmul.f32 %v6816, %v6656
    %v6834 = vmul.f32 %v6820, %v6656
    %v6835 = vmul.f32 %v6824, %v6656
    %v6836 = vmul.f32 %v6828, %v6656
    %v6837 = vadd.f32 %v6789, %v6829
    %v6838 = vadd.f32 %v6790, %v6830
    %v6839 = vadd.f32 %v6791, %v6831
    %v6840 = vadd.f32 %v6792, %v6832
    %v6841 = vadd.f32 %v6793, %v6833
    %v6842 = vadd.f32 %v6794, %v6834
    %v6843 = vadd.f32 %v6795, %v6835
    %v6844 = vadd.f32 %v6796, %v6836
    %v6845 = vlaneseq
    %v6846 = vshrl.u32 %v6845, 7
    %v6847 = vsub.s32 4, %v6846
    %v6848 = vrot.slane %v6653, %v6847
    %v6849 = vlaneseq
    %v6850 = vshrl.u32 %v6849, 7
    %v6851 = vsub.s32 4, %v6850
    %v6852 = vrot.slane %v6654, %v6851
    %v6853 = vlaneseq
    %v6854 = vshrl.u32 %v6853, 7
    %v6855 = vsub.s32 4, %v6854
    %v6856 = vrot.slane %v6655, %v6855
    %v6857 = vlaneseq
    %v6858 = vshrl.u32 %v6857, 7
    %v6859 = vsub.s32 4, %v6858
    %v6860 = vrot.slane %v6656, %v6859
    %v6861 = vlaneseq
    %v6862 = vshrl.u32 %v6861, 7
    %v6863 = vsub.s32 4, %v6862
    %v6864 = vrot.slane %v6657, %v6863
    %v6865 = vlaneseq
    %v6866 = vshrl.u32 %v6865, 7
    %v6867 = vsub.s32 4, %v6866
    %v6868 = vrot.slane %v6658, %v6867
    %v6869 = vlaneseq
    %v6870 = vshrl.u32 %v6869, 7
    %v6871 = vsub.s32 4, %v6870
    %v6872 = vrot.slane %v6659, %v6871
    %v6873 = vlaneseq
    %v6874 = vshrl.u32 %v6873, 7
    %v6875 = vsub.s32 4, %v6874
    %v6876 = vrot.slane %v6660, %v6875
    %v6877 = vmul.f32 %v6848, %v6657
    %v6878 = vmul.f32 %v6852, %v6657
    %v6879 = vmul.f32 %v6856, %v6657
    %v6880 = vmul.f32 %v6860, %v6657
    %v6881 = vmul.f32 %v6864, %v6657
    %v6882 = vmul.f32 %v6868, %v6657
    %v6883 = vmul.f32 %v6872, %v6657
    %v6884 = vmul.f32 %v6876, %v6657
    %v6885 = vadd.f32 %v6837, %v6877
    %v6886 = vadd.f32 %v6838, %v6878
    %v6887 = vadd.f32 %v6839, %v6879
    %v6888 = vadd.f32 %v6840, %v6880
    %v6889 = vadd.f32 %v6841, %v6881
    %v6890 = vadd.f32 %v6842, %v6882
    %v6891 = vadd.f32 %v6843, %v6883
    %v6892 = vadd.f32 %v6844, %v6884
    %v6893 = vlaneseq
    %v6894 = vshrl.u32 %v6893, 7
    %v6895 = vsub.s32 5, %v6894
    %v6896 = vrot.slane %v6653, %v6895
    %v6897 = vlaneseq
    %v6898 = vshrl.u32 %v6897, 7
    %v6899 = vsub.s32 5, %v6898
    %v6900 = vrot.slane %v6654, %v6899
    %v6901 = vlaneseq
    %v6902 = vshrl.u32 %v6901, 7
    %v6903 = vsub.s32 5, %v6902
    %v6904 = vrot.slane %v6655, %v6903
    %v6905 = vlaneseq
    %v6906 = vshrl.u32 %v6905, 7
    %v6907 = vsub.s32 5, %v6906
    %v6908 = vrot.slane %v6656, %v6907
    %v6909 = vlaneseq
    %v6910 = vshrl.u32 %v6909, 7
    %v6911 = vsub.s32 5, %v6910
    %v6912 = vrot.slane %v6657, %v6911
    %v6913 = vlaneseq
    %v6914 = vshrl.u32 %v6913, 7
    %v6915 = vsub.s32 5, %v6914
    %v6916 = vrot.slane %v6658, %v6915
    %v6917 = vlaneseq
    %v6918 = vshrl.u32 %v6917, 7
    %v6919 = vsub.s32 5, %v6918
    %v6920 = vrot.slane %v6659, %v6919
    %v6921 = vlaneseq
    %v6922 = vshrl.u32 %v6921, 7
    %v6923 = vsub.s32 5, %v6922
    %v6924 = vrot.slane %v6660, %v6923
    %v6925 = vmul.f32 %v6896, %v6658
    %v6926 = vmul.f32 %v6900, %v6658
    %v6927 = vmul.f32 %v6904, %v6658
    %v6928 = vmul.f32 %v6908, %v6658
    %v6929 = vmul.f32 %v6912, %v6658
    %v6930 = vmul.f32 %v6916, %v6658
    %v6931 = vmul.f32 %v6920, %v6658
    %v6932 = vmul.f32 %v6924, %v6658
    %v6933 = vadd.f32 %v6885, %v6925
    %v6934 = vadd.f32 %v6886, %v6926
    %v6935 = vadd.f32 %v6887, %v6927
    %v6936 = vadd.f32 %v6888, %v6928
    %v6937 = vadd.f32 %v6889, %v6929
    %v6938 = vadd.f32 %v6890, %v6930
    %v6939 = vadd.f32 %v6891, %v6931
    %v6940 = vadd.f32 %v6892, %v6932
    %v6941 = vlaneseq
    %v6942 = vshrl.u32 %v6941, 7
    %v6943 = vsub.s32 6, %v6942
    %v6944 = vrot.slane %v6653, %v6943
    %v6945 = vlaneseq
    %v6946 = vshrl.u32 %v6945, 7
    %v6947 = vsub.s32 6, %v6946
    %v6948 = vrot.slane %v6654, %v6947
    %v6949 = vlaneseq
    %v6950 = vshrl.u32 %v6949, 7
    %v6951 = vsub.s32 6, %v6950
    %v6952 = vrot.slane %v6655, %v6951
    %v6953 = vlaneseq
    %v6954 = vshrl.u32 %v6953, 7
    %v6955 = vsub.s32 6, %v6954
    %v6956 = vrot.slane %v6656, %v6955
    %v6957 = vlaneseq
    %v6958 = vshrl.u32 %v6957, 7
    %v6959 = vsub.s32 6, %v6958
    %v6960 = vrot.slane %v6657, %v6959
    %v6961 = vlaneseq
    %v6962 = vshrl.u32 %v6961, 7
    %v6963 = vsub.s32 6, %v6962
    %v6964 = vrot.slane %v6658, %v6963
    %v6965 = vlaneseq
    %v6966 = vshrl.u32 %v6965, 7
    %v6967 = vsub.s32 6, %v6966
    %v6968 = vrot.slane %v6659, %v6967
    %v6969 = vlaneseq
    %v6970 = vshrl.u32 %v6969, 7
    %v6971 = vsub.s32 6, %v6970
    %v6972 = vrot.slane %v6660, %v6971
    %v6973 = vmul.f32 %v6944, %v6659
    %v6974 = vmul.f32 %v6948, %v6659
    %v6975 = vmul.f32 %v6952, %v6659
    %v6976 = vmul.f32 %v6956, %v6659
    %v6977 = vmul.f32 %v6960, %v6659
    %v6978 = vmul.f32 %v6964, %v6659
    %v6979 = vmul.f32 %v6968, %v6659
    %v6980 = vmul.f32 %v6972, %v6659
    %v6981 = vadd.f32 %v6933, %v6973
    %v6982 = vadd.f32 %v6934, %v6974
    %v6983 = vadd.f32 %v6935, %v6975
    %v6984 = vadd.f32 %v6936, %v6976
    %v6985 = vadd.f32 %v6937, %v6977
    %v6986 = vadd.f32 %v6938, %v6978
    %v6987 = vadd.f32 %v6939, %v6979
    %v6988 = vadd.f32 %v6940, %v6980
    %v6989 = vlaneseq
    %v6990 = vshrl.u32 %v6989, 7
    %v6991 = vsub.s32 7, %v6990
    %v6992 = vrot.slane %v6653, %v6991
    %v6993 = vlaneseq
    %v6994 = vshrl.u32 %v6993, 7
    %v6995 = vsub.s32 7, %v6994
    %v6996 = vrot.slane %v6654, %v6995
    %v6997 = vlaneseq
    %v6998 = vshrl.u32 %v6997, 7
    %v6999 = vsub.s32 7, %v6998
    %v7000 = vrot.slane %v6655, %v6999
    %v7001 = vlaneseq
    %v7002 = vshrl.u32 %v7001, 7
    %v7003 = vsub.s32 7, %v7002
    %v7004 = vrot.slane %v6656, %v7003
    %v7005 = vlaneseq
    %v7006 = vshrl.u32 %v7005, 7
    %v7007 = vsub.s32 7, %v7006
    %v7008 = vrot.slane %v6657, %v7007
    %v7009 = vlaneseq
    %v7010 = vshrl.u32 %v7009, 7
    %v7011 = vsub.s32 7, %v7010
    %v7012 = vrot.slane %v6658, %v7011
    %v7013 = vlaneseq
    %v7014 = vshrl.u32 %v7013, 7
    %v7015 = vsub.s32 7, %v7014
    %v7016 = vrot.slane %v6659, %v7015
    %v7017 = vlaneseq
    %v7018 = vshrl.u32 %v7017, 7
    %v7019 = vsub.s32 7, %v7018
    %v7020 = vrot.slane %v6660, %v7019
    %v7021 = vmul.f32 %v6992, %v6660
    %v7022 = vmul.f32 %v6996, %v6660
    %v7023 = vmul.f32 %v7000, %v6660
    %v7024 = vmul.f32 %v7004, %v6660
    %v7025 = vmul.f32 %v7008, %v6660
    %v7026 = vmul.f32 %v7012, %v6660
    %v7027 = vmul.f32 %v7016, %v6660
    %v7028 = vmul.f32 %v7020, %v6660
    %v7029 = vadd.f32 %v6981, %v7021
    %v7030 = vadd.f32 %v6982, %v7022
    %v7031 = vadd.f32 %v6983, %v7023
    %v7032 = vadd.f32 %v6984, %v7024
    %v7033 = vadd.f32 %v6985, %v7025
    %v7034 = vadd.f32 %v6986, %v7026
    %v7035 = vadd.f32 %v6987, %v7027
    %v7036 = vadd.f32 %v6988, %v7028
    %v7037 = vsub.f32 %v6269, %v6645
    %v7038 = vsub.f32 %v6270, %v6646
    %v7039 = vsub.f32 %v6271, %v6647
    %v7040 = vsub.f32 %v6272, %v6648
    %v7041 = vsub.f32 %v6273, %v6649
    %v7042 = vsub.f32 %v6274, %v6650
    %v7043 = vsub.f32 %v6275, %v6651
    %v7044 = vsub.f32 %v6276, %v6652
    %v7045 = vsub.f32 %v7029, %v6269
    %v7046 = vsub.f32 %v7030, %v6270
    %v7047 = vsub.f32 %v7031, %v6271
    %v7048 = vsub.f32 %v7032, %v6272
    %v7049 = vsub.f32 %v7033, %v6273
    %v7050 = vsub.f32 %v7034, %v6274
    %v7051 = vsub.f32 %v7035, %v6275
    %v7052 = vsub.f32 %v7036, %v6276
    %v7053 = vsub.f32 %v7045, %v6645
    %v7054 = vsub.f32 %v7046, %v6646
    %v7055 = vsub.f32 %v7047, %v6647
    %v7056 = vsub.f32 %v7048, %v6648
    %v7057 = vsub.f32 %v7049, %v6649
    %v7058 = vsub.f32 %v7050, %v6650
    %v7059 = vsub.f32 %v7051, %v6651
    %v7060 = vsub.f32 %v7052, %v6652
    %v7061 = vld [vmem:[%s3] sm:$0x1]
    %v7062 = vstv %s5880
    %vm7063 = vcmp.lt.s32.totalorder %v7062, %v7061
    %v7064 = vsel %vm7063, 1, 0
    %v7065 = vlaneseq
    %v7066 = vshrl.u32 %v7065, 7
    %v7067 = vsub.s32 0, %v7066
    %v7068 = vrot.slane %v7064, %v7067
    %vm7069 = vcmp.eq.s32.totalorder %v7068, 1
    %v7070 = vsel %vm7069, %v7037, %v5885
    %v7071 = vsel %vm7069, %v7038, %v5886
    %v7072 = vsel %vm7069, %v7039, %v5887
    %v7073 = vsel %vm7069, %v7040, %v5888
    %v7074 = vsel %vm7069, %v7041, %v5889
    %v7075 = vsel %vm7069, %v7042, %v5890
    %v7076 = vsel %vm7069, %v7043, %v5891
    %v7077 = vsel %vm7069, %v7044, %v5892
    %7078 = vst [vmem:[%s5] sm:$0xff] %v7070
    %7079 = vst [vmem:[%s5 + $0x8] sm:$0xff] %v7071
    %7080 = vst [vmem:[%s5 + $0x10] sm:$0xff] %v7072
    %7081 = vst [vmem:[%s5 + $0x18] sm:$0xff] %v7073
    %7082 = vst [vmem:[%s5 + $0x20] sm:$0xff] %v7074
    %7083 = vst [vmem:[%s5 + $0x28] sm:$0xff] %v7075
    %7084 = vst [vmem:[%s5 + $0x30] sm:$0xff] %v7076
    %7085 = vst [vmem:[%s5 + $0x38] sm:$0xff] %v7077
    %v7086 = vsel %vm7069, %v7053, %v5893
    %v7087 = vsel %vm7069, %v7054, %v5894
    %v7088 = vsel %vm7069, %v7055, %v5895
    %v7089 = vsel %vm7069, %v7056, %v5896
    %v7090 = vsel %vm7069, %v7057, %v5897
    %v7091 = vsel %vm7069, %v7058, %v5898
    %v7092 = vsel %vm7069, %v7059, %v5899
    %v7093 = vsel %vm7069, %v7060, %v5900
    %7094 = vst [vmem:[%s6] sm:$0xff] %v7086
    %7095 = vst [vmem:[%s6 + $0x8] sm:$0xff] %v7087
    %7096 = vst [vmem:[%s6 + $0x10] sm:$0xff] %v7088
    %7097 = vst [vmem:[%s6 + $0x18] sm:$0xff] %v7089
    %7098 = vst [vmem:[%s6 + $0x20] sm:$0xff] %v7090
    %7099 = vst [vmem:[%s6 + $0x28] sm:$0xff] %v7091
    %7100 = vst [vmem:[%s6 + $0x30] sm:$0xff] %v7092
    %7101 = vst [vmem:[%s6 + $0x38] sm:$0xff] %v7093
  $region22: #{base_projection_forward.3} parent=0 // loop_footer
    %s5882 = sadd.s32 %s5880, 1
  $region23: #{base_projection_forward.3} parent=0 // loop_footer_branch
    %5879 = sbr.rel target = $region19
  $region24: #{base_projection_forward.3} parent=0 // loop_exit
    _
  // Predicated region
  $region25: #{base_projection_forward.3} parent=0 // pred_check
    _
  $region26: #{base_projection_forward.3} parent=0 // pred_check_branch
    %7103 = sbr.rel (0) target = $region28
  $region27: #{base_projection_forward.3} parent=0 // pred_region
    _
  $region28: #{base_projection_forward.3} parent=0 // pred_fallthru
    _
  // Predicated region
  $region29: #{base_projection_forward.3} parent=0 // pred_check
    _
  $region30: #{base_projection_forward.3} parent=0 // pred_check_branch
    %7105 = sbr.rel (0) target = $region32
  $region31: #{base_projection_forward.3} parent=0 // pred_region
    _
  $region32: #{base_projection_forward.3} parent=0 // pred_fallthru
    _
  // Predicated region
  $region33: #{base_projection_forward.3} parent=0 // pred_check
    _
  $region34: #{base_projection_forward.3} parent=0 // pred_check_branch
    %7107 = sbr.rel (0) target = $region36
  $region35: #{base_projection_forward.3} parent=0 // pred_region
    _
  $region36: #{base_projection_forward.3} parent=0 // pred_fallthru
    _
  // Predicated region
  $region37: #{base_projection_forward.3} parent=0 // pred_check
    _
  $region38: #{base_projection_forward.3} parent=0 // pred_check_branch
    %7109 = sbr.rel (0) target = $region40
  $region39: #{base_projection_forward.3} parent=0 // pred_region
    _
  $region40: #{base_projection_forward.3} parent=0 // pred_fallthru
    _

</llo_original>
